<compile_context>
chip_gen: v7x
topology: tpu7x:2x2x1
jax: 0.10.0
libtpu: 0.0.40
codegen_flags: <defaults>
</compile_context>

<pallas_src>
import numpy as np
import jax
import jax.numpy as jnp
from jax.experimental import pallas as pl
from jax.experimental.pallas import tpu as pltpu  # noqa: F401

# ---- small hyperparameters consistent with Decoder.__init__ ------------------
B = 2             # batch
S = 8             # decoder AND encoder sequence length
D = 32            # model_dim == encoding_dim
I = 32            # intermediate_dim (== model_dim, see notes above)
H = 4             # num_heads
DK = 8            # k_dim per head
DV = 8            # v_dim per head
VOCAB = 50        # output_dim
VOCAB_PAD = 64    # table padded so the one-hot matmul K dim is 8-aligned
N_LAYERS = 2
N_POSITION = 200
N = B * S         # flattened row count
HN = H * N        # heads folded into sublanes for attention
EPS = 1e-5        # nn.LayerNorm default
NEG = -1e10       # mask fill value
SCALE = float(np.sqrt(D))             # torch.sqrt(FloatTensor([model_dim]))
INV_SQRT_DK = 1.0 / float(np.sqrt(DK))


# ------------------------------------------------------------------------------
# fused Pallas kernel: embed (gather + pos-add) + N_LAYERS decoder layers
# ------------------------------------------------------------------------------
def _decoder_kernel(ids_ref, emb_ref, pos_ref, enc_ref, mask_ref,
                    wqkv_ref, bqkv_ref, wo_ref, wff_ref, vec_ref, out_ref):
    # TODO(synk): source applies self.scale(trg) / position_encoding(trg) to raw
    # ids (broken as written); implemented as the intended emb*sqrt(D) + sinusoid.
    # --- token embedding: in-kernel gather via one-hot matmul (table pre-scaled) ---
    ids = ids_ref[...]                                                # [N, 1] int32
    iota = jax.lax.broadcasted_iota(jnp.int32, (N, VOCAB_PAD), 1)
    onehot = (iota == ids).astype(jnp.float32)                        # [N, VOCAB_PAD]
    x = jnp.dot(onehot, emb_ref[...],
                preferred_element_type=jnp.float32) + pos_ref[...]    # [N, D]

    enc = enc_ref[...]                                                # [N, D]
    mask_add = mask_ref[...]                                          # [HN, HN] additive 0 / -1e10
    enc_b = jnp.broadcast_to(enc, (H, N, D))                          # hoisted, reused every layer

    def layernorm(v, g, b):
        mu = jnp.mean(v, axis=-1, keepdims=True)
        var = jnp.mean((v - mu) ** 2, axis=-1, keepdims=True)
        return (v - mu) * jax.lax.rsqrt(var + EPS) * g + b

    def mha(q_src_b, k_src_b, v_src_b, aidx, bo):
        # q/k/v sources: [H, N, D]; weights pre-transposed to [H, D, DK] (no
        # in-kernel XLU transpose); 1/sqrt(dk) folded into q weights/bias.
        wbase = aidx * 3
        q = jnp.einsum('hnd,hde->hne', q_src_b, wqkv_ref[wbase + 0],
                       preferred_element_type=jnp.float32)
        k = jnp.einsum('hnd,hde->hne', k_src_b, wqkv_ref[wbase + 1],
                       preferred_element_type=jnp.float32)
        v = jnp.einsum('hnd,hde->hne', v_src_b, wqkv_ref[wbase + 2],
                       preferred_element_type=jnp.float32)
        # fold heads into the sublane dim: [H, N, DK] -> [H*N, DK] (free reshape)
        qf = q.reshape(HN, DK) + bqkv_ref[wbase + 0]
        kf = k.reshape(HN, DK) + bqkv_ref[wbase + 1]
        vf = v.reshape(HN, DV) + bqkv_ref[wbase + 2]
        # one lane-dense [HN, HN] score matrix; cross-head / cross-batch pairs
        # are killed by the precomputed additive block-diagonal mask.
        s = jnp.einsum('qe,ke->qk', qf, kf,
                       preferred_element_type=jnp.float32) + mask_add
        s = s - jnp.max(s, axis=-1, keepdims=True)
        e = jnp.exp(s)
        p = e * pl.reciprocal(jnp.sum(e, axis=-1, keepdims=True), approx=True)
        ctx = jnp.einsum('qk,ke->qe', p, vf,
                         preferred_element_type=jnp.float32)           # [HN, DV]
        proj = jnp.einsum('hne,hed->hnd', ctx.reshape(H, N, DV), wo_ref[aidx],
                          preferred_element_type=jnp.float32)          # [H, N, D]
        return jnp.sum(proj, axis=0) + bo                              # [N, D]

    for l in range(N_LAYERS):                             # static unroll (2 layers)
        x_b = jnp.broadcast_to(x, (H, N, D))              # layer input; used by both attns
        vb0 = l * 10
        # --- self-attention + LayerNorm --------------------------------------
        sa = mha(x_b, x_b, x_b, l * 2 + 0, vec_ref[vb0 + 0])
        h1 = layernorm(x + sa, vec_ref[vb0 + 1], vec_ref[vb0 + 2])
        # --- encoder attention (q=enc, k=layer input x, v=enc; same mask) -----
        ca = mha(enc_b, x_b, enc_b, l * 2 + 1, vec_ref[vb0 + 3])
        h2 = layernorm(h1 + ca, vec_ref[vb0 + 4], vec_ref[vb0 + 5])
        # --- position-wise feed-forward + LayerNorm ----------------------------
        hid = jnp.maximum(jnp.dot(h2, wff_ref[l * 2 + 0],
                                  preferred_element_type=jnp.float32) + vec_ref[vb0 + 6],
                          0.0)
        ffo = jnp.dot(hid, wff_ref[l * 2 + 1],
                      preferred_element_type=jnp.float32) + vec_ref[vb0 + 7]
        x = layernorm(h2 + ffo, vec_ref[vb0 + 8], vec_ref[vb0 + 9])

    out_ref[...] = x


# ------------------------------------------------------------------------------
# wrappers
# ------------------------------------------------------------------------------
def _additive_mask(src_mask):
    # [B, S, S] -> additive [H*N, H*N]: 0 where (same head, same batch, src_mask
    # allows), else NEG.  Cross-head / cross-batch pairs can never attend.
    attend = (src_mask != 0).astype(jnp.float32)                       # [B, S, S]
    eye_b = jnp.eye(B, dtype=jnp.float32)
    bd = jnp.einsum('bc,bqk->bqck', eye_b, attend).reshape(N, N)       # batch block-diag
    eye_h = jnp.eye(H, dtype=jnp.float32)
    full = jnp.einsum('hg,qk->hqgk', eye_h, bd).reshape(HN, HN)        # head block-diag
    return jnp.where(full > 0, 0.0, NEG).astype(jnp.float32)


@jax.jit
def decoder_forward(trg_ids, encoder_output, src_mask, trg_mask, packed):
    del trg_mask  # source wiring: both attentions use Decoder's src_mask
    ids = trg_ids.reshape(N, 1).astype(jnp.int32)
    enc = encoder_output.reshape(N, D)
    mask_add = _additive_mask(src_mask)
    out = pl.pallas_call(
        _decoder_kernel,
        out_shape=jax.ShapeDtypeStruct((N, D), jnp.float32),
    )(ids, packed["emb_pad"], packed["pos_flat"], enc, mask_add,
      packed["wqkv"], packed["bqkv"], packed["wo"], packed["wff"], packed["vec"])
    return out.reshape(B, S, D)


# ------------------------------------------------------------------------------
# parameter construction (deterministic, synthetic) + packing for the kernel
# ------------------------------------------------------------------------------
def _linear(key, fi, fo, scale=0.05):
    kw, kb = jax.random.split(key)
    return (scale * jax.random.normal(kw, (fi, fo), jnp.float32),
            scale * jax.random.normal(kb, (1, fo), jnp.float32))


def _mha_params(key):
    ks = jax.random.split(key, 4)
    wq, bq = _linear(ks[0], D, H * DK)
    wk, bk = _linear(ks[1], D, H * DK)
    wv, bv = _linear(ks[2], D, H * DV)
    wo, bo = _linear(ks[3], H * DV, D)
    return [wq, bq, wk, bk, wv, bv, wo, bo]


def _ln_params(key, dim):
    kg, kb = jax.random.split(key)
    return [1.0 + 0.1 * jax.random.normal(kg, (1, dim), jnp.float32),
            0.1 * jax.random.normal(kb, (1, dim), jnp.float32)]


def _layer_params(key):
    ks = jax.random.split(key, 6)
    p = []
    p += _mha_params(ks[0])          # self_attention
    p += _ln_params(ks[1], D)        # self_attention_layer_norm
    p += _mha_params(ks[2])          # encoder_attention
    p += _ln_params(ks[3], D)        # encoder_attention_layer_norm
    w1, b1 = _linear(jax.random.fold_in(ks[4], 0), D, I)
    w2, b2 = _linear(jax.random.fold_in(ks[4], 1), I, D)
    p += [w1, b1, w2, b2]            # positionwise_feedforward
    p += _ln_params(ks[5], I)        # ff_layer_norm
    return p


def _sinusoid_table(n_position, dim):
    pos = np.arange(n_position, dtype=np.float64)[:, None]
    i = np.arange(dim, dtype=np.float64)[None, :]
    angle = pos / np.power(10000.0, 2.0 * (i // 2) / dim)
    tbl = np.zeros((n_position, dim), dtype=np.float32)
    tbl[:, 0::2] = np.sin(angle[:, 0::2])
    tbl[:, 1::2] = np.cos(angle[:, 1::2])
    return jnp.asarray(tbl)


def init_params(key):
    k_emb, k_layers = jax.random.split(key)
    return {
        "emb_table": 0.1 * jax.random.normal(k_emb, (VOCAB, D), jnp.float32),
        "pos_table": _sinusoid_table(N_POSITION, D),
        "layers": [_layer_params(jax.random.fold_in(k_layers, l)) for l in range(N_LAYERS)],
        # fc_out = Linear(intermediate_dim, output_dim) is never applied in forward.
    }


def pack_params(params):
    """Pack raw per-layer params into the few stacked slabs the fused kernel consumes."""
    wqkv, bqkv, wo, wff, vec = [], [], [], [], []
    for lp in params["layers"]:
        sa, ln1 = lp[0:8], lp[8:10]
        ca, ln2 = lp[10:18], lp[18:20]
        ff, ln3 = lp[20:24], lp[24:26]
        for attn in (sa, ca):
            awq, abq, awk, abk, awv, abv, awo, _abo = attn
            for j, (w, b) in enumerate(((awq, abq), (awk, abk), (awv, abv))):
                fold = INV_SQRT_DK if j == 0 else 1.0          # fold 1/sqrt(dk) into q
                # [D, H*DK] -> [H, D, DK]: contraction dim ends up on the RHS
                # sublane dim, so the in-kernel batched matmul needs no transpose.
                wqkv.append((w * fold).reshape(D, H, DK).transpose(1, 0, 2))
                # bias replicated to the folded [H*N, DK] layout.
                b_rep = jnp.broadcast_to((b * fold).reshape(H, 1, DK),
                                         (H, N, DK)).reshape(HN, DK)
                bqkv.append(b_rep)
            wo.append(awo.reshape(H, DV, D))                   # [H, DV, D]
        vec += [sa[7], ln1[0], ln1[1], ca[7], ln2[0], ln2[1],
                ff[1], ff[3], ln3[0], ln3[1]]                  # 10 x [1, D]
        wff += [ff[0], ff[2]]                                  # 2  x [D, I]
    emb_scaled = params["emb_table"] * SCALE                   # fold sqrt(D) into the table
    emb_pad = jnp.concatenate(
        [emb_scaled, jnp.zeros((VOCAB_PAD - VOCAB, D), jnp.float32)], axis=0)
    return {
        "emb_pad": emb_pad,                                    # [VOCAB_PAD, D]
        "pos_flat": jnp.tile(params["pos_table"][:S], (B, 1)), # [N, D]
        "wqkv": jnp.stack(wqkv),    # [L*6, H, D, DK]
        "bqkv": jnp.stack(bqkv),    # [L*6, H*N, DK]
        "wo":   jnp.stack(wo),      # [L*2, H, DV, D]
        "wff":  jnp.stack(wff),     # [L*2, D, I]
        "vec":  jnp.stack(vec),     # [L*10, 1, D]
    }


# ------------------------------------------------------------------------------
# pure-JAX reference (per-batch, per-head; mirrors the PyTorch module)
# ------------------------------------------------------------------------------
def _layernorm_ref(x, g, b):
    mu = jnp.mean(x, axis=-1, keepdims=True)
    var = jnp.mean((x - mu) ** 2, axis=-1, keepdims=True)
    return (x - mu) * jax.lax.rsqrt(var + EPS) * g + b


def _mha_ref(x_q, x_k, x_v, mask, wq, bq, wk, bk, wv, bv, wo, bo):
    q = jnp.dot(x_q, wq, preferred_element_type=jnp.float32) + bq
    k = jnp.dot(x_k, wk, preferred_element_type=jnp.float32) + bk
    v = jnp.dot(x_v, wv, preferred_element_type=jnp.float32) + bv
    out = bo
    for h in range(H):
        qh = q[:, h * DK:(h + 1) * DK]
        kh = k[:, h * DK:(h + 1) * DK]
        vh = v[:, h * DV:(h + 1) * DV]
        s = jnp.dot(qh, kh.T, preferred_element_type=jnp.float32) * INV_SQRT_DK
        s = jnp.where(mask != 0, s, NEG)
        s = s - jnp.max(s, axis=-1, keepdims=True)
        e = jnp.exp(s)
        p = e / jnp.sum(e, axis=-1, keepdims=True)
        out = out + jnp.dot(jnp.dot(p, vh, preferred_element_type=jnp.float32),
                            wo[h * DV:(h + 1) * DV, :], preferred_element_type=jnp.float32)
    return out


def _decoder_layer_ref(x, enc, mask, lp):
    sa, ln1 = lp[0:8], lp[8:10]
    ca, ln2 = lp[10:18], lp[18:20]
    ff, ln3 = lp[20:24], lp[24:26]
    h1 = _layernorm_ref(x + _mha_ref(x, x, x, mask, *sa), *ln1)
    h2 = _layernorm_ref(h1 + _mha_ref(enc, x, enc, mask, *ca), *ln2)
    hid = jnp.maximum(jnp.dot(h2, ff[0], preferred_element_type=jnp.float32) + ff[1], 0.0)
    ffo = jnp.dot(hid, ff[2], preferred_element_type=jnp.float32) + ff[3]
    return _layernorm_ref(h2 + ffo, *ln3)


def decoder_forward_ref(trg_ids, encoder_output, src_mask, trg_mask, params):
    emb = jnp.take(params["emb_table"], trg_ids, axis=0)
    x = emb * SCALE + params["pos_table"][:S][None]
    for lp in params["layers"]:
        x = jnp.stack([_decoder_layer_ref(x[b], encoder_output[b], src_mask[b], lp)
                       for b in range(B)], axis=0)
    return x


# ------------------------------------------------------------------------------
if __name__ == "__main__":
    key = jax.random.PRNGKey(0)
    k_p, k_ids, k_enc = jax.random.split(key, 3)
    params = init_params(k_p)
    packed = pack_params(params)

    trg_ids = jax.random.randint(k_ids, (B, S), 0, VOCAB)
    encoder_output = jax.random.normal(k_enc, (B, S, D), jnp.float32)

    # masks: nonzero == attend.  src_mask blocks the last 2 key positions for batch 1;
    # trg_mask is causal (unused by the source's mask wiring, passed for fidelity).
    src_mask_np = np.ones((B, S, S), np.float32)
    src_mask_np[1, :, S - 2:] = 0.0
    src_mask = jnp.asarray(src_mask_np)
    trg_mask = jnp.asarray(np.tril(np.ones((S, S), np.float32))[None].repeat(B, axis=0))

    out = decoder_forward(trg_ids, encoder_output, src_mask, trg_mask, packed)
    out = jax.block_until_ready(out)

    ref = decoder_forward_ref(trg_ids, encoder_output, src_mask, trg_mask, params)
    np.testing.assert_allclose(np.asarray(out), np.asarray(ref), atol=2e-2, rtol=2e-2)
    assert out.shape == (B, S, D) and out.dtype == jnp.float32
    print("KERNEL_OK")
</pallas_src>

<mosaic_0001>
module attributes {stable_mosaic.version = 11 : i64} {
  func.func @_decoder_kernel(%arg0: memref<16x1xi32, #tpu.memory_space<vmem>>, %arg1: memref<64x32xf32, #tpu.memory_space<vmem>>, %arg2: memref<16x32xf32, #tpu.memory_space<vmem>>, %arg3: memref<16x32xf32, #tpu.memory_space<vmem>>, %arg4: memref<64x64xf32, #tpu.memory_space<vmem>>, %arg5: memref<12x4x32x8xf32, #tpu.memory_space<vmem>>, %arg6: memref<12x64x8xf32, #tpu.memory_space<vmem>>, %arg7: memref<4x4x8x32xf32, #tpu.memory_space<vmem>>, %arg8: memref<4x32x32xf32, #tpu.memory_space<vmem>>, %arg9: memref<20x1x32xf32, #tpu.memory_space<vmem>>, %arg10: memref<16x32xf32, #tpu.memory_space<vmem>>) attributes {dimension_semantics = [], scalar_prefetch = 0 : i64, scratch_operands = 0 : i64, tpu.core_type = #tpu.core_type<tc>} {
    %c0 = arith.constant 0 : index
    %c0_0 = arith.constant 0 : index
    %0 = vector.load %arg0[%c0, %c0_0] : memref<16x1xi32, #tpu.memory_space<vmem>>, vector<16x1xi32>
    %1 = tpu.iota {dimensions = array<i32: 1>} : vector<16x64xi32>
    %2 = vector.broadcast %0 : vector<16x1xi32> to vector<16x64xi32>
    %3 = arith.cmpi eq, %1, %2 : vector<16x64xi32>
    %4 = arith.extui %3 : vector<16x64xi1> to vector<16x64xi32>
    %5 = arith.sitofp %4 : vector<16x64xi32> to vector<16x64xf32>
    %c0_1 = arith.constant 0 : index
    %c0_2 = arith.constant 0 : index
    %6 = vector.load %arg1[%c0_1, %c0_2] : memref<64x32xf32, #tpu.memory_space<vmem>>, vector<64x32xf32>
    %cst = arith.constant dense<0.000000e+00> : vector<16x32xf32>
    %7 = tpu.matmul %5, %6, %cst {dimension_numbers = #tpu.dot_dimension_numbers<[1], [0], [0], [1], [0, 0, 1, 1], [], []>} : vector<16x64xf32>, vector<64x32xf32>, vector<16x32xf32> -> vector<16x32xf32>
    %c0_3 = arith.constant 0 : index
    %c0_4 = arith.constant 0 : index
    %8 = vector.load %arg2[%c0_3, %c0_4] : memref<16x32xf32, #tpu.memory_space<vmem>>, vector<16x32xf32>
    %9 = arith.addf %7, %8 : vector<16x32xf32>
    %c0_5 = arith.constant 0 : index
    %c0_6 = arith.constant 0 : index
    %10 = vector.load %arg3[%c0_5, %c0_6] : memref<16x32xf32, #tpu.memory_space<vmem>>, vector<16x32xf32>
    %c0_7 = arith.constant 0 : index
    %c0_8 = arith.constant 0 : index
    %11 = vector.load %arg4[%c0_7, %c0_8] : memref<64x64xf32, #tpu.memory_space<vmem>>, vector<64x64xf32>
    %12 = vector.shape_cast %10 : vector<16x32xf32> to vector<1x16x32xf32>
    %13 = vector.broadcast %12 : vector<1x16x32xf32> to vector<4x16x32xf32>
    %14 = vector.shape_cast %9 : vector<16x32xf32> to vector<1x16x32xf32>
    %15 = vector.broadcast %14 : vector<1x16x32xf32> to vector<4x16x32xf32>
    %c0_9 = arith.constant 0 : index
    %c0_10 = arith.constant 0 : index
    %c0_11 = arith.constant 0 : index
    %16 = vector.load %arg9[%c0_9, %c0_10, %c0_11] : memref<20x1x32xf32, #tpu.memory_space<vmem>>, vector<1x1x32xf32>
    %17 = vector.shape_cast %16 : vector<1x1x32xf32> to vector<1x32xf32>
    %c0_12 = arith.constant 0 : index
    %c0_13 = arith.constant 0 : index
    %c0_14 = arith.constant 0 : index
    %c0_15 = arith.constant 0 : index
    %18 = vector.load %arg5[%c0_12, %c0_13, %c0_14, %c0_15] : memref<12x4x32x8xf32, #tpu.memory_space<vmem>>, vector<1x4x32x8xf32>
    %19 = vector.shape_cast %18 : vector<1x4x32x8xf32> to vector<4x32x8xf32>
    "tpu.trace_start"() <{level = 10 : i32, message = "hnd,hde->hne"}> : () -> ()
    %cst_16 = arith.constant dense<0.000000e+00> : vector<4x16x8xf32>
    %20 = tpu.matmul %15, %19, %cst_16 {dimension_numbers = #tpu.dot_dimension_numbers<[2], [1], [1], [2], [0, 0, 0, 1, 1, 2], [0], [0]>} : vector<4x16x32xf32>, vector<4x32x8xf32>, vector<4x16x8xf32> -> vector<4x16x8xf32>
    "tpu.trace_stop"() : () -> ()
    %c1 = arith.constant 1 : index
    %c0_17 = arith.constant 0 : index
    %c0_18 = arith.constant 0 : index
    %c0_19 = arith.constant 0 : index
    %21 = vector.load %arg5[%c1, %c0_17, %c0_18, %c0_19] : memref<12x4x32x8xf32, #tpu.memory_space<vmem>>, vector<1x4x32x8xf32>
    %22 = vector.shape_cast %21 : vector<1x4x32x8xf32> to vector<4x32x8xf32>
    "tpu.trace_start"() <{level = 10 : i32, message = "hnd,hde->hne"}> : () -> ()
    %cst_20 = arith.constant dense<0.000000e+00> : vector<4x16x8xf32>
    %23 = tpu.matmul %15, %22, %cst_20 {dimension_numbers = #tpu.dot_dimension_numbers<[2], [1], [1], [2], [0, 0, 0, 1, 1, 2], [0], [0]>} : vector<4x16x32xf32>, vector<4x32x8xf32>, vector<4x16x8xf32> -> vector<4x16x8xf32>
    "tpu.trace_stop"() : () -> ()
    %c2 = arith.constant 2 : index
    %c0_21 = arith.constant 0 : index
    %c0_22 = arith.constant 0 : index
    %c0_23 = arith.constant 0 : index
    %24 = vector.load %arg5[%c2, %c0_21, %c0_22, %c0_23] : memref<12x4x32x8xf32, #tpu.memory_space<vmem>>, vector<1x4x32x8xf32>
    %25 = vector.shape_cast %24 : vector<1x4x32x8xf32> to vector<4x32x8xf32>
    "tpu.trace_start"() <{level = 10 : i32, message = "hnd,hde->hne"}> : () -> ()
    %cst_24 = arith.constant dense<0.000000e+00> : vector<4x16x8xf32>
    %26 = tpu.matmul %15, %25, %cst_24 {dimension_numbers = #tpu.dot_dimension_numbers<[2], [1], [1], [2], [0, 0, 0, 1, 1, 2], [0], [0]>} : vector<4x16x32xf32>, vector<4x32x8xf32>, vector<4x16x8xf32> -> vector<4x16x8xf32>
    "tpu.trace_stop"() : () -> ()
    %27 = vector.shape_cast %20 : vector<4x16x8xf32> to vector<64x8xf32>
    %c0_25 = arith.constant 0 : index
    %c0_26 = arith.constant 0 : index
    %c0_27 = arith.constant 0 : index
    %28 = vector.load %arg6[%c0_25, %c0_26, %c0_27] : memref<12x64x8xf32, #tpu.memory_space<vmem>>, vector<1x64x8xf32>
    %29 = vector.shape_cast %28 : vector<1x64x8xf32> to vector<64x8xf32>
    %30 = arith.addf %27, %29 : vector<64x8xf32>
    %31 = vector.shape_cast %23 : vector<4x16x8xf32> to vector<64x8xf32>
    %c1_28 = arith.constant 1 : index
    %c0_29 = arith.constant 0 : index
    %c0_30 = arith.constant 0 : index
    %32 = vector.load %arg6[%c1_28, %c0_29, %c0_30] : memref<12x64x8xf32, #tpu.memory_space<vmem>>, vector<1x64x8xf32>
    %33 = vector.shape_cast %32 : vector<1x64x8xf32> to vector<64x8xf32>
    %34 = arith.addf %31, %33 : vector<64x8xf32>
    %35 = vector.shape_cast %26 : vector<4x16x8xf32> to vector<64x8xf32>
    %c2_31 = arith.constant 2 : index
    %c0_32 = arith.constant 0 : index
    %c0_33 = arith.constant 0 : index
    %36 = vector.load %arg6[%c2_31, %c0_32, %c0_33] : memref<12x64x8xf32, #tpu.memory_space<vmem>>, vector<1x64x8xf32>
    %37 = vector.shape_cast %36 : vector<1x64x8xf32> to vector<64x8xf32>
    %38 = arith.addf %35, %37 : vector<64x8xf32>
    "tpu.trace_start"() <{level = 10 : i32, message = "qe,ke->qk"}> : () -> ()
    %cst_34 = arith.constant dense<0.000000e+00> : vector<64x64xf32>
    %39 = tpu.matmul %30, %34, %cst_34 {dimension_numbers = #tpu.dot_dimension_numbers<[1], [1], [0], [0], [0, 0, 1, 0], [], []>} : vector<64x8xf32>, vector<64x8xf32>, vector<64x64xf32> -> vector<64x64xf32>
    "tpu.trace_stop"() : () -> ()
    %40 = arith.addf %39, %11 : vector<64x64xf32>
    %cst_35 = arith.constant dense<0xFF800000> : vector<64xf32>
    %41 = vector.multi_reduction <maximumf>, %40, %cst_35 [1] : vector<64x64xf32> to vector<64xf32>
    %42 = vector.shape_cast %41 : vector<64xf32> to vector<64x1xf32>
    %43 = vector.broadcast %42 : vector<64x1xf32> to vector<64x64xf32>
    %44 = arith.subf %40, %43 : vector<64x64xf32>
    %45 = math.exp %44 : vector<64x64xf32>
    %cst_36 = arith.constant dense<0.000000e+00> : vector<64xf32>
    %46 = vector.multi_reduction <add>, %45, %cst_36 [1] : vector<64x64xf32> to vector<64xf32>
    %47 = vector.shape_cast %46 : vector<64xf32> to vector<64x1xf32>
    %48 = tpu.reciprocal %47 {approx = true} : vector<64x1xf32> -> vector<64x1xf32>
    %49 = vector.broadcast %48 : vector<64x1xf32> to vector<64x64xf32>
    %50 = arith.mulf %45, %49 : vector<64x64xf32>
    "tpu.trace_start"() <{level = 10 : i32, message = "qk,ke->qe"}> : () -> ()
    %cst_37 = arith.constant dense<0.000000e+00> : vector<64x8xf32>
    %51 = tpu.matmul %50, %38, %cst_37 {dimension_numbers = #tpu.dot_dimension_numbers<[1], [0], [0], [1], [0, 0, 1, 1], [], []>} : vector<64x64xf32>, vector<64x8xf32>, vector<64x8xf32> -> vector<64x8xf32>
    "tpu.trace_stop"() : () -> ()
    %52 = vector.shape_cast %51 : vector<64x8xf32> to vector<4x16x8xf32>
    %c0_38 = arith.constant 0 : index
    %c0_39 = arith.constant 0 : index
    %c0_40 = arith.constant 0 : index
    %c0_41 = arith.constant 0 : index
    %53 = vector.load %arg7[%c0_38, %c0_39, %c0_40, %c0_41] : memref<4x4x8x32xf32, #tpu.memory_space<vmem>>, vector<1x4x8x32xf32>
    %54 = vector.shape_cast %53 : vector<1x4x8x32xf32> to vector<4x8x32xf32>
    "tpu.trace_start"() <{level = 10 : i32, message = "hne,hed->hnd"}> : () -> ()
    %cst_42 = arith.constant dense<0.000000e+00> : vector<4x16x32xf32>
    %55 = tpu.matmul %52, %54, %cst_42 {dimension_numbers = #tpu.dot_dimension_numbers<[2], [1], [1], [2], [0, 0, 0, 1, 1, 2], [0], [0]>} : vector<4x16x8xf32>, vector<4x8x32xf32>, vector<4x16x32xf32> -> vector<4x16x32xf32>
    "tpu.trace_stop"() : () -> ()
    %cst_43 = arith.constant dense<0.000000e+00> : vector<16x32xf32>
    %56 = vector.multi_reduction <add>, %55, %cst_43 [0] : vector<4x16x32xf32> to vector<16x32xf32>
    %57 = vector.broadcast %17 : vector<1x32xf32> to vector<16x32xf32>
    %58 = arith.addf %56, %57 : vector<16x32xf32>
    %59 = arith.addf %9, %58 : vector<16x32xf32>
    %c1_44 = arith.constant 1 : index
    %c0_45 = arith.constant 0 : index
    %c0_46 = arith.constant 0 : index
    %60 = vector.load %arg9[%c1_44, %c0_45, %c0_46] : memref<20x1x32xf32, #tpu.memory_space<vmem>>, vector<1x1x32xf32>
    %61 = vector.shape_cast %60 : vector<1x1x32xf32> to vector<1x32xf32>
    %c2_47 = arith.constant 2 : index
    %c0_48 = arith.constant 0 : index
    %c0_49 = arith.constant 0 : index
    %62 = vector.load %arg9[%c2_47, %c0_48, %c0_49] : memref<20x1x32xf32, #tpu.memory_space<vmem>>, vector<1x1x32xf32>
    %63 = vector.shape_cast %62 : vector<1x1x32xf32> to vector<1x32xf32>
    %cst_50 = arith.constant dense<0.000000e+00> : vector<16xf32>
    %64 = vector.multi_reduction <add>, %59, %cst_50 [1] : vector<16x32xf32> to vector<16xf32>
    %65 = vector.shape_cast %64 : vector<16xf32> to vector<16x1xf32>
    %cst_51 = arith.constant 3.200000e+01 : f32
    %66 = vector.broadcast %cst_51 : f32 to vector<16x1xf32>
    %67 = arith.divf %65, %66 : vector<16x1xf32>
    %68 = vector.broadcast %67 : vector<16x1xf32> to vector<16x32xf32>
    %69 = arith.subf %59, %68 : vector<16x32xf32>
    %70 = arith.mulf %69, %69 : vector<16x32xf32>
    %cst_52 = arith.constant dense<0.000000e+00> : vector<16xf32>
    %71 = vector.multi_reduction <add>, %70, %cst_52 [1] : vector<16x32xf32> to vector<16xf32>
    %72 = vector.shape_cast %71 : vector<16xf32> to vector<16x1xf32>
    %cst_53 = arith.constant 3.200000e+01 : f32
    %73 = vector.broadcast %cst_53 : f32 to vector<16x1xf32>
    %74 = arith.divf %72, %73 : vector<16x1xf32>
    %75 = vector.broadcast %67 : vector<16x1xf32> to vector<16x32xf32>
    %76 = arith.subf %59, %75 : vector<16x32xf32>
    %cst_54 = arith.constant 9.99999974E-6 : f32
    %77 = vector.broadcast %cst_54 : f32 to vector<16x1xf32>
    %78 = arith.addf %74, %77 : vector<16x1xf32>
    %79 = math.rsqrt %78 : vector<16x1xf32>
    %80 = vector.broadcast %79 : vector<16x1xf32> to vector<16x32xf32>
    %81 = arith.mulf %76, %80 : vector<16x32xf32>
    %82 = vector.broadcast %61 : vector<1x32xf32> to vector<16x32xf32>
    %83 = arith.mulf %81, %82 : vector<16x32xf32>
    %84 = vector.broadcast %63 : vector<1x32xf32> to vector<16x32xf32>
    %85 = arith.addf %83, %84 : vector<16x32xf32>
    %c3 = arith.constant 3 : index
    %c0_55 = arith.constant 0 : index
    %c0_56 = arith.constant 0 : index
    %86 = vector.load %arg9[%c3, %c0_55, %c0_56] : memref<20x1x32xf32, #tpu.memory_space<vmem>>, vector<1x1x32xf32>
    %87 = vector.shape_cast %86 : vector<1x1x32xf32> to vector<1x32xf32>
    %c3_57 = arith.constant 3 : index
    %c0_58 = arith.constant 0 : index
    %c0_59 = arith.constant 0 : index
    %c0_60 = arith.constant 0 : index
    %88 = vector.load %arg5[%c3_57, %c0_58, %c0_59, %c0_60] : memref<12x4x32x8xf32, #tpu.memory_space<vmem>>, vector<1x4x32x8xf32>
    %89 = vector.shape_cast %88 : vector<1x4x32x8xf32> to vector<4x32x8xf32>
    "tpu.trace_start"() <{level = 10 : i32, message = "hnd,hde->hne"}> : () -> ()
    %cst_61 = arith.constant dense<0.000000e+00> : vector<4x16x8xf32>
    %90 = tpu.matmul %13, %89, %cst_61 {dimension_numbers = #tpu.dot_dimension_numbers<[2], [1], [1], [2], [0, 0, 0, 1, 1, 2], [0], [0]>} : vector<4x16x32xf32>, vector<4x32x8xf32>, vector<4x16x8xf32> -> vector<4x16x8xf32>
    "tpu.trace_stop"() : () -> ()
    %c4 = arith.constant 4 : index
    %c0_62 = arith.constant 0 : index
    %c0_63 = arith.constant 0 : index
    %c0_64 = arith.constant 0 : index
    %91 = vector.load %arg5[%c4, %c0_62, %c0_63, %c0_64] : memref<12x4x32x8xf32, #tpu.memory_space<vmem>>, vector<1x4x32x8xf32>
    %92 = vector.shape_cast %91 : vector<1x4x32x8xf32> to vector<4x32x8xf32>
    "tpu.trace_start"() <{level = 10 : i32, message = "hnd,hde->hne"}> : () -> ()
    %cst_65 = arith.constant dense<0.000000e+00> : vector<4x16x8xf32>
    %93 = tpu.matmul %15, %92, %cst_65 {dimension_numbers = #tpu.dot_dimension_numbers<[2], [1], [1], [2], [0, 0, 0, 1, 1, 2], [0], [0]>} : vector<4x16x32xf32>, vector<4x32x8xf32>, vector<4x16x8xf32> -> vector<4x16x8xf32>
    "tpu.trace_stop"() : () -> ()
    %c5 = arith.constant 5 : index
    %c0_66 = arith.constant 0 : index
    %c0_67 = arith.constant 0 : index
    %c0_68 = arith.constant 0 : index
    %94 = vector.load %arg5[%c5, %c0_66, %c0_67, %c0_68] : memref<12x4x32x8xf32, #tpu.memory_space<vmem>>, vector<1x4x32x8xf32>
    %95 = vector.shape_cast %94 : vector<1x4x32x8xf32> to vector<4x32x8xf32>
    "tpu.trace_start"() <{level = 10 : i32, message = "hnd,hde->hne"}> : () -> ()
    %cst_69 = arith.constant dense<0.000000e+00> : vector<4x16x8xf32>
    %96 = tpu.matmul %13, %95, %cst_69 {dimension_numbers = #tpu.dot_dimension_numbers<[2], [1], [1], [2], [0, 0, 0, 1, 1, 2], [0], [0]>} : vector<4x16x32xf32>, vector<4x32x8xf32>, vector<4x16x8xf32> -> vector<4x16x8xf32>
    "tpu.trace_stop"() : () -> ()
    %97 = vector.shape_cast %90 : vector<4x16x8xf32> to vector<64x8xf32>
    %c3_70 = arith.constant 3 : index
    %c0_71 = arith.constant 0 : index
    %c0_72 = arith.constant 0 : index
    %98 = vector.load %arg6[%c3_70, %c0_71, %c0_72] : memref<12x64x8xf32, #tpu.memory_space<vmem>>, vector<1x64x8xf32>
    %99 = vector.shape_cast %98 : vector<1x64x8xf32> to vector<64x8xf32>
    %100 = arith.addf %97, %99 : vector<64x8xf32>
    %101 = vector.shape_cast %93 : vector<4x16x8xf32> to vector<64x8xf32>
    %c4_73 = arith.constant 4 : index
    %c0_74 = arith.constant 0 : index
    %c0_75 = arith.constant 0 : index
    %102 = vector.load %arg6[%c4_73, %c0_74, %c0_75] : memref<12x64x8xf32, #tpu.memory_space<vmem>>, vector<1x64x8xf32>
    %103 = vector.shape_cast %102 : vector<1x64x8xf32> to vector<64x8xf32>
    %104 = arith.addf %101, %103 : vector<64x8xf32>
    %105 = vector.shape_cast %96 : vector<4x16x8xf32> to vector<64x8xf32>
    %c5_76 = arith.constant 5 : index
    %c0_77 = arith.constant 0 : index
    %c0_78 = arith.constant 0 : index
    %106 = vector.load %arg6[%c5_76, %c0_77, %c0_78] : memref<12x64x8xf32, #tpu.memory_space<vmem>>, vector<1x64x8xf32>
    %107 = vector.shape_cast %106 : vector<1x64x8xf32> to vector<64x8xf32>
    %108 = arith.addf %105, %107 : vector<64x8xf32>
    "tpu.trace_start"() <{level = 10 : i32, message = "qe,ke->qk"}> : () -> ()
    %cst_79 = arith.constant dense<0.000000e+00> : vector<64x64xf32>
    %109 = tpu.matmul %100, %104, %cst_79 {dimension_numbers = #tpu.dot_dimension_numbers<[1], [1], [0], [0], [0, 0, 1, 0], [], []>} : vector<64x8xf32>, vector<64x8xf32>, vector<64x64xf32> -> vector<64x64xf32>
    "tpu.trace_stop"() : () -> ()
    %110 = arith.addf %109, %11 : vector<64x64xf32>
    %cst_80 = arith.constant dense<0xFF800000> : vector<64xf32>
    %111 = vector.multi_reduction <maximumf>, %110, %cst_80 [1] : vector<64x64xf32> to vector<64xf32>
    %112 = vector.shape_cast %111 : vector<64xf32> to vector<64x1xf32>
    %113 = vector.broadcast %112 : vector<64x1xf32> to vector<64x64xf32>
    %114 = arith.subf %110, %113 : vector<64x64xf32>
    %115 = math.exp %114 : vector<64x64xf32>
    %cst_81 = arith.constant dense<0.000000e+00> : vector<64xf32>
    %116 = vector.multi_reduction <add>, %115, %cst_81 [1] : vector<64x64xf32> to vector<64xf32>
    %117 = vector.shape_cast %116 : vector<64xf32> to vector<64x1xf32>
    %118 = tpu.reciprocal %117 {approx = true} : vector<64x1xf32> -> vector<64x1xf32>
    %119 = vector.broadcast %118 : vector<64x1xf32> to vector<64x64xf32>
    %120 = arith.mulf %115, %119 : vector<64x64xf32>
    "tpu.trace_start"() <{level = 10 : i32, message = "qk,ke->qe"}> : () -> ()
    %cst_82 = arith.constant dense<0.000000e+00> : vector<64x8xf32>
    %121 = tpu.matmul %120, %108, %cst_82 {dimension_numbers = #tpu.dot_dimension_numbers<[1], [0], [0], [1], [0, 0, 1, 1], [], []>} : vector<64x64xf32>, vector<64x8xf32>, vector<64x8xf32> -> vector<64x8xf32>
    "tpu.trace_stop"() : () -> ()
    %122 = vector.shape_cast %121 : vector<64x8xf32> to vector<4x16x8xf32>
    %c1_83 = arith.constant 1 : index
    %c0_84 = arith.constant 0 : index
    %c0_85 = arith.constant 0 : index
    %c0_86 = arith.constant 0 : index
    %123 = vector.load %arg7[%c1_83, %c0_84, %c0_85, %c0_86] : memref<4x4x8x32xf32, #tpu.memory_space<vmem>>, vector<1x4x8x32xf32>
    %124 = vector.shape_cast %123 : vector<1x4x8x32xf32> to vector<4x8x32xf32>
    "tpu.trace_start"() <{level = 10 : i32, message = "hne,hed->hnd"}> : () -> ()
    %cst_87 = arith.constant dense<0.000000e+00> : vector<4x16x32xf32>
    %125 = tpu.matmul %122, %124, %cst_87 {dimension_numbers = #tpu.dot_dimension_numbers<[2], [1], [1], [2], [0, 0, 0, 1, 1, 2], [0], [0]>} : vector<4x16x8xf32>, vector<4x8x32xf32>, vector<4x16x32xf32> -> vector<4x16x32xf32>
    "tpu.trace_stop"() : () -> ()
    %cst_88 = arith.constant dense<0.000000e+00> : vector<16x32xf32>
    %126 = vector.multi_reduction <add>, %125, %cst_88 [0] : vector<4x16x32xf32> to vector<16x32xf32>
    %127 = vector.broadcast %87 : vector<1x32xf32> to vector<16x32xf32>
    %128 = arith.addf %126, %127 : vector<16x32xf32>
    %129 = arith.addf %85, %128 : vector<16x32xf32>
    %c4_89 = arith.constant 4 : index
    %c0_90 = arith.constant 0 : index
    %c0_91 = arith.constant 0 : index
    %130 = vector.load %arg9[%c4_89, %c0_90, %c0_91] : memref<20x1x32xf32, #tpu.memory_space<vmem>>, vector<1x1x32xf32>
    %131 = vector.shape_cast %130 : vector<1x1x32xf32> to vector<1x32xf32>
    %c5_92 = arith.constant 5 : index
    %c0_93 = arith.constant 0 : index
    %c0_94 = arith.constant 0 : index
    %132 = vector.load %arg9[%c5_92, %c0_93, %c0_94] : memref<20x1x32xf32, #tpu.memory_space<vmem>>, vector<1x1x32xf32>
    %133 = vector.shape_cast %132 : vector<1x1x32xf32> to vector<1x32xf32>
    %cst_95 = arith.constant dense<0.000000e+00> : vector<16xf32>
    %134 = vector.multi_reduction <add>, %129, %cst_95 [1] : vector<16x32xf32> to vector<16xf32>
    %135 = vector.shape_cast %134 : vector<16xf32> to vector<16x1xf32>
    %cst_96 = arith.constant 3.200000e+01 : f32
    %136 = vector.broadcast %cst_96 : f32 to vector<16x1xf32>
    %137 = arith.divf %135, %136 : vector<16x1xf32>
    %138 = vector.broadcast %137 : vector<16x1xf32> to vector<16x32xf32>
    %139 = arith.subf %129, %138 : vector<16x32xf32>
    %140 = arith.mulf %139, %139 : vector<16x32xf32>
    %cst_97 = arith.constant dense<0.000000e+00> : vector<16xf32>
    %141 = vector.multi_reduction <add>, %140, %cst_97 [1] : vector<16x32xf32> to vector<16xf32>
    %142 = vector.shape_cast %141 : vector<16xf32> to vector<16x1xf32>
    %cst_98 = arith.constant 3.200000e+01 : f32
    %143 = vector.broadcast %cst_98 : f32 to vector<16x1xf32>
    %144 = arith.divf %142, %143 : vector<16x1xf32>
    %145 = vector.broadcast %137 : vector<16x1xf32> to vector<16x32xf32>
    %146 = arith.subf %129, %145 : vector<16x32xf32>
    %cst_99 = arith.constant 9.99999974E-6 : f32
    %147 = vector.broadcast %cst_99 : f32 to vector<16x1xf32>
    %148 = arith.addf %144, %147 : vector<16x1xf32>
    %149 = math.rsqrt %148 : vector<16x1xf32>
    %150 = vector.broadcast %149 : vector<16x1xf32> to vector<16x32xf32>
    %151 = arith.mulf %146, %150 : vector<16x32xf32>
    %152 = vector.broadcast %131 : vector<1x32xf32> to vector<16x32xf32>
    %153 = arith.mulf %151, %152 : vector<16x32xf32>
    %154 = vector.broadcast %133 : vector<1x32xf32> to vector<16x32xf32>
    %155 = arith.addf %153, %154 : vector<16x32xf32>
    %c0_100 = arith.constant 0 : index
    %c0_101 = arith.constant 0 : index
    %c0_102 = arith.constant 0 : index
    %156 = vector.load %arg8[%c0_100, %c0_101, %c0_102] : memref<4x32x32xf32, #tpu.memory_space<vmem>>, vector<1x32x32xf32>
    %157 = vector.shape_cast %156 : vector<1x32x32xf32> to vector<32x32xf32>
    %cst_103 = arith.constant dense<0.000000e+00> : vector<16x32xf32>
    %158 = tpu.matmul %155, %157, %cst_103 {dimension_numbers = #tpu.dot_dimension_numbers<[1], [0], [0], [1], [0, 0, 1, 1], [], []>} : vector<16x32xf32>, vector<32x32xf32>, vector<16x32xf32> -> vector<16x32xf32>
    %c6 = arith.constant 6 : index
    %c0_104 = arith.constant 0 : index
    %c0_105 = arith.constant 0 : index
    %159 = vector.load %arg9[%c6, %c0_104, %c0_105] : memref<20x1x32xf32, #tpu.memory_space<vmem>>, vector<1x1x32xf32>
    %160 = vector.shape_cast %159 : vector<1x1x32xf32> to vector<1x32xf32>
    %161 = vector.broadcast %160 : vector<1x32xf32> to vector<16x32xf32>
    %162 = arith.addf %158, %161 : vector<16x32xf32>
    %cst_106 = arith.constant 0.000000e+00 : f32
    %163 = vector.broadcast %cst_106 : f32 to vector<16x32xf32>
    %164 = arith.maximumf %162, %163 : vector<16x32xf32>
    %c1_107 = arith.constant 1 : index
    %c0_108 = arith.constant 0 : index
    %c0_109 = arith.constant 0 : index
    %165 = vector.load %arg8[%c1_107, %c0_108, %c0_109] : memref<4x32x32xf32, #tpu.memory_space<vmem>>, vector<1x32x32xf32>
    %166 = vector.shape_cast %165 : vector<1x32x32xf32> to vector<32x32xf32>
    %cst_110 = arith.constant dense<0.000000e+00> : vector<16x32xf32>
    %167 = tpu.matmul %164, %166, %cst_110 {dimension_numbers = #tpu.dot_dimension_numbers<[1], [0], [0], [1], [0, 0, 1, 1], [], []>} : vector<16x32xf32>, vector<32x32xf32>, vector<16x32xf32> -> vector<16x32xf32>
    %c7 = arith.constant 7 : index
    %c0_111 = arith.constant 0 : index
    %c0_112 = arith.constant 0 : index
    %168 = vector.load %arg9[%c7, %c0_111, %c0_112] : memref<20x1x32xf32, #tpu.memory_space<vmem>>, vector<1x1x32xf32>
    %169 = vector.shape_cast %168 : vector<1x1x32xf32> to vector<1x32xf32>
    %170 = vector.broadcast %169 : vector<1x32xf32> to vector<16x32xf32>
    %171 = arith.addf %167, %170 : vector<16x32xf32>
    %172 = arith.addf %155, %171 : vector<16x32xf32>
    %c8 = arith.constant 8 : index
    %c0_113 = arith.constant 0 : index
    %c0_114 = arith.constant 0 : index
    %173 = vector.load %arg9[%c8, %c0_113, %c0_114] : memref<20x1x32xf32, #tpu.memory_space<vmem>>, vector<1x1x32xf32>
    %174 = vector.shape_cast %173 : vector<1x1x32xf32> to vector<1x32xf32>
    %c9 = arith.constant 9 : index
    %c0_115 = arith.constant 0 : index
    %c0_116 = arith.constant 0 : index
    %175 = vector.load %arg9[%c9, %c0_115, %c0_116] : memref<20x1x32xf32, #tpu.memory_space<vmem>>, vector<1x1x32xf32>
    %176 = vector.shape_cast %175 : vector<1x1x32xf32> to vector<1x32xf32>
    %cst_117 = arith.constant dense<0.000000e+00> : vector<16xf32>
    %177 = vector.multi_reduction <add>, %172, %cst_117 [1] : vector<16x32xf32> to vector<16xf32>
    %178 = vector.shape_cast %177 : vector<16xf32> to vector<16x1xf32>
    %cst_118 = arith.constant 3.200000e+01 : f32
    %179 = vector.broadcast %cst_118 : f32 to vector<16x1xf32>
    %180 = arith.divf %178, %179 : vector<16x1xf32>
    %181 = vector.broadcast %180 : vector<16x1xf32> to vector<16x32xf32>
    %182 = arith.subf %172, %181 : vector<16x32xf32>
    %183 = arith.mulf %182, %182 : vector<16x32xf32>
    %cst_119 = arith.constant dense<0.000000e+00> : vector<16xf32>
    %184 = vector.multi_reduction <add>, %183, %cst_119 [1] : vector<16x32xf32> to vector<16xf32>
    %185 = vector.shape_cast %184 : vector<16xf32> to vector<16x1xf32>
    %cst_120 = arith.constant 3.200000e+01 : f32
    %186 = vector.broadcast %cst_120 : f32 to vector<16x1xf32>
    %187 = arith.divf %185, %186 : vector<16x1xf32>
    %188 = vector.broadcast %180 : vector<16x1xf32> to vector<16x32xf32>
    %189 = arith.subf %172, %188 : vector<16x32xf32>
    %cst_121 = arith.constant 9.99999974E-6 : f32
    %190 = vector.broadcast %cst_121 : f32 to vector<16x1xf32>
    %191 = arith.addf %187, %190 : vector<16x1xf32>
    %192 = math.rsqrt %191 : vector<16x1xf32>
    %193 = vector.broadcast %192 : vector<16x1xf32> to vector<16x32xf32>
    %194 = arith.mulf %189, %193 : vector<16x32xf32>
    %195 = vector.broadcast %174 : vector<1x32xf32> to vector<16x32xf32>
    %196 = arith.mulf %194, %195 : vector<16x32xf32>
    %197 = vector.broadcast %176 : vector<1x32xf32> to vector<16x32xf32>
    %198 = arith.addf %196, %197 : vector<16x32xf32>
    %199 = vector.shape_cast %198 : vector<16x32xf32> to vector<1x16x32xf32>
    %200 = vector.broadcast %199 : vector<1x16x32xf32> to vector<4x16x32xf32>
    %c10 = arith.constant 10 : index
    %c0_122 = arith.constant 0 : index
    %c0_123 = arith.constant 0 : index
    %201 = vector.load %arg9[%c10, %c0_122, %c0_123] : memref<20x1x32xf32, #tpu.memory_space<vmem>>, vector<1x1x32xf32>
    %202 = vector.shape_cast %201 : vector<1x1x32xf32> to vector<1x32xf32>
    %c6_124 = arith.constant 6 : index
    %c0_125 = arith.constant 0 : index
    %c0_126 = arith.constant 0 : index
    %c0_127 = arith.constant 0 : index
    %203 = vector.load %arg5[%c6_124, %c0_125, %c0_126, %c0_127] : memref<12x4x32x8xf32, #tpu.memory_space<vmem>>, vector<1x4x32x8xf32>
    %204 = vector.shape_cast %203 : vector<1x4x32x8xf32> to vector<4x32x8xf32>
    "tpu.trace_start"() <{level = 10 : i32, message = "hnd,hde->hne"}> : () -> ()
    %cst_128 = arith.constant dense<0.000000e+00> : vector<4x16x8xf32>
    %205 = tpu.matmul %200, %204, %cst_128 {dimension_numbers = #tpu.dot_dimension_numbers<[2], [1], [1], [2], [0, 0, 0, 1, 1, 2], [0], [0]>} : vector<4x16x32xf32>, vector<4x32x8xf32>, vector<4x16x8xf32> -> vector<4x16x8xf32>
    "tpu.trace_stop"() : () -> ()
    %c7_129 = arith.constant 7 : index
    %c0_130 = arith.constant 0 : index
    %c0_131 = arith.constant 0 : index
    %c0_132 = arith.constant 0 : index
    %206 = vector.load %arg5[%c7_129, %c0_130, %c0_131, %c0_132] : memref<12x4x32x8xf32, #tpu.memory_space<vmem>>, vector<1x4x32x8xf32>
    %207 = vector.shape_cast %206 : vector<1x4x32x8xf32> to vector<4x32x8xf32>
    "tpu.trace_start"() <{level = 10 : i32, message = "hnd,hde->hne"}> : () -> ()
    %cst_133 = arith.constant dense<0.000000e+00> : vector<4x16x8xf32>
    %208 = tpu.matmul %200, %207, %cst_133 {dimension_numbers = #tpu.dot_dimension_numbers<[2], [1], [1], [2], [0, 0, 0, 1, 1, 2], [0], [0]>} : vector<4x16x32xf32>, vector<4x32x8xf32>, vector<4x16x8xf32> -> vector<4x16x8xf32>
    "tpu.trace_stop"() : () -> ()
    %c8_134 = arith.constant 8 : index
    %c0_135 = arith.constant 0 : index
    %c0_136 = arith.constant 0 : index
    %c0_137 = arith.constant 0 : index
    %209 = vector.load %arg5[%c8_134, %c0_135, %c0_136, %c0_137] : memref<12x4x32x8xf32, #tpu.memory_space<vmem>>, vector<1x4x32x8xf32>
    %210 = vector.shape_cast %209 : vector<1x4x32x8xf32> to vector<4x32x8xf32>
    "tpu.trace_start"() <{level = 10 : i32, message = "hnd,hde->hne"}> : () -> ()
    %cst_138 = arith.constant dense<0.000000e+00> : vector<4x16x8xf32>
    %211 = tpu.matmul %200, %210, %cst_138 {dimension_numbers = #tpu.dot_dimension_numbers<[2], [1], [1], [2], [0, 0, 0, 1, 1, 2], [0], [0]>} : vector<4x16x32xf32>, vector<4x32x8xf32>, vector<4x16x8xf32> -> vector<4x16x8xf32>
    "tpu.trace_stop"() : () -> ()
    %212 = vector.shape_cast %205 : vector<4x16x8xf32> to vector<64x8xf32>
    %c6_139 = arith.constant 6 : index
    %c0_140 = arith.constant 0 : index
    %c0_141 = arith.constant 0 : index
    %213 = vector.load %arg6[%c6_139, %c0_140, %c0_141] : memref<12x64x8xf32, #tpu.memory_space<vmem>>, vector<1x64x8xf32>
    %214 = vector.shape_cast %213 : vector<1x64x8xf32> to vector<64x8xf32>
    %215 = arith.addf %212, %214 : vector<64x8xf32>
    %216 = vector.shape_cast %208 : vector<4x16x8xf32> to vector<64x8xf32>
    %c7_142 = arith.constant 7 : index
    %c0_143 = arith.constant 0 : index
    %c0_144 = arith.constant 0 : index
    %217 = vector.load %arg6[%c7_142, %c0_143, %c0_144] : memref<12x64x8xf32, #tpu.memory_space<vmem>>, vector<1x64x8xf32>
    %218 = vector.shape_cast %217 : vector<1x64x8xf32> to vector<64x8xf32>
    %219 = arith.addf %216, %218 : vector<64x8xf32>
    %220 = vector.shape_cast %211 : vector<4x16x8xf32> to vector<64x8xf32>
    %c8_145 = arith.constant 8 : index
    %c0_146 = arith.constant 0 : index
    %c0_147 = arith.constant 0 : index
    %221 = vector.load %arg6[%c8_145, %c0_146, %c0_147] : memref<12x64x8xf32, #tpu.memory_space<vmem>>, vector<1x64x8xf32>
    %222 = vector.shape_cast %221 : vector<1x64x8xf32> to vector<64x8xf32>
    %223 = arith.addf %220, %222 : vector<64x8xf32>
    "tpu.trace_start"() <{level = 10 : i32, message = "qe,ke->qk"}> : () -> ()
    %cst_148 = arith.constant dense<0.000000e+00> : vector<64x64xf32>
    %224 = tpu.matmul %215, %219, %cst_148 {dimension_numbers = #tpu.dot_dimension_numbers<[1], [1], [0], [0], [0, 0, 1, 0], [], []>} : vector<64x8xf32>, vector<64x8xf32>, vector<64x64xf32> -> vector<64x64xf32>
    "tpu.trace_stop"() : () -> ()
    %225 = arith.addf %224, %11 : vector<64x64xf32>
    %cst_149 = arith.constant dense<0xFF800000> : vector<64xf32>
    %226 = vector.multi_reduction <maximumf>, %225, %cst_149 [1] : vector<64x64xf32> to vector<64xf32>
    %227 = vector.shape_cast %226 : vector<64xf32> to vector<64x1xf32>
    %228 = vector.broadcast %227 : vector<64x1xf32> to vector<64x64xf32>
    %229 = arith.subf %225, %228 : vector<64x64xf32>
    %230 = math.exp %229 : vector<64x64xf32>
    %cst_150 = arith.constant dense<0.000000e+00> : vector<64xf32>
    %231 = vector.multi_reduction <add>, %230, %cst_150 [1] : vector<64x64xf32> to vector<64xf32>
    %232 = vector.shape_cast %231 : vector<64xf32> to vector<64x1xf32>
    %233 = tpu.reciprocal %232 {approx = true} : vector<64x1xf32> -> vector<64x1xf32>
    %234 = vector.broadcast %233 : vector<64x1xf32> to vector<64x64xf32>
    %235 = arith.mulf %230, %234 : vector<64x64xf32>
    "tpu.trace_start"() <{level = 10 : i32, message = "qk,ke->qe"}> : () -> ()
    %cst_151 = arith.constant dense<0.000000e+00> : vector<64x8xf32>
    %236 = tpu.matmul %235, %223, %cst_151 {dimension_numbers = #tpu.dot_dimension_numbers<[1], [0], [0], [1], [0, 0, 1, 1], [], []>} : vector<64x64xf32>, vector<64x8xf32>, vector<64x8xf32> -> vector<64x8xf32>
    "tpu.trace_stop"() : () -> ()
    %237 = vector.shape_cast %236 : vector<64x8xf32> to vector<4x16x8xf32>
    %c2_152 = arith.constant 2 : index
    %c0_153 = arith.constant 0 : index
    %c0_154 = arith.constant 0 : index
    %c0_155 = arith.constant 0 : index
    %238 = vector.load %arg7[%c2_152, %c0_153, %c0_154, %c0_155] : memref<4x4x8x32xf32, #tpu.memory_space<vmem>>, vector<1x4x8x32xf32>
    %239 = vector.shape_cast %238 : vector<1x4x8x32xf32> to vector<4x8x32xf32>
    "tpu.trace_start"() <{level = 10 : i32, message = "hne,hed->hnd"}> : () -> ()
    %cst_156 = arith.constant dense<0.000000e+00> : vector<4x16x32xf32>
    %240 = tpu.matmul %237, %239, %cst_156 {dimension_numbers = #tpu.dot_dimension_numbers<[2], [1], [1], [2], [0, 0, 0, 1, 1, 2], [0], [0]>} : vector<4x16x8xf32>, vector<4x8x32xf32>, vector<4x16x32xf32> -> vector<4x16x32xf32>
    "tpu.trace_stop"() : () -> ()
    %cst_157 = arith.constant dense<0.000000e+00> : vector<16x32xf32>
    %241 = vector.multi_reduction <add>, %240, %cst_157 [0] : vector<4x16x32xf32> to vector<16x32xf32>
    %242 = vector.broadcast %202 : vector<1x32xf32> to vector<16x32xf32>
    %243 = arith.addf %241, %242 : vector<16x32xf32>
    %244 = arith.addf %198, %243 : vector<16x32xf32>
    %c11 = arith.constant 11 : index
    %c0_158 = arith.constant 0 : index
    %c0_159 = arith.constant 0 : index
    %245 = vector.load %arg9[%c11, %c0_158, %c0_159] : memref<20x1x32xf32, #tpu.memory_space<vmem>>, vector<1x1x32xf32>
    %246 = vector.shape_cast %245 : vector<1x1x32xf32> to vector<1x32xf32>
    %c12 = arith.constant 12 : index
    %c0_160 = arith.constant 0 : index
    %c0_161 = arith.constant 0 : index
    %247 = vector.load %arg9[%c12, %c0_160, %c0_161] : memref<20x1x32xf32, #tpu.memory_space<vmem>>, vector<1x1x32xf32>
    %248 = vector.shape_cast %247 : vector<1x1x32xf32> to vector<1x32xf32>
    %cst_162 = arith.constant dense<0.000000e+00> : vector<16xf32>
    %249 = vector.multi_reduction <add>, %244, %cst_162 [1] : vector<16x32xf32> to vector<16xf32>
    %250 = vector.shape_cast %249 : vector<16xf32> to vector<16x1xf32>
    %cst_163 = arith.constant 3.200000e+01 : f32
    %251 = vector.broadcast %cst_163 : f32 to vector<16x1xf32>
    %252 = arith.divf %250, %251 : vector<16x1xf32>
    %253 = vector.broadcast %252 : vector<16x1xf32> to vector<16x32xf32>
    %254 = arith.subf %244, %253 : vector<16x32xf32>
    %255 = arith.mulf %254, %254 : vector<16x32xf32>
    %cst_164 = arith.constant dense<0.000000e+00> : vector<16xf32>
    %256 = vector.multi_reduction <add>, %255, %cst_164 [1] : vector<16x32xf32> to vector<16xf32>
    %257 = vector.shape_cast %256 : vector<16xf32> to vector<16x1xf32>
    %cst_165 = arith.constant 3.200000e+01 : f32
    %258 = vector.broadcast %cst_165 : f32 to vector<16x1xf32>
    %259 = arith.divf %257, %258 : vector<16x1xf32>
    %260 = vector.broadcast %252 : vector<16x1xf32> to vector<16x32xf32>
    %261 = arith.subf %244, %260 : vector<16x32xf32>
    %cst_166 = arith.constant 9.99999974E-6 : f32
    %262 = vector.broadcast %cst_166 : f32 to vector<16x1xf32>
    %263 = arith.addf %259, %262 : vector<16x1xf32>
    %264 = math.rsqrt %263 : vector<16x1xf32>
    %265 = vector.broadcast %264 : vector<16x1xf32> to vector<16x32xf32>
    %266 = arith.mulf %261, %265 : vector<16x32xf32>
    %267 = vector.broadcast %246 : vector<1x32xf32> to vector<16x32xf32>
    %268 = arith.mulf %266, %267 : vector<16x32xf32>
    %269 = vector.broadcast %248 : vector<1x32xf32> to vector<16x32xf32>
    %270 = arith.addf %268, %269 : vector<16x32xf32>
    %c13 = arith.constant 13 : index
    %c0_167 = arith.constant 0 : index
    %c0_168 = arith.constant 0 : index
    %271 = vector.load %arg9[%c13, %c0_167, %c0_168] : memref<20x1x32xf32, #tpu.memory_space<vmem>>, vector<1x1x32xf32>
    %272 = vector.shape_cast %271 : vector<1x1x32xf32> to vector<1x32xf32>
    %c9_169 = arith.constant 9 : index
    %c0_170 = arith.constant 0 : index
    %c0_171 = arith.constant 0 : index
    %c0_172 = arith.constant 0 : index
    %273 = vector.load %arg5[%c9_169, %c0_170, %c0_171, %c0_172] : memref<12x4x32x8xf32, #tpu.memory_space<vmem>>, vector<1x4x32x8xf32>
    %274 = vector.shape_cast %273 : vector<1x4x32x8xf32> to vector<4x32x8xf32>
    "tpu.trace_start"() <{level = 10 : i32, message = "hnd,hde->hne"}> : () -> ()
    %cst_173 = arith.constant dense<0.000000e+00> : vector<4x16x8xf32>
    %275 = tpu.matmul %13, %274, %cst_173 {dimension_numbers = #tpu.dot_dimension_numbers<[2], [1], [1], [2], [0, 0, 0, 1, 1, 2], [0], [0]>} : vector<4x16x32xf32>, vector<4x32x8xf32>, vector<4x16x8xf32> -> vector<4x16x8xf32>
    "tpu.trace_stop"() : () -> ()
    %c10_174 = arith.constant 10 : index
    %c0_175 = arith.constant 0 : index
    %c0_176 = arith.constant 0 : index
    %c0_177 = arith.constant 0 : index
    %276 = vector.load %arg5[%c10_174, %c0_175, %c0_176, %c0_177] : memref<12x4x32x8xf32, #tpu.memory_space<vmem>>, vector<1x4x32x8xf32>
    %277 = vector.shape_cast %276 : vector<1x4x32x8xf32> to vector<4x32x8xf32>
    "tpu.trace_start"() <{level = 10 : i32, message = "hnd,hde->hne"}> : () -> ()
    %cst_178 = arith.constant dense<0.000000e+00> : vector<4x16x8xf32>
    %278 = tpu.matmul %200, %277, %cst_178 {dimension_numbers = #tpu.dot_dimension_numbers<[2], [1], [1], [2], [0, 0, 0, 1, 1, 2], [0], [0]>} : vector<4x16x32xf32>, vector<4x32x8xf32>, vector<4x16x8xf32> -> vector<4x16x8xf32>
    "tpu.trace_stop"() : () -> ()
    %c11_179 = arith.constant 11 : index
    %c0_180 = arith.constant 0 : index
    %c0_181 = arith.constant 0 : index
    %c0_182 = arith.constant 0 : index
    %279 = vector.load %arg5[%c11_179, %c0_180, %c0_181, %c0_182] : memref<12x4x32x8xf32, #tpu.memory_space<vmem>>, vector<1x4x32x8xf32>
    %280 = vector.shape_cast %279 : vector<1x4x32x8xf32> to vector<4x32x8xf32>
    "tpu.trace_start"() <{level = 10 : i32, message = "hnd,hde->hne"}> : () -> ()
    %cst_183 = arith.constant dense<0.000000e+00> : vector<4x16x8xf32>
    %281 = tpu.matmul %13, %280, %cst_183 {dimension_numbers = #tpu.dot_dimension_numbers<[2], [1], [1], [2], [0, 0, 0, 1, 1, 2], [0], [0]>} : vector<4x16x32xf32>, vector<4x32x8xf32>, vector<4x16x8xf32> -> vector<4x16x8xf32>
    "tpu.trace_stop"() : () -> ()
    %282 = vector.shape_cast %275 : vector<4x16x8xf32> to vector<64x8xf32>
    %c9_184 = arith.constant 9 : index
    %c0_185 = arith.constant 0 : index
    %c0_186 = arith.constant 0 : index
    %283 = vector.load %arg6[%c9_184, %c0_185, %c0_186] : memref<12x64x8xf32, #tpu.memory_space<vmem>>, vector<1x64x8xf32>
    %284 = vector.shape_cast %283 : vector<1x64x8xf32> to vector<64x8xf32>
    %285 = arith.addf %282, %284 : vector<64x8xf32>
    %286 = vector.shape_cast %278 : vector<4x16x8xf32> to vector<64x8xf32>
    %c10_187 = arith.constant 10 : index
    %c0_188 = arith.constant 0 : index
    %c0_189 = arith.constant 0 : index
    %287 = vector.load %arg6[%c10_187, %c0_188, %c0_189] : memref<12x64x8xf32, #tpu.memory_space<vmem>>, vector<1x64x8xf32>
    %288 = vector.shape_cast %287 : vector<1x64x8xf32> to vector<64x8xf32>
    %289 = arith.addf %286, %288 : vector<64x8xf32>
    %290 = vector.shape_cast %281 : vector<4x16x8xf32> to vector<64x8xf32>
    %c11_190 = arith.constant 11 : index
    %c0_191 = arith.constant 0 : index
    %c0_192 = arith.constant 0 : index
    %291 = vector.load %arg6[%c11_190, %c0_191, %c0_192] : memref<12x64x8xf32, #tpu.memory_space<vmem>>, vector<1x64x8xf32>
    %292 = vector.shape_cast %291 : vector<1x64x8xf32> to vector<64x8xf32>
    %293 = arith.addf %290, %292 : vector<64x8xf32>
    "tpu.trace_start"() <{level = 10 : i32, message = "qe,ke->qk"}> : () -> ()
    %cst_193 = arith.constant dense<0.000000e+00> : vector<64x64xf32>
    %294 = tpu.matmul %285, %289, %cst_193 {dimension_numbers = #tpu.dot_dimension_numbers<[1], [1], [0], [0], [0, 0, 1, 0], [], []>} : vector<64x8xf32>, vector<64x8xf32>, vector<64x64xf32> -> vector<64x64xf32>
    "tpu.trace_stop"() : () -> ()
    %295 = arith.addf %294, %11 : vector<64x64xf32>
    %cst_194 = arith.constant dense<0xFF800000> : vector<64xf32>
    %296 = vector.multi_reduction <maximumf>, %295, %cst_194 [1] : vector<64x64xf32> to vector<64xf32>
    %297 = vector.shape_cast %296 : vector<64xf32> to vector<64x1xf32>
    %298 = vector.broadcast %297 : vector<64x1xf32> to vector<64x64xf32>
    %299 = arith.subf %295, %298 : vector<64x64xf32>
    %300 = math.exp %299 : vector<64x64xf32>
    %cst_195 = arith.constant dense<0.000000e+00> : vector<64xf32>
    %301 = vector.multi_reduction <add>, %300, %cst_195 [1] : vector<64x64xf32> to vector<64xf32>
    %302 = vector.shape_cast %301 : vector<64xf32> to vector<64x1xf32>
    %303 = tpu.reciprocal %302 {approx = true} : vector<64x1xf32> -> vector<64x1xf32>
    %304 = vector.broadcast %303 : vector<64x1xf32> to vector<64x64xf32>
    %305 = arith.mulf %300, %304 : vector<64x64xf32>
    "tpu.trace_start"() <{level = 10 : i32, message = "qk,ke->qe"}> : () -> ()
    %cst_196 = arith.constant dense<0.000000e+00> : vector<64x8xf32>
    %306 = tpu.matmul %305, %293, %cst_196 {dimension_numbers = #tpu.dot_dimension_numbers<[1], [0], [0], [1], [0, 0, 1, 1], [], []>} : vector<64x64xf32>, vector<64x8xf32>, vector<64x8xf32> -> vector<64x8xf32>
    "tpu.trace_stop"() : () -> ()
    %307 = vector.shape_cast %306 : vector<64x8xf32> to vector<4x16x8xf32>
    %c3_197 = arith.constant 3 : index
    %c0_198 = arith.constant 0 : index
    %c0_199 = arith.constant 0 : index
    %c0_200 = arith.constant 0 : index
    %308 = vector.load %arg7[%c3_197, %c0_198, %c0_199, %c0_200] : memref<4x4x8x32xf32, #tpu.memory_space<vmem>>, vector<1x4x8x32xf32>
    %309 = vector.shape_cast %308 : vector<1x4x8x32xf32> to vector<4x8x32xf32>
    "tpu.trace_start"() <{level = 10 : i32, message = "hne,hed->hnd"}> : () -> ()
    %cst_201 = arith.constant dense<0.000000e+00> : vector<4x16x32xf32>
    %310 = tpu.matmul %307, %309, %cst_201 {dimension_numbers = #tpu.dot_dimension_numbers<[2], [1], [1], [2], [0, 0, 0, 1, 1, 2], [0], [0]>} : vector<4x16x8xf32>, vector<4x8x32xf32>, vector<4x16x32xf32> -> vector<4x16x32xf32>
    "tpu.trace_stop"() : () -> ()
    %cst_202 = arith.constant dense<0.000000e+00> : vector<16x32xf32>
    %311 = vector.multi_reduction <add>, %310, %cst_202 [0] : vector<4x16x32xf32> to vector<16x32xf32>
    %312 = vector.broadcast %272 : vector<1x32xf32> to vector<16x32xf32>
    %313 = arith.addf %311, %312 : vector<16x32xf32>
    %314 = arith.addf %270, %313 : vector<16x32xf32>
    %c14 = arith.constant 14 : index
    %c0_203 = arith.constant 0 : index
    %c0_204 = arith.constant 0 : index
    %315 = vector.load %arg9[%c14, %c0_203, %c0_204] : memref<20x1x32xf32, #tpu.memory_space<vmem>>, vector<1x1x32xf32>
    %316 = vector.shape_cast %315 : vector<1x1x32xf32> to vector<1x32xf32>
    %c15 = arith.constant 15 : index
    %c0_205 = arith.constant 0 : index
    %c0_206 = arith.constant 0 : index
    %317 = vector.load %arg9[%c15, %c0_205, %c0_206] : memref<20x1x32xf32, #tpu.memory_space<vmem>>, vector<1x1x32xf32>
    %318 = vector.shape_cast %317 : vector<1x1x32xf32> to vector<1x32xf32>
    %cst_207 = arith.constant dense<0.000000e+00> : vector<16xf32>
    %319 = vector.multi_reduction <add>, %314, %cst_207 [1] : vector<16x32xf32> to vector<16xf32>
    %320 = vector.shape_cast %319 : vector<16xf32> to vector<16x1xf32>
    %cst_208 = arith.constant 3.200000e+01 : f32
    %321 = vector.broadcast %cst_208 : f32 to vector<16x1xf32>
    %322 = arith.divf %320, %321 : vector<16x1xf32>
    %323 = vector.broadcast %322 : vector<16x1xf32> to vector<16x32xf32>
    %324 = arith.subf %314, %323 : vector<16x32xf32>
    %325 = arith.mulf %324, %324 : vector<16x32xf32>
    %cst_209 = arith.constant dense<0.000000e+00> : vector<16xf32>
    %326 = vector.multi_reduction <add>, %325, %cst_209 [1] : vector<16x32xf32> to vector<16xf32>
    %327 = vector.shape_cast %326 : vector<16xf32> to vector<16x1xf32>
    %cst_210 = arith.constant 3.200000e+01 : f32
    %328 = vector.broadcast %cst_210 : f32 to vector<16x1xf32>
    %329 = arith.divf %327, %328 : vector<16x1xf32>
    %330 = vector.broadcast %322 : vector<16x1xf32> to vector<16x32xf32>
    %331 = arith.subf %314, %330 : vector<16x32xf32>
    %cst_211 = arith.constant 9.99999974E-6 : f32
    %332 = vector.broadcast %cst_211 : f32 to vector<16x1xf32>
    %333 = arith.addf %329, %332 : vector<16x1xf32>
    %334 = math.rsqrt %333 : vector<16x1xf32>
    %335 = vector.broadcast %334 : vector<16x1xf32> to vector<16x32xf32>
    %336 = arith.mulf %331, %335 : vector<16x32xf32>
    %337 = vector.broadcast %316 : vector<1x32xf32> to vector<16x32xf32>
    %338 = arith.mulf %336, %337 : vector<16x32xf32>
    %339 = vector.broadcast %318 : vector<1x32xf32> to vector<16x32xf32>
    %340 = arith.addf %338, %339 : vector<16x32xf32>
    %c2_212 = arith.constant 2 : index
    %c0_213 = arith.constant 0 : index
    %c0_214 = arith.constant 0 : index
    %341 = vector.load %arg8[%c2_212, %c0_213, %c0_214] : memref<4x32x32xf32, #tpu.memory_space<vmem>>, vector<1x32x32xf32>
    %342 = vector.shape_cast %341 : vector<1x32x32xf32> to vector<32x32xf32>
    %cst_215 = arith.constant dense<0.000000e+00> : vector<16x32xf32>
    %343 = tpu.matmul %340, %342, %cst_215 {dimension_numbers = #tpu.dot_dimension_numbers<[1], [0], [0], [1], [0, 0, 1, 1], [], []>} : vector<16x32xf32>, vector<32x32xf32>, vector<16x32xf32> -> vector<16x32xf32>
    %c16 = arith.constant 16 : index
    %c0_216 = arith.constant 0 : index
    %c0_217 = arith.constant 0 : index
    %344 = vector.load %arg9[%c16, %c0_216, %c0_217] : memref<20x1x32xf32, #tpu.memory_space<vmem>>, vector<1x1x32xf32>
    %345 = vector.shape_cast %344 : vector<1x1x32xf32> to vector<1x32xf32>
    %346 = vector.broadcast %345 : vector<1x32xf32> to vector<16x32xf32>
    %347 = arith.addf %343, %346 : vector<16x32xf32>
    %cst_218 = arith.constant 0.000000e+00 : f32
    %348 = vector.broadcast %cst_218 : f32 to vector<16x32xf32>
    %349 = arith.maximumf %347, %348 : vector<16x32xf32>
    %c3_219 = arith.constant 3 : index
    %c0_220 = arith.constant 0 : index
    %c0_221 = arith.constant 0 : index
    %350 = vector.load %arg8[%c3_219, %c0_220, %c0_221] : memref<4x32x32xf32, #tpu.memory_space<vmem>>, vector<1x32x32xf32>
    %351 = vector.shape_cast %350 : vector<1x32x32xf32> to vector<32x32xf32>
    %cst_222 = arith.constant dense<0.000000e+00> : vector<16x32xf32>
    %352 = tpu.matmul %349, %351, %cst_222 {dimension_numbers = #tpu.dot_dimension_numbers<[1], [0], [0], [1], [0, 0, 1, 1], [], []>} : vector<16x32xf32>, vector<32x32xf32>, vector<16x32xf32> -> vector<16x32xf32>
    %c17 = arith.constant 17 : index
    %c0_223 = arith.constant 0 : index
    %c0_224 = arith.constant 0 : index
    %353 = vector.load %arg9[%c17, %c0_223, %c0_224] : memref<20x1x32xf32, #tpu.memory_space<vmem>>, vector<1x1x32xf32>
    %354 = vector.shape_cast %353 : vector<1x1x32xf32> to vector<1x32xf32>
    %355 = vector.broadcast %354 : vector<1x32xf32> to vector<16x32xf32>
    %356 = arith.addf %352, %355 : vector<16x32xf32>
    %357 = arith.addf %340, %356 : vector<16x32xf32>
    %c18 = arith.constant 18 : index
    %c0_225 = arith.constant 0 : index
    %c0_226 = arith.constant 0 : index
    %358 = vector.load %arg9[%c18, %c0_225, %c0_226] : memref<20x1x32xf32, #tpu.memory_space<vmem>>, vector<1x1x32xf32>
    %359 = vector.shape_cast %358 : vector<1x1x32xf32> to vector<1x32xf32>
    %c19 = arith.constant 19 : index
    %c0_227 = arith.constant 0 : index
    %c0_228 = arith.constant 0 : index
    %360 = vector.load %arg9[%c19, %c0_227, %c0_228] : memref<20x1x32xf32, #tpu.memory_space<vmem>>, vector<1x1x32xf32>
    %361 = vector.shape_cast %360 : vector<1x1x32xf32> to vector<1x32xf32>
    %cst_229 = arith.constant dense<0.000000e+00> : vector<16xf32>
    %362 = vector.multi_reduction <add>, %357, %cst_229 [1] : vector<16x32xf32> to vector<16xf32>
    %363 = vector.shape_cast %362 : vector<16xf32> to vector<16x1xf32>
    %cst_230 = arith.constant 3.200000e+01 : f32
    %364 = vector.broadcast %cst_230 : f32 to vector<16x1xf32>
    %365 = arith.divf %363, %364 : vector<16x1xf32>
    %366 = vector.broadcast %365 : vector<16x1xf32> to vector<16x32xf32>
    %367 = arith.subf %357, %366 : vector<16x32xf32>
    %368 = arith.mulf %367, %367 : vector<16x32xf32>
    %cst_231 = arith.constant dense<0.000000e+00> : vector<16xf32>
    %369 = vector.multi_reduction <add>, %368, %cst_231 [1] : vector<16x32xf32> to vector<16xf32>
    %370 = vector.shape_cast %369 : vector<16xf32> to vector<16x1xf32>
    %cst_232 = arith.constant 3.200000e+01 : f32
    %371 = vector.broadcast %cst_232 : f32 to vector<16x1xf32>
    %372 = arith.divf %370, %371 : vector<16x1xf32>
    %373 = vector.broadcast %365 : vector<16x1xf32> to vector<16x32xf32>
    %374 = arith.subf %357, %373 : vector<16x32xf32>
    %cst_233 = arith.constant 9.99999974E-6 : f32
    %375 = vector.broadcast %cst_233 : f32 to vector<16x1xf32>
    %376 = arith.addf %372, %375 : vector<16x1xf32>
    %377 = math.rsqrt %376 : vector<16x1xf32>
    %378 = vector.broadcast %377 : vector<16x1xf32> to vector<16x32xf32>
    %379 = arith.mulf %374, %378 : vector<16x32xf32>
    %380 = vector.broadcast %359 : vector<1x32xf32> to vector<16x32xf32>
    %381 = arith.mulf %379, %380 : vector<16x32xf32>
    %382 = vector.broadcast %361 : vector<1x32xf32> to vector<16x32xf32>
    %383 = arith.addf %381, %382 : vector<16x32xf32>
    %c0_234 = arith.constant 0 : index
    %c0_235 = arith.constant 0 : index
    %384 = vector.load %arg10[%c0_234, %c0_235] : memref<16x32xf32, #tpu.memory_space<vmem>>, vector<16x32xf32>
    tpu.vector_store %arg10[%c0_234, %c0_235], %383 {strides = array<i32>} : memref<16x32xf32, #tpu.memory_space<vmem>>, vector<16x32xf32>,
    return
  }
}

</mosaic_0001>

<llo_original>
// kernel: decoder_forward.1
$region0: #{decoder_forward.1}
  #allocation0 [shape = 'u32[]', space=smem, size = 0x4, offset = 0x4, fixed_abs, tag = 'smem constant byte address 0x4 - core index']
  #allocation1 [shape = 'u32[144,128]{1,0:T(1,128)}', space=vmem, size = 0x12000, scoped, tag = 'internal scratch']
  %s0 = inlined_call_operand.vmem [shape: s32[16,1], index: 0, kind: input, shape index: {}]
  %s1 = inlined_call_operand.vmem [shape: f32[64,32], index: 1, kind: input, shape index: {}]
  %s2 = inlined_call_operand.vmem [shape: f32[16,32], index: 2, kind: input, shape index: {}]
  %s3 = inlined_call_operand.vmem [shape: f32[16,32], index: 3, kind: input, shape index: {}]
  %s4 = inlined_call_operand.vmem [shape: f32[64,64], index: 4, kind: input, shape index: {}]
  %s5 = inlined_call_operand.vmem [shape: f32[12,4,32,8], index: 5, kind: input, shape index: {}]
  %s6 = inlined_call_operand.vmem [shape: f32[12,64,8], index: 6, kind: input, shape index: {}]
  %s7 = inlined_call_operand.vmem [shape: f32[4,4,8,32], index: 7, kind: input, shape index: {}]
  %s8 = inlined_call_operand.vmem [shape: f32[4,32,32], index: 8, kind: input, shape index: {}]
  %s9 = inlined_call_operand.vmem [shape: f32[20,1,32], index: 9, kind: input, shape index: {}]
  %s10 = inlined_call_operand.hbm [shape: f32[16,32], index: 10, kind: output, shape index: {}]
  %s11 = sld [smem:[#allocation0]]
  $region50: #{decoder_forward.1} parent=0
    _
  %s13 = ssub.s32 1, %s11
  %s14 = scalar_select 0, %s13, %s11
  $region1: #{decoder_forward.1} parent=0
    #allocation2 [shape = 'u8[8192]{0}', space=vmem, size = 0x2000, scoped, tag = 'output window, operand 0, single buffered']
    #allocation3 [shape = 's32[1]{0}', space=sflag, size = 0x4, scoped, tag = 'scoped memory for decoder_forward.1']
    %15 = vsyncpa [#allocation3], 0
    // Predicated region
    $region2: #{decoder_forward.1} parent=1 // pred_check
      _
    $region3: #{decoder_forward.1} parent=1 // pred_check_branch
      %17 = sbr.rel (0) target = $region5
    $region4: #{decoder_forward.1} parent=1 // pred_region
      _
    $region5: #{decoder_forward.1} parent=1 // pred_fallthru
      _
    // Predicated region
    $region6: #{decoder_forward.1} parent=1 // pred_check
      _
    $region7: #{decoder_forward.1} parent=1 // pred_check_branch
      %19 = sbr.rel (0) target = $region9
    $region8: #{decoder_forward.1} parent=1 // pred_region
      _
    $region9: #{decoder_forward.1} parent=1 // pred_fallthru
      _
    // Predicated region
    $region10: #{decoder_forward.1} parent=1 // pred_check
      _
    $region11: #{decoder_forward.1} parent=1 // pred_check_branch
      %21 = sbr.rel (0) target = $region13
    $region12: #{decoder_forward.1} parent=1 // pred_region
      _
    $region13: #{decoder_forward.1} parent=1 // pred_fallthru
      _
    // Predicated region
    $region14: #{decoder_forward.1} parent=1 // pred_check
      _
    $region15: #{decoder_forward.1} parent=1 // pred_check_branch
      %23 = sbr.rel (0) target = $region17
    $region16: #{decoder_forward.1} parent=1 // pred_region
      _
    $region17: #{decoder_forward.1} parent=1 // pred_fallthru
      _
    // Predicated region
    $region18: #{decoder_forward.1} parent=1 // pred_check
      _
    $region19: #{decoder_forward.1} parent=1 // pred_check_branch
      %25 = sbr.rel (0) target = $region21
    $region20: #{decoder_forward.1} parent=1 // pred_region
      _
    $region21: #{decoder_forward.1} parent=1 // pred_fallthru
      _
    // Predicated region
    $region22: #{decoder_forward.1} parent=1 // pred_check
      _
    $region23: #{decoder_forward.1} parent=1 // pred_check_branch
      %27 = sbr.rel (0) target = $region25
    $region24: #{decoder_forward.1} parent=1 // pred_region
      _
    $region25: #{decoder_forward.1} parent=1 // pred_fallthru
      _
    // Predicated region
    $region26: #{decoder_forward.1} parent=1 // pred_check
      _
    $region27: #{decoder_forward.1} parent=1 // pred_check_branch
      %29 = sbr.rel (0) target = $region29
    $region28: #{decoder_forward.1} parent=1 // pred_region
      _
    $region29: #{decoder_forward.1} parent=1 // pred_fallthru
      _
    // Predicated region
    $region30: #{decoder_forward.1} parent=1 // pred_check
      _
    $region31: #{decoder_forward.1} parent=1 // pred_check_branch
      %31 = sbr.rel (0) target = $region33
    $region32: #{decoder_forward.1} parent=1 // pred_region
      _
    $region33: #{decoder_forward.1} parent=1 // pred_fallthru
      _
    // Predicated region
    $region34: #{decoder_forward.1} parent=1 // pred_check
      _
    $region35: #{decoder_forward.1} parent=1 // pred_check_branch
      %33 = sbr.rel (0) target = $region37
    $region36: #{decoder_forward.1} parent=1 // pred_region
      _
    $region37: #{decoder_forward.1} parent=1 // pred_fallthru
      _
    // Predicated region
    $region38: #{decoder_forward.1} parent=1 // pred_check
      _
    $region39: #{decoder_forward.1} parent=1 // pred_check_branch
      %35 = sbr.rel (0) target = $region41
    $region40: #{decoder_forward.1} parent=1 // pred_region
      _
    $region41: #{decoder_forward.1} parent=1 // pred_fallthru
      _
    %v36 = vld [vmem:[%s0] sm:$0xff]
    %v37 = vld [vmem:[%s0 + $0x8] sm:$0xff]
    %v38 = vlaneseq
    %v39 = vand.u32 %v38, 127
    %40 = vset.pattern.permute.xlu0 0
    %41 = vperm.xlu0 %40, %v36
    %v42 = vpop.permute.xlu0 %41
    %43 = vset.pattern.permute.xlu0 0
    %44 = vperm.xlu0 %43, %v37
    %v45 = vpop.permute.xlu0 %44
    %vm46 = vcmp.eq.s32.totalorder %v39, %v42
    %vm47 = vcmp.eq.s32.totalorder %v39, %v45
    %v48 = vsel %vm46, 1, 0
    %v49 = vsel %vm47, 1, 0
    %v50 = vcvt.s32.f32 %v48
    %v51 = vcvt.s32.f32 %v49
    %v52 = vld [vmem:[%s1] sm:$0xff]
    %v53 = vld [vmem:[%s1 + $0x8] sm:$0xff]
    %v54 = vld [vmem:[%s1 + $0x10] sm:$0xff]
    %v55 = vld [vmem:[%s1 + $0x18] sm:$0xff]
    %v56 = vld [vmem:[%s1 + $0x20] sm:$0xff]
    %v57 = vld [vmem:[%s1 + $0x28] sm:$0xff]
    %v58 = vld [vmem:[%s1 + $0x30] sm:$0xff]
    %v59 = vld [vmem:[%s1 + $0x38] sm:$0xff]
    %v60 = vld [vmem:[%s2] sm:$0xff]
    %v61 = vld [vmem:[%s2 + $0x8] sm:$0xff]
    %vm62 = vcmask 523264
    %v64 = vsel %vm62, %v50, 0
    %v67 = vsel %vm62, %v51, 0
    %69 = vmatprep.subr.mxu0 0.0
    %70 = vmatpush1.msra.mxu0 %v52
    %71 = vmatprep.subr.mxu0 0.0
    %72 = vmatpush1.msra.mxu0 %v53
    %73 = vmatprep.subr.mxu0 0.0
    %74 = vmatpush1.msra.mxu0 %v54
    %75 = vmatprep.subr.mxu0 0.0
    %76 = vmatpush1.msra.mxu0 %v55
    %77 = vmatprep.subr.mxu0 0.0
    %78 = vmatpush1.msra.mxu0 %v56
    %79 = vmatprep.subr.mxu0 0.0
    %80 = vmatpush1.msra.mxu0 %v57
    %81 = vmatprep.subr.mxu0 0.0
    %82 = vmatpush1.msra.mxu0 %v58
    %83 = vmatprep.subr.mxu0 0.0
    %84 = vmatpush1.msra.mxu0 %v59
    %85 = vmatprep.subr.mxu0 0.0
    %86 = vmatpush1.msra.mxu0 0.0
    %87 = vmatprep.subr.mxu0 0.0
    %88 = vmatpush1.msra.mxu0 0.0
    %89 = vmatprep.subr.mxu0 0.0
    %90 = vmatpush1.msra.mxu0 0.0
    %91 = vmatprep.subr.mxu0 0.0
    %92 = vmatpush1.msra.mxu0 0.0
    %93 = vmatprep.subr.mxu0 0.0
    %94 = vmatpush1.msra.mxu0 0.0
    %95 = vmatprep.subr.mxu0 0.0
    %96 = vmatpush1.msra.mxu0 0.0
    %97 = vmatprep.subr.mxu0 0.0
    %98 = vmatpush1.msra.mxu0 0.0
    %99 = vmatprep.subr.mxu0 0.0
    %100 = vmatpush1.msra.mxu0 0.0
    %101 = vmatprep.subr.mxu0 0.0
    %102 = vmatpush1.msra.mxu0 0.0
    %103 = vmatprep.subr.mxu0 0.0
    %104 = vmatpush1.msra.mxu0 0.0
    %105 = vmatprep.subr.mxu0 0.0
    %106 = vmatpush1.msra.mxu0 0.0
    %107 = vmatprep.subr.mxu0 0.0
    %108 = vmatpush1.msra.mxu0 0.0
    %109 = vmatprep.subr.mxu0 0.0
    %110 = vmatpush1.msra.mxu0 0.0
    %111 = vmatprep.subr.mxu0 0.0
    %112 = vmatpush1.msra.mxu0 0.0
    %113 = vmatprep.subr.mxu0 0.0
    %114 = vmatpush1.msra.mxu0 0.0
    %115 = vmatprep.subr.mxu0 0.0
    %116 = vmatpush1.msra.mxu0 0.0
    %117 = vmatprep.subr.mxu0 0.0
    %118 = vmatpush1.msra.mxu0 0.0
    %119 = vmatprep.subr.mxu0 0.0
    %120 = vmatpush1.msra.mxu0 0.0
    %121 = vmatprep.subr.mxu0 0.0
    %122 = vmatpush1.msra.mxu0 0.0
    %123 = vmatprep.subr.mxu0 0.0
    %124 = vmatpush1.msra.mxu0 0.0
    %125 = vmatprep.subr.mxu0 0.0
    %126 = vmatpush1.msra.mxu0 0.0
    %127 = vmatprep.subr.mxu0 0.0
    %128 = vmatpush1.msra.mxu0 0.0
    %129 = vmatprep.subr.mxu0 0.0
    %130 = vmatpush1.msra.mxu0 0.0
    %131 = vmatprep.subr.mxu0 0.0
    %132 = vmatpush1.msra.mxu0 0.0
    %133 = vmatprep.mubr.f32.mxu0 0.0
    %134 = vmatmul.mubr.f32.gmra.mrb[0].mxu0 %v64
    %v135 = vpop.f32.mrb[0].mxu0
    %v136 = vadd.f32 %v60, %v135
    %v137 = vpop.f32.mrb[0].mxu0
    %138 = vmatprep.mubr.f32.mxu0 0.0
    %139 = vmatmul.mubr.f32.gmra.mrb[0].mxu0 %v67
    %v140 = vpop.f32.mrb[0].mxu0
    %v141 = vadd.f32 %v61, %v140
    %v142 = vpop.f32.mrb[0].mxu0
    %143 = vdwg.mxu0
    %v144 = vld [vmem:[%s3] sm:$0xff]
    %v145 = vld [vmem:[%s3 + $0x8] sm:$0xff]
    %v146 = vld [vmem:[%s4] sm:$0xff]
    %v147 = vld [vmem:[%s4 + $0x8] sm:$0xff]
    %v148 = vld [vmem:[%s4 + $0x10] sm:$0xff]
    %v149 = vld [vmem:[%s4 + $0x18] sm:$0xff]
    %v150 = vld [vmem:[%s4 + $0x20] sm:$0xff]
    %v151 = vld [vmem:[%s4 + $0x28] sm:$0xff]
    %v152 = vld [vmem:[%s4 + $0x30] sm:$0xff]
    %v153 = vld [vmem:[%s4 + $0x38] sm:$0xff]
    %v154 = vld [vmem:[%s9] sm:$0x1]
    %v155 = vld [vmem:[%s5] sm:$0xff]
    %v156 = vld [vmem:[%s5 + $0x8] sm:$0xff]
    %v157 = vld [vmem:[%s5 + $0x10] sm:$0xff]
    %v158 = vld [vmem:[%s5 + $0x18] sm:$0xff]
    %v159 = vld [vmem:[%s5 + $0x20] sm:$0xff]
    %v160 = vld [vmem:[%s5 + $0x28] sm:$0xff]
    %v161 = vld [vmem:[%s5 + $0x30] sm:$0xff]
    %v162 = vld [vmem:[%s5 + $0x38] sm:$0xff]
    %v163 = vld [vmem:[%s5 + $0x40] sm:$0xff]
    %v164 = vld [vmem:[%s5 + $0x48] sm:$0xff]
    %v165 = vld [vmem:[%s5 + $0x50] sm:$0xff]
    %v166 = vld [vmem:[%s5 + $0x58] sm:$0xff]
    %v167 = vld [vmem:[%s5 + $0x60] sm:$0xff]
    %v168 = vld [vmem:[%s5 + $0x68] sm:$0xff]
    %v169 = vld [vmem:[%s5 + $0x70] sm:$0xff]
    %v170 = vld [vmem:[%s5 + $0x78] sm:$0xff]
    %vm171 = vcmask 261120
    %v173 = vsel %vm171, %v136, 0
    %v176 = vsel %vm171, %v141, 0
    %178 = vmatprep.subr.mxu0 0.0
    %179 = vmatpush1.msra.mxu0 %v155
    %180 = vmatprep.subr.mxu0 0.0
    %181 = vmatpush1.msra.mxu0 %v156
    %182 = vmatprep.subr.mxu0 0.0
    %183 = vmatpush1.msra.mxu0 %v157
    %184 = vmatprep.subr.mxu0 0.0
    %185 = vmatpush1.msra.mxu0 %v158
    %186 = vmatprep.subr.mxu0 0.0
    %187 = vmatpush1.msra.mxu0 0.0
    %188 = vmatprep.subr.mxu0 0.0
    %189 = vmatpush1.msra.mxu0 0.0
    %190 = vmatprep.subr.mxu0 0.0
    %191 = vmatpush1.msra.mxu0 0.0
    %192 = vmatprep.subr.mxu0 0.0
    %193 = vmatpush1.msra.mxu0 0.0
    %194 = vmatprep.subr.mxu0 0.0
    %195 = vmatpush1.msra.mxu0 0.0
    %196 = vmatprep.subr.mxu0 0.0
    %197 = vmatpush1.msra.mxu0 0.0
    %198 = vmatprep.subr.mxu0 0.0
    %199 = vmatpush1.msra.mxu0 0.0
    %200 = vmatprep.subr.mxu0 0.0
    %201 = vmatpush1.msra.mxu0 0.0
    %202 = vmatprep.subr.mxu0 0.0
    %203 = vmatpush1.msra.mxu0 0.0
    %204 = vmatprep.subr.mxu0 0.0
    %205 = vmatpush1.msra.mxu0 0.0
    %206 = vmatprep.subr.mxu0 0.0
    %207 = vmatpush1.msra.mxu0 0.0
    %208 = vmatprep.subr.mxu0 0.0
    %209 = vmatpush1.msra.mxu0 0.0
    %210 = vmatprep.subr.mxu0 0.0
    %211 = vmatpush1.msra.mxu0 0.0
    %212 = vmatprep.subr.mxu0 0.0
    %213 = vmatpush1.msra.mxu0 0.0
    %214 = vmatprep.subr.mxu0 0.0
    %215 = vmatpush1.msra.mxu0 0.0
    %216 = vmatprep.subr.mxu0 0.0
    %217 = vmatpush1.msra.mxu0 0.0
    %218 = vmatprep.subr.mxu0 0.0
    %219 = vmatpush1.msra.mxu0 0.0
    %220 = vmatprep.subr.mxu0 0.0
    %221 = vmatpush1.msra.mxu0 0.0
    %222 = vmatprep.subr.mxu0 0.0
    %223 = vmatpush1.msra.mxu0 0.0
    %224 = vmatprep.subr.mxu0 0.0
    %225 = vmatpush1.msra.mxu0 0.0
    %226 = vmatprep.subr.mxu0 0.0
    %227 = vmatpush1.msra.mxu0 0.0
    %228 = vmatprep.subr.mxu0 0.0
    %229 = vmatpush1.msra.mxu0 0.0
    %230 = vmatprep.subr.mxu0 0.0
    %231 = vmatpush1.msra.mxu0 0.0
    %232 = vmatprep.subr.mxu0 0.0
    %233 = vmatpush1.msra.mxu0 0.0
    %234 = vmatprep.subr.mxu0 0.0
    %235 = vmatpush1.msra.mxu0 0.0
    %236 = vmatprep.subr.mxu0 0.0
    %237 = vmatpush1.msra.mxu0 0.0
    %238 = vmatprep.subr.mxu0 0.0
    %239 = vmatpush1.msra.mxu0 0.0
    %240 = vmatprep.subr.mxu0 0.0
    %241 = vmatpush1.msra.mxu0 0.0
    %242 = vmatprep.mubr.f32.mxu0 0.0
    %243 = vmatmul.mubr.f32.gmra.mrb[0].mxu0 %v173
    %v244 = vpop.f32.mrb[0].mxu0
    %v245 = vadd.f32 0.0, %v244
    %v246 = vpop.f32.mrb[0].mxu0
    %247 = vmatprep.mubr.f32.mxu0 0.0
    %248 = vmatmul.mubr.f32.gmra.mrb[0].mxu0 %v176
    %v249 = vpop.f32.mrb[0].mxu0
    %v250 = vadd.f32 0.0, %v249
    %v251 = vpop.f32.mrb[0].mxu0
    %252 = vdwg.mxu0
    %253 = vmatprep.subr.mxu0 0.0
    %254 = vmatpush1.msra.mxu0 %v159
    %255 = vmatprep.subr.mxu0 0.0
    %256 = vmatpush1.msra.mxu0 %v160
    %257 = vmatprep.subr.mxu0 0.0
    %258 = vmatpush1.msra.mxu0 %v161
    %259 = vmatprep.subr.mxu0 0.0
    %260 = vmatpush1.msra.mxu0 %v162
    %261 = vmatprep.subr.mxu0 0.0
    %262 = vmatpush1.msra.mxu0 0.0
    %263 = vmatprep.subr.mxu0 0.0
    %264 = vmatpush1.msra.mxu0 0.0
    %265 = vmatprep.subr.mxu0 0.0
    %266 = vmatpush1.msra.mxu0 0.0
    %267 = vmatprep.subr.mxu0 0.0
    %268 = vmatpush1.msra.mxu0 0.0
    %269 = vmatprep.subr.mxu0 0.0
    %270 = vmatpush1.msra.mxu0 0.0
    %271 = vmatprep.subr.mxu0 0.0
    %272 = vmatpush1.msra.mxu0 0.0
    %273 = vmatprep.subr.mxu0 0.0
    %274 = vmatpush1.msra.mxu0 0.0
    %275 = vmatprep.subr.mxu0 0.0
    %276 = vmatpush1.msra.mxu0 0.0
    %277 = vmatprep.subr.mxu0 0.0
    %278 = vmatpush1.msra.mxu0 0.0
    %279 = vmatprep.subr.mxu0 0.0
    %280 = vmatpush1.msra.mxu0 0.0
    %281 = vmatprep.subr.mxu0 0.0
    %282 = vmatpush1.msra.mxu0 0.0
    %283 = vmatprep.subr.mxu0 0.0
    %284 = vmatpush1.msra.mxu0 0.0
    %285 = vmatprep.subr.mxu0 0.0
    %286 = vmatpush1.msra.mxu0 0.0
    %287 = vmatprep.subr.mxu0 0.0
    %288 = vmatpush1.msra.mxu0 0.0
    %289 = vmatprep.subr.mxu0 0.0
    %290 = vmatpush1.msra.mxu0 0.0
    %291 = vmatprep.subr.mxu0 0.0
    %292 = vmatpush1.msra.mxu0 0.0
    %293 = vmatprep.subr.mxu0 0.0
    %294 = vmatpush1.msra.mxu0 0.0
    %295 = vmatprep.subr.mxu0 0.0
    %296 = vmatpush1.msra.mxu0 0.0
    %297 = vmatprep.subr.mxu0 0.0
    %298 = vmatpush1.msra.mxu0 0.0
    %299 = vmatprep.subr.mxu0 0.0
    %300 = vmatpush1.msra.mxu0 0.0
    %301 = vmatprep.subr.mxu0 0.0
    %302 = vmatpush1.msra.mxu0 0.0
    %303 = vmatprep.subr.mxu0 0.0
    %304 = vmatpush1.msra.mxu0 0.0
    %305 = vmatprep.subr.mxu0 0.0
    %306 = vmatpush1.msra.mxu0 0.0
    %307 = vmatprep.subr.mxu0 0.0
    %308 = vmatpush1.msra.mxu0 0.0
    %309 = vmatprep.subr.mxu0 0.0
    %310 = vmatpush1.msra.mxu0 0.0
    %311 = vmatprep.subr.mxu0 0.0
    %312 = vmatpush1.msra.mxu0 0.0
    %313 = vmatprep.subr.mxu0 0.0
    %314 = vmatpush1.msra.mxu0 0.0
    %315 = vmatprep.subr.mxu0 0.0
    %316 = vmatpush1.msra.mxu0 0.0
    %317 = vmatprep.mubr.f32.mxu0 0.0
    %318 = vmatmul.mubr.f32.gmra.mrb[0].mxu0 %v173
    %v319 = vpop.f32.mrb[0].mxu0
    %v320 = vadd.f32 0.0, %v319
    %v321 = vpop.f32.mrb[0].mxu0
    %322 = vmatprep.mubr.f32.mxu0 0.0
    %323 = vmatmul.mubr.f32.gmra.mrb[0].mxu0 %v176
    %v324 = vpop.f32.mrb[0].mxu0
    %v325 = vadd.f32 0.0, %v324
    %v326 = vpop.f32.mrb[0].mxu0
    %327 = vdwg.mxu0
    %328 = vmatprep.subr.mxu0 0.0
    %329 = vmatpush1.msra.mxu0 %v163
    %330 = vmatprep.subr.mxu0 0.0
    %331 = vmatpush1.msra.mxu0 %v164
    %332 = vmatprep.subr.mxu0 0.0
    %333 = vmatpush1.msra.mxu0 %v165
    %334 = vmatprep.subr.mxu0 0.0
    %335 = vmatpush1.msra.mxu0 %v166
    %336 = vmatprep.subr.mxu0 0.0
    %337 = vmatpush1.msra.mxu0 0.0
    %338 = vmatprep.subr.mxu0 0.0
    %339 = vmatpush1.msra.mxu0 0.0
    %340 = vmatprep.subr.mxu0 0.0
    %341 = vmatpush1.msra.mxu0 0.0
    %342 = vmatprep.subr.mxu0 0.0
    %343 = vmatpush1.msra.mxu0 0.0
    %344 = vmatprep.subr.mxu0 0.0
    %345 = vmatpush1.msra.mxu0 0.0
    %346 = vmatprep.subr.mxu0 0.0
    %347 = vmatpush1.msra.mxu0 0.0
    %348 = vmatprep.subr.mxu0 0.0
    %349 = vmatpush1.msra.mxu0 0.0
    %350 = vmatprep.subr.mxu0 0.0
    %351 = vmatpush1.msra.mxu0 0.0
    %352 = vmatprep.subr.mxu0 0.0
    %353 = vmatpush1.msra.mxu0 0.0
    %354 = vmatprep.subr.mxu0 0.0
    %355 = vmatpush1.msra.mxu0 0.0
    %356 = vmatprep.subr.mxu0 0.0
    %357 = vmatpush1.msra.mxu0 0.0
    %358 = vmatprep.subr.mxu0 0.0
    %359 = vmatpush1.msra.mxu0 0.0
    %360 = vmatprep.subr.mxu0 0.0
    %361 = vmatpush1.msra.mxu0 0.0
    %362 = vmatprep.subr.mxu0 0.0
    %363 = vmatpush1.msra.mxu0 0.0
    %364 = vmatprep.subr.mxu0 0.0
    %365 = vmatpush1.msra.mxu0 0.0
    %366 = vmatprep.subr.mxu0 0.0
    %367 = vmatpush1.msra.mxu0 0.0
    %368 = vmatprep.subr.mxu0 0.0
    %369 = vmatpush1.msra.mxu0 0.0
    %370 = vmatprep.subr.mxu0 0.0
    %371 = vmatpush1.msra.mxu0 0.0
    %372 = vmatprep.subr.mxu0 0.0
    %373 = vmatpush1.msra.mxu0 0.0
    %374 = vmatprep.subr.mxu0 0.0
    %375 = vmatpush1.msra.mxu0 0.0
    %376 = vmatprep.subr.mxu0 0.0
    %377 = vmatpush1.msra.mxu0 0.0
    %378 = vmatprep.subr.mxu0 0.0
    %379 = vmatpush1.msra.mxu0 0.0
    %380 = vmatprep.subr.mxu0 0.0
    %381 = vmatpush1.msra.mxu0 0.0
    %382 = vmatprep.subr.mxu0 0.0
    %383 = vmatpush1.msra.mxu0 0.0
    %384 = vmatprep.subr.mxu0 0.0
    %385 = vmatpush1.msra.mxu0 0.0
    %386 = vmatprep.subr.mxu0 0.0
    %387 = vmatpush1.msra.mxu0 0.0
    %388 = vmatprep.subr.mxu0 0.0
    %389 = vmatpush1.msra.mxu0 0.0
    %390 = vmatprep.subr.mxu0 0.0
    %391 = vmatpush1.msra.mxu0 0.0
    %392 = vmatprep.mubr.f32.mxu0 0.0
    %393 = vmatmul.mubr.f32.gmra.mrb[0].mxu0 %v173
    %v394 = vpop.f32.mrb[0].mxu0
    %v395 = vadd.f32 0.0, %v394
    %v396 = vpop.f32.mrb[0].mxu0
    %397 = vmatprep.mubr.f32.mxu0 0.0
    %398 = vmatmul.mubr.f32.gmra.mrb[0].mxu0 %v176
    %v399 = vpop.f32.mrb[0].mxu0
    %v400 = vadd.f32 0.0, %v399
    %v401 = vpop.f32.mrb[0].mxu0
    %402 = vdwg.mxu0
    %403 = vmatprep.subr.mxu0 0.0
    %404 = vmatpush1.msra.mxu0 %v167
    %405 = vmatprep.subr.mxu0 0.0
    %406 = vmatpush1.msra.mxu0 %v168
    %407 = vmatprep.subr.mxu0 0.0
    %408 = vmatpush1.msra.mxu0 %v169
    %409 = vmatprep.subr.mxu0 0.0
    %410 = vmatpush1.msra.mxu0 %v170
    %411 = vmatprep.subr.mxu0 0.0
    %412 = vmatpush1.msra.mxu0 0.0
    %413 = vmatprep.subr.mxu0 0.0
    %414 = vmatpush1.msra.mxu0 0.0
    %415 = vmatprep.subr.mxu0 0.0
    %416 = vmatpush1.msra.mxu0 0.0
    %417 = vmatprep.subr.mxu0 0.0
    %418 = vmatpush1.msra.mxu0 0.0
    %419 = vmatprep.subr.mxu0 0.0
    %420 = vmatpush1.msra.mxu0 0.0
    %421 = vmatprep.subr.mxu0 0.0
    %422 = vmatpush1.msra.mxu0 0.0
    %423 = vmatprep.subr.mxu0 0.0
    %424 = vmatpush1.msra.mxu0 0.0
    %425 = vmatprep.subr.mxu0 0.0
    %426 = vmatpush1.msra.mxu0 0.0
    %427 = vmatprep.subr.mxu0 0.0
    %428 = vmatpush1.msra.mxu0 0.0
    %429 = vmatprep.subr.mxu0 0.0
    %430 = vmatpush1.msra.mxu0 0.0
    %431 = vmatprep.subr.mxu0 0.0
    %432 = vmatpush1.msra.mxu0 0.0
    %433 = vmatprep.subr.mxu0 0.0
    %434 = vmatpush1.msra.mxu0 0.0
    %435 = vmatprep.subr.mxu0 0.0
    %436 = vmatpush1.msra.mxu0 0.0
    %437 = vmatprep.subr.mxu0 0.0
    %438 = vmatpush1.msra.mxu0 0.0
    %439 = vmatprep.subr.mxu0 0.0
    %440 = vmatpush1.msra.mxu0 0.0
    %441 = vmatprep.subr.mxu0 0.0
    %442 = vmatpush1.msra.mxu0 0.0
    %443 = vmatprep.subr.mxu0 0.0
    %444 = vmatpush1.msra.mxu0 0.0
    %445 = vmatprep.subr.mxu0 0.0
    %446 = vmatpush1.msra.mxu0 0.0
    %447 = vmatprep.subr.mxu0 0.0
    %448 = vmatpush1.msra.mxu0 0.0
    %449 = vmatprep.subr.mxu0 0.0
    %450 = vmatpush1.msra.mxu0 0.0
    %451 = vmatprep.subr.mxu0 0.0
    %452 = vmatpush1.msra.mxu0 0.0
    %453 = vmatprep.subr.mxu0 0.0
    %454 = vmatpush1.msra.mxu0 0.0
    %455 = vmatprep.subr.mxu0 0.0
    %456 = vmatpush1.msra.mxu0 0.0
    %457 = vmatprep.subr.mxu0 0.0
    %458 = vmatpush1.msra.mxu0 0.0
    %459 = vmatprep.subr.mxu0 0.0
    %460 = vmatpush1.msra.mxu0 0.0
    %461 = vmatprep.subr.mxu0 0.0
    %462 = vmatpush1.msra.mxu0 0.0
    %463 = vmatprep.subr.mxu0 0.0
    %464 = vmatpush1.msra.mxu0 0.0
    %465 = vmatprep.subr.mxu0 0.0
    %466 = vmatpush1.msra.mxu0 0.0
    %467 = vmatprep.mubr.f32.mxu0 0.0
    %468 = vmatmul.mubr.f32.gmra.mrb[0].mxu0 %v173
    %v469 = vpop.f32.mrb[0].mxu0
    %v470 = vadd.f32 0.0, %v469
    %v471 = vpop.f32.mrb[0].mxu0
    %472 = vmatprep.mubr.f32.mxu0 0.0
    %473 = vmatmul.mubr.f32.gmra.mrb[0].mxu0 %v176
    %v474 = vpop.f32.mrb[0].mxu0
    %v475 = vadd.f32 0.0, %v474
    %v476 = vpop.f32.mrb[0].mxu0
    %477 = vdwg.mxu0
    %s478 = scalar_lea.vmem %s5, 128
    %v479 = vld [vmem:[%s478] sm:$0xff]
    %v480 = vld [vmem:[%s478 + $0x8] sm:$0xff]
    %v481 = vld [vmem:[%s478 + $0x10] sm:$0xff]
    %v482 = vld [vmem:[%s478 + $0x18] sm:$0xff]
    %v483 = vld [vmem:[%s478 + $0x20] sm:$0xff]
    %v484 = vld [vmem:[%s478 + $0x28] sm:$0xff]
    %v485 = vld [vmem:[%s478 + $0x30] sm:$0xff]
    %v486 = vld [vmem:[%s478 + $0x38] sm:$0xff]
    %v487 = vld [vmem:[%s478 + $0x40] sm:$0xff]
    %v488 = vld [vmem:[%s478 + $0x48] sm:$0xff]
    %v489 = vld [vmem:[%s478 + $0x50] sm:$0xff]
    %v490 = vld [vmem:[%s478 + $0x58] sm:$0xff]
    %v491 = vld [vmem:[%s478 + $0x60] sm:$0xff]
    %v492 = vld [vmem:[%s478 + $0x68] sm:$0xff]
    %v493 = vld [vmem:[%s478 + $0x70] sm:$0xff]
    %v494 = vld [vmem:[%s478 + $0x78] sm:$0xff]
    %495 = vmatprep.subr.mxu0 0.0
    %496 = vmatpush1.msra.mxu0 %v479
    %497 = vmatprep.subr.mxu0 0.0
    %498 = vmatpush1.msra.mxu0 %v480
    %499 = vmatprep.subr.mxu0 0.0
    %500 = vmatpush1.msra.mxu0 %v481
    %501 = vmatprep.subr.mxu0 0.0
    %502 = vmatpush1.msra.mxu0 %v482
    %503 = vmatprep.subr.mxu0 0.0
    %504 = vmatpush1.msra.mxu0 0.0
    %505 = vmatprep.subr.mxu0 0.0
    %506 = vmatpush1.msra.mxu0 0.0
    %507 = vmatprep.subr.mxu0 0.0
    %508 = vmatpush1.msra.mxu0 0.0
    %509 = vmatprep.subr.mxu0 0.0
    %510 = vmatpush1.msra.mxu0 0.0
    %511 = vmatprep.subr.mxu0 0.0
    %512 = vmatpush1.msra.mxu0 0.0
    %513 = vmatprep.subr.mxu0 0.0
    %514 = vmatpush1.msra.mxu0 0.0
    %515 = vmatprep.subr.mxu0 0.0
    %516 = vmatpush1.msra.mxu0 0.0
    %517 = vmatprep.subr.mxu0 0.0
    %518 = vmatpush1.msra.mxu0 0.0
    %519 = vmatprep.subr.mxu0 0.0
    %520 = vmatpush1.msra.mxu0 0.0
    %521 = vmatprep.subr.mxu0 0.0
    %522 = vmatpush1.msra.mxu0 0.0
    %523 = vmatprep.subr.mxu0 0.0
    %524 = vmatpush1.msra.mxu0 0.0
    %525 = vmatprep.subr.mxu0 0.0
    %526 = vmatpush1.msra.mxu0 0.0
    %527 = vmatprep.subr.mxu0 0.0
    %528 = vmatpush1.msra.mxu0 0.0
    %529 = vmatprep.subr.mxu0 0.0
    %530 = vmatpush1.msra.mxu0 0.0
    %531 = vmatprep.subr.mxu0 0.0
    %532 = vmatpush1.msra.mxu0 0.0
    %533 = vmatprep.subr.mxu0 0.0
    %534 = vmatpush1.msra.mxu0 0.0
    %535 = vmatprep.subr.mxu0 0.0
    %536 = vmatpush1.msra.mxu0 0.0
    %537 = vmatprep.subr.mxu0 0.0
    %538 = vmatpush1.msra.mxu0 0.0
    %539 = vmatprep.subr.mxu0 0.0
    %540 = vmatpush1.msra.mxu0 0.0
    %541 = vmatprep.subr.mxu0 0.0
    %542 = vmatpush1.msra.mxu0 0.0
    %543 = vmatprep.subr.mxu0 0.0
    %544 = vmatpush1.msra.mxu0 0.0
    %545 = vmatprep.subr.mxu0 0.0
    %546 = vmatpush1.msra.mxu0 0.0
    %547 = vmatprep.subr.mxu0 0.0
    %548 = vmatpush1.msra.mxu0 0.0
    %549 = vmatprep.subr.mxu0 0.0
    %550 = vmatpush1.msra.mxu0 0.0
    %551 = vmatprep.subr.mxu0 0.0
    %552 = vmatpush1.msra.mxu0 0.0
    %553 = vmatprep.subr.mxu0 0.0
    %554 = vmatpush1.msra.mxu0 0.0
    %555 = vmatprep.subr.mxu0 0.0
    %556 = vmatpush1.msra.mxu0 0.0
    %557 = vmatprep.subr.mxu0 0.0
    %558 = vmatpush1.msra.mxu0 0.0
    %559 = vmatprep.mubr.f32.mxu0 0.0
    %560 = vmatmul.mubr.f32.gmra.mrb[0].mxu0 %v173
    %v561 = vpop.f32.mrb[0].mxu0
    %v562 = vadd.f32 0.0, %v561
    %v563 = vpop.f32.mrb[0].mxu0
    %564 = vmatprep.mubr.f32.mxu0 0.0
    %565 = vmatmul.mubr.f32.gmra.mrb[0].mxu0 %v176
    %v566 = vpop.f32.mrb[0].mxu0
    %v567 = vadd.f32 0.0, %v566
    %v568 = vpop.f32.mrb[0].mxu0
    %569 = vdwg.mxu0
    %570 = vmatprep.subr.mxu0 0.0
    %571 = vmatpush1.msra.mxu0 %v483
    %572 = vmatprep.subr.mxu0 0.0
    %573 = vmatpush1.msra.mxu0 %v484
    %574 = vmatprep.subr.mxu0 0.0
    %575 = vmatpush1.msra.mxu0 %v485
    %576 = vmatprep.subr.mxu0 0.0
    %577 = vmatpush1.msra.mxu0 %v486
    %578 = vmatprep.subr.mxu0 0.0
    %579 = vmatpush1.msra.mxu0 0.0
    %580 = vmatprep.subr.mxu0 0.0
    %581 = vmatpush1.msra.mxu0 0.0
    %582 = vmatprep.subr.mxu0 0.0
    %583 = vmatpush1.msra.mxu0 0.0
    %584 = vmatprep.subr.mxu0 0.0
    %585 = vmatpush1.msra.mxu0 0.0
    %586 = vmatprep.subr.mxu0 0.0
    %587 = vmatpush1.msra.mxu0 0.0
    %588 = vmatprep.subr.mxu0 0.0
    %589 = vmatpush1.msra.mxu0 0.0
    %590 = vmatprep.subr.mxu0 0.0
    %591 = vmatpush1.msra.mxu0 0.0
    %592 = vmatprep.subr.mxu0 0.0
    %593 = vmatpush1.msra.mxu0 0.0
    %594 = vmatprep.subr.mxu0 0.0
    %595 = vmatpush1.msra.mxu0 0.0
    %596 = vmatprep.subr.mxu0 0.0
    %597 = vmatpush1.msra.mxu0 0.0
    %598 = vmatprep.subr.mxu0 0.0
    %599 = vmatpush1.msra.mxu0 0.0
    %600 = vmatprep.subr.mxu0 0.0
    %601 = vmatpush1.msra.mxu0 0.0
    %602 = vmatprep.subr.mxu0 0.0
    %603 = vmatpush1.msra.mxu0 0.0
    %604 = vmatprep.subr.mxu0 0.0
    %605 = vmatpush1.msra.mxu0 0.0
    %606 = vmatprep.subr.mxu0 0.0
    %607 = vmatpush1.msra.mxu0 0.0
    %608 = vmatprep.subr.mxu0 0.0
    %609 = vmatpush1.msra.mxu0 0.0
    %610 = vmatprep.subr.mxu0 0.0
    %611 = vmatpush1.msra.mxu0 0.0
    %612 = vmatprep.subr.mxu0 0.0
    %613 = vmatpush1.msra.mxu0 0.0
    %614 = vmatprep.subr.mxu0 0.0
    %615 = vmatpush1.msra.mxu0 0.0
    %616 = vmatprep.subr.mxu0 0.0
    %617 = vmatpush1.msra.mxu0 0.0
    %618 = vmatprep.subr.mxu0 0.0
    %619 = vmatpush1.msra.mxu0 0.0
    %620 = vmatprep.subr.mxu0 0.0
    %621 = vmatpush1.msra.mxu0 0.0
    %622 = vmatprep.subr.mxu0 0.0
    %623 = vmatpush1.msra.mxu0 0.0
    %624 = vmatprep.subr.mxu0 0.0
    %625 = vmatpush1.msra.mxu0 0.0
    %626 = vmatprep.subr.mxu0 0.0
    %627 = vmatpush1.msra.mxu0 0.0
    %628 = vmatprep.subr.mxu0 0.0
    %629 = vmatpush1.msra.mxu0 0.0
    %630 = vmatprep.subr.mxu0 0.0
    %631 = vmatpush1.msra.mxu0 0.0
    %632 = vmatprep.subr.mxu0 0.0
    %633 = vmatpush1.msra.mxu0 0.0
    %634 = vmatprep.mubr.f32.mxu0 0.0
    %635 = vmatmul.mubr.f32.gmra.mrb[0].mxu0 %v173
    %v636 = vpop.f32.mrb[0].mxu0
    %v637 = vadd.f32 0.0, %v636
    %v638 = vpop.f32.mrb[0].mxu0
    %639 = vmatprep.mubr.f32.mxu0 0.0
    %640 = vmatmul.mubr.f32.gmra.mrb[0].mxu0 %v176
    %v641 = vpop.f32.mrb[0].mxu0
    %v642 = vadd.f32 0.0, %v641
    %v643 = vpop.f32.mrb[0].mxu0
    %644 = vdwg.mxu0
    %645 = vmatprep.subr.mxu0 0.0
    %646 = vmatpush1.msra.mxu0 %v487
    %647 = vmatprep.subr.mxu0 0.0
    %648 = vmatpush1.msra.mxu0 %v488
    %649 = vmatprep.subr.mxu0 0.0
    %650 = vmatpush1.msra.mxu0 %v489
    %651 = vmatprep.subr.mxu0 0.0
    %652 = vmatpush1.msra.mxu0 %v490
    %653 = vmatprep.subr.mxu0 0.0
    %654 = vmatpush1.msra.mxu0 0.0
    %655 = vmatprep.subr.mxu0 0.0
    %656 = vmatpush1.msra.mxu0 0.0
    %657 = vmatprep.subr.mxu0 0.0
    %658 = vmatpush1.msra.mxu0 0.0
    %659 = vmatprep.subr.mxu0 0.0
    %660 = vmatpush1.msra.mxu0 0.0
    %661 = vmatprep.subr.mxu0 0.0
    %662 = vmatpush1.msra.mxu0 0.0
    %663 = vmatprep.subr.mxu0 0.0
    %664 = vmatpush1.msra.mxu0 0.0
    %665 = vmatprep.subr.mxu0 0.0
    %666 = vmatpush1.msra.mxu0 0.0
    %667 = vmatprep.subr.mxu0 0.0
    %668 = vmatpush1.msra.mxu0 0.0
    %669 = vmatprep.subr.mxu0 0.0
    %670 = vmatpush1.msra.mxu0 0.0
    %671 = vmatprep.subr.mxu0 0.0
    %672 = vmatpush1.msra.mxu0 0.0
    %673 = vmatprep.subr.mxu0 0.0
    %674 = vmatpush1.msra.mxu0 0.0
    %675 = vmatprep.subr.mxu0 0.0
    %676 = vmatpush1.msra.mxu0 0.0
    %677 = vmatprep.subr.mxu0 0.0
    %678 = vmatpush1.msra.mxu0 0.0
    %679 = vmatprep.subr.mxu0 0.0
    %680 = vmatpush1.msra.mxu0 0.0
    %681 = vmatprep.subr.mxu0 0.0
    %682 = vmatpush1.msra.mxu0 0.0
    %683 = vmatprep.subr.mxu0 0.0
    %684 = vmatpush1.msra.mxu0 0.0
    %685 = vmatprep.subr.mxu0 0.0
    %686 = vmatpush1.msra.mxu0 0.0
    %687 = vmatprep.subr.mxu0 0.0
    %688 = vmatpush1.msra.mxu0 0.0
    %689 = vmatprep.subr.mxu0 0.0
    %690 = vmatpush1.msra.mxu0 0.0
    %691 = vmatprep.subr.mxu0 0.0
    %692 = vmatpush1.msra.mxu0 0.0
    %693 = vmatprep.subr.mxu0 0.0
    %694 = vmatpush1.msra.mxu0 0.0
    %695 = vmatprep.subr.mxu0 0.0
    %696 = vmatpush1.msra.mxu0 0.0
    %697 = vmatprep.subr.mxu0 0.0
    %698 = vmatpush1.msra.mxu0 0.0
    %699 = vmatprep.subr.mxu0 0.0
    %700 = vmatpush1.msra.mxu0 0.0
    %701 = vmatprep.subr.mxu0 0.0
    %702 = vmatpush1.msra.mxu0 0.0
    %703 = vmatprep.subr.mxu0 0.0
    %704 = vmatpush1.msra.mxu0 0.0
    %705 = vmatprep.subr.mxu0 0.0
    %706 = vmatpush1.msra.mxu0 0.0
    %707 = vmatprep.subr.mxu0 0.0
    %708 = vmatpush1.msra.mxu0 0.0
    %709 = vmatprep.mubr.f32.mxu0 0.0
    %710 = vmatmul.mubr.f32.gmra.mrb[0].mxu0 %v173
    %v711 = vpop.f32.mrb[0].mxu0
    %v712 = vadd.f32 0.0, %v711
    %v713 = vpop.f32.mrb[0].mxu0
    %714 = vmatprep.mubr.f32.mxu0 0.0
    %715 = vmatmul.mubr.f32.gmra.mrb[0].mxu0 %v176
    %v716 = vpop.f32.mrb[0].mxu0
    %v717 = vadd.f32 0.0, %v716
    %v718 = vpop.f32.mrb[0].mxu0
    %719 = vdwg.mxu0
    %720 = vmatprep.subr.mxu0 0.0
    %721 = vmatpush1.msra.mxu0 %v491
    %722 = vmatprep.subr.mxu0 0.0
    %723 = vmatpush1.msra.mxu0 %v492
    %724 = vmatprep.subr.mxu0 0.0
    %725 = vmatpush1.msra.mxu0 %v493
    %726 = vmatprep.subr.mxu0 0.0
    %727 = vmatpush1.msra.mxu0 %v494
    %728 = vmatprep.subr.mxu0 0.0
    %729 = vmatpush1.msra.mxu0 0.0
    %730 = vmatprep.subr.mxu0 0.0
    %731 = vmatpush1.msra.mxu0 0.0
    %732 = vmatprep.subr.mxu0 0.0
    %733 = vmatpush1.msra.mxu0 0.0
    %734 = vmatprep.subr.mxu0 0.0
    %735 = vmatpush1.msra.mxu0 0.0
    %736 = vmatprep.subr.mxu0 0.0
    %737 = vmatpush1.msra.mxu0 0.0
    %738 = vmatprep.subr.mxu0 0.0
    %739 = vmatpush1.msra.mxu0 0.0
    %740 = vmatprep.subr.mxu0 0.0
    %741 = vmatpush1.msra.mxu0 0.0
    %742 = vmatprep.subr.mxu0 0.0
    %743 = vmatpush1.msra.mxu0 0.0
    %744 = vmatprep.subr.mxu0 0.0
    %745 = vmatpush1.msra.mxu0 0.0
    %746 = vmatprep.subr.mxu0 0.0
    %747 = vmatpush1.msra.mxu0 0.0
    %748 = vmatprep.subr.mxu0 0.0
    %749 = vmatpush1.msra.mxu0 0.0
    %750 = vmatprep.subr.mxu0 0.0
    %751 = vmatpush1.msra.mxu0 0.0
    %752 = vmatprep.subr.mxu0 0.0
    %753 = vmatpush1.msra.mxu0 0.0
    %754 = vmatprep.subr.mxu0 0.0
    %755 = vmatpush1.msra.mxu0 0.0
    %756 = vmatprep.subr.mxu0 0.0
    %757 = vmatpush1.msra.mxu0 0.0
    %758 = vmatprep.subr.mxu0 0.0
    %759 = vmatpush1.msra.mxu0 0.0
    %760 = vmatprep.subr.mxu0 0.0
    %761 = vmatpush1.msra.mxu0 0.0
    %762 = vmatprep.subr.mxu0 0.0
    %763 = vmatpush1.msra.mxu0 0.0
    %764 = vmatprep.subr.mxu0 0.0
    %765 = vmatpush1.msra.mxu0 0.0
    %766 = vmatprep.subr.mxu0 0.0
    %767 = vmatpush1.msra.mxu0 0.0
    %768 = vmatprep.subr.mxu0 0.0
    %769 = vmatpush1.msra.mxu0 0.0
    %770 = vmatprep.subr.mxu0 0.0
    %771 = vmatpush1.msra.mxu0 0.0
    %772 = vmatprep.subr.mxu0 0.0
    %773 = vmatpush1.msra.mxu0 0.0
    %774 = vmatprep.subr.mxu0 0.0
    %775 = vmatpush1.msra.mxu0 0.0
    %776 = vmatprep.subr.mxu0 0.0
    %777 = vmatpush1.msra.mxu0 0.0
    %778 = vmatprep.subr.mxu0 0.0
    %779 = vmatpush1.msra.mxu0 0.0
    %780 = vmatprep.subr.mxu0 0.0
    %781 = vmatpush1.msra.mxu0 0.0
    %782 = vmatprep.subr.mxu0 0.0
    %783 = vmatpush1.msra.mxu0 0.0
    %784 = vmatprep.mubr.f32.mxu0 0.0
    %785 = vmatmul.mubr.f32.gmra.mrb[0].mxu0 %v173
    %v786 = vpop.f32.mrb[0].mxu0
    %v787 = vadd.f32 0.0, %v786
    %v788 = vpop.f32.mrb[0].mxu0
    %789 = vmatprep.mubr.f32.mxu0 0.0
    %790 = vmatmul.mubr.f32.gmra.mrb[0].mxu0 %v176
    %v791 = vpop.f32.mrb[0].mxu0
    %v792 = vadd.f32 0.0, %v791
    %v793 = vpop.f32.mrb[0].mxu0
    %794 = vdwg.mxu0
    %s795 = scalar_lea.vmem %s5, 256
    %v796 = vld [vmem:[%s795] sm:$0xff]
    %v797 = vld [vmem:[%s795 + $0x8] sm:$0xff]
    %v798 = vld [vmem:[%s795 + $0x10] sm:$0xff]
    %v799 = vld [vmem:[%s795 + $0x18] sm:$0xff]
    %v800 = vld [vmem:[%s795 + $0x20] sm:$0xff]
    %v801 = vld [vmem:[%s795 + $0x28] sm:$0xff]
    %v802 = vld [vmem:[%s795 + $0x30] sm:$0xff]
    %v803 = vld [vmem:[%s795 + $0x38] sm:$0xff]
    %v804 = vld [vmem:[%s795 + $0x40] sm:$0xff]
    %v805 = vld [vmem:[%s795 + $0x48] sm:$0xff]
    %v806 = vld [vmem:[%s795 + $0x50] sm:$0xff]
    %v807 = vld [vmem:[%s795 + $0x58] sm:$0xff]
    %v808 = vld [vmem:[%s795 + $0x60] sm:$0xff]
    %v809 = vld [vmem:[%s795 + $0x68] sm:$0xff]
    %v810 = vld [vmem:[%s795 + $0x70] sm:$0xff]
    %v811 = vld [vmem:[%s795 + $0x78] sm:$0xff]
    %812 = vmatprep.subr.mxu0 0.0
    %813 = vmatpush1.msra.mxu0 %v796
    %814 = vmatprep.subr.mxu0 0.0
    %815 = vmatpush1.msra.mxu0 %v797
    %816 = vmatprep.subr.mxu0 0.0
    %817 = vmatpush1.msra.mxu0 %v798
    %818 = vmatprep.subr.mxu0 0.0
    %819 = vmatpush1.msra.mxu0 %v799
    %820 = vmatprep.subr.mxu0 0.0
    %821 = vmatpush1.msra.mxu0 0.0
    %822 = vmatprep.subr.mxu0 0.0
    %823 = vmatpush1.msra.mxu0 0.0
    %824 = vmatprep.subr.mxu0 0.0
    %825 = vmatpush1.msra.mxu0 0.0
    %826 = vmatprep.subr.mxu0 0.0
    %827 = vmatpush1.msra.mxu0 0.0
    %828 = vmatprep.subr.mxu0 0.0
    %829 = vmatpush1.msra.mxu0 0.0
    %830 = vmatprep.subr.mxu0 0.0
    %831 = vmatpush1.msra.mxu0 0.0
    %832 = vmatprep.subr.mxu0 0.0
    %833 = vmatpush1.msra.mxu0 0.0
    %834 = vmatprep.subr.mxu0 0.0
    %835 = vmatpush1.msra.mxu0 0.0
    %836 = vmatprep.subr.mxu0 0.0
    %837 = vmatpush1.msra.mxu0 0.0
    %838 = vmatprep.subr.mxu0 0.0
    %839 = vmatpush1.msra.mxu0 0.0
    %840 = vmatprep.subr.mxu0 0.0
    %841 = vmatpush1.msra.mxu0 0.0
    %842 = vmatprep.subr.mxu0 0.0
    %843 = vmatpush1.msra.mxu0 0.0
    %844 = vmatprep.subr.mxu0 0.0
    %845 = vmatpush1.msra.mxu0 0.0
    %846 = vmatprep.subr.mxu0 0.0
    %847 = vmatpush1.msra.mxu0 0.0
    %848 = vmatprep.subr.mxu0 0.0
    %849 = vmatpush1.msra.mxu0 0.0
    %850 = vmatprep.subr.mxu0 0.0
    %851 = vmatpush1.msra.mxu0 0.0
    %852 = vmatprep.subr.mxu0 0.0
    %853 = vmatpush1.msra.mxu0 0.0
    %854 = vmatprep.subr.mxu0 0.0
    %855 = vmatpush1.msra.mxu0 0.0
    %856 = vmatprep.subr.mxu0 0.0
    %857 = vmatpush1.msra.mxu0 0.0
    %858 = vmatprep.subr.mxu0 0.0
    %859 = vmatpush1.msra.mxu0 0.0
    %860 = vmatprep.subr.mxu0 0.0
    %861 = vmatpush1.msra.mxu0 0.0
    %862 = vmatprep.subr.mxu0 0.0
    %863 = vmatpush1.msra.mxu0 0.0
    %864 = vmatprep.subr.mxu0 0.0
    %865 = vmatpush1.msra.mxu0 0.0
    %866 = vmatprep.subr.mxu0 0.0
    %867 = vmatpush1.msra.mxu0 0.0
    %868 = vmatprep.subr.mxu0 0.0
    %869 = vmatpush1.msra.mxu0 0.0
    %870 = vmatprep.subr.mxu0 0.0
    %871 = vmatpush1.msra.mxu0 0.0
    %872 = vmatprep.subr.mxu0 0.0
    %873 = vmatpush1.msra.mxu0 0.0
    %874 = vmatprep.subr.mxu0 0.0
    %875 = vmatpush1.msra.mxu0 0.0
    %876 = vmatprep.mubr.f32.mxu0 0.0
    %877 = vmatmul.mubr.f32.gmra.mrb[0].mxu0 %v173
    %v878 = vpop.f32.mrb[0].mxu0
    %v879 = vadd.f32 0.0, %v878
    %v880 = vpop.f32.mrb[0].mxu0
    %881 = vmatprep.mubr.f32.mxu0 0.0
    %882 = vmatmul.mubr.f32.gmra.mrb[0].mxu0 %v176
    %v883 = vpop.f32.mrb[0].mxu0
    %v884 = vadd.f32 0.0, %v883
    %v885 = vpop.f32.mrb[0].mxu0
    %886 = vdwg.mxu0
    %887 = vmatprep.subr.mxu0 0.0
    %888 = vmatpush1.msra.mxu0 %v800
    %889 = vmatprep.subr.mxu0 0.0
    %890 = vmatpush1.msra.mxu0 %v801
    %891 = vmatprep.subr.mxu0 0.0
    %892 = vmatpush1.msra.mxu0 %v802
    %893 = vmatprep.subr.mxu0 0.0
    %894 = vmatpush1.msra.mxu0 %v803
    %895 = vmatprep.subr.mxu0 0.0
    %896 = vmatpush1.msra.mxu0 0.0
    %897 = vmatprep.subr.mxu0 0.0
    %898 = vmatpush1.msra.mxu0 0.0
    %899 = vmatprep.subr.mxu0 0.0
    %900 = vmatpush1.msra.mxu0 0.0
    %901 = vmatprep.subr.mxu0 0.0
    %902 = vmatpush1.msra.mxu0 0.0
    %903 = vmatprep.subr.mxu0 0.0
    %904 = vmatpush1.msra.mxu0 0.0
    %905 = vmatprep.subr.mxu0 0.0
    %906 = vmatpush1.msra.mxu0 0.0
    %907 = vmatprep.subr.mxu0 0.0
    %908 = vmatpush1.msra.mxu0 0.0
    %909 = vmatprep.subr.mxu0 0.0
    %910 = vmatpush1.msra.mxu0 0.0
    %911 = vmatprep.subr.mxu0 0.0
    %912 = vmatpush1.msra.mxu0 0.0
    %913 = vmatprep.subr.mxu0 0.0
    %914 = vmatpush1.msra.mxu0 0.0
    %915 = vmatprep.subr.mxu0 0.0
    %916 = vmatpush1.msra.mxu0 0.0
    %917 = vmatprep.subr.mxu0 0.0
    %918 = vmatpush1.msra.mxu0 0.0
    %919 = vmatprep.subr.mxu0 0.0
    %920 = vmatpush1.msra.mxu0 0.0
    %921 = vmatprep.subr.mxu0 0.0
    %922 = vmatpush1.msra.mxu0 0.0
    %923 = vmatprep.subr.mxu0 0.0
    %924 = vmatpush1.msra.mxu0 0.0
    %925 = vmatprep.subr.mxu0 0.0
    %926 = vmatpush1.msra.mxu0 0.0
    %927 = vmatprep.subr.mxu0 0.0
    %928 = vmatpush1.msra.mxu0 0.0
    %929 = vmatprep.subr.mxu0 0.0
    %930 = vmatpush1.msra.mxu0 0.0
    %931 = vmatprep.subr.mxu0 0.0
    %932 = vmatpush1.msra.mxu0 0.0
    %933 = vmatprep.subr.mxu0 0.0
    %934 = vmatpush1.msra.mxu0 0.0
    %935 = vmatprep.subr.mxu0 0.0
    %936 = vmatpush1.msra.mxu0 0.0
    %937 = vmatprep.subr.mxu0 0.0
    %938 = vmatpush1.msra.mxu0 0.0
    %939 = vmatprep.subr.mxu0 0.0
    %940 = vmatpush1.msra.mxu0 0.0
    %941 = vmatprep.subr.mxu0 0.0
    %942 = vmatpush1.msra.mxu0 0.0
    %943 = vmatprep.subr.mxu0 0.0
    %944 = vmatpush1.msra.mxu0 0.0
    %945 = vmatprep.subr.mxu0 0.0
    %946 = vmatpush1.msra.mxu0 0.0
    %947 = vmatprep.subr.mxu0 0.0
    %948 = vmatpush1.msra.mxu0 0.0
    %949 = vmatprep.subr.mxu0 0.0
    %950 = vmatpush1.msra.mxu0 0.0
    %951 = vmatprep.mubr.f32.mxu0 0.0
    %952 = vmatmul.mubr.f32.gmra.mrb[0].mxu0 %v173
    %v953 = vpop.f32.mrb[0].mxu0
    %v954 = vadd.f32 0.0, %v953
    %v955 = vpop.f32.mrb[0].mxu0
    %956 = vmatprep.mubr.f32.mxu0 0.0
    %957 = vmatmul.mubr.f32.gmra.mrb[0].mxu0 %v176
    %v958 = vpop.f32.mrb[0].mxu0
    %v959 = vadd.f32 0.0, %v958
    %v960 = vpop.f32.mrb[0].mxu0
    %961 = vdwg.mxu0
    %962 = vmatprep.subr.mxu0 0.0
    %963 = vmatpush1.msra.mxu0 %v804
    %964 = vmatprep.subr.mxu0 0.0
    %965 = vmatpush1.msra.mxu0 %v805
    %966 = vmatprep.subr.mxu0 0.0
    %967 = vmatpush1.msra.mxu0 %v806
    %968 = vmatprep.subr.mxu0 0.0
    %969 = vmatpush1.msra.mxu0 %v807
    %970 = vmatprep.subr.mxu0 0.0
    %971 = vmatpush1.msra.mxu0 0.0
    %972 = vmatprep.subr.mxu0 0.0
    %973 = vmatpush1.msra.mxu0 0.0
    %974 = vmatprep.subr.mxu0 0.0
    %975 = vmatpush1.msra.mxu0 0.0
    %976 = vmatprep.subr.mxu0 0.0
    %977 = vmatpush1.msra.mxu0 0.0
    %978 = vmatprep.subr.mxu0 0.0
    %979 = vmatpush1.msra.mxu0 0.0
    %980 = vmatprep.subr.mxu0 0.0
    %981 = vmatpush1.msra.mxu0 0.0
    %982 = vmatprep.subr.mxu0 0.0
    %983 = vmatpush1.msra.mxu0 0.0
    %984 = vmatprep.subr.mxu0 0.0
    %985 = vmatpush1.msra.mxu0 0.0
    %986 = vmatprep.subr.mxu0 0.0
    %987 = vmatpush1.msra.mxu0 0.0
    %988 = vmatprep.subr.mxu0 0.0
    %989 = vmatpush1.msra.mxu0 0.0
    %990 = vmatprep.subr.mxu0 0.0
    %991 = vmatpush1.msra.mxu0 0.0
    %992 = vmatprep.subr.mxu0 0.0
    %993 = vmatpush1.msra.mxu0 0.0
    %994 = vmatprep.subr.mxu0 0.0
    %995 = vmatpush1.msra.mxu0 0.0
    %996 = vmatprep.subr.mxu0 0.0
    %997 = vmatpush1.msra.mxu0 0.0
    %998 = vmatprep.subr.mxu0 0.0
    %999 = vmatpush1.msra.mxu0 0.0
    %1000 = vmatprep.subr.mxu0 0.0
    %1001 = vmatpush1.msra.mxu0 0.0
    %1002 = vmatprep.subr.mxu0 0.0
    %1003 = vmatpush1.msra.mxu0 0.0
    %1004 = vmatprep.subr.mxu0 0.0
    %1005 = vmatpush1.msra.mxu0 0.0
    %1006 = vmatprep.subr.mxu0 0.0
    %1007 = vmatpush1.msra.mxu0 0.0
    %1008 = vmatprep.subr.mxu0 0.0
    %1009 = vmatpush1.msra.mxu0 0.0
    %1010 = vmatprep.subr.mxu0 0.0
    %1011 = vmatpush1.msra.mxu0 0.0
    %1012 = vmatprep.subr.mxu0 0.0
    %1013 = vmatpush1.msra.mxu0 0.0
    %1014 = vmatprep.subr.mxu0 0.0
    %1015 = vmatpush1.msra.mxu0 0.0
    %1016 = vmatprep.subr.mxu0 0.0
    %1017 = vmatpush1.msra.mxu0 0.0
    %1018 = vmatprep.subr.mxu0 0.0
    %1019 = vmatpush1.msra.mxu0 0.0
    %1020 = vmatprep.subr.mxu0 0.0
    %1021 = vmatpush1.msra.mxu0 0.0
    %1022 = vmatprep.subr.mxu0 0.0
    %1023 = vmatpush1.msra.mxu0 0.0
    %1024 = vmatprep.subr.mxu0 0.0
    %1025 = vmatpush1.msra.mxu0 0.0
    %1026 = vmatprep.mubr.f32.mxu0 0.0
    %1027 = vmatmul.mubr.f32.gmra.mrb[0].mxu0 %v173
    %v1028 = vpop.f32.mrb[0].mxu0
    %v1029 = vadd.f32 0.0, %v1028
    %v1030 = vpop.f32.mrb[0].mxu0
    %1031 = vmatprep.mubr.f32.mxu0 0.0
    %1032 = vmatmul.mubr.f32.gmra.mrb[0].mxu0 %v176
    %v1033 = vpop.f32.mrb[0].mxu0
    %v1034 = vadd.f32 0.0, %v1033
    %v1035 = vpop.f32.mrb[0].mxu0
    %1036 = vdwg.mxu0
    %1037 = vmatprep.subr.mxu0 0.0
    %1038 = vmatpush1.msra.mxu0 %v808
    %1039 = vmatprep.subr.mxu0 0.0
    %1040 = vmatpush1.msra.mxu0 %v809
    %1041 = vmatprep.subr.mxu0 0.0
    %1042 = vmatpush1.msra.mxu0 %v810
    %1043 = vmatprep.subr.mxu0 0.0
    %1044 = vmatpush1.msra.mxu0 %v811
    %1045 = vmatprep.subr.mxu0 0.0
    %1046 = vmatpush1.msra.mxu0 0.0
    %1047 = vmatprep.subr.mxu0 0.0
    %1048 = vmatpush1.msra.mxu0 0.0
    %1049 = vmatprep.subr.mxu0 0.0
    %1050 = vmatpush1.msra.mxu0 0.0
    %1051 = vmatprep.subr.mxu0 0.0
    %1052 = vmatpush1.msra.mxu0 0.0
    %1053 = vmatprep.subr.mxu0 0.0
    %1054 = vmatpush1.msra.mxu0 0.0
    %1055 = vmatprep.subr.mxu0 0.0
    %1056 = vmatpush1.msra.mxu0 0.0
    %1057 = vmatprep.subr.mxu0 0.0
    %1058 = vmatpush1.msra.mxu0 0.0
    %1059 = vmatprep.subr.mxu0 0.0
    %1060 = vmatpush1.msra.mxu0 0.0
    %1061 = vmatprep.subr.mxu0 0.0
    %1062 = vmatpush1.msra.mxu0 0.0
    %1063 = vmatprep.subr.mxu0 0.0
    %1064 = vmatpush1.msra.mxu0 0.0
    %1065 = vmatprep.subr.mxu0 0.0
    %1066 = vmatpush1.msra.mxu0 0.0
    %1067 = vmatprep.subr.mxu0 0.0
    %1068 = vmatpush1.msra.mxu0 0.0
    %1069 = vmatprep.subr.mxu0 0.0
    %1070 = vmatpush1.msra.mxu0 0.0
    %1071 = vmatprep.subr.mxu0 0.0
    %1072 = vmatpush1.msra.mxu0 0.0
    %1073 = vmatprep.subr.mxu0 0.0
    %1074 = vmatpush1.msra.mxu0 0.0
    %1075 = vmatprep.subr.mxu0 0.0
    %1076 = vmatpush1.msra.mxu0 0.0
    %1077 = vmatprep.subr.mxu0 0.0
    %1078 = vmatpush1.msra.mxu0 0.0
    %1079 = vmatprep.subr.mxu0 0.0
    %1080 = vmatpush1.msra.mxu0 0.0
    %1081 = vmatprep.subr.mxu0 0.0
    %1082 = vmatpush1.msra.mxu0 0.0
    %1083 = vmatprep.subr.mxu0 0.0
    %1084 = vmatpush1.msra.mxu0 0.0
    %1085 = vmatprep.subr.mxu0 0.0
    %1086 = vmatpush1.msra.mxu0 0.0
    %1087 = vmatprep.subr.mxu0 0.0
    %1088 = vmatpush1.msra.mxu0 0.0
    %1089 = vmatprep.subr.mxu0 0.0
    %1090 = vmatpush1.msra.mxu0 0.0
    %1091 = vmatprep.subr.mxu0 0.0
    %1092 = vmatpush1.msra.mxu0 0.0
    %1093 = vmatprep.subr.mxu0 0.0
    %1094 = vmatpush1.msra.mxu0 0.0
    %1095 = vmatprep.subr.mxu0 0.0
    %1096 = vmatpush1.msra.mxu0 0.0
    %1097 = vmatprep.subr.mxu0 0.0
    %1098 = vmatpush1.msra.mxu0 0.0
    %1099 = vmatprep.subr.mxu0 0.0
    %1100 = vmatpush1.msra.mxu0 0.0
    %1101 = vmatprep.mubr.f32.mxu0 0.0
    %1102 = vmatmul.mubr.f32.gmra.mrb[0].mxu0 %v173
    %v1103 = vpop.f32.mrb[0].mxu0
    %v1104 = vadd.f32 0.0, %v1103
    %v1105 = vpop.f32.mrb[0].mxu0
    %1106 = vmatprep.mubr.f32.mxu0 0.0
    %1107 = vmatmul.mubr.f32.gmra.mrb[0].mxu0 %v176
    %v1108 = vpop.f32.mrb[0].mxu0
    %v1109 = vadd.f32 0.0, %v1108
    %v1110 = vpop.f32.mrb[0].mxu0
    %1111 = vdwg.mxu0
    %v1112 = vld [vmem:[%s6] sm:$0xff]
    %v1113 = vld [vmem:[%s6 + $0x8] sm:$0xff]
    %v1114 = vld [vmem:[%s6 + $0x10] sm:$0xff]
    %v1115 = vld [vmem:[%s6 + $0x18] sm:$0xff]
    %v1116 = vld [vmem:[%s6 + $0x20] sm:$0xff]
    %v1117 = vld [vmem:[%s6 + $0x28] sm:$0xff]
    %v1118 = vld [vmem:[%s6 + $0x30] sm:$0xff]
    %v1119 = vld [vmem:[%s6 + $0x38] sm:$0xff]
    %v1120 = vadd.f32 %v245, %v1112
    %v1121 = vadd.f32 %v250, %v1113
    %v1122 = vadd.f32 %v320, %v1114
    %v1123 = vadd.f32 %v325, %v1115
    %v1124 = vadd.f32 %v395, %v1116
    %v1125 = vadd.f32 %v400, %v1117
    %v1126 = vadd.f32 %v470, %v1118
    %v1127 = vadd.f32 %v475, %v1119
    %s1128 = scalar_lea.vmem %s6, 64
    %v1129 = vld [vmem:[%s1128] sm:$0xff]
    %v1130 = vld [vmem:[%s1128 + $0x8] sm:$0xff]
    %v1131 = vld [vmem:[%s1128 + $0x10] sm:$0xff]
    %v1132 = vld [vmem:[%s1128 + $0x18] sm:$0xff]
    %v1133 = vld [vmem:[%s1128 + $0x20] sm:$0xff]
    %v1134 = vld [vmem:[%s1128 + $0x28] sm:$0xff]
    %v1135 = vld [vmem:[%s1128 + $0x30] sm:$0xff]
    %v1136 = vld [vmem:[%s1128 + $0x38] sm:$0xff]
    %v1137 = vadd.f32 %v562, %v1129
    %v1138 = vadd.f32 %v567, %v1130
    %v1139 = vadd.f32 %v637, %v1131
    %v1140 = vadd.f32 %v642, %v1132
    %v1141 = vadd.f32 %v712, %v1133
    %v1142 = vadd.f32 %v717, %v1134
    %v1143 = vadd.f32 %v787, %v1135
    %v1144 = vadd.f32 %v792, %v1136
    %s1145 = scalar_lea.vmem %s6, 128
    %v1146 = vld [vmem:[%s1145] sm:$0xff]
    %v1147 = vld [vmem:[%s1145 + $0x8] sm:$0xff]
    %v1148 = vld [vmem:[%s1145 + $0x10] sm:$0xff]
    %v1149 = vld [vmem:[%s1145 + $0x18] sm:$0xff]
    %v1150 = vld [vmem:[%s1145 + $0x20] sm:$0xff]
    %v1151 = vld [vmem:[%s1145 + $0x28] sm:$0xff]
    %v1152 = vld [vmem:[%s1145 + $0x30] sm:$0xff]
    %v1153 = vld [vmem:[%s1145 + $0x38] sm:$0xff]
    %v1154 = vadd.f32 %v879, %v1146
    %v1155 = vadd.f32 %v884, %v1147
    %v1156 = vadd.f32 %v954, %v1148
    %v1157 = vadd.f32 %v959, %v1149
    %v1158 = vadd.f32 %v1029, %v1150
    %v1159 = vadd.f32 %v1034, %v1151
    %v1160 = vadd.f32 %v1104, %v1152
    %v1161 = vadd.f32 %v1109, %v1153
    %vm1162 = vcmask 64512
    %v1164 = vsel %vm1162, %v1120, 0
    %v1167 = vsel %vm1162, %v1121, 0
    %v1170 = vsel %vm1162, %v1122, 0
    %v1173 = vsel %vm1162, %v1123, 0
    %v1176 = vsel %vm1162, %v1124, 0
    %v1179 = vsel %vm1162, %v1125, 0
    %v1182 = vsel %vm1162, %v1126, 0
    %v1185 = vsel %vm1162, %v1127, 0
    %v1188 = vsel %vm1162, %v1137, 0
    %v1191 = vsel %vm1162, %v1138, 0
    %v1194 = vsel %vm1162, %v1139, 0
    %v1197 = vsel %vm1162, %v1140, 0
    %v1200 = vsel %vm1162, %v1141, 0
    %v1203 = vsel %vm1162, %v1142, 0
    %v1206 = vsel %vm1162, %v1143, 0
    %v1209 = vsel %vm1162, %v1144, 0
    %1211 = vmatprep.subr.mxu0 0.0
    %1212 = vmatpush1.xpose.msra.mxu0 %v1188
    %1213 = vmatprep.subr.mxu0 0.0
    %1214 = vmatpush1.xpose.msra.mxu0 %v1191
    %1215 = vmatprep.subr.mxu0 0.0
    %1216 = vmatpush1.xpose.msra.mxu0 %v1194
    %1217 = vmatprep.subr.mxu0 0.0
    %1218 = vmatpush1.xpose.msra.mxu0 %v1197
    %1219 = vmatprep.subr.mxu0 0.0
    %1220 = vmatpush1.xpose.msra.mxu0 %v1200
    %1221 = vmatprep.subr.mxu0 0.0
    %1222 = vmatpush1.xpose.msra.mxu0 %v1203
    %1223 = vmatprep.subr.mxu0 0.0
    %1224 = vmatpush1.xpose.msra.mxu0 %v1206
    %1225 = vmatprep.subr.mxu0 0.0
    %1226 = vmatpush1.xpose.msra.mxu0 %v1209
    %1227 = vmatprep.subr.mxu0 0.0
    %1228 = vmatpush1.xpose.msra.mxu0 0.0
    %1229 = vmatprep.subr.mxu0 0.0
    %1230 = vmatpush1.xpose.msra.mxu0 0.0
    %1231 = vmatprep.subr.mxu0 0.0
    %1232 = vmatpush1.xpose.msra.mxu0 0.0
    %1233 = vmatprep.subr.mxu0 0.0
    %1234 = vmatpush1.xpose.msra.mxu0 0.0
    %1235 = vmatprep.subr.mxu0 0.0
    %1236 = vmatpush1.xpose.msra.mxu0 0.0
    %1237 = vmatprep.subr.mxu0 0.0
    %1238 = vmatpush1.xpose.msra.mxu0 0.0
    %1239 = vmatprep.subr.mxu0 0.0
    %1240 = vmatpush1.xpose.msra.mxu0 0.0
    %1241 = vmatprep.subr.mxu0 0.0
    %1242 = vmatpush1.xpose.msra.mxu0 0.0
    %1243 = vmatprep.subr.mxu0 0.0
    %1244 = vmatpush1.xpose.msra.mxu0 0.0
    %1245 = vmatprep.subr.mxu0 0.0
    %1246 = vmatpush1.xpose.msra.mxu0 0.0
    %1247 = vmatprep.subr.mxu0 0.0
    %1248 = vmatpush1.xpose.msra.mxu0 0.0
    %1249 = vmatprep.subr.mxu0 0.0
    %1250 = vmatpush1.xpose.msra.mxu0 0.0
    %1251 = vmatprep.subr.mxu0 0.0
    %1252 = vmatpush1.xpose.msra.mxu0 0.0
    %1253 = vmatprep.subr.mxu0 0.0
    %1254 = vmatpush1.xpose.msra.mxu0 0.0
    %1255 = vmatprep.subr.mxu0 0.0
    %1256 = vmatpush1.xpose.msra.mxu0 0.0
    %1257 = vmatprep.subr.mxu0 0.0
    %1258 = vmatpush1.xpose.msra.mxu0 0.0
    %1259 = vmatprep.subr.mxu0 0.0
    %1260 = vmatpush1.xpose.msra.mxu0 0.0
    %1261 = vmatprep.subr.mxu0 0.0
    %1262 = vmatpush1.xpose.msra.mxu0 0.0
    %1263 = vmatprep.subr.mxu0 0.0
    %1264 = vmatpush1.xpose.msra.mxu0 0.0
    %1265 = vmatprep.subr.mxu0 0.0
    %1266 = vmatpush1.xpose.msra.mxu0 0.0
    %1267 = vmatprep.subr.mxu0 0.0
    %1268 = vmatpush1.xpose.msra.mxu0 0.0
    %1269 = vmatprep.subr.mxu0 0.0
    %1270 = vmatpush1.xpose.msra.mxu0 0.0
    %1271 = vmatprep.subr.mxu0 0.0
    %1272 = vmatpush1.xpose.msra.mxu0 0.0
    %1273 = vmatprep.subr.mxu0 0.0
    %1274 = vmatpush1.xpose.msra.mxu0 0.0
    %1275 = vmatprep.mubr.f32.mxu0 0.0
    %1276 = vmatmul.mubr.f32.gmra.mrb[0].mxu0 %v1164
    %v1277 = vpop.f32.mrb[0].mxu0
    %v1278 = vadd.f32 %v146, %v1277
    %v1279 = vpop.f32.mrb[0].mxu0
    %1280 = vmatprep.mubr.f32.mxu0 0.0
    %1281 = vmatmul.mubr.f32.gmra.mrb[0].mxu0 %v1167
    %v1282 = vpop.f32.mrb[0].mxu0
    %v1283 = vadd.f32 %v147, %v1282
    %v1284 = vpop.f32.mrb[0].mxu0
    %1285 = vmatprep.mubr.f32.mxu0 0.0
    %1286 = vmatmul.mubr.f32.gmra.mrb[0].mxu0 %v1170
    %v1287 = vpop.f32.mrb[0].mxu0
    %v1288 = vadd.f32 %v148, %v1287
    %v1289 = vpop.f32.mrb[0].mxu0
    %1290 = vmatprep.mubr.f32.mxu0 0.0
    %1291 = vmatmul.mubr.f32.gmra.mrb[0].mxu0 %v1173
    %v1292 = vpop.f32.mrb[0].mxu0
    %v1293 = vadd.f32 %v149, %v1292
    %v1294 = vpop.f32.mrb[0].mxu0
    %1295 = vmatprep.mubr.f32.mxu0 0.0
    %1296 = vmatmul.mubr.f32.gmra.mrb[0].mxu0 %v1176
    %v1297 = vpop.f32.mrb[0].mxu0
    %v1298 = vadd.f32 %v150, %v1297
    %v1299 = vpop.f32.mrb[0].mxu0
    %1300 = vmatprep.mubr.f32.mxu0 0.0
    %1301 = vmatmul.mubr.f32.gmra.mrb[0].mxu0 %v1179
    %v1302 = vpop.f32.mrb[0].mxu0
    %v1303 = vadd.f32 %v151, %v1302
    %v1304 = vpop.f32.mrb[0].mxu0
    %1305 = vmatprep.mubr.f32.mxu0 0.0
    %1306 = vmatmul.mubr.f32.gmra.mrb[0].mxu0 %v1182
    %v1307 = vpop.f32.mrb[0].mxu0
    %v1308 = vadd.f32 %v152, %v1307
    %v1309 = vpop.f32.mrb[0].mxu0
    %1310 = vmatprep.mubr.f32.mxu0 0.0
    %1311 = vmatmul.mubr.f32.gmra.mrb[0].mxu0 %v1185
    %v1312 = vpop.f32.mrb[0].mxu0
    %v1313 = vadd.f32 %v153, %v1312
    %v1314 = vpop.f32.mrb[0].mxu0
    %1315 = vdwg.mxu0
    %v1316 = vsel %vm62, %v1278, -inf
    %1317 = vmax.xlane.f32.xlu0 %v1316
    %v1318 = vpop.xlane.xlu0 %1317
    %v1319 = vsel %vm62, %v1283, -inf
    %1320 = vmax.xlane.f32.xlu0 %v1319
    %v1321 = vpop.xlane.xlu0 %1320
    %v1322 = vsel %vm62, %v1288, -inf
    %1323 = vmax.xlane.f32.xlu0 %v1322
    %v1324 = vpop.xlane.xlu0 %1323
    %v1325 = vsel %vm62, %v1293, -inf
    %1326 = vmax.xlane.f32.xlu0 %v1325
    %v1327 = vpop.xlane.xlu0 %1326
    %v1328 = vsel %vm62, %v1298, -inf
    %1329 = vmax.xlane.f32.xlu0 %v1328
    %v1330 = vpop.xlane.xlu0 %1329
    %v1331 = vsel %vm62, %v1303, -inf
    %1332 = vmax.xlane.f32.xlu0 %v1331
    %v1333 = vpop.xlane.xlu0 %1332
    %v1334 = vsel %vm62, %v1308, -inf
    %1335 = vmax.xlane.f32.xlu0 %v1334
    %v1336 = vpop.xlane.xlu0 %1335
    %v1337 = vsel %vm62, %v1313, -inf
    %1338 = vmax.xlane.f32.xlu0 %v1337
    %v1339 = vpop.xlane.xlu0 %1338
    %v1340 = vsub.f32 %v1278, %v1318
    %v1341 = vsub.f32 %v1283, %v1321
    %v1342 = vsub.f32 %v1288, %v1324
    %v1343 = vsub.f32 %v1293, %v1327
    %v1344 = vsub.f32 %v1298, %v1330
    %v1345 = vsub.f32 %v1303, %v1333
    %v1346 = vsub.f32 %v1308, %v1336
    %v1347 = vsub.f32 %v1313, %v1339
    %v1348 = vmul.f32 %v1340, 1.442695
    %v1349 = vpow.pop %v1348
    %v1350 = vmul.f32 %v1341, 1.442695
    %v1351 = vpow.pop %v1350
    %v1352 = vmul.f32 %v1342, 1.442695
    %v1353 = vpow.pop %v1352
    %v1354 = vmul.f32 %v1343, 1.442695
    %v1355 = vpow.pop %v1354
    %v1356 = vmul.f32 %v1344, 1.442695
    %v1357 = vpow.pop %v1356
    %v1358 = vmul.f32 %v1345, 1.442695
    %v1359 = vpow.pop %v1358
    %v1360 = vmul.f32 %v1346, 1.442695
    %v1361 = vpow.pop %v1360
    %v1362 = vmul.f32 %v1347, 1.442695
    %v1363 = vpow.pop %v1362
    %v1364 = vsel %vm62, %v1349, 0.0
    %1365 = vadd.xlane.f32.xlu0 %v1364
    %v1366 = vpop.xlane.xlu0 %1365
    %v1367 = vsel %vm62, %v1351, 0.0
    %1368 = vadd.xlane.f32.xlu0 %v1367
    %v1369 = vpop.xlane.xlu0 %1368
    %v1370 = vsel %vm62, %v1353, 0.0
    %1371 = vadd.xlane.f32.xlu0 %v1370
    %v1372 = vpop.xlane.xlu0 %1371
    %v1373 = vsel %vm62, %v1355, 0.0
    %1374 = vadd.xlane.f32.xlu0 %v1373
    %v1375 = vpop.xlane.xlu0 %1374
    %v1376 = vsel %vm62, %v1357, 0.0
    %1377 = vadd.xlane.f32.xlu0 %v1376
    %v1378 = vpop.xlane.xlu0 %1377
    %v1379 = vsel %vm62, %v1359, 0.0
    %1380 = vadd.xlane.f32.xlu0 %v1379
    %v1381 = vpop.xlane.xlu0 %1380
    %v1382 = vsel %vm62, %v1361, 0.0
    %1383 = vadd.xlane.f32.xlu0 %v1382
    %v1384 = vpop.xlane.xlu0 %1383
    %v1385 = vsel %vm62, %v1363, 0.0
    %1386 = vadd.xlane.f32.xlu0 %v1385
    %v1387 = vpop.xlane.xlu0 %1386
    %v1388 = vrcp.pop %v1366
    %v1389 = vrcp.pop %v1369
    %v1390 = vrcp.pop %v1372
    %v1391 = vrcp.pop %v1375
    %v1392 = vrcp.pop %v1378
    %v1393 = vrcp.pop %v1381
    %v1394 = vrcp.pop %v1384
    %v1395 = vrcp.pop %v1387
    %v1396 = vmul.f32 %v1349, %v1388
    %v1397 = vmul.f32 %v1351, %v1389
    %v1398 = vmul.f32 %v1353, %v1390
    %v1399 = vmul.f32 %v1355, %v1391
    %v1400 = vmul.f32 %v1357, %v1392
    %v1401 = vmul.f32 %v1359, %v1393
    %v1402 = vmul.f32 %v1361, %v1394
    %v1403 = vmul.f32 %v1363, %v1395
    %v1405 = vsel %vm62, %v1396, 0
    %v1408 = vsel %vm62, %v1397, 0
    %v1411 = vsel %vm62, %v1398, 0
    %v1414 = vsel %vm62, %v1399, 0
    %v1417 = vsel %vm62, %v1400, 0
    %v1420 = vsel %vm62, %v1401, 0
    %v1423 = vsel %vm62, %v1402, 0
    %v1426 = vsel %vm62, %v1403, 0
    %1428 = vmatprep.subr.mxu0 0.0
    %1429 = vmatpush1.msra.mxu0 %v1154
    %1430 = vmatprep.subr.mxu0 0.0
    %1431 = vmatpush1.msra.mxu0 %v1155
    %1432 = vmatprep.subr.mxu0 0.0
    %1433 = vmatpush1.msra.mxu0 %v1156
    %1434 = vmatprep.subr.mxu0 0.0
    %1435 = vmatpush1.msra.mxu0 %v1157
    %1436 = vmatprep.subr.mxu0 0.0
    %1437 = vmatpush1.msra.mxu0 %v1158
    %1438 = vmatprep.subr.mxu0 0.0
    %1439 = vmatpush1.msra.mxu0 %v1159
    %1440 = vmatprep.subr.mxu0 0.0
    %1441 = vmatpush1.msra.mxu0 %v1160
    %1442 = vmatprep.subr.mxu0 0.0
    %1443 = vmatpush1.msra.mxu0 %v1161
    %1444 = vmatprep.subr.mxu0 0.0
    %1445 = vmatpush1.msra.mxu0 0.0
    %1446 = vmatprep.subr.mxu0 0.0
    %1447 = vmatpush1.msra.mxu0 0.0
    %1448 = vmatprep.subr.mxu0 0.0
    %1449 = vmatpush1.msra.mxu0 0.0
    %1450 = vmatprep.subr.mxu0 0.0
    %1451 = vmatpush1.msra.mxu0 0.0
    %1452 = vmatprep.subr.mxu0 0.0
    %1453 = vmatpush1.msra.mxu0 0.0
    %1454 = vmatprep.subr.mxu0 0.0
    %1455 = vmatpush1.msra.mxu0 0.0
    %1456 = vmatprep.subr.mxu0 0.0
    %1457 = vmatpush1.msra.mxu0 0.0
    %1458 = vmatprep.subr.mxu0 0.0
    %1459 = vmatpush1.msra.mxu0 0.0
    %1460 = vmatprep.subr.mxu0 0.0
    %1461 = vmatpush1.msra.mxu0 0.0
    %1462 = vmatprep.subr.mxu0 0.0
    %1463 = vmatpush1.msra.mxu0 0.0
    %1464 = vmatprep.subr.mxu0 0.0
    %1465 = vmatpush1.msra.mxu0 0.0
    %1466 = vmatprep.subr.mxu0 0.0
    %1467 = vmatpush1.msra.mxu0 0.0
    %1468 = vmatprep.subr.mxu0 0.0
    %1469 = vmatpush1.msra.mxu0 0.0
    %1470 = vmatprep.subr.mxu0 0.0
    %1471 = vmatpush1.msra.mxu0 0.0
    %1472 = vmatprep.subr.mxu0 0.0
    %1473 = vmatpush1.msra.mxu0 0.0
    %1474 = vmatprep.subr.mxu0 0.0
    %1475 = vmatpush1.msra.mxu0 0.0
    %1476 = vmatprep.subr.mxu0 0.0
    %1477 = vmatpush1.msra.mxu0 0.0
    %1478 = vmatprep.subr.mxu0 0.0
    %1479 = vmatpush1.msra.mxu0 0.0
    %1480 = vmatprep.subr.mxu0 0.0
    %1481 = vmatpush1.msra.mxu0 0.0
    %1482 = vmatprep.subr.mxu0 0.0
    %1483 = vmatpush1.msra.mxu0 0.0
    %1484 = vmatprep.subr.mxu0 0.0
    %1485 = vmatpush1.msra.mxu0 0.0
    %1486 = vmatprep.subr.mxu0 0.0
    %1487 = vmatpush1.msra.mxu0 0.0
    %1488 = vmatprep.subr.mxu0 0.0
    %1489 = vmatpush1.msra.mxu0 0.0
    %1490 = vmatprep.subr.mxu0 0.0
    %1491 = vmatpush1.msra.mxu0 0.0
    %1492 = vmatprep.mubr.f32.mxu0 0.0
    %1493 = vmatmul.mubr.f32.gmra.mrb[0].mxu0 %v1405
    %v1494 = vpop.f32.mrb[0].mxu0
    %v1495 = vadd.f32 0.0, %v1494
    %v1496 = vpop.f32.mrb[0].mxu0
    %1497 = vmatprep.mubr.f32.mxu0 0.0
    %1498 = vmatmul.mubr.f32.gmra.mrb[0].mxu0 %v1408
    %v1499 = vpop.f32.mrb[0].mxu0
    %v1500 = vadd.f32 0.0, %v1499
    %v1501 = vpop.f32.mrb[0].mxu0
    %1502 = vmatprep.mubr.f32.mxu0 0.0
    %1503 = vmatmul.mubr.f32.gmra.mrb[0].mxu0 %v1411
    %v1504 = vpop.f32.mrb[0].mxu0
    %v1505 = vadd.f32 0.0, %v1504
    %v1506 = vpop.f32.mrb[0].mxu0
    %1507 = vmatprep.mubr.f32.mxu0 0.0
    %1508 = vmatmul.mubr.f32.gmra.mrb[0].mxu0 %v1414
    %v1509 = vpop.f32.mrb[0].mxu0
    %v1510 = vadd.f32 0.0, %v1509
    %v1511 = vpop.f32.mrb[0].mxu0
    %1512 = vmatprep.mubr.f32.mxu0 0.0
    %1513 = vmatmul.mubr.f32.gmra.mrb[0].mxu0 %v1417
    %v1514 = vpop.f32.mrb[0].mxu0
    %v1515 = vadd.f32 0.0, %v1514
    %v1516 = vpop.f32.mrb[0].mxu0
    %1517 = vmatprep.mubr.f32.mxu0 0.0
    %1518 = vmatmul.mubr.f32.gmra.mrb[0].mxu0 %v1420
    %v1519 = vpop.f32.mrb[0].mxu0
    %v1520 = vadd.f32 0.0, %v1519
    %v1521 = vpop.f32.mrb[0].mxu0
    %1522 = vmatprep.mubr.f32.mxu0 0.0
    %1523 = vmatmul.mubr.f32.gmra.mrb[0].mxu0 %v1423
    %v1524 = vpop.f32.mrb[0].mxu0
    %v1525 = vadd.f32 0.0, %v1524
    %v1526 = vpop.f32.mrb[0].mxu0
    %1527 = vmatprep.mubr.f32.mxu0 0.0
    %1528 = vmatmul.mubr.f32.gmra.mrb[0].mxu0 %v1426
    %v1529 = vpop.f32.mrb[0].mxu0
    %v1530 = vadd.f32 0.0, %v1529
    %v1531 = vpop.f32.mrb[0].mxu0
    %1532 = vdwg.mxu0
    %v1533 = vld [vmem:[%s7] sm:$0xff]
    %v1534 = vld [vmem:[%s7 + $0x8] sm:$0xff]
    %v1535 = vld [vmem:[%s7 + $0x10] sm:$0xff]
    %v1536 = vld [vmem:[%s7 + $0x18] sm:$0xff]
    %v1538 = vsel %vm1162, %v1495, 0
    %v1541 = vsel %vm1162, %v1500, 0
    %1543 = vmatprep.subr.mxu0 0.0
    %1544 = vmatpush1.msra.mxu0 %v1533
    %1545 = vmatprep.subr.mxu0 0.0
    %1546 = vmatpush1.msra.mxu0 0.0
    %1547 = vmatprep.subr.mxu0 0.0
    %1548 = vmatpush1.msra.mxu0 0.0
    %1549 = vmatprep.subr.mxu0 0.0
    %1550 = vmatpush1.msra.mxu0 0.0
    %1551 = vmatprep.subr.mxu0 0.0
    %1552 = vmatpush1.msra.mxu0 0.0
    %1553 = vmatprep.subr.mxu0 0.0
    %1554 = vmatpush1.msra.mxu0 0.0
    %1555 = vmatprep.subr.mxu0 0.0
    %1556 = vmatpush1.msra.mxu0 0.0
    %1557 = vmatprep.subr.mxu0 0.0
    %1558 = vmatpush1.msra.mxu0 0.0
    %1559 = vmatprep.subr.mxu0 0.0
    %1560 = vmatpush1.msra.mxu0 0.0
    %1561 = vmatprep.subr.mxu0 0.0
    %1562 = vmatpush1.msra.mxu0 0.0
    %1563 = vmatprep.subr.mxu0 0.0
    %1564 = vmatpush1.msra.mxu0 0.0
    %1565 = vmatprep.subr.mxu0 0.0
    %1566 = vmatpush1.msra.mxu0 0.0
    %1567 = vmatprep.subr.mxu0 0.0
    %1568 = vmatpush1.msra.mxu0 0.0
    %1569 = vmatprep.subr.mxu0 0.0
    %1570 = vmatpush1.msra.mxu0 0.0
    %1571 = vmatprep.subr.mxu0 0.0
    %1572 = vmatpush1.msra.mxu0 0.0
    %1573 = vmatprep.subr.mxu0 0.0
    %1574 = vmatpush1.msra.mxu0 0.0
    %1575 = vmatprep.subr.mxu0 0.0
    %1576 = vmatpush1.msra.mxu0 0.0
    %1577 = vmatprep.subr.mxu0 0.0
    %1578 = vmatpush1.msra.mxu0 0.0
    %1579 = vmatprep.subr.mxu0 0.0
    %1580 = vmatpush1.msra.mxu0 0.0
    %1581 = vmatprep.subr.mxu0 0.0
    %1582 = vmatpush1.msra.mxu0 0.0
    %1583 = vmatprep.subr.mxu0 0.0
    %1584 = vmatpush1.msra.mxu0 0.0
    %1585 = vmatprep.subr.mxu0 0.0
    %1586 = vmatpush1.msra.mxu0 0.0
    %1587 = vmatprep.subr.mxu0 0.0
    %1588 = vmatpush1.msra.mxu0 0.0
    %1589 = vmatprep.subr.mxu0 0.0
    %1590 = vmatpush1.msra.mxu0 0.0
    %1591 = vmatprep.subr.mxu0 0.0
    %1592 = vmatpush1.msra.mxu0 0.0
    %1593 = vmatprep.subr.mxu0 0.0
    %1594 = vmatpush1.msra.mxu0 0.0
    %1595 = vmatprep.subr.mxu0 0.0
    %1596 = vmatpush1.msra.mxu0 0.0
    %1597 = vmatprep.subr.mxu0 0.0
    %1598 = vmatpush1.msra.mxu0 0.0
    %1599 = vmatprep.subr.mxu0 0.0
    %1600 = vmatpush1.msra.mxu0 0.0
    %1601 = vmatprep.subr.mxu0 0.0
    %1602 = vmatpush1.msra.mxu0 0.0
    %1603 = vmatprep.subr.mxu0 0.0
    %1604 = vmatpush1.msra.mxu0 0.0
    %1605 = vmatprep.subr.mxu0 0.0
    %1606 = vmatpush1.msra.mxu0 0.0
    %1607 = vmatprep.mubr.f32.mxu0 0.0
    %1608 = vmatmul.mubr.f32.gmra.mrb[0].mxu0 %v1538
    %v1609 = vpop.f32.mrb[0].mxu0
    %v1610 = vadd.f32 0.0, %v1609
    %v1611 = vpop.f32.mrb[0].mxu0
    %1612 = vmatprep.mubr.f32.mxu0 0.0
    %1613 = vmatmul.mubr.f32.gmra.mrb[0].mxu0 %v1541
    %v1614 = vpop.f32.mrb[0].mxu0
    %v1615 = vadd.f32 0.0, %v1614
    %v1616 = vpop.f32.mrb[0].mxu0
    %1617 = vdwg.mxu0
    %v1619 = vsel %vm1162, %v1505, 0
    %v1622 = vsel %vm1162, %v1510, 0
    %1624 = vmatprep.subr.mxu0 0.0
    %1625 = vmatpush1.msra.mxu0 %v1534
    %1626 = vmatprep.subr.mxu0 0.0
    %1627 = vmatpush1.msra.mxu0 0.0
    %1628 = vmatprep.subr.mxu0 0.0
    %1629 = vmatpush1.msra.mxu0 0.0
    %1630 = vmatprep.subr.mxu0 0.0
    %1631 = vmatpush1.msra.mxu0 0.0
    %1632 = vmatprep.subr.mxu0 0.0
    %1633 = vmatpush1.msra.mxu0 0.0
    %1634 = vmatprep.subr.mxu0 0.0
    %1635 = vmatpush1.msra.mxu0 0.0
    %1636 = vmatprep.subr.mxu0 0.0
    %1637 = vmatpush1.msra.mxu0 0.0
    %1638 = vmatprep.subr.mxu0 0.0
    %1639 = vmatpush1.msra.mxu0 0.0
    %1640 = vmatprep.subr.mxu0 0.0
    %1641 = vmatpush1.msra.mxu0 0.0
    %1642 = vmatprep.subr.mxu0 0.0
    %1643 = vmatpush1.msra.mxu0 0.0
    %1644 = vmatprep.subr.mxu0 0.0
    %1645 = vmatpush1.msra.mxu0 0.0
    %1646 = vmatprep.subr.mxu0 0.0
    %1647 = vmatpush1.msra.mxu0 0.0
    %1648 = vmatprep.subr.mxu0 0.0
    %1649 = vmatpush1.msra.mxu0 0.0
    %1650 = vmatprep.subr.mxu0 0.0
    %1651 = vmatpush1.msra.mxu0 0.0
    %1652 = vmatprep.subr.mxu0 0.0
    %1653 = vmatpush1.msra.mxu0 0.0
    %1654 = vmatprep.subr.mxu0 0.0
    %1655 = vmatpush1.msra.mxu0 0.0
    %1656 = vmatprep.subr.mxu0 0.0
    %1657 = vmatpush1.msra.mxu0 0.0
    %1658 = vmatprep.subr.mxu0 0.0
    %1659 = vmatpush1.msra.mxu0 0.0
    %1660 = vmatprep.subr.mxu0 0.0
    %1661 = vmatpush1.msra.mxu0 0.0
    %1662 = vmatprep.subr.mxu0 0.0
    %1663 = vmatpush1.msra.mxu0 0.0
    %1664 = vmatprep.subr.mxu0 0.0
    %1665 = vmatpush1.msra.mxu0 0.0
    %1666 = vmatprep.subr.mxu0 0.0
    %1667 = vmatpush1.msra.mxu0 0.0
    %1668 = vmatprep.subr.mxu0 0.0
    %1669 = vmatpush1.msra.mxu0 0.0
    %1670 = vmatprep.subr.mxu0 0.0
    %1671 = vmatpush1.msra.mxu0 0.0
    %1672 = vmatprep.subr.mxu0 0.0
    %1673 = vmatpush1.msra.mxu0 0.0
    %1674 = vmatprep.subr.mxu0 0.0
    %1675 = vmatpush1.msra.mxu0 0.0
    %1676 = vmatprep.subr.mxu0 0.0
    %1677 = vmatpush1.msra.mxu0 0.0
    %1678 = vmatprep.subr.mxu0 0.0
    %1679 = vmatpush1.msra.mxu0 0.0
    %1680 = vmatprep.subr.mxu0 0.0
    %1681 = vmatpush1.msra.mxu0 0.0
    %1682 = vmatprep.subr.mxu0 0.0
    %1683 = vmatpush1.msra.mxu0 0.0
    %1684 = vmatprep.subr.mxu0 0.0
    %1685 = vmatpush1.msra.mxu0 0.0
    %1686 = vmatprep.subr.mxu0 0.0
    %1687 = vmatpush1.msra.mxu0 0.0
    %1688 = vmatprep.mubr.f32.mxu0 0.0
    %1689 = vmatmul.mubr.f32.gmra.mrb[0].mxu0 %v1619
    %v1690 = vpop.f32.mrb[0].mxu0
    %v1691 = vadd.f32 0.0, %v1690
    %v1692 = vpop.f32.mrb[0].mxu0
    %1693 = vmatprep.mubr.f32.mxu0 0.0
    %1694 = vmatmul.mubr.f32.gmra.mrb[0].mxu0 %v1622
    %v1695 = vpop.f32.mrb[0].mxu0
    %v1696 = vadd.f32 0.0, %v1695
    %v1697 = vpop.f32.mrb[0].mxu0
    %1698 = vdwg.mxu0
    %v1700 = vsel %vm1162, %v1515, 0
    %v1703 = vsel %vm1162, %v1520, 0
    %1705 = vmatprep.subr.mxu0 0.0
    %1706 = vmatpush1.msra.mxu0 %v1535
    %1707 = vmatprep.subr.mxu0 0.0
    %1708 = vmatpush1.msra.mxu0 0.0
    %1709 = vmatprep.subr.mxu0 0.0
    %1710 = vmatpush1.msra.mxu0 0.0
    %1711 = vmatprep.subr.mxu0 0.0
    %1712 = vmatpush1.msra.mxu0 0.0
    %1713 = vmatprep.subr.mxu0 0.0
    %1714 = vmatpush1.msra.mxu0 0.0
    %1715 = vmatprep.subr.mxu0 0.0
    %1716 = vmatpush1.msra.mxu0 0.0
    %1717 = vmatprep.subr.mxu0 0.0
    %1718 = vmatpush1.msra.mxu0 0.0
    %1719 = vmatprep.subr.mxu0 0.0
    %1720 = vmatpush1.msra.mxu0 0.0
    %1721 = vmatprep.subr.mxu0 0.0
    %1722 = vmatpush1.msra.mxu0 0.0
    %1723 = vmatprep.subr.mxu0 0.0
    %1724 = vmatpush1.msra.mxu0 0.0
    %1725 = vmatprep.subr.mxu0 0.0
    %1726 = vmatpush1.msra.mxu0 0.0
    %1727 = vmatprep.subr.mxu0 0.0
    %1728 = vmatpush1.msra.mxu0 0.0
    %1729 = vmatprep.subr.mxu0 0.0
    %1730 = vmatpush1.msra.mxu0 0.0
    %1731 = vmatprep.subr.mxu0 0.0
    %1732 = vmatpush1.msra.mxu0 0.0
    %1733 = vmatprep.subr.mxu0 0.0
    %1734 = vmatpush1.msra.mxu0 0.0
    %1735 = vmatprep.subr.mxu0 0.0
    %1736 = vmatpush1.msra.mxu0 0.0
    %1737 = vmatprep.subr.mxu0 0.0
    %1738 = vmatpush1.msra.mxu0 0.0
    %1739 = vmatprep.subr.mxu0 0.0
    %1740 = vmatpush1.msra.mxu0 0.0
    %1741 = vmatprep.subr.mxu0 0.0
    %1742 = vmatpush1.msra.mxu0 0.0
    %1743 = vmatprep.subr.mxu0 0.0
    %1744 = vmatpush1.msra.mxu0 0.0
    %1745 = vmatprep.subr.mxu0 0.0
    %1746 = vmatpush1.msra.mxu0 0.0
    %1747 = vmatprep.subr.mxu0 0.0
    %1748 = vmatpush1.msra.mxu0 0.0
    %1749 = vmatprep.subr.mxu0 0.0
    %1750 = vmatpush1.msra.mxu0 0.0
    %1751 = vmatprep.subr.mxu0 0.0
    %1752 = vmatpush1.msra.mxu0 0.0
    %1753 = vmatprep.subr.mxu0 0.0
    %1754 = vmatpush1.msra.mxu0 0.0
    %1755 = vmatprep.subr.mxu0 0.0
    %1756 = vmatpush1.msra.mxu0 0.0
    %1757 = vmatprep.subr.mxu0 0.0
    %1758 = vmatpush1.msra.mxu0 0.0
    %1759 = vmatprep.subr.mxu0 0.0
    %1760 = vmatpush1.msra.mxu0 0.0
    %1761 = vmatprep.subr.mxu0 0.0
    %1762 = vmatpush1.msra.mxu0 0.0
    %1763 = vmatprep.subr.mxu0 0.0
    %1764 = vmatpush1.msra.mxu0 0.0
    %1765 = vmatprep.subr.mxu0 0.0
    %1766 = vmatpush1.msra.mxu0 0.0
    %1767 = vmatprep.subr.mxu0 0.0
    %1768 = vmatpush1.msra.mxu0 0.0
    %1769 = vmatprep.mubr.f32.mxu0 0.0
    %1770 = vmatmul.mubr.f32.gmra.mrb[0].mxu0 %v1700
    %v1771 = vpop.f32.mrb[0].mxu0
    %v1772 = vadd.f32 0.0, %v1771
    %v1773 = vpop.f32.mrb[0].mxu0
    %1774 = vmatprep.mubr.f32.mxu0 0.0
    %1775 = vmatmul.mubr.f32.gmra.mrb[0].mxu0 %v1703
    %v1776 = vpop.f32.mrb[0].mxu0
    %v1777 = vadd.f32 0.0, %v1776
    %v1778 = vpop.f32.mrb[0].mxu0
    %1779 = vdwg.mxu0
    %v1781 = vsel %vm1162, %v1525, 0
    %v1784 = vsel %vm1162, %v1530, 0
    %1786 = vmatprep.subr.mxu0 0.0
    %1787 = vmatpush1.msra.mxu0 %v1536
    %1788 = vmatprep.subr.mxu0 0.0
    %1789 = vmatpush1.msra.mxu0 0.0
    %1790 = vmatprep.subr.mxu0 0.0
    %1791 = vmatpush1.msra.mxu0 0.0
    %1792 = vmatprep.subr.mxu0 0.0
    %1793 = vmatpush1.msra.mxu0 0.0
    %1794 = vmatprep.subr.mxu0 0.0
    %1795 = vmatpush1.msra.mxu0 0.0
    %1796 = vmatprep.subr.mxu0 0.0
    %1797 = vmatpush1.msra.mxu0 0.0
    %1798 = vmatprep.subr.mxu0 0.0
    %1799 = vmatpush1.msra.mxu0 0.0
    %1800 = vmatprep.subr.mxu0 0.0
    %1801 = vmatpush1.msra.mxu0 0.0
    %1802 = vmatprep.subr.mxu0 0.0
    %1803 = vmatpush1.msra.mxu0 0.0
    %1804 = vmatprep.subr.mxu0 0.0
    %1805 = vmatpush1.msra.mxu0 0.0
    %1806 = vmatprep.subr.mxu0 0.0
    %1807 = vmatpush1.msra.mxu0 0.0
    %1808 = vmatprep.subr.mxu0 0.0
    %1809 = vmatpush1.msra.mxu0 0.0
    %1810 = vmatprep.subr.mxu0 0.0
    %1811 = vmatpush1.msra.mxu0 0.0
    %1812 = vmatprep.subr.mxu0 0.0
    %1813 = vmatpush1.msra.mxu0 0.0
    %1814 = vmatprep.subr.mxu0 0.0
    %1815 = vmatpush1.msra.mxu0 0.0
    %1816 = vmatprep.subr.mxu0 0.0
    %1817 = vmatpush1.msra.mxu0 0.0
    %1818 = vmatprep.subr.mxu0 0.0
    %1819 = vmatpush1.msra.mxu0 0.0
    %1820 = vmatprep.subr.mxu0 0.0
    %1821 = vmatpush1.msra.mxu0 0.0
    %1822 = vmatprep.subr.mxu0 0.0
    %1823 = vmatpush1.msra.mxu0 0.0
    %1824 = vmatprep.subr.mxu0 0.0
    %1825 = vmatpush1.msra.mxu0 0.0
    %1826 = vmatprep.subr.mxu0 0.0
    %1827 = vmatpush1.msra.mxu0 0.0
    %1828 = vmatprep.subr.mxu0 0.0
    %1829 = vmatpush1.msra.mxu0 0.0
    %1830 = vmatprep.subr.mxu0 0.0
    %1831 = vmatpush1.msra.mxu0 0.0
    %1832 = vmatprep.subr.mxu0 0.0
    %1833 = vmatpush1.msra.mxu0 0.0
    %1834 = vmatprep.subr.mxu0 0.0
    %1835 = vmatpush1.msra.mxu0 0.0
    %1836 = vmatprep.subr.mxu0 0.0
    %1837 = vmatpush1.msra.mxu0 0.0
    %1838 = vmatprep.subr.mxu0 0.0
    %1839 = vmatpush1.msra.mxu0 0.0
    %1840 = vmatprep.subr.mxu0 0.0
    %1841 = vmatpush1.msra.mxu0 0.0
    %1842 = vmatprep.subr.mxu0 0.0
    %1843 = vmatpush1.msra.mxu0 0.0
    %1844 = vmatprep.subr.mxu0 0.0
    %1845 = vmatpush1.msra.mxu0 0.0
    %1846 = vmatprep.subr.mxu0 0.0
    %1847 = vmatpush1.msra.mxu0 0.0
    %1848 = vmatprep.subr.mxu0 0.0
    %1849 = vmatpush1.msra.mxu0 0.0
    %1850 = vmatprep.mubr.f32.mxu0 0.0
    %1851 = vmatmul.mubr.f32.gmra.mrb[0].mxu0 %v1781
    %v1852 = vpop.f32.mrb[0].mxu0
    %v1853 = vadd.f32 0.0, %v1852
    %v1854 = vpop.f32.mrb[0].mxu0
    %1855 = vmatprep.mubr.f32.mxu0 0.0
    %1856 = vmatmul.mubr.f32.gmra.mrb[0].mxu0 %v1784
    %v1857 = vpop.f32.mrb[0].mxu0
    %v1858 = vadd.f32 0.0, %v1857
    %v1859 = vpop.f32.mrb[0].mxu0
    %1860 = vdwg.mxu0
    %v1861 = vsel %vm171, %v1610, 0.0
    %v1862 = vsel %vm171, %v1691, 0.0
    %v1863 = vadd.f32 %v1861, %v1862
    %v1864 = vsel %vm171, %v1772, 0.0
    %v1865 = vadd.f32 %v1863, %v1864
    %v1866 = vsel %vm171, %v1853, 0.0
    %v1867 = vadd.f32 %v1865, %v1866
    %v1868 = vsel %vm171, %v1615, 0.0
    %v1869 = vsel %vm171, %v1696, 0.0
    %v1870 = vadd.f32 %v1868, %v1869
    %v1871 = vsel %vm171, %v1777, 0.0
    %v1872 = vadd.f32 %v1870, %v1871
    %v1873 = vsel %vm171, %v1858, 0.0
    %v1874 = vadd.f32 %v1872, %v1873
    %v1876 = vlaneseq
    %v1877 = vshrl.u32 %v1876, 7
    %v1878 = vsub.s32 0, %v1877
    %v1879 = vrot.slane %v154, %v1878
    %v1881 = vadd.f32 %v1867, %v1879
    %v1882 = vadd.f32 %v1874, %v1879
    %v1883 = vadd.f32 %v136, %v1881
    %v1884 = vadd.f32 %v141, %v1882
    %s1885 = scalar_lea.vmem %s9, 1
    %v1886 = vld [vmem:[%s1885] sm:$0x1]
    %s1887 = scalar_lea.vmem %s9, 2
    %v1888 = vld [vmem:[%s1887] sm:$0x1]
    %v1889 = vsel %vm171, %v1883, 0.0
    %1890 = vadd.xlane.f32.xlu0 %v1889
    %v1891 = vpop.xlane.xlu0 %1890
    %v1892 = vsel %vm171, %v1884, 0.0
    %1893 = vadd.xlane.f32.xlu0 %v1892
    %v1894 = vpop.xlane.xlu0 %1893
    %v1895 = vrcp.pop 32.0
    %v1896 = vmul.f32 %v1891, %v1895
    %v1897 = vmul.f32 %v1894, %v1895
    %v1898 = vsub.f32 %v1883, %v1896
    %v1899 = vsub.f32 %v1884, %v1897
    %v1900 = vmul.f32 %v1898, %v1898
    %v1901 = vmul.f32 %v1899, %v1899
    %v1902 = vsel %vm171, %v1900, 0.0
    %1903 = vadd.xlane.f32.xlu0 %v1902
    %v1904 = vpop.xlane.xlu0 %1903
    %v1905 = vsel %vm171, %v1901, 0.0
    %1906 = vadd.xlane.f32.xlu0 %v1905
    %v1907 = vpop.xlane.xlu0 %1906
    %v1908 = vmul.f32 %v1904, %v1895
    %v1909 = vmul.f32 %v1907, %v1895
    %v1910 = vadd.f32 %v1908, 1e-05
    %v1911 = vadd.f32 %v1909, 1e-05
    %v1912 = vrsqrt.pop %v1910
    %v1913 = vrsqrt.pop %v1911
    %v1914 = vmul.f32 %v1898, %v1912
    %v1915 = vmul.f32 %v1899, %v1913
    %v1917 = vlaneseq
    %v1918 = vshrl.u32 %v1917, 7
    %v1919 = vsub.s32 0, %v1918
    %v1920 = vrot.slane %v1886, %v1919
    %v1922 = vmul.f32 %v1914, %v1920
    %v1923 = vmul.f32 %v1915, %v1920
    %v1925 = vlaneseq
    %v1926 = vshrl.u32 %v1925, 7
    %v1927 = vsub.s32 0, %v1926
    %v1928 = vrot.slane %v1888, %v1927
    %v1930 = vadd.f32 %v1922, %v1928
    %v1931 = vadd.f32 %v1923, %v1928
    %s1932 = scalar_lea.vmem %s9, 3
    %v1933 = vld [vmem:[%s1932] sm:$0x1]
    %s1934 = scalar_lea.vmem %s5, 384
    %v1935 = vld [vmem:[%s1934] sm:$0xff]
    %v1936 = vld [vmem:[%s1934 + $0x8] sm:$0xff]
    %v1937 = vld [vmem:[%s1934 + $0x10] sm:$0xff]
    %v1938 = vld [vmem:[%s1934 + $0x18] sm:$0xff]
    %v1939 = vld [vmem:[%s1934 + $0x20] sm:$0xff]
    %v1940 = vld [vmem:[%s1934 + $0x28] sm:$0xff]
    %v1941 = vld [vmem:[%s1934 + $0x30] sm:$0xff]
    %v1942 = vld [vmem:[%s1934 + $0x38] sm:$0xff]
    %v1943 = vld [vmem:[%s1934 + $0x40] sm:$0xff]
    %v1944 = vld [vmem:[%s1934 + $0x48] sm:$0xff]
    %v1945 = vld [vmem:[%s1934 + $0x50] sm:$0xff]
    %v1946 = vld [vmem:[%s1934 + $0x58] sm:$0xff]
    %v1947 = vld [vmem:[%s1934 + $0x60] sm:$0xff]
    %v1948 = vld [vmem:[%s1934 + $0x68] sm:$0xff]
    %v1949 = vld [vmem:[%s1934 + $0x70] sm:$0xff]
    %v1950 = vld [vmem:[%s1934 + $0x78] sm:$0xff]
    %v1952 = vsel %vm171, %v144, 0
    %v1955 = vsel %vm171, %v145, 0
    %1957 = vmatprep.subr.mxu0 0.0
    %1958 = vmatpush1.msra.mxu0 %v1935
    %1959 = vmatprep.subr.mxu0 0.0
    %1960 = vmatpush1.msra.mxu0 %v1936
    %1961 = vmatprep.subr.mxu0 0.0
    %1962 = vmatpush1.msra.mxu0 %v1937
    %1963 = vmatprep.subr.mxu0 0.0
    %1964 = vmatpush1.msra.mxu0 %v1938
    %1965 = vmatprep.subr.mxu0 0.0
    %1966 = vmatpush1.msra.mxu0 0.0
    %1967 = vmatprep.subr.mxu0 0.0
    %1968 = vmatpush1.msra.mxu0 0.0
    %1969 = vmatprep.subr.mxu0 0.0
    %1970 = vmatpush1.msra.mxu0 0.0
    %1971 = vmatprep.subr.mxu0 0.0
    %1972 = vmatpush1.msra.mxu0 0.0
    %1973 = vmatprep.subr.mxu0 0.0
    %1974 = vmatpush1.msra.mxu0 0.0
    %1975 = vmatprep.subr.mxu0 0.0
    %1976 = vmatpush1.msra.mxu0 0.0
    %1977 = vmatprep.subr.mxu0 0.0
    %1978 = vmatpush1.msra.mxu0 0.0
    %1979 = vmatprep.subr.mxu0 0.0
    %1980 = vmatpush1.msra.mxu0 0.0
    %1981 = vmatprep.subr.mxu0 0.0
    %1982 = vmatpush1.msra.mxu0 0.0
    %1983 = vmatprep.subr.mxu0 0.0
    %1984 = vmatpush1.msra.mxu0 0.0
    %1985 = vmatprep.subr.mxu0 0.0
    %1986 = vmatpush1.msra.mxu0 0.0
    %1987 = vmatprep.subr.mxu0 0.0
    %1988 = vmatpush1.msra.mxu0 0.0
    %1989 = vmatprep.subr.mxu0 0.0
    %1990 = vmatpush1.msra.mxu0 0.0
    %1991 = vmatprep.subr.mxu0 0.0
    %1992 = vmatpush1.msra.mxu0 0.0
    %1993 = vmatprep.subr.mxu0 0.0
    %1994 = vmatpush1.msra.mxu0 0.0
    %1995 = vmatprep.subr.mxu0 0.0
    %1996 = vmatpush1.msra.mxu0 0.0
    %1997 = vmatprep.subr.mxu0 0.0
    %1998 = vmatpush1.msra.mxu0 0.0
    %1999 = vmatprep.subr.mxu0 0.0
    %2000 = vmatpush1.msra.mxu0 0.0
    %2001 = vmatprep.subr.mxu0 0.0
    %2002 = vmatpush1.msra.mxu0 0.0
    %2003 = vmatprep.subr.mxu0 0.0
    %2004 = vmatpush1.msra.mxu0 0.0
    %2005 = vmatprep.subr.mxu0 0.0
    %2006 = vmatpush1.msra.mxu0 0.0
    %2007 = vmatprep.subr.mxu0 0.0
    %2008 = vmatpush1.msra.mxu0 0.0
    %2009 = vmatprep.subr.mxu0 0.0
    %2010 = vmatpush1.msra.mxu0 0.0
    %2011 = vmatprep.subr.mxu0 0.0
    %2012 = vmatpush1.msra.mxu0 0.0
    %2013 = vmatprep.subr.mxu0 0.0
    %2014 = vmatpush1.msra.mxu0 0.0
    %2015 = vmatprep.subr.mxu0 0.0
    %2016 = vmatpush1.msra.mxu0 0.0
    %2017 = vmatprep.subr.mxu0 0.0
    %2018 = vmatpush1.msra.mxu0 0.0
    %2019 = vmatprep.subr.mxu0 0.0
    %2020 = vmatpush1.msra.mxu0 0.0
    %2021 = vmatprep.mubr.f32.mxu0 0.0
    %2022 = vmatmul.mubr.f32.gmra.mrb[0].mxu0 %v1952
    %v2023 = vpop.f32.mrb[0].mxu0
    %v2024 = vadd.f32 0.0, %v2023
    %v2025 = vpop.f32.mrb[0].mxu0
    %2026 = vmatprep.mubr.f32.mxu0 0.0
    %2027 = vmatmul.mubr.f32.gmra.mrb[0].mxu0 %v1955
    %v2028 = vpop.f32.mrb[0].mxu0
    %v2029 = vadd.f32 0.0, %v2028
    %v2030 = vpop.f32.mrb[0].mxu0
    %2031 = vdwg.mxu0
    %2032 = vmatprep.subr.mxu0 0.0
    %2033 = vmatpush1.msra.mxu0 %v1939
    %2034 = vmatprep.subr.mxu0 0.0
    %2035 = vmatpush1.msra.mxu0 %v1940
    %2036 = vmatprep.subr.mxu0 0.0
    %2037 = vmatpush1.msra.mxu0 %v1941
    %2038 = vmatprep.subr.mxu0 0.0
    %2039 = vmatpush1.msra.mxu0 %v1942
    %2040 = vmatprep.subr.mxu0 0.0
    %2041 = vmatpush1.msra.mxu0 0.0
    %2042 = vmatprep.subr.mxu0 0.0
    %2043 = vmatpush1.msra.mxu0 0.0
    %2044 = vmatprep.subr.mxu0 0.0
    %2045 = vmatpush1.msra.mxu0 0.0
    %2046 = vmatprep.subr.mxu0 0.0
    %2047 = vmatpush1.msra.mxu0 0.0
    %2048 = vmatprep.subr.mxu0 0.0
    %2049 = vmatpush1.msra.mxu0 0.0
    %2050 = vmatprep.subr.mxu0 0.0
    %2051 = vmatpush1.msra.mxu0 0.0
    %2052 = vmatprep.subr.mxu0 0.0
    %2053 = vmatpush1.msra.mxu0 0.0
    %2054 = vmatprep.subr.mxu0 0.0
    %2055 = vmatpush1.msra.mxu0 0.0
    %2056 = vmatprep.subr.mxu0 0.0
    %2057 = vmatpush1.msra.mxu0 0.0
    %2058 = vmatprep.subr.mxu0 0.0
    %2059 = vmatpush1.msra.mxu0 0.0
    %2060 = vmatprep.subr.mxu0 0.0
    %2061 = vmatpush1.msra.mxu0 0.0
    %2062 = vmatprep.subr.mxu0 0.0
    %2063 = vmatpush1.msra.mxu0 0.0
    %2064 = vmatprep.subr.mxu0 0.0
    %2065 = vmatpush1.msra.mxu0 0.0
    %2066 = vmatprep.subr.mxu0 0.0
    %2067 = vmatpush1.msra.mxu0 0.0
    %2068 = vmatprep.subr.mxu0 0.0
    %2069 = vmatpush1.msra.mxu0 0.0
    %2070 = vmatprep.subr.mxu0 0.0
    %2071 = vmatpush1.msra.mxu0 0.0
    %2072 = vmatprep.subr.mxu0 0.0
    %2073 = vmatpush1.msra.mxu0 0.0
    %2074 = vmatprep.subr.mxu0 0.0
    %2075 = vmatpush1.msra.mxu0 0.0
    %2076 = vmatprep.subr.mxu0 0.0
    %2077 = vmatpush1.msra.mxu0 0.0
    %2078 = vmatprep.subr.mxu0 0.0
    %2079 = vmatpush1.msra.mxu0 0.0
    %2080 = vmatprep.subr.mxu0 0.0
    %2081 = vmatpush1.msra.mxu0 0.0
    %2082 = vmatprep.subr.mxu0 0.0
    %2083 = vmatpush1.msra.mxu0 0.0
    %2084 = vmatprep.subr.mxu0 0.0
    %2085 = vmatpush1.msra.mxu0 0.0
    %2086 = vmatprep.subr.mxu0 0.0
    %2087 = vmatpush1.msra.mxu0 0.0
    %2088 = vmatprep.subr.mxu0 0.0
    %2089 = vmatpush1.msra.mxu0 0.0
    %2090 = vmatprep.subr.mxu0 0.0
    %2091 = vmatpush1.msra.mxu0 0.0
    %2092 = vmatprep.subr.mxu0 0.0
    %2093 = vmatpush1.msra.mxu0 0.0
    %2094 = vmatprep.subr.mxu0 0.0
    %2095 = vmatpush1.msra.mxu0 0.0
    %2096 = vmatprep.mubr.f32.mxu0 0.0
    %2097 = vmatmul.mubr.f32.gmra.mrb[0].mxu0 %v1952
    %v2098 = vpop.f32.mrb[0].mxu0
    %v2099 = vadd.f32 0.0, %v2098
    %v2100 = vpop.f32.mrb[0].mxu0
    %2101 = vmatprep.mubr.f32.mxu0 0.0
    %2102 = vmatmul.mubr.f32.gmra.mrb[0].mxu0 %v1955
    %v2103 = vpop.f32.mrb[0].mxu0
    %v2104 = vadd.f32 0.0, %v2103
    %v2105 = vpop.f32.mrb[0].mxu0
    %2106 = vdwg.mxu0
    %2107 = vmatprep.subr.mxu0 0.0
    %2108 = vmatpush1.msra.mxu0 %v1943
    %2109 = vmatprep.subr.mxu0 0.0
    %2110 = vmatpush1.msra.mxu0 %v1944
    %2111 = vmatprep.subr.mxu0 0.0
    %2112 = vmatpush1.msra.mxu0 %v1945
    %2113 = vmatprep.subr.mxu0 0.0
    %2114 = vmatpush1.msra.mxu0 %v1946
    %2115 = vmatprep.subr.mxu0 0.0
    %2116 = vmatpush1.msra.mxu0 0.0
    %2117 = vmatprep.subr.mxu0 0.0
    %2118 = vmatpush1.msra.mxu0 0.0
    %2119 = vmatprep.subr.mxu0 0.0
    %2120 = vmatpush1.msra.mxu0 0.0
    %2121 = vmatprep.subr.mxu0 0.0
    %2122 = vmatpush1.msra.mxu0 0.0
    %2123 = vmatprep.subr.mxu0 0.0
    %2124 = vmatpush1.msra.mxu0 0.0
    %2125 = vmatprep.subr.mxu0 0.0
    %2126 = vmatpush1.msra.mxu0 0.0
    %2127 = vmatprep.subr.mxu0 0.0
    %2128 = vmatpush1.msra.mxu0 0.0
    %2129 = vmatprep.subr.mxu0 0.0
    %2130 = vmatpush1.msra.mxu0 0.0
    %2131 = vmatprep.subr.mxu0 0.0
    %2132 = vmatpush1.msra.mxu0 0.0
    %2133 = vmatprep.subr.mxu0 0.0
    %2134 = vmatpush1.msra.mxu0 0.0
    %2135 = vmatprep.subr.mxu0 0.0
    %2136 = vmatpush1.msra.mxu0 0.0
    %2137 = vmatprep.subr.mxu0 0.0
    %2138 = vmatpush1.msra.mxu0 0.0
    %2139 = vmatprep.subr.mxu0 0.0
    %2140 = vmatpush1.msra.mxu0 0.0
    %2141 = vmatprep.subr.mxu0 0.0
    %2142 = vmatpush1.msra.mxu0 0.0
    %2143 = vmatprep.subr.mxu0 0.0
    %2144 = vmatpush1.msra.mxu0 0.0
    %2145 = vmatprep.subr.mxu0 0.0
    %2146 = vmatpush1.msra.mxu0 0.0
    %2147 = vmatprep.subr.mxu0 0.0
    %2148 = vmatpush1.msra.mxu0 0.0
    %2149 = vmatprep.subr.mxu0 0.0
    %2150 = vmatpush1.msra.mxu0 0.0
    %2151 = vmatprep.subr.mxu0 0.0
    %2152 = vmatpush1.msra.mxu0 0.0
    %2153 = vmatprep.subr.mxu0 0.0
    %2154 = vmatpush1.msra.mxu0 0.0
    %2155 = vmatprep.subr.mxu0 0.0
    %2156 = vmatpush1.msra.mxu0 0.0
    %2157 = vmatprep.subr.mxu0 0.0
    %2158 = vmatpush1.msra.mxu0 0.0
    %2159 = vmatprep.subr.mxu0 0.0
    %2160 = vmatpush1.msra.mxu0 0.0
    %2161 = vmatprep.subr.mxu0 0.0
    %2162 = vmatpush1.msra.mxu0 0.0
    %2163 = vmatprep.subr.mxu0 0.0
    %2164 = vmatpush1.msra.mxu0 0.0
    %2165 = vmatprep.subr.mxu0 0.0
    %2166 = vmatpush1.msra.mxu0 0.0
    %2167 = vmatprep.subr.mxu0 0.0
    %2168 = vmatpush1.msra.mxu0 0.0
    %2169 = vmatprep.subr.mxu0 0.0
    %2170 = vmatpush1.msra.mxu0 0.0
    %2171 = vmatprep.mubr.f32.mxu0 0.0
    %2172 = vmatmul.mubr.f32.gmra.mrb[0].mxu0 %v1952
    %v2173 = vpop.f32.mrb[0].mxu0
    %v2174 = vadd.f32 0.0, %v2173
    %v2175 = vpop.f32.mrb[0].mxu0
    %2176 = vmatprep.mubr.f32.mxu0 0.0
    %2177 = vmatmul.mubr.f32.gmra.mrb[0].mxu0 %v1955
    %v2178 = vpop.f32.mrb[0].mxu0
    %v2179 = vadd.f32 0.0, %v2178
    %v2180 = vpop.f32.mrb[0].mxu0
    %2181 = vdwg.mxu0
    %2182 = vmatprep.subr.mxu0 0.0
    %2183 = vmatpush1.msra.mxu0 %v1947
    %2184 = vmatprep.subr.mxu0 0.0
    %2185 = vmatpush1.msra.mxu0 %v1948
    %2186 = vmatprep.subr.mxu0 0.0
    %2187 = vmatpush1.msra.mxu0 %v1949
    %2188 = vmatprep.subr.mxu0 0.0
    %2189 = vmatpush1.msra.mxu0 %v1950
    %2190 = vmatprep.subr.mxu0 0.0
    %2191 = vmatpush1.msra.mxu0 0.0
    %2192 = vmatprep.subr.mxu0 0.0
    %2193 = vmatpush1.msra.mxu0 0.0
    %2194 = vmatprep.subr.mxu0 0.0
    %2195 = vmatpush1.msra.mxu0 0.0
    %2196 = vmatprep.subr.mxu0 0.0
    %2197 = vmatpush1.msra.mxu0 0.0
    %2198 = vmatprep.subr.mxu0 0.0
    %2199 = vmatpush1.msra.mxu0 0.0
    %2200 = vmatprep.subr.mxu0 0.0
    %2201 = vmatpush1.msra.mxu0 0.0
    %2202 = vmatprep.subr.mxu0 0.0
    %2203 = vmatpush1.msra.mxu0 0.0
    %2204 = vmatprep.subr.mxu0 0.0
    %2205 = vmatpush1.msra.mxu0 0.0
    %2206 = vmatprep.subr.mxu0 0.0
    %2207 = vmatpush1.msra.mxu0 0.0
    %2208 = vmatprep.subr.mxu0 0.0
    %2209 = vmatpush1.msra.mxu0 0.0
    %2210 = vmatprep.subr.mxu0 0.0
    %2211 = vmatpush1.msra.mxu0 0.0
    %2212 = vmatprep.subr.mxu0 0.0
    %2213 = vmatpush1.msra.mxu0 0.0
    %2214 = vmatprep.subr.mxu0 0.0
    %2215 = vmatpush1.msra.mxu0 0.0
    %2216 = vmatprep.subr.mxu0 0.0
    %2217 = vmatpush1.msra.mxu0 0.0
    %2218 = vmatprep.subr.mxu0 0.0
    %2219 = vmatpush1.msra.mxu0 0.0
    %2220 = vmatprep.subr.mxu0 0.0
    %2221 = vmatpush1.msra.mxu0 0.0
    %2222 = vmatprep.subr.mxu0 0.0
    %2223 = vmatpush1.msra.mxu0 0.0
    %2224 = vmatprep.subr.mxu0 0.0
    %2225 = vmatpush1.msra.mxu0 0.0
    %2226 = vmatprep.subr.mxu0 0.0
    %2227 = vmatpush1.msra.mxu0 0.0
    %2228 = vmatprep.subr.mxu0 0.0
    %2229 = vmatpush1.msra.mxu0 0.0
    %2230 = vmatprep.subr.mxu0 0.0
    %2231 = vmatpush1.msra.mxu0 0.0
    %2232 = vmatprep.subr.mxu0 0.0
    %2233 = vmatpush1.msra.mxu0 0.0
    %2234 = vmatprep.subr.mxu0 0.0
    %2235 = vmatpush1.msra.mxu0 0.0
    %2236 = vmatprep.subr.mxu0 0.0
    %2237 = vmatpush1.msra.mxu0 0.0
    %2238 = vmatprep.subr.mxu0 0.0
    %2239 = vmatpush1.msra.mxu0 0.0
    %2240 = vmatprep.subr.mxu0 0.0
    %2241 = vmatpush1.msra.mxu0 0.0
    %2242 = vmatprep.subr.mxu0 0.0
    %2243 = vmatpush1.msra.mxu0 0.0
    %2244 = vmatprep.subr.mxu0 0.0
    %2245 = vmatpush1.msra.mxu0 0.0
    %2246 = vmatprep.mubr.f32.mxu0 0.0
    %2247 = vmatmul.mubr.f32.gmra.mrb[0].mxu0 %v1952
    %v2248 = vpop.f32.mrb[0].mxu0
    %v2249 = vadd.f32 0.0, %v2248
    %v2250 = vpop.f32.mrb[0].mxu0
    %2251 = vmatprep.mubr.f32.mxu0 0.0
    %2252 = vmatmul.mubr.f32.gmra.mrb[0].mxu0 %v1955
    %v2253 = vpop.f32.mrb[0].mxu0
    %v2254 = vadd.f32 0.0, %v2253
    %v2255 = vpop.f32.mrb[0].mxu0
    %2256 = vdwg.mxu0
    %s2257 = scalar_lea.vmem %s5, 512
    %v2258 = vld [vmem:[%s2257] sm:$0xff]
    %v2259 = vld [vmem:[%s2257 + $0x8] sm:$0xff]
    %v2260 = vld [vmem:[%s2257 + $0x10] sm:$0xff]
    %v2261 = vld [vmem:[%s2257 + $0x18] sm:$0xff]
    %v2262 = vld [vmem:[%s2257 + $0x20] sm:$0xff]
    %v2263 = vld [vmem:[%s2257 + $0x28] sm:$0xff]
    %v2264 = vld [vmem:[%s2257 + $0x30] sm:$0xff]
    %v2265 = vld [vmem:[%s2257 + $0x38] sm:$0xff]
    %v2266 = vld [vmem:[%s2257 + $0x40] sm:$0xff]
    %v2267 = vld [vmem:[%s2257 + $0x48] sm:$0xff]
    %v2268 = vld [vmem:[%s2257 + $0x50] sm:$0xff]
    %v2269 = vld [vmem:[%s2257 + $0x58] sm:$0xff]
    %v2270 = vld [vmem:[%s2257 + $0x60] sm:$0xff]
    %v2271 = vld [vmem:[%s2257 + $0x68] sm:$0xff]
    %v2272 = vld [vmem:[%s2257 + $0x70] sm:$0xff]
    %v2273 = vld [vmem:[%s2257 + $0x78] sm:$0xff]
    %2274 = vmatprep.subr.mxu0 0.0
    %2275 = vmatpush1.msra.mxu0 %v2258
    %2276 = vmatprep.subr.mxu0 0.0
    %2277 = vmatpush1.msra.mxu0 %v2259
    %2278 = vmatprep.subr.mxu0 0.0
    %2279 = vmatpush1.msra.mxu0 %v2260
    %2280 = vmatprep.subr.mxu0 0.0
    %2281 = vmatpush1.msra.mxu0 %v2261
    %2282 = vmatprep.subr.mxu0 0.0
    %2283 = vmatpush1.msra.mxu0 0.0
    %2284 = vmatprep.subr.mxu0 0.0
    %2285 = vmatpush1.msra.mxu0 0.0
    %2286 = vmatprep.subr.mxu0 0.0
    %2287 = vmatpush1.msra.mxu0 0.0
    %2288 = vmatprep.subr.mxu0 0.0
    %2289 = vmatpush1.msra.mxu0 0.0
    %2290 = vmatprep.subr.mxu0 0.0
    %2291 = vmatpush1.msra.mxu0 0.0
    %2292 = vmatprep.subr.mxu0 0.0
    %2293 = vmatpush1.msra.mxu0 0.0
    %2294 = vmatprep.subr.mxu0 0.0
    %2295 = vmatpush1.msra.mxu0 0.0
    %2296 = vmatprep.subr.mxu0 0.0
    %2297 = vmatpush1.msra.mxu0 0.0
    %2298 = vmatprep.subr.mxu0 0.0
    %2299 = vmatpush1.msra.mxu0 0.0
    %2300 = vmatprep.subr.mxu0 0.0
    %2301 = vmatpush1.msra.mxu0 0.0
    %2302 = vmatprep.subr.mxu0 0.0
    %2303 = vmatpush1.msra.mxu0 0.0
    %2304 = vmatprep.subr.mxu0 0.0
    %2305 = vmatpush1.msra.mxu0 0.0
    %2306 = vmatprep.subr.mxu0 0.0
    %2307 = vmatpush1.msra.mxu0 0.0
    %2308 = vmatprep.subr.mxu0 0.0
    %2309 = vmatpush1.msra.mxu0 0.0
    %2310 = vmatprep.subr.mxu0 0.0
    %2311 = vmatpush1.msra.mxu0 0.0
    %2312 = vmatprep.subr.mxu0 0.0
    %2313 = vmatpush1.msra.mxu0 0.0
    %2314 = vmatprep.subr.mxu0 0.0
    %2315 = vmatpush1.msra.mxu0 0.0
    %2316 = vmatprep.subr.mxu0 0.0
    %2317 = vmatpush1.msra.mxu0 0.0
    %2318 = vmatprep.subr.mxu0 0.0
    %2319 = vmatpush1.msra.mxu0 0.0
    %2320 = vmatprep.subr.mxu0 0.0
    %2321 = vmatpush1.msra.mxu0 0.0
    %2322 = vmatprep.subr.mxu0 0.0
    %2323 = vmatpush1.msra.mxu0 0.0
    %2324 = vmatprep.subr.mxu0 0.0
    %2325 = vmatpush1.msra.mxu0 0.0
    %2326 = vmatprep.subr.mxu0 0.0
    %2327 = vmatpush1.msra.mxu0 0.0
    %2328 = vmatprep.subr.mxu0 0.0
    %2329 = vmatpush1.msra.mxu0 0.0
    %2330 = vmatprep.subr.mxu0 0.0
    %2331 = vmatpush1.msra.mxu0 0.0
    %2332 = vmatprep.subr.mxu0 0.0
    %2333 = vmatpush1.msra.mxu0 0.0
    %2334 = vmatprep.subr.mxu0 0.0
    %2335 = vmatpush1.msra.mxu0 0.0
    %2336 = vmatprep.subr.mxu0 0.0
    %2337 = vmatpush1.msra.mxu0 0.0
    %2338 = vmatprep.mubr.f32.mxu0 0.0
    %2339 = vmatmul.mubr.f32.gmra.mrb[0].mxu0 %v173
    %v2340 = vpop.f32.mrb[0].mxu0
    %v2341 = vadd.f32 0.0, %v2340
    %v2342 = vpop.f32.mrb[0].mxu0
    %2343 = vmatprep.mubr.f32.mxu0 0.0
    %2344 = vmatmul.mubr.f32.gmra.mrb[0].mxu0 %v176
    %v2345 = vpop.f32.mrb[0].mxu0
    %v2346 = vadd.f32 0.0, %v2345
    %v2347 = vpop.f32.mrb[0].mxu0
    %2348 = vdwg.mxu0
    %2349 = vmatprep.subr.mxu0 0.0
    %2350 = vmatpush1.msra.mxu0 %v2262
    %2351 = vmatprep.subr.mxu0 0.0
    %2352 = vmatpush1.msra.mxu0 %v2263
    %2353 = vmatprep.subr.mxu0 0.0
    %2354 = vmatpush1.msra.mxu0 %v2264
    %2355 = vmatprep.subr.mxu0 0.0
    %2356 = vmatpush1.msra.mxu0 %v2265
    %2357 = vmatprep.subr.mxu0 0.0
    %2358 = vmatpush1.msra.mxu0 0.0
    %2359 = vmatprep.subr.mxu0 0.0
    %2360 = vmatpush1.msra.mxu0 0.0
    %2361 = vmatprep.subr.mxu0 0.0
    %2362 = vmatpush1.msra.mxu0 0.0
    %2363 = vmatprep.subr.mxu0 0.0
    %2364 = vmatpush1.msra.mxu0 0.0
    %2365 = vmatprep.subr.mxu0 0.0
    %2366 = vmatpush1.msra.mxu0 0.0
    %2367 = vmatprep.subr.mxu0 0.0
    %2368 = vmatpush1.msra.mxu0 0.0
    %2369 = vmatprep.subr.mxu0 0.0
    %2370 = vmatpush1.msra.mxu0 0.0
    %2371 = vmatprep.subr.mxu0 0.0
    %2372 = vmatpush1.msra.mxu0 0.0
    %2373 = vmatprep.subr.mxu0 0.0
    %2374 = vmatpush1.msra.mxu0 0.0
    %2375 = vmatprep.subr.mxu0 0.0
    %2376 = vmatpush1.msra.mxu0 0.0
    %2377 = vmatprep.subr.mxu0 0.0
    %2378 = vmatpush1.msra.mxu0 0.0
    %2379 = vmatprep.subr.mxu0 0.0
    %2380 = vmatpush1.msra.mxu0 0.0
    %2381 = vmatprep.subr.mxu0 0.0
    %2382 = vmatpush1.msra.mxu0 0.0
    %2383 = vmatprep.subr.mxu0 0.0
    %2384 = vmatpush1.msra.mxu0 0.0
    %2385 = vmatprep.subr.mxu0 0.0
    %2386 = vmatpush1.msra.mxu0 0.0
    %2387 = vmatprep.subr.mxu0 0.0
    %2388 = vmatpush1.msra.mxu0 0.0
    %2389 = vmatprep.subr.mxu0 0.0
    %2390 = vmatpush1.msra.mxu0 0.0
    %2391 = vmatprep.subr.mxu0 0.0
    %2392 = vmatpush1.msra.mxu0 0.0
    %2393 = vmatprep.subr.mxu0 0.0
    %2394 = vmatpush1.msra.mxu0 0.0
    %2395 = vmatprep.subr.mxu0 0.0
    %2396 = vmatpush1.msra.mxu0 0.0
    %2397 = vmatprep.subr.mxu0 0.0
    %2398 = vmatpush1.msra.mxu0 0.0
    %2399 = vmatprep.subr.mxu0 0.0
    %2400 = vmatpush1.msra.mxu0 0.0
    %2401 = vmatprep.subr.mxu0 0.0
    %2402 = vmatpush1.msra.mxu0 0.0
    %2403 = vmatprep.subr.mxu0 0.0
    %2404 = vmatpush1.msra.mxu0 0.0
    %2405 = vmatprep.subr.mxu0 0.0
    %2406 = vmatpush1.msra.mxu0 0.0
    %2407 = vmatprep.subr.mxu0 0.0
    %2408 = vmatpush1.msra.mxu0 0.0
    %2409 = vmatprep.subr.mxu0 0.0
    %2410 = vmatpush1.msra.mxu0 0.0
    %2411 = vmatprep.subr.mxu0 0.0
    %2412 = vmatpush1.msra.mxu0 0.0
    %2413 = vmatprep.mubr.f32.mxu0 0.0
    %2414 = vmatmul.mubr.f32.gmra.mrb[0].mxu0 %v173
    %v2415 = vpop.f32.mrb[0].mxu0
    %v2416 = vadd.f32 0.0, %v2415
    %v2417 = vpop.f32.mrb[0].mxu0
    %2418 = vmatprep.mubr.f32.mxu0 0.0
    %2419 = vmatmul.mubr.f32.gmra.mrb[0].mxu0 %v176
    %v2420 = vpop.f32.mrb[0].mxu0
    %v2421 = vadd.f32 0.0, %v2420
    %v2422 = vpop.f32.mrb[0].mxu0
    %2423 = vdwg.mxu0
    %2424 = vmatprep.subr.mxu0 0.0
    %2425 = vmatpush1.msra.mxu0 %v2266
    %2426 = vmatprep.subr.mxu0 0.0
    %2427 = vmatpush1.msra.mxu0 %v2267
    %2428 = vmatprep.subr.mxu0 0.0
    %2429 = vmatpush1.msra.mxu0 %v2268
    %2430 = vmatprep.subr.mxu0 0.0
    %2431 = vmatpush1.msra.mxu0 %v2269
    %2432 = vmatprep.subr.mxu0 0.0
    %2433 = vmatpush1.msra.mxu0 0.0
    %2434 = vmatprep.subr.mxu0 0.0
    %2435 = vmatpush1.msra.mxu0 0.0
    %2436 = vmatprep.subr.mxu0 0.0
    %2437 = vmatpush1.msra.mxu0 0.0
    %2438 = vmatprep.subr.mxu0 0.0
    %2439 = vmatpush1.msra.mxu0 0.0
    %2440 = vmatprep.subr.mxu0 0.0
    %2441 = vmatpush1.msra.mxu0 0.0
    %2442 = vmatprep.subr.mxu0 0.0
    %2443 = vmatpush1.msra.mxu0 0.0
    %2444 = vmatprep.subr.mxu0 0.0
    %2445 = vmatpush1.msra.mxu0 0.0
    %2446 = vmatprep.subr.mxu0 0.0
    %2447 = vmatpush1.msra.mxu0 0.0
    %2448 = vmatprep.subr.mxu0 0.0
    %2449 = vmatpush1.msra.mxu0 0.0
    %2450 = vmatprep.subr.mxu0 0.0
    %2451 = vmatpush1.msra.mxu0 0.0
    %2452 = vmatprep.subr.mxu0 0.0
    %2453 = vmatpush1.msra.mxu0 0.0
    %2454 = vmatprep.subr.mxu0 0.0
    %2455 = vmatpush1.msra.mxu0 0.0
    %2456 = vmatprep.subr.mxu0 0.0
    %2457 = vmatpush1.msra.mxu0 0.0
    %2458 = vmatprep.subr.mxu0 0.0
    %2459 = vmatpush1.msra.mxu0 0.0
    %2460 = vmatprep.subr.mxu0 0.0
    %2461 = vmatpush1.msra.mxu0 0.0
    %2462 = vmatprep.subr.mxu0 0.0
    %2463 = vmatpush1.msra.mxu0 0.0
    %2464 = vmatprep.subr.mxu0 0.0
    %2465 = vmatpush1.msra.mxu0 0.0
    %2466 = vmatprep.subr.mxu0 0.0
    %2467 = vmatpush1.msra.mxu0 0.0
    %2468 = vmatprep.subr.mxu0 0.0
    %2469 = vmatpush1.msra.mxu0 0.0
    %2470 = vmatprep.subr.mxu0 0.0
    %2471 = vmatpush1.msra.mxu0 0.0
    %2472 = vmatprep.subr.mxu0 0.0
    %2473 = vmatpush1.msra.mxu0 0.0
    %2474 = vmatprep.subr.mxu0 0.0
    %2475 = vmatpush1.msra.mxu0 0.0
    %2476 = vmatprep.subr.mxu0 0.0
    %2477 = vmatpush1.msra.mxu0 0.0
    %2478 = vmatprep.subr.mxu0 0.0
    %2479 = vmatpush1.msra.mxu0 0.0
    %2480 = vmatprep.subr.mxu0 0.0
    %2481 = vmatpush1.msra.mxu0 0.0
    %2482 = vmatprep.subr.mxu0 0.0
    %2483 = vmatpush1.msra.mxu0 0.0
    %2484 = vmatprep.subr.mxu0 0.0
    %2485 = vmatpush1.msra.mxu0 0.0
    %2486 = vmatprep.subr.mxu0 0.0
    %2487 = vmatpush1.msra.mxu0 0.0
    %2488 = vmatprep.mubr.f32.mxu0 0.0
    %2489 = vmatmul.mubr.f32.gmra.mrb[0].mxu0 %v173
    %v2490 = vpop.f32.mrb[0].mxu0
    %v2491 = vadd.f32 0.0, %v2490
    %v2492 = vpop.f32.mrb[0].mxu0
    %2493 = vmatprep.mubr.f32.mxu0 0.0
    %2494 = vmatmul.mubr.f32.gmra.mrb[0].mxu0 %v176
    %v2495 = vpop.f32.mrb[0].mxu0
    %v2496 = vadd.f32 0.0, %v2495
    %v2497 = vpop.f32.mrb[0].mxu0
    %2498 = vdwg.mxu0
    %2499 = vmatprep.subr.mxu0 0.0
    %2500 = vmatpush1.msra.mxu0 %v2270
    %2501 = vmatprep.subr.mxu0 0.0
    %2502 = vmatpush1.msra.mxu0 %v2271
    %2503 = vmatprep.subr.mxu0 0.0
    %2504 = vmatpush1.msra.mxu0 %v2272
    %2505 = vmatprep.subr.mxu0 0.0
    %2506 = vmatpush1.msra.mxu0 %v2273
    %2507 = vmatprep.subr.mxu0 0.0
    %2508 = vmatpush1.msra.mxu0 0.0
    %2509 = vmatprep.subr.mxu0 0.0
    %2510 = vmatpush1.msra.mxu0 0.0
    %2511 = vmatprep.subr.mxu0 0.0
    %2512 = vmatpush1.msra.mxu0 0.0
    %2513 = vmatprep.subr.mxu0 0.0
    %2514 = vmatpush1.msra.mxu0 0.0
    %2515 = vmatprep.subr.mxu0 0.0
    %2516 = vmatpush1.msra.mxu0 0.0
    %2517 = vmatprep.subr.mxu0 0.0
    %2518 = vmatpush1.msra.mxu0 0.0
    %2519 = vmatprep.subr.mxu0 0.0
    %2520 = vmatpush1.msra.mxu0 0.0
    %2521 = vmatprep.subr.mxu0 0.0
    %2522 = vmatpush1.msra.mxu0 0.0
    %2523 = vmatprep.subr.mxu0 0.0
    %2524 = vmatpush1.msra.mxu0 0.0
    %2525 = vmatprep.subr.mxu0 0.0
    %2526 = vmatpush1.msra.mxu0 0.0
    %2527 = vmatprep.subr.mxu0 0.0
    %2528 = vmatpush1.msra.mxu0 0.0
    %2529 = vmatprep.subr.mxu0 0.0
    %2530 = vmatpush1.msra.mxu0 0.0
    %2531 = vmatprep.subr.mxu0 0.0
    %2532 = vmatpush1.msra.mxu0 0.0
    %2533 = vmatprep.subr.mxu0 0.0
    %2534 = vmatpush1.msra.mxu0 0.0
    %2535 = vmatprep.subr.mxu0 0.0
    %2536 = vmatpush1.msra.mxu0 0.0
    %2537 = vmatprep.subr.mxu0 0.0
    %2538 = vmatpush1.msra.mxu0 0.0
    %2539 = vmatprep.subr.mxu0 0.0
    %2540 = vmatpush1.msra.mxu0 0.0
    %2541 = vmatprep.subr.mxu0 0.0
    %2542 = vmatpush1.msra.mxu0 0.0
    %2543 = vmatprep.subr.mxu0 0.0
    %2544 = vmatpush1.msra.mxu0 0.0
    %2545 = vmatprep.subr.mxu0 0.0
    %2546 = vmatpush1.msra.mxu0 0.0
    %2547 = vmatprep.subr.mxu0 0.0
    %2548 = vmatpush1.msra.mxu0 0.0
    %2549 = vmatprep.subr.mxu0 0.0
    %2550 = vmatpush1.msra.mxu0 0.0
    %2551 = vmatprep.subr.mxu0 0.0
    %2552 = vmatpush1.msra.mxu0 0.0
    %2553 = vmatprep.subr.mxu0 0.0
    %2554 = vmatpush1.msra.mxu0 0.0
    %2555 = vmatprep.subr.mxu0 0.0
    %2556 = vmatpush1.msra.mxu0 0.0
    %2557 = vmatprep.subr.mxu0 0.0
    %2558 = vmatpush1.msra.mxu0 0.0
    %2559 = vmatprep.subr.mxu0 0.0
    %2560 = vmatpush1.msra.mxu0 0.0
    %2561 = vmatprep.subr.mxu0 0.0
    %2562 = vmatpush1.msra.mxu0 0.0
    %2563 = vmatprep.mubr.f32.mxu0 0.0
    %2564 = vmatmul.mubr.f32.gmra.mrb[0].mxu0 %v173
    %v2565 = vpop.f32.mrb[0].mxu0
    %v2566 = vadd.f32 0.0, %v2565
    %v2567 = vpop.f32.mrb[0].mxu0
    %2568 = vmatprep.mubr.f32.mxu0 0.0
    %2569 = vmatmul.mubr.f32.gmra.mrb[0].mxu0 %v176
    %v2570 = vpop.f32.mrb[0].mxu0
    %v2571 = vadd.f32 0.0, %v2570
    %v2572 = vpop.f32.mrb[0].mxu0
    %2573 = vdwg.mxu0
    %s2574 = scalar_lea.vmem %s5, 640
    %v2575 = vld [vmem:[%s2574] sm:$0xff]
    %v2576 = vld [vmem:[%s2574 + $0x8] sm:$0xff]
    %v2577 = vld [vmem:[%s2574 + $0x10] sm:$0xff]
    %v2578 = vld [vmem:[%s2574 + $0x18] sm:$0xff]
    %v2579 = vld [vmem:[%s2574 + $0x20] sm:$0xff]
    %v2580 = vld [vmem:[%s2574 + $0x28] sm:$0xff]
    %v2581 = vld [vmem:[%s2574 + $0x30] sm:$0xff]
    %v2582 = vld [vmem:[%s2574 + $0x38] sm:$0xff]
    %v2583 = vld [vmem:[%s2574 + $0x40] sm:$0xff]
    %v2584 = vld [vmem:[%s2574 + $0x48] sm:$0xff]
    %v2585 = vld [vmem:[%s2574 + $0x50] sm:$0xff]
    %v2586 = vld [vmem:[%s2574 + $0x58] sm:$0xff]
    %v2587 = vld [vmem:[%s2574 + $0x60] sm:$0xff]
    %v2588 = vld [vmem:[%s2574 + $0x68] sm:$0xff]
    %v2589 = vld [vmem:[%s2574 + $0x70] sm:$0xff]
    %v2590 = vld [vmem:[%s2574 + $0x78] sm:$0xff]
    %2591 = vmatprep.subr.mxu0 0.0
    %2592 = vmatpush1.msra.mxu0 %v2575
    %2593 = vmatprep.subr.mxu0 0.0
    %2594 = vmatpush1.msra.mxu0 %v2576
    %2595 = vmatprep.subr.mxu0 0.0
    %2596 = vmatpush1.msra.mxu0 %v2577
    %2597 = vmatprep.subr.mxu0 0.0
    %2598 = vmatpush1.msra.mxu0 %v2578
    %2599 = vmatprep.subr.mxu0 0.0
    %2600 = vmatpush1.msra.mxu0 0.0
    %2601 = vmatprep.subr.mxu0 0.0
    %2602 = vmatpush1.msra.mxu0 0.0
    %2603 = vmatprep.subr.mxu0 0.0
    %2604 = vmatpush1.msra.mxu0 0.0
    %2605 = vmatprep.subr.mxu0 0.0
    %2606 = vmatpush1.msra.mxu0 0.0
    %2607 = vmatprep.subr.mxu0 0.0
    %2608 = vmatpush1.msra.mxu0 0.0
    %2609 = vmatprep.subr.mxu0 0.0
    %2610 = vmatpush1.msra.mxu0 0.0
    %2611 = vmatprep.subr.mxu0 0.0
    %2612 = vmatpush1.msra.mxu0 0.0
    %2613 = vmatprep.subr.mxu0 0.0
    %2614 = vmatpush1.msra.mxu0 0.0
    %2615 = vmatprep.subr.mxu0 0.0
    %2616 = vmatpush1.msra.mxu0 0.0
    %2617 = vmatprep.subr.mxu0 0.0
    %2618 = vmatpush1.msra.mxu0 0.0
    %2619 = vmatprep.subr.mxu0 0.0
    %2620 = vmatpush1.msra.mxu0 0.0
    %2621 = vmatprep.subr.mxu0 0.0
    %2622 = vmatpush1.msra.mxu0 0.0
    %2623 = vmatprep.subr.mxu0 0.0
    %2624 = vmatpush1.msra.mxu0 0.0
    %2625 = vmatprep.subr.mxu0 0.0
    %2626 = vmatpush1.msra.mxu0 0.0
    %2627 = vmatprep.subr.mxu0 0.0
    %2628 = vmatpush1.msra.mxu0 0.0
    %2629 = vmatprep.subr.mxu0 0.0
    %2630 = vmatpush1.msra.mxu0 0.0
    %2631 = vmatprep.subr.mxu0 0.0
    %2632 = vmatpush1.msra.mxu0 0.0
    %2633 = vmatprep.subr.mxu0 0.0
    %2634 = vmatpush1.msra.mxu0 0.0
    %2635 = vmatprep.subr.mxu0 0.0
    %2636 = vmatpush1.msra.mxu0 0.0
    %2637 = vmatprep.subr.mxu0 0.0
    %2638 = vmatpush1.msra.mxu0 0.0
    %2639 = vmatprep.subr.mxu0 0.0
    %2640 = vmatpush1.msra.mxu0 0.0
    %2641 = vmatprep.subr.mxu0 0.0
    %2642 = vmatpush1.msra.mxu0 0.0
    %2643 = vmatprep.subr.mxu0 0.0
    %2644 = vmatpush1.msra.mxu0 0.0
    %2645 = vmatprep.subr.mxu0 0.0
    %2646 = vmatpush1.msra.mxu0 0.0
    %2647 = vmatprep.subr.mxu0 0.0
    %2648 = vmatpush1.msra.mxu0 0.0
    %2649 = vmatprep.subr.mxu0 0.0
    %2650 = vmatpush1.msra.mxu0 0.0
    %2651 = vmatprep.subr.mxu0 0.0
    %2652 = vmatpush1.msra.mxu0 0.0
    %2653 = vmatprep.subr.mxu0 0.0
    %2654 = vmatpush1.msra.mxu0 0.0
    %2655 = vmatprep.mubr.f32.mxu0 0.0
    %2656 = vmatmul.mubr.f32.gmra.mrb[0].mxu0 %v1952
    %v2657 = vpop.f32.mrb[0].mxu0
    %v2658 = vadd.f32 0.0, %v2657
    %v2659 = vpop.f32.mrb[0].mxu0
    %2660 = vmatprep.mubr.f32.mxu0 0.0
    %2661 = vmatmul.mubr.f32.gmra.mrb[0].mxu0 %v1955
    %v2662 = vpop.f32.mrb[0].mxu0
    %v2663 = vadd.f32 0.0, %v2662
    %v2664 = vpop.f32.mrb[0].mxu0
    %2665 = vdwg.mxu0
    %2666 = vmatprep.subr.mxu0 0.0
    %2667 = vmatpush1.msra.mxu0 %v2579
    %2668 = vmatprep.subr.mxu0 0.0
    %2669 = vmatpush1.msra.mxu0 %v2580
    %2670 = vmatprep.subr.mxu0 0.0
    %2671 = vmatpush1.msra.mxu0 %v2581
    %2672 = vmatprep.subr.mxu0 0.0
    %2673 = vmatpush1.msra.mxu0 %v2582
    %2674 = vmatprep.subr.mxu0 0.0
    %2675 = vmatpush1.msra.mxu0 0.0
    %2676 = vmatprep.subr.mxu0 0.0
    %2677 = vmatpush1.msra.mxu0 0.0
    %2678 = vmatprep.subr.mxu0 0.0
    %2679 = vmatpush1.msra.mxu0 0.0
    %2680 = vmatprep.subr.mxu0 0.0
    %2681 = vmatpush1.msra.mxu0 0.0
    %2682 = vmatprep.subr.mxu0 0.0
    %2683 = vmatpush1.msra.mxu0 0.0
    %2684 = vmatprep.subr.mxu0 0.0
    %2685 = vmatpush1.msra.mxu0 0.0
    %2686 = vmatprep.subr.mxu0 0.0
    %2687 = vmatpush1.msra.mxu0 0.0
    %2688 = vmatprep.subr.mxu0 0.0
    %2689 = vmatpush1.msra.mxu0 0.0
    %2690 = vmatprep.subr.mxu0 0.0
    %2691 = vmatpush1.msra.mxu0 0.0
    %2692 = vmatprep.subr.mxu0 0.0
    %2693 = vmatpush1.msra.mxu0 0.0
    %2694 = vmatprep.subr.mxu0 0.0
    %2695 = vmatpush1.msra.mxu0 0.0
    %2696 = vmatprep.subr.mxu0 0.0
    %2697 = vmatpush1.msra.mxu0 0.0
    %2698 = vmatprep.subr.mxu0 0.0
    %2699 = vmatpush1.msra.mxu0 0.0
    %2700 = vmatprep.subr.mxu0 0.0
    %2701 = vmatpush1.msra.mxu0 0.0
    %2702 = vmatprep.subr.mxu0 0.0
    %2703 = vmatpush1.msra.mxu0 0.0
    %2704 = vmatprep.subr.mxu0 0.0
    %2705 = vmatpush1.msra.mxu0 0.0
    %2706 = vmatprep.subr.mxu0 0.0
    %2707 = vmatpush1.msra.mxu0 0.0
    %2708 = vmatprep.subr.mxu0 0.0
    %2709 = vmatpush1.msra.mxu0 0.0
    %2710 = vmatprep.subr.mxu0 0.0
    %2711 = vmatpush1.msra.mxu0 0.0
    %2712 = vmatprep.subr.mxu0 0.0
    %2713 = vmatpush1.msra.mxu0 0.0
    %2714 = vmatprep.subr.mxu0 0.0
    %2715 = vmatpush1.msra.mxu0 0.0
    %2716 = vmatprep.subr.mxu0 0.0
    %2717 = vmatpush1.msra.mxu0 0.0
    %2718 = vmatprep.subr.mxu0 0.0
    %2719 = vmatpush1.msra.mxu0 0.0
    %2720 = vmatprep.subr.mxu0 0.0
    %2721 = vmatpush1.msra.mxu0 0.0
    %2722 = vmatprep.subr.mxu0 0.0
    %2723 = vmatpush1.msra.mxu0 0.0
    %2724 = vmatprep.subr.mxu0 0.0
    %2725 = vmatpush1.msra.mxu0 0.0
    %2726 = vmatprep.subr.mxu0 0.0
    %2727 = vmatpush1.msra.mxu0 0.0
    %2728 = vmatprep.subr.mxu0 0.0
    %2729 = vmatpush1.msra.mxu0 0.0
    %2730 = vmatprep.mubr.f32.mxu0 0.0
    %2731 = vmatmul.mubr.f32.gmra.mrb[0].mxu0 %v1952
    %v2732 = vpop.f32.mrb[0].mxu0
    %v2733 = vadd.f32 0.0, %v2732
    %v2734 = vpop.f32.mrb[0].mxu0
    %2735 = vmatprep.mubr.f32.mxu0 0.0
    %2736 = vmatmul.mubr.f32.gmra.mrb[0].mxu0 %v1955
    %v2737 = vpop.f32.mrb[0].mxu0
    %v2738 = vadd.f32 0.0, %v2737
    %v2739 = vpop.f32.mrb[0].mxu0
    %2740 = vdwg.mxu0
    %2741 = vmatprep.subr.mxu0 0.0
    %2742 = vmatpush1.msra.mxu0 %v2583
    %2743 = vmatprep.subr.mxu0 0.0
    %2744 = vmatpush1.msra.mxu0 %v2584
    %2745 = vmatprep.subr.mxu0 0.0
    %2746 = vmatpush1.msra.mxu0 %v2585
    %2747 = vmatprep.subr.mxu0 0.0
    %2748 = vmatpush1.msra.mxu0 %v2586
    %2749 = vmatprep.subr.mxu0 0.0
    %2750 = vmatpush1.msra.mxu0 0.0
    %2751 = vmatprep.subr.mxu0 0.0
    %2752 = vmatpush1.msra.mxu0 0.0
    %2753 = vmatprep.subr.mxu0 0.0
    %2754 = vmatpush1.msra.mxu0 0.0
    %2755 = vmatprep.subr.mxu0 0.0
    %2756 = vmatpush1.msra.mxu0 0.0
    %2757 = vmatprep.subr.mxu0 0.0
    %2758 = vmatpush1.msra.mxu0 0.0
    %2759 = vmatprep.subr.mxu0 0.0
    %2760 = vmatpush1.msra.mxu0 0.0
    %2761 = vmatprep.subr.mxu0 0.0
    %2762 = vmatpush1.msra.mxu0 0.0
    %2763 = vmatprep.subr.mxu0 0.0
    %2764 = vmatpush1.msra.mxu0 0.0
    %2765 = vmatprep.subr.mxu0 0.0
    %2766 = vmatpush1.msra.mxu0 0.0
    %2767 = vmatprep.subr.mxu0 0.0
    %2768 = vmatpush1.msra.mxu0 0.0
    %2769 = vmatprep.subr.mxu0 0.0
    %2770 = vmatpush1.msra.mxu0 0.0
    %2771 = vmatprep.subr.mxu0 0.0
    %2772 = vmatpush1.msra.mxu0 0.0
    %2773 = vmatprep.subr.mxu0 0.0
    %2774 = vmatpush1.msra.mxu0 0.0
    %2775 = vmatprep.subr.mxu0 0.0
    %2776 = vmatpush1.msra.mxu0 0.0
    %2777 = vmatprep.subr.mxu0 0.0
    %2778 = vmatpush1.msra.mxu0 0.0
    %2779 = vmatprep.subr.mxu0 0.0
    %2780 = vmatpush1.msra.mxu0 0.0
    %2781 = vmatprep.subr.mxu0 0.0
    %2782 = vmatpush1.msra.mxu0 0.0
    %2783 = vmatprep.subr.mxu0 0.0
    %2784 = vmatpush1.msra.mxu0 0.0
    %2785 = vmatprep.subr.mxu0 0.0
    %2786 = vmatpush1.msra.mxu0 0.0
    %2787 = vmatprep.subr.mxu0 0.0
    %2788 = vmatpush1.msra.mxu0 0.0
    %2789 = vmatprep.subr.mxu0 0.0
    %2790 = vmatpush1.msra.mxu0 0.0
    %2791 = vmatprep.subr.mxu0 0.0
    %2792 = vmatpush1.msra.mxu0 0.0
    %2793 = vmatprep.subr.mxu0 0.0
    %2794 = vmatpush1.msra.mxu0 0.0
    %2795 = vmatprep.subr.mxu0 0.0
    %2796 = vmatpush1.msra.mxu0 0.0
    %2797 = vmatprep.subr.mxu0 0.0
    %2798 = vmatpush1.msra.mxu0 0.0
    %2799 = vmatprep.subr.mxu0 0.0
    %2800 = vmatpush1.msra.mxu0 0.0
    %2801 = vmatprep.subr.mxu0 0.0
    %2802 = vmatpush1.msra.mxu0 0.0
    %2803 = vmatprep.subr.mxu0 0.0
    %2804 = vmatpush1.msra.mxu0 0.0
    %2805 = vmatprep.mubr.f32.mxu0 0.0
    %2806 = vmatmul.mubr.f32.gmra.mrb[0].mxu0 %v1952
    %v2807 = vpop.f32.mrb[0].mxu0
    %v2808 = vadd.f32 0.0, %v2807
    %v2809 = vpop.f32.mrb[0].mxu0
    %2810 = vmatprep.mubr.f32.mxu0 0.0
    %2811 = vmatmul.mubr.f32.gmra.mrb[0].mxu0 %v1955
    %v2812 = vpop.f32.mrb[0].mxu0
    %v2813 = vadd.f32 0.0, %v2812
    %v2814 = vpop.f32.mrb[0].mxu0
    %2815 = vdwg.mxu0
    %2816 = vmatprep.subr.mxu0 0.0
    %2817 = vmatpush1.msra.mxu0 %v2587
    %2818 = vmatprep.subr.mxu0 0.0
    %2819 = vmatpush1.msra.mxu0 %v2588
    %2820 = vmatprep.subr.mxu0 0.0
    %2821 = vmatpush1.msra.mxu0 %v2589
    %2822 = vmatprep.subr.mxu0 0.0
    %2823 = vmatpush1.msra.mxu0 %v2590
    %2824 = vmatprep.subr.mxu0 0.0
    %2825 = vmatpush1.msra.mxu0 0.0
    %2826 = vmatprep.subr.mxu0 0.0
    %2827 = vmatpush1.msra.mxu0 0.0
    %2828 = vmatprep.subr.mxu0 0.0
    %2829 = vmatpush1.msra.mxu0 0.0
    %2830 = vmatprep.subr.mxu0 0.0
    %2831 = vmatpush1.msra.mxu0 0.0
    %2832 = vmatprep.subr.mxu0 0.0
    %2833 = vmatpush1.msra.mxu0 0.0
    %2834 = vmatprep.subr.mxu0 0.0
    %2835 = vmatpush1.msra.mxu0 0.0
    %2836 = vmatprep.subr.mxu0 0.0
    %2837 = vmatpush1.msra.mxu0 0.0
    %2838 = vmatprep.subr.mxu0 0.0
    %2839 = vmatpush1.msra.mxu0 0.0
    %2840 = vmatprep.subr.mxu0 0.0
    %2841 = vmatpush1.msra.mxu0 0.0
    %2842 = vmatprep.subr.mxu0 0.0
    %2843 = vmatpush1.msra.mxu0 0.0
    %2844 = vmatprep.subr.mxu0 0.0
    %2845 = vmatpush1.msra.mxu0 0.0
    %2846 = vmatprep.subr.mxu0 0.0
    %2847 = vmatpush1.msra.mxu0 0.0
    %2848 = vmatprep.subr.mxu0 0.0
    %2849 = vmatpush1.msra.mxu0 0.0
    %2850 = vmatprep.subr.mxu0 0.0
    %2851 = vmatpush1.msra.mxu0 0.0
    %2852 = vmatprep.subr.mxu0 0.0
    %2853 = vmatpush1.msra.mxu0 0.0
    %2854 = vmatprep.subr.mxu0 0.0
    %2855 = vmatpush1.msra.mxu0 0.0
    %2856 = vmatprep.subr.mxu0 0.0
    %2857 = vmatpush1.msra.mxu0 0.0
    %2858 = vmatprep.subr.mxu0 0.0
    %2859 = vmatpush1.msra.mxu0 0.0
    %2860 = vmatprep.subr.mxu0 0.0
    %2861 = vmatpush1.msra.mxu0 0.0
    %2862 = vmatprep.subr.mxu0 0.0
    %2863 = vmatpush1.msra.mxu0 0.0
    %2864 = vmatprep.subr.mxu0 0.0
    %2865 = vmatpush1.msra.mxu0 0.0
    %2866 = vmatprep.subr.mxu0 0.0
    %2867 = vmatpush1.msra.mxu0 0.0
    %2868 = vmatprep.subr.mxu0 0.0
    %2869 = vmatpush1.msra.mxu0 0.0
    %2870 = vmatprep.subr.mxu0 0.0
    %2871 = vmatpush1.msra.mxu0 0.0
    %2872 = vmatprep.subr.mxu0 0.0
    %2873 = vmatpush1.msra.mxu0 0.0
    %2874 = vmatprep.subr.mxu0 0.0
    %2875 = vmatpush1.msra.mxu0 0.0
    %2876 = vmatprep.subr.mxu0 0.0
    %2877 = vmatpush1.msra.mxu0 0.0
    %2878 = vmatprep.subr.mxu0 0.0
    %2879 = vmatpush1.msra.mxu0 0.0
    %2880 = vmatprep.mubr.f32.mxu0 0.0
    %2881 = vmatmul.mubr.f32.gmra.mrb[0].mxu0 %v1952
    %v2882 = vpop.f32.mrb[0].mxu0
    %v2883 = vadd.f32 0.0, %v2882
    %v2884 = vpop.f32.mrb[0].mxu0
    %2885 = vmatprep.mubr.f32.mxu0 0.0
    %2886 = vmatmul.mubr.f32.gmra.mrb[0].mxu0 %v1955
    %v2887 = vpop.f32.mrb[0].mxu0
    %v2888 = vadd.f32 0.0, %v2887
    %v2889 = vpop.f32.mrb[0].mxu0
    %2890 = vdwg.mxu0
    %s2891 = scalar_lea.vmem %s6, 192
    %v2892 = vld [vmem:[%s2891] sm:$0xff]
    %v2893 = vld [vmem:[%s2891 + $0x8] sm:$0xff]
    %v2894 = vld [vmem:[%s2891 + $0x10] sm:$0xff]
    %v2895 = vld [vmem:[%s2891 + $0x18] sm:$0xff]
    %v2896 = vld [vmem:[%s2891 + $0x20] sm:$0xff]
    %v2897 = vld [vmem:[%s2891 + $0x28] sm:$0xff]
    %v2898 = vld [vmem:[%s2891 + $0x30] sm:$0xff]
    %v2899 = vld [vmem:[%s2891 + $0x38] sm:$0xff]
    %v2900 = vadd.f32 %v2024, %v2892
    %v2901 = vadd.f32 %v2029, %v2893
    %v2902 = vadd.f32 %v2099, %v2894
    %v2903 = vadd.f32 %v2104, %v2895
    %v2904 = vadd.f32 %v2174, %v2896
    %v2905 = vadd.f32 %v2179, %v2897
    %v2906 = vadd.f32 %v2249, %v2898
    %v2907 = vadd.f32 %v2254, %v2899
    %s2908 = scalar_lea.vmem %s6, 256
    %v2909 = vld [vmem:[%s2908] sm:$0xff]
    %v2910 = vld [vmem:[%s2908 + $0x8] sm:$0xff]
    %v2911 = vld [vmem:[%s2908 + $0x10] sm:$0xff]
    %v2912 = vld [vmem:[%s2908 + $0x18] sm:$0xff]
    %v2913 = vld [vmem:[%s2908 + $0x20] sm:$0xff]
    %v2914 = vld [vmem:[%s2908 + $0x28] sm:$0xff]
    %v2915 = vld [vmem:[%s2908 + $0x30] sm:$0xff]
    %v2916 = vld [vmem:[%s2908 + $0x38] sm:$0xff]
    %v2917 = vadd.f32 %v2341, %v2909
    %v2918 = vadd.f32 %v2346, %v2910
    %v2919 = vadd.f32 %v2416, %v2911
    %v2920 = vadd.f32 %v2421, %v2912
    %v2921 = vadd.f32 %v2491, %v2913
    %v2922 = vadd.f32 %v2496, %v2914
    %v2923 = vadd.f32 %v2566, %v2915
    %v2924 = vadd.f32 %v2571, %v2916
    %s2925 = scalar_lea.vmem %s6, 320
    %v2926 = vld [vmem:[%s2925] sm:$0xff]
    %v2927 = vld [vmem:[%s2925 + $0x8] sm:$0xff]
    %v2928 = vld [vmem:[%s2925 + $0x10] sm:$0xff]
    %v2929 = vld [vmem:[%s2925 + $0x18] sm:$0xff]
    %v2930 = vld [vmem:[%s2925 + $0x20] sm:$0xff]
    %v2931 = vld [vmem:[%s2925 + $0x28] sm:$0xff]
    %v2932 = vld [vmem:[%s2925 + $0x30] sm:$0xff]
    %v2933 = vld [vmem:[%s2925 + $0x38] sm:$0xff]
    %v2934 = vadd.f32 %v2658, %v2926
    %v2935 = vadd.f32 %v2663, %v2927
    %v2936 = vadd.f32 %v2733, %v2928
    %v2937 = vadd.f32 %v2738, %v2929
    %v2938 = vadd.f32 %v2808, %v2930
    %v2939 = vadd.f32 %v2813, %v2931
    %v2940 = vadd.f32 %v2883, %v2932
    %v2941 = vadd.f32 %v2888, %v2933
    %v2943 = vsel %vm1162, %v2900, 0
    %v2946 = vsel %vm1162, %v2901, 0
    %v2949 = vsel %vm1162, %v2902, 0
    %v2952 = vsel %vm1162, %v2903, 0
    %v2955 = vsel %vm1162, %v2904, 0
    %v2958 = vsel %vm1162, %v2905, 0
    %v2961 = vsel %vm1162, %v2906, 0
    %v2964 = vsel %vm1162, %v2907, 0
    %v2967 = vsel %vm1162, %v2917, 0
    %v2970 = vsel %vm1162, %v2918, 0
    %v2973 = vsel %vm1162, %v2919, 0
    %v2976 = vsel %vm1162, %v2920, 0
    %v2979 = vsel %vm1162, %v2921, 0
    %v2982 = vsel %vm1162, %v2922, 0
    %v2985 = vsel %vm1162, %v2923, 0
    %v2988 = vsel %vm1162, %v2924, 0
    %2990 = vmatprep.subr.mxu0 0.0
    %2991 = vmatpush1.xpose.msra.mxu0 %v2967
    %2992 = vmatprep.subr.mxu0 0.0
    %2993 = vmatpush1.xpose.msra.mxu0 %v2970
    %2994 = vmatprep.subr.mxu0 0.0
    %2995 = vmatpush1.xpose.msra.mxu0 %v2973
    %2996 = vmatprep.subr.mxu0 0.0
    %2997 = vmatpush1.xpose.msra.mxu0 %v2976
    %2998 = vmatprep.subr.mxu0 0.0
    %2999 = vmatpush1.xpose.msra.mxu0 %v2979
    %3000 = vmatprep.subr.mxu0 0.0
    %3001 = vmatpush1.xpose.msra.mxu0 %v2982
    %3002 = vmatprep.subr.mxu0 0.0
    %3003 = vmatpush1.xpose.msra.mxu0 %v2985
    %3004 = vmatprep.subr.mxu0 0.0
    %3005 = vmatpush1.xpose.msra.mxu0 %v2988
    %3006 = vmatprep.subr.mxu0 0.0
    %3007 = vmatpush1.xpose.msra.mxu0 0.0
    %3008 = vmatprep.subr.mxu0 0.0
    %3009 = vmatpush1.xpose.msra.mxu0 0.0
    %3010 = vmatprep.subr.mxu0 0.0
    %3011 = vmatpush1.xpose.msra.mxu0 0.0
    %3012 = vmatprep.subr.mxu0 0.0
    %3013 = vmatpush1.xpose.msra.mxu0 0.0
    %3014 = vmatprep.subr.mxu0 0.0
    %3015 = vmatpush1.xpose.msra.mxu0 0.0
    %3016 = vmatprep.subr.mxu0 0.0
    %3017 = vmatpush1.xpose.msra.mxu0 0.0
    %3018 = vmatprep.subr.mxu0 0.0
    %3019 = vmatpush1.xpose.msra.mxu0 0.0
    %3020 = vmatprep.subr.mxu0 0.0
    %3021 = vmatpush1.xpose.msra.mxu0 0.0
    %3022 = vmatprep.subr.mxu0 0.0
    %3023 = vmatpush1.xpose.msra.mxu0 0.0
    %3024 = vmatprep.subr.mxu0 0.0
    %3025 = vmatpush1.xpose.msra.mxu0 0.0
    %3026 = vmatprep.subr.mxu0 0.0
    %3027 = vmatpush1.xpose.msra.mxu0 0.0
    %3028 = vmatprep.subr.mxu0 0.0
    %3029 = vmatpush1.xpose.msra.mxu0 0.0
    %3030 = vmatprep.subr.mxu0 0.0
    %3031 = vmatpush1.xpose.msra.mxu0 0.0
    %3032 = vmatprep.subr.mxu0 0.0
    %3033 = vmatpush1.xpose.msra.mxu0 0.0
    %3034 = vmatprep.subr.mxu0 0.0
    %3035 = vmatpush1.xpose.msra.mxu0 0.0
    %3036 = vmatprep.subr.mxu0 0.0
    %3037 = vmatpush1.xpose.msra.mxu0 0.0
    %3038 = vmatprep.subr.mxu0 0.0
    %3039 = vmatpush1.xpose.msra.mxu0 0.0
    %3040 = vmatprep.subr.mxu0 0.0
    %3041 = vmatpush1.xpose.msra.mxu0 0.0
    %3042 = vmatprep.subr.mxu0 0.0
    %3043 = vmatpush1.xpose.msra.mxu0 0.0
    %3044 = vmatprep.subr.mxu0 0.0
    %3045 = vmatpush1.xpose.msra.mxu0 0.0
    %3046 = vmatprep.subr.mxu0 0.0
    %3047 = vmatpush1.xpose.msra.mxu0 0.0
    %3048 = vmatprep.subr.mxu0 0.0
    %3049 = vmatpush1.xpose.msra.mxu0 0.0
    %3050 = vmatprep.subr.mxu0 0.0
    %3051 = vmatpush1.xpose.msra.mxu0 0.0
    %3052 = vmatprep.subr.mxu0 0.0
    %3053 = vmatpush1.xpose.msra.mxu0 0.0
    %3054 = vmatprep.mubr.f32.mxu0 0.0
    %3055 = vmatmul.mubr.f32.gmra.mrb[0].mxu0 %v2943
    %v3056 = vpop.f32.mrb[0].mxu0
    %v3057 = vadd.f32 %v146, %v3056
    %v3058 = vpop.f32.mrb[0].mxu0
    %3059 = vmatprep.mubr.f32.mxu0 0.0
    %3060 = vmatmul.mubr.f32.gmra.mrb[0].mxu0 %v2946
    %v3061 = vpop.f32.mrb[0].mxu0
    %v3062 = vadd.f32 %v147, %v3061
    %v3063 = vpop.f32.mrb[0].mxu0
    %3064 = vmatprep.mubr.f32.mxu0 0.0
    %3065 = vmatmul.mubr.f32.gmra.mrb[0].mxu0 %v2949
    %v3066 = vpop.f32.mrb[0].mxu0
    %v3067 = vadd.f32 %v148, %v3066
    %v3068 = vpop.f32.mrb[0].mxu0
    %3069 = vmatprep.mubr.f32.mxu0 0.0
    %3070 = vmatmul.mubr.f32.gmra.mrb[0].mxu0 %v2952
    %v3071 = vpop.f32.mrb[0].mxu0
    %v3072 = vadd.f32 %v149, %v3071
    %v3073 = vpop.f32.mrb[0].mxu0
    %3074 = vmatprep.mubr.f32.mxu0 0.0
    %3075 = vmatmul.mubr.f32.gmra.mrb[0].mxu0 %v2955
    %v3076 = vpop.f32.mrb[0].mxu0
    %v3077 = vadd.f32 %v150, %v3076
    %v3078 = vpop.f32.mrb[0].mxu0
    %3079 = vmatprep.mubr.f32.mxu0 0.0
    %3080 = vmatmul.mubr.f32.gmra.mrb[0].mxu0 %v2958
    %v3081 = vpop.f32.mrb[0].mxu0
    %v3082 = vadd.f32 %v151, %v3081
    %v3083 = vpop.f32.mrb[0].mxu0
    %3084 = vmatprep.mubr.f32.mxu0 0.0
    %3085 = vmatmul.mubr.f32.gmra.mrb[0].mxu0 %v2961
    %v3086 = vpop.f32.mrb[0].mxu0
    %v3087 = vadd.f32 %v152, %v3086
    %v3088 = vpop.f32.mrb[0].mxu0
    %3089 = vmatprep.mubr.f32.mxu0 0.0
    %3090 = vmatmul.mubr.f32.gmra.mrb[0].mxu0 %v2964
    %v3091 = vpop.f32.mrb[0].mxu0
    %v3092 = vadd.f32 %v153, %v3091
    %v3093 = vpop.f32.mrb[0].mxu0
    %3094 = vdwg.mxu0
    %v3095 = vsel %vm62, %v3057, -inf
    %3096 = vmax.xlane.f32.xlu0 %v3095
    %v3097 = vpop.xlane.xlu0 %3096
    %v3098 = vsel %vm62, %v3062, -inf
    %3099 = vmax.xlane.f32.xlu0 %v3098
    %v3100 = vpop.xlane.xlu0 %3099
    %v3101 = vsel %vm62, %v3067, -inf
    %3102 = vmax.xlane.f32.xlu0 %v3101
    %v3103 = vpop.xlane.xlu0 %3102
    %v3104 = vsel %vm62, %v3072, -inf
    %3105 = vmax.xlane.f32.xlu0 %v3104
    %v3106 = vpop.xlane.xlu0 %3105
    %v3107 = vsel %vm62, %v3077, -inf
    %3108 = vmax.xlane.f32.xlu0 %v3107
    %v3109 = vpop.xlane.xlu0 %3108
    %v3110 = vsel %vm62, %v3082, -inf
    %3111 = vmax.xlane.f32.xlu0 %v3110
    %v3112 = vpop.xlane.xlu0 %3111
    %v3113 = vsel %vm62, %v3087, -inf
    %3114 = vmax.xlane.f32.xlu0 %v3113
    %v3115 = vpop.xlane.xlu0 %3114
    %v3116 = vsel %vm62, %v3092, -inf
    %3117 = vmax.xlane.f32.xlu0 %v3116
    %v3118 = vpop.xlane.xlu0 %3117
    %v3119 = vsub.f32 %v3057, %v3097
    %v3120 = vsub.f32 %v3062, %v3100
    %v3121 = vsub.f32 %v3067, %v3103
    %v3122 = vsub.f32 %v3072, %v3106
    %v3123 = vsub.f32 %v3077, %v3109
    %v3124 = vsub.f32 %v3082, %v3112
    %v3125 = vsub.f32 %v3087, %v3115
    %v3126 = vsub.f32 %v3092, %v3118
    %v3127 = vmul.f32 %v3119, 1.442695
    %v3128 = vpow.pop %v3127
    %v3129 = vmul.f32 %v3120, 1.442695
    %v3130 = vpow.pop %v3129
    %v3131 = vmul.f32 %v3121, 1.442695
    %v3132 = vpow.pop %v3131
    %v3133 = vmul.f32 %v3122, 1.442695
    %v3134 = vpow.pop %v3133
    %v3135 = vmul.f32 %v3123, 1.442695
    %v3136 = vpow.pop %v3135
    %v3137 = vmul.f32 %v3124, 1.442695
    %v3138 = vpow.pop %v3137
    %v3139 = vmul.f32 %v3125, 1.442695
    %v3140 = vpow.pop %v3139
    %v3141 = vmul.f32 %v3126, 1.442695
    %v3142 = vpow.pop %v3141
    %v3143 = vsel %vm62, %v3128, 0.0
    %3144 = vadd.xlane.f32.xlu0 %v3143
    %v3145 = vpop.xlane.xlu0 %3144
    %v3146 = vsel %vm62, %v3130, 0.0
    %3147 = vadd.xlane.f32.xlu0 %v3146
    %v3148 = vpop.xlane.xlu0 %3147
    %v3149 = vsel %vm62, %v3132, 0.0
    %3150 = vadd.xlane.f32.xlu0 %v3149
    %v3151 = vpop.xlane.xlu0 %3150
    %v3152 = vsel %vm62, %v3134, 0.0
    %3153 = vadd.xlane.f32.xlu0 %v3152
    %v3154 = vpop.xlane.xlu0 %3153
    %v3155 = vsel %vm62, %v3136, 0.0
    %3156 = vadd.xlane.f32.xlu0 %v3155
    %v3157 = vpop.xlane.xlu0 %3156
    %v3158 = vsel %vm62, %v3138, 0.0
    %3159 = vadd.xlane.f32.xlu0 %v3158
    %v3160 = vpop.xlane.xlu0 %3159
    %v3161 = vsel %vm62, %v3140, 0.0
    %3162 = vadd.xlane.f32.xlu0 %v3161
    %v3163 = vpop.xlane.xlu0 %3162
    %v3164 = vsel %vm62, %v3142, 0.0
    %3165 = vadd.xlane.f32.xlu0 %v3164
    %v3166 = vpop.xlane.xlu0 %3165
    %v3167 = vrcp.pop %v3145
    %v3168 = vrcp.pop %v3148
    %v3169 = vrcp.pop %v3151
    %v3170 = vrcp.pop %v3154
    %v3171 = vrcp.pop %v3157
    %v3172 = vrcp.pop %v3160
    %v3173 = vrcp.pop %v3163
    %v3174 = vrcp.pop %v3166
    %v3175 = vmul.f32 %v3128, %v3167
    %v3176 = vmul.f32 %v3130, %v3168
    %v3177 = vmul.f32 %v3132, %v3169
    %v3178 = vmul.f32 %v3134, %v3170
    %v3179 = vmul.f32 %v3136, %v3171
    %v3180 = vmul.f32 %v3138, %v3172
    %v3181 = vmul.f32 %v3140, %v3173
    %v3182 = vmul.f32 %v3142, %v3174
    %v3184 = vsel %vm62, %v3175, 0
    %v3187 = vsel %vm62, %v3176, 0
    %v3190 = vsel %vm62, %v3177, 0
    %v3193 = vsel %vm62, %v3178, 0
    %v3196 = vsel %vm62, %v3179, 0
    %v3199 = vsel %vm62, %v3180, 0
    %v3202 = vsel %vm62, %v3181, 0
    %v3205 = vsel %vm62, %v3182, 0
    %3207 = vmatprep.subr.mxu0 0.0
    %3208 = vmatpush1.msra.mxu0 %v2934
    %3209 = vmatprep.subr.mxu0 0.0
    %3210 = vmatpush1.msra.mxu0 %v2935
    %3211 = vmatprep.subr.mxu0 0.0
    %3212 = vmatpush1.msra.mxu0 %v2936
    %3213 = vmatprep.subr.mxu0 0.0
    %3214 = vmatpush1.msra.mxu0 %v2937
    %3215 = vmatprep.subr.mxu0 0.0
    %3216 = vmatpush1.msra.mxu0 %v2938
    %3217 = vmatprep.subr.mxu0 0.0
    %3218 = vmatpush1.msra.mxu0 %v2939
    %3219 = vmatprep.subr.mxu0 0.0
    %3220 = vmatpush1.msra.mxu0 %v2940
    %3221 = vmatprep.subr.mxu0 0.0
    %3222 = vmatpush1.msra.mxu0 %v2941
    %3223 = vmatprep.subr.mxu0 0.0
    %3224 = vmatpush1.msra.mxu0 0.0
    %3225 = vmatprep.subr.mxu0 0.0
    %3226 = vmatpush1.msra.mxu0 0.0
    %3227 = vmatprep.subr.mxu0 0.0
    %3228 = vmatpush1.msra.mxu0 0.0
    %3229 = vmatprep.subr.mxu0 0.0
    %3230 = vmatpush1.msra.mxu0 0.0
    %3231 = vmatprep.subr.mxu0 0.0
    %3232 = vmatpush1.msra.mxu0 0.0
    %3233 = vmatprep.subr.mxu0 0.0
    %3234 = vmatpush1.msra.mxu0 0.0
    %3235 = vmatprep.subr.mxu0 0.0
    %3236 = vmatpush1.msra.mxu0 0.0
    %3237 = vmatprep.subr.mxu0 0.0
    %3238 = vmatpush1.msra.mxu0 0.0
    %3239 = vmatprep.subr.mxu0 0.0
    %3240 = vmatpush1.msra.mxu0 0.0
    %3241 = vmatprep.subr.mxu0 0.0
    %3242 = vmatpush1.msra.mxu0 0.0
    %3243 = vmatprep.subr.mxu0 0.0
    %3244 = vmatpush1.msra.mxu0 0.0
    %3245 = vmatprep.subr.mxu0 0.0
    %3246 = vmatpush1.msra.mxu0 0.0
    %3247 = vmatprep.subr.mxu0 0.0
    %3248 = vmatpush1.msra.mxu0 0.0
    %3249 = vmatprep.subr.mxu0 0.0
    %3250 = vmatpush1.msra.mxu0 0.0
    %3251 = vmatprep.subr.mxu0 0.0
    %3252 = vmatpush1.msra.mxu0 0.0
    %3253 = vmatprep.subr.mxu0 0.0
    %3254 = vmatpush1.msra.mxu0 0.0
    %3255 = vmatprep.subr.mxu0 0.0
    %3256 = vmatpush1.msra.mxu0 0.0
    %3257 = vmatprep.subr.mxu0 0.0
    %3258 = vmatpush1.msra.mxu0 0.0
    %3259 = vmatprep.subr.mxu0 0.0
    %3260 = vmatpush1.msra.mxu0 0.0
    %3261 = vmatprep.subr.mxu0 0.0
    %3262 = vmatpush1.msra.mxu0 0.0
    %3263 = vmatprep.subr.mxu0 0.0
    %3264 = vmatpush1.msra.mxu0 0.0
    %3265 = vmatprep.subr.mxu0 0.0
    %3266 = vmatpush1.msra.mxu0 0.0
    %3267 = vmatprep.subr.mxu0 0.0
    %3268 = vmatpush1.msra.mxu0 0.0
    %3269 = vmatprep.subr.mxu0 0.0
    %3270 = vmatpush1.msra.mxu0 0.0
    %3271 = vmatprep.mubr.f32.mxu0 0.0
    %3272 = vmatmul.mubr.f32.gmra.mrb[0].mxu0 %v3184
    %v3273 = vpop.f32.mrb[0].mxu0
    %v3274 = vadd.f32 0.0, %v3273
    %v3275 = vpop.f32.mrb[0].mxu0
    %3276 = vmatprep.mubr.f32.mxu0 0.0
    %3277 = vmatmul.mubr.f32.gmra.mrb[0].mxu0 %v3187
    %v3278 = vpop.f32.mrb[0].mxu0
    %v3279 = vadd.f32 0.0, %v3278
    %v3280 = vpop.f32.mrb[0].mxu0
    %3281 = vmatprep.mubr.f32.mxu0 0.0
    %3282 = vmatmul.mubr.f32.gmra.mrb[0].mxu0 %v3190
    %v3283 = vpop.f32.mrb[0].mxu0
    %v3284 = vadd.f32 0.0, %v3283
    %v3285 = vpop.f32.mrb[0].mxu0
    %3286 = vmatprep.mubr.f32.mxu0 0.0
    %3287 = vmatmul.mubr.f32.gmra.mrb[0].mxu0 %v3193
    %v3288 = vpop.f32.mrb[0].mxu0
    %v3289 = vadd.f32 0.0, %v3288
    %v3290 = vpop.f32.mrb[0].mxu0
    %3291 = vmatprep.mubr.f32.mxu0 0.0
    %3292 = vmatmul.mubr.f32.gmra.mrb[0].mxu0 %v3196
    %v3293 = vpop.f32.mrb[0].mxu0
    %v3294 = vadd.f32 0.0, %v3293
    %v3295 = vpop.f32.mrb[0].mxu0
    %3296 = vmatprep.mubr.f32.mxu0 0.0
    %3297 = vmatmul.mubr.f32.gmra.mrb[0].mxu0 %v3199
    %v3298 = vpop.f32.mrb[0].mxu0
    %v3299 = vadd.f32 0.0, %v3298
    %v3300 = vpop.f32.mrb[0].mxu0
    %3301 = vmatprep.mubr.f32.mxu0 0.0
    %3302 = vmatmul.mubr.f32.gmra.mrb[0].mxu0 %v3202
    %v3303 = vpop.f32.mrb[0].mxu0
    %v3304 = vadd.f32 0.0, %v3303
    %v3305 = vpop.f32.mrb[0].mxu0
    %3306 = vmatprep.mubr.f32.mxu0 0.0
    %3307 = vmatmul.mubr.f32.gmra.mrb[0].mxu0 %v3205
    %v3308 = vpop.f32.mrb[0].mxu0
    %v3309 = vadd.f32 0.0, %v3308
    %v3310 = vpop.f32.mrb[0].mxu0
    %3311 = vdwg.mxu0
    %s3312 = scalar_lea.vmem %s7, 32
    %v3313 = vld [vmem:[%s3312] sm:$0xff]
    %v3314 = vld [vmem:[%s3312 + $0x8] sm:$0xff]
    %v3315 = vld [vmem:[%s3312 + $0x10] sm:$0xff]
    %v3316 = vld [vmem:[%s3312 + $0x18] sm:$0xff]
    %v3318 = vsel %vm1162, %v3274, 0
    %v3321 = vsel %vm1162, %v3279, 0
    %3323 = vmatprep.subr.mxu0 0.0
    %3324 = vmatpush1.msra.mxu0 %v3313
    %3325 = vmatprep.subr.mxu0 0.0
    %3326 = vmatpush1.msra.mxu0 0.0
    %3327 = vmatprep.subr.mxu0 0.0
    %3328 = vmatpush1.msra.mxu0 0.0
    %3329 = vmatprep.subr.mxu0 0.0
    %3330 = vmatpush1.msra.mxu0 0.0
    %3331 = vmatprep.subr.mxu0 0.0
    %3332 = vmatpush1.msra.mxu0 0.0
    %3333 = vmatprep.subr.mxu0 0.0
    %3334 = vmatpush1.msra.mxu0 0.0
    %3335 = vmatprep.subr.mxu0 0.0
    %3336 = vmatpush1.msra.mxu0 0.0
    %3337 = vmatprep.subr.mxu0 0.0
    %3338 = vmatpush1.msra.mxu0 0.0
    %3339 = vmatprep.subr.mxu0 0.0
    %3340 = vmatpush1.msra.mxu0 0.0
    %3341 = vmatprep.subr.mxu0 0.0
    %3342 = vmatpush1.msra.mxu0 0.0
    %3343 = vmatprep.subr.mxu0 0.0
    %3344 = vmatpush1.msra.mxu0 0.0
    %3345 = vmatprep.subr.mxu0 0.0
    %3346 = vmatpush1.msra.mxu0 0.0
    %3347 = vmatprep.subr.mxu0 0.0
    %3348 = vmatpush1.msra.mxu0 0.0
    %3349 = vmatprep.subr.mxu0 0.0
    %3350 = vmatpush1.msra.mxu0 0.0
    %3351 = vmatprep.subr.mxu0 0.0
    %3352 = vmatpush1.msra.mxu0 0.0
    %3353 = vmatprep.subr.mxu0 0.0
    %3354 = vmatpush1.msra.mxu0 0.0
    %3355 = vmatprep.subr.mxu0 0.0
    %3356 = vmatpush1.msra.mxu0 0.0
    %3357 = vmatprep.subr.mxu0 0.0
    %3358 = vmatpush1.msra.mxu0 0.0
    %3359 = vmatprep.subr.mxu0 0.0
    %3360 = vmatpush1.msra.mxu0 0.0
    %3361 = vmatprep.subr.mxu0 0.0
    %3362 = vmatpush1.msra.mxu0 0.0
    %3363 = vmatprep.subr.mxu0 0.0
    %3364 = vmatpush1.msra.mxu0 0.0
    %3365 = vmatprep.subr.mxu0 0.0
    %3366 = vmatpush1.msra.mxu0 0.0
    %3367 = vmatprep.subr.mxu0 0.0
    %3368 = vmatpush1.msra.mxu0 0.0
    %3369 = vmatprep.subr.mxu0 0.0
    %3370 = vmatpush1.msra.mxu0 0.0
    %3371 = vmatprep.subr.mxu0 0.0
    %3372 = vmatpush1.msra.mxu0 0.0
    %3373 = vmatprep.subr.mxu0 0.0
    %3374 = vmatpush1.msra.mxu0 0.0
    %3375 = vmatprep.subr.mxu0 0.0
    %3376 = vmatpush1.msra.mxu0 0.0
    %3377 = vmatprep.subr.mxu0 0.0
    %3378 = vmatpush1.msra.mxu0 0.0
    %3379 = vmatprep.subr.mxu0 0.0
    %3380 = vmatpush1.msra.mxu0 0.0
    %3381 = vmatprep.subr.mxu0 0.0
    %3382 = vmatpush1.msra.mxu0 0.0
    %3383 = vmatprep.subr.mxu0 0.0
    %3384 = vmatpush1.msra.mxu0 0.0
    %3385 = vmatprep.subr.mxu0 0.0
    %3386 = vmatpush1.msra.mxu0 0.0
    %3387 = vmatprep.mubr.f32.mxu0 0.0
    %3388 = vmatmul.mubr.f32.gmra.mrb[0].mxu0 %v3318
    %v3389 = vpop.f32.mrb[0].mxu0
    %v3390 = vadd.f32 0.0, %v3389
    %v3391 = vpop.f32.mrb[0].mxu0
    %3392 = vmatprep.mubr.f32.mxu0 0.0
    %3393 = vmatmul.mubr.f32.gmra.mrb[0].mxu0 %v3321
    %v3394 = vpop.f32.mrb[0].mxu0
    %v3395 = vadd.f32 0.0, %v3394
    %v3396 = vpop.f32.mrb[0].mxu0
    %3397 = vdwg.mxu0
    %v3399 = vsel %vm1162, %v3284, 0
    %v3402 = vsel %vm1162, %v3289, 0
    %3404 = vmatprep.subr.mxu0 0.0
    %3405 = vmatpush1.msra.mxu0 %v3314
    %3406 = vmatprep.subr.mxu0 0.0
    %3407 = vmatpush1.msra.mxu0 0.0
    %3408 = vmatprep.subr.mxu0 0.0
    %3409 = vmatpush1.msra.mxu0 0.0
    %3410 = vmatprep.subr.mxu0 0.0
    %3411 = vmatpush1.msra.mxu0 0.0
    %3412 = vmatprep.subr.mxu0 0.0
    %3413 = vmatpush1.msra.mxu0 0.0
    %3414 = vmatprep.subr.mxu0 0.0
    %3415 = vmatpush1.msra.mxu0 0.0
    %3416 = vmatprep.subr.mxu0 0.0
    %3417 = vmatpush1.msra.mxu0 0.0
    %3418 = vmatprep.subr.mxu0 0.0
    %3419 = vmatpush1.msra.mxu0 0.0
    %3420 = vmatprep.subr.mxu0 0.0
    %3421 = vmatpush1.msra.mxu0 0.0
    %3422 = vmatprep.subr.mxu0 0.0
    %3423 = vmatpush1.msra.mxu0 0.0
    %3424 = vmatprep.subr.mxu0 0.0
    %3425 = vmatpush1.msra.mxu0 0.0
    %3426 = vmatprep.subr.mxu0 0.0
    %3427 = vmatpush1.msra.mxu0 0.0
    %3428 = vmatprep.subr.mxu0 0.0
    %3429 = vmatpush1.msra.mxu0 0.0
    %3430 = vmatprep.subr.mxu0 0.0
    %3431 = vmatpush1.msra.mxu0 0.0
    %3432 = vmatprep.subr.mxu0 0.0
    %3433 = vmatpush1.msra.mxu0 0.0
    %3434 = vmatprep.subr.mxu0 0.0
    %3435 = vmatpush1.msra.mxu0 0.0
    %3436 = vmatprep.subr.mxu0 0.0
    %3437 = vmatpush1.msra.mxu0 0.0
    %3438 = vmatprep.subr.mxu0 0.0
    %3439 = vmatpush1.msra.mxu0 0.0
    %3440 = vmatprep.subr.mxu0 0.0
    %3441 = vmatpush1.msra.mxu0 0.0
    %3442 = vmatprep.subr.mxu0 0.0
    %3443 = vmatpush1.msra.mxu0 0.0
    %3444 = vmatprep.subr.mxu0 0.0
    %3445 = vmatpush1.msra.mxu0 0.0
    %3446 = vmatprep.subr.mxu0 0.0
    %3447 = vmatpush1.msra.mxu0 0.0
    %3448 = vmatprep.subr.mxu0 0.0
    %3449 = vmatpush1.msra.mxu0 0.0
    %3450 = vmatprep.subr.mxu0 0.0
    %3451 = vmatpush1.msra.mxu0 0.0
    %3452 = vmatprep.subr.mxu0 0.0
    %3453 = vmatpush1.msra.mxu0 0.0
    %3454 = vmatprep.subr.mxu0 0.0
    %3455 = vmatpush1.msra.mxu0 0.0
    %3456 = vmatprep.subr.mxu0 0.0
    %3457 = vmatpush1.msra.mxu0 0.0
    %3458 = vmatprep.subr.mxu0 0.0
    %3459 = vmatpush1.msra.mxu0 0.0
    %3460 = vmatprep.subr.mxu0 0.0
    %3461 = vmatpush1.msra.mxu0 0.0
    %3462 = vmatprep.subr.mxu0 0.0
    %3463 = vmatpush1.msra.mxu0 0.0
    %3464 = vmatprep.subr.mxu0 0.0
    %3465 = vmatpush1.msra.mxu0 0.0
    %3466 = vmatprep.subr.mxu0 0.0
    %3467 = vmatpush1.msra.mxu0 0.0
    %3468 = vmatprep.mubr.f32.mxu0 0.0
    %3469 = vmatmul.mubr.f32.gmra.mrb[0].mxu0 %v3399
    %v3470 = vpop.f32.mrb[0].mxu0
    %v3471 = vadd.f32 0.0, %v3470
    %v3472 = vpop.f32.mrb[0].mxu0
    %3473 = vmatprep.mubr.f32.mxu0 0.0
    %3474 = vmatmul.mubr.f32.gmra.mrb[0].mxu0 %v3402
    %v3475 = vpop.f32.mrb[0].mxu0
    %v3476 = vadd.f32 0.0, %v3475
    %v3477 = vpop.f32.mrb[0].mxu0
    %3478 = vdwg.mxu0
    %v3480 = vsel %vm1162, %v3294, 0
    %v3483 = vsel %vm1162, %v3299, 0
    %3485 = vmatprep.subr.mxu0 0.0
    %3486 = vmatpush1.msra.mxu0 %v3315
    %3487 = vmatprep.subr.mxu0 0.0
    %3488 = vmatpush1.msra.mxu0 0.0
    %3489 = vmatprep.subr.mxu0 0.0
    %3490 = vmatpush1.msra.mxu0 0.0
    %3491 = vmatprep.subr.mxu0 0.0
    %3492 = vmatpush1.msra.mxu0 0.0
    %3493 = vmatprep.subr.mxu0 0.0
    %3494 = vmatpush1.msra.mxu0 0.0
    %3495 = vmatprep.subr.mxu0 0.0
    %3496 = vmatpush1.msra.mxu0 0.0
    %3497 = vmatprep.subr.mxu0 0.0
    %3498 = vmatpush1.msra.mxu0 0.0
    %3499 = vmatprep.subr.mxu0 0.0
    %3500 = vmatpush1.msra.mxu0 0.0
    %3501 = vmatprep.subr.mxu0 0.0
    %3502 = vmatpush1.msra.mxu0 0.0
    %3503 = vmatprep.subr.mxu0 0.0
    %3504 = vmatpush1.msra.mxu0 0.0
    %3505 = vmatprep.subr.mxu0 0.0
    %3506 = vmatpush1.msra.mxu0 0.0
    %3507 = vmatprep.subr.mxu0 0.0
    %3508 = vmatpush1.msra.mxu0 0.0
    %3509 = vmatprep.subr.mxu0 0.0
    %3510 = vmatpush1.msra.mxu0 0.0
    %3511 = vmatprep.subr.mxu0 0.0
    %3512 = vmatpush1.msra.mxu0 0.0
    %3513 = vmatprep.subr.mxu0 0.0
    %3514 = vmatpush1.msra.mxu0 0.0
    %3515 = vmatprep.subr.mxu0 0.0
    %3516 = vmatpush1.msra.mxu0 0.0
    %3517 = vmatprep.subr.mxu0 0.0
    %3518 = vmatpush1.msra.mxu0 0.0
    %3519 = vmatprep.subr.mxu0 0.0
    %3520 = vmatpush1.msra.mxu0 0.0
    %3521 = vmatprep.subr.mxu0 0.0
    %3522 = vmatpush1.msra.mxu0 0.0
    %3523 = vmatprep.subr.mxu0 0.0
    %3524 = vmatpush1.msra.mxu0 0.0
    %3525 = vmatprep.subr.mxu0 0.0
    %3526 = vmatpush1.msra.mxu0 0.0
    %3527 = vmatprep.subr.mxu0 0.0
    %3528 = vmatpush1.msra.mxu0 0.0
    %3529 = vmatprep.subr.mxu0 0.0
    %3530 = vmatpush1.msra.mxu0 0.0
    %3531 = vmatprep.subr.mxu0 0.0
    %3532 = vmatpush1.msra.mxu0 0.0
    %3533 = vmatprep.subr.mxu0 0.0
    %3534 = vmatpush1.msra.mxu0 0.0
    %3535 = vmatprep.subr.mxu0 0.0
    %3536 = vmatpush1.msra.mxu0 0.0
    %3537 = vmatprep.subr.mxu0 0.0
    %3538 = vmatpush1.msra.mxu0 0.0
    %3539 = vmatprep.subr.mxu0 0.0
    %3540 = vmatpush1.msra.mxu0 0.0
    %3541 = vmatprep.subr.mxu0 0.0
    %3542 = vmatpush1.msra.mxu0 0.0
    %3543 = vmatprep.subr.mxu0 0.0
    %3544 = vmatpush1.msra.mxu0 0.0
    %3545 = vmatprep.subr.mxu0 0.0
    %3546 = vmatpush1.msra.mxu0 0.0
    %3547 = vmatprep.subr.mxu0 0.0
    %3548 = vmatpush1.msra.mxu0 0.0
    %3549 = vmatprep.mubr.f32.mxu0 0.0
    %3550 = vmatmul.mubr.f32.gmra.mrb[0].mxu0 %v3480
    %v3551 = vpop.f32.mrb[0].mxu0
    %v3552 = vadd.f32 0.0, %v3551
    %v3553 = vpop.f32.mrb[0].mxu0
    %3554 = vmatprep.mubr.f32.mxu0 0.0
    %3555 = vmatmul.mubr.f32.gmra.mrb[0].mxu0 %v3483
    %v3556 = vpop.f32.mrb[0].mxu0
    %v3557 = vadd.f32 0.0, %v3556
    %v3558 = vpop.f32.mrb[0].mxu0
    %3559 = vdwg.mxu0
    %v3561 = vsel %vm1162, %v3304, 0
    %v3564 = vsel %vm1162, %v3309, 0
    %3566 = vmatprep.subr.mxu0 0.0
    %3567 = vmatpush1.msra.mxu0 %v3316
    %3568 = vmatprep.subr.mxu0 0.0
    %3569 = vmatpush1.msra.mxu0 0.0
    %3570 = vmatprep.subr.mxu0 0.0
    %3571 = vmatpush1.msra.mxu0 0.0
    %3572 = vmatprep.subr.mxu0 0.0
    %3573 = vmatpush1.msra.mxu0 0.0
    %3574 = vmatprep.subr.mxu0 0.0
    %3575 = vmatpush1.msra.mxu0 0.0
    %3576 = vmatprep.subr.mxu0 0.0
    %3577 = vmatpush1.msra.mxu0 0.0
    %3578 = vmatprep.subr.mxu0 0.0
    %3579 = vmatpush1.msra.mxu0 0.0
    %3580 = vmatprep.subr.mxu0 0.0
    %3581 = vmatpush1.msra.mxu0 0.0
    %3582 = vmatprep.subr.mxu0 0.0
    %3583 = vmatpush1.msra.mxu0 0.0
    %3584 = vmatprep.subr.mxu0 0.0
    %3585 = vmatpush1.msra.mxu0 0.0
    %3586 = vmatprep.subr.mxu0 0.0
    %3587 = vmatpush1.msra.mxu0 0.0
    %3588 = vmatprep.subr.mxu0 0.0
    %3589 = vmatpush1.msra.mxu0 0.0
    %3590 = vmatprep.subr.mxu0 0.0
    %3591 = vmatpush1.msra.mxu0 0.0
    %3592 = vmatprep.subr.mxu0 0.0
    %3593 = vmatpush1.msra.mxu0 0.0
    %3594 = vmatprep.subr.mxu0 0.0
    %3595 = vmatpush1.msra.mxu0 0.0
    %3596 = vmatprep.subr.mxu0 0.0
    %3597 = vmatpush1.msra.mxu0 0.0
    %3598 = vmatprep.subr.mxu0 0.0
    %3599 = vmatpush1.msra.mxu0 0.0
    %3600 = vmatprep.subr.mxu0 0.0
    %3601 = vmatpush1.msra.mxu0 0.0
    %3602 = vmatprep.subr.mxu0 0.0
    %3603 = vmatpush1.msra.mxu0 0.0
    %3604 = vmatprep.subr.mxu0 0.0
    %3605 = vmatpush1.msra.mxu0 0.0
    %3606 = vmatprep.subr.mxu0 0.0
    %3607 = vmatpush1.msra.mxu0 0.0
    %3608 = vmatprep.subr.mxu0 0.0
    %3609 = vmatpush1.msra.mxu0 0.0
    %3610 = vmatprep.subr.mxu0 0.0
    %3611 = vmatpush1.msra.mxu0 0.0
    %3612 = vmatprep.subr.mxu0 0.0
    %3613 = vmatpush1.msra.mxu0 0.0
    %3614 = vmatprep.subr.mxu0 0.0
    %3615 = vmatpush1.msra.mxu0 0.0
    %3616 = vmatprep.subr.mxu0 0.0
    %3617 = vmatpush1.msra.mxu0 0.0
    %3618 = vmatprep.subr.mxu0 0.0
    %3619 = vmatpush1.msra.mxu0 0.0
    %3620 = vmatprep.subr.mxu0 0.0
    %3621 = vmatpush1.msra.mxu0 0.0
    %3622 = vmatprep.subr.mxu0 0.0
    %3623 = vmatpush1.msra.mxu0 0.0
    %3624 = vmatprep.subr.mxu0 0.0
    %3625 = vmatpush1.msra.mxu0 0.0
    %3626 = vmatprep.subr.mxu0 0.0
    %3627 = vmatpush1.msra.mxu0 0.0
    %3628 = vmatprep.subr.mxu0 0.0
    %3629 = vmatpush1.msra.mxu0 0.0
    %3630 = vmatprep.mubr.f32.mxu0 0.0
    %3631 = vmatmul.mubr.f32.gmra.mrb[0].mxu0 %v3561
    %v3632 = vpop.f32.mrb[0].mxu0
    %v3633 = vadd.f32 0.0, %v3632
    %v3634 = vpop.f32.mrb[0].mxu0
    %3635 = vmatprep.mubr.f32.mxu0 0.0
    %3636 = vmatmul.mubr.f32.gmra.mrb[0].mxu0 %v3564
    %v3637 = vpop.f32.mrb[0].mxu0
    %v3638 = vadd.f32 0.0, %v3637
    %v3639 = vpop.f32.mrb[0].mxu0
    %3640 = vdwg.mxu0
    %v3641 = vsel %vm171, %v3390, 0.0
    %v3642 = vsel %vm171, %v3471, 0.0
    %v3643 = vadd.f32 %v3641, %v3642
    %v3644 = vsel %vm171, %v3552, 0.0
    %v3645 = vadd.f32 %v3643, %v3644
    %v3646 = vsel %vm171, %v3633, 0.0
    %v3647 = vadd.f32 %v3645, %v3646
    %v3648 = vsel %vm171, %v3395, 0.0
    %v3649 = vsel %vm171, %v3476, 0.0
    %v3650 = vadd.f32 %v3648, %v3649
    %v3651 = vsel %vm171, %v3557, 0.0
    %v3652 = vadd.f32 %v3650, %v3651
    %v3653 = vsel %vm171, %v3638, 0.0
    %v3654 = vadd.f32 %v3652, %v3653
    %v3656 = vlaneseq
    %v3657 = vshrl.u32 %v3656, 7
    %v3658 = vsub.s32 0, %v3657
    %v3659 = vrot.slane %v1933, %v3658
    %v3661 = vadd.f32 %v3647, %v3659
    %v3662 = vadd.f32 %v3654, %v3659
    %v3663 = vadd.f32 %v1930, %v3661
    %v3664 = vadd.f32 %v1931, %v3662
    %s3665 = scalar_lea.vmem %s9, 4
    %v3666 = vld [vmem:[%s3665] sm:$0x1]
    %s3667 = scalar_lea.vmem %s9, 5
    %v3668 = vld [vmem:[%s3667] sm:$0x1]
    %v3669 = vsel %vm171, %v3663, 0.0
    %3670 = vadd.xlane.f32.xlu0 %v3669
    %v3671 = vpop.xlane.xlu0 %3670
    %v3672 = vsel %vm171, %v3664, 0.0
    %3673 = vadd.xlane.f32.xlu0 %v3672
    %v3674 = vpop.xlane.xlu0 %3673
    %v3675 = vmul.f32 %v3671, %v1895
    %v3676 = vmul.f32 %v3674, %v1895
    %v3677 = vsub.f32 %v3663, %v3675
    %v3678 = vsub.f32 %v3664, %v3676
    %v3679 = vmul.f32 %v3677, %v3677
    %v3680 = vmul.f32 %v3678, %v3678
    %v3681 = vsel %vm171, %v3679, 0.0
    %3682 = vadd.xlane.f32.xlu0 %v3681
    %v3683 = vpop.xlane.xlu0 %3682
    %v3684 = vsel %vm171, %v3680, 0.0
    %3685 = vadd.xlane.f32.xlu0 %v3684
    %v3686 = vpop.xlane.xlu0 %3685
    %v3687 = vmul.f32 %v3683, %v1895
    %v3688 = vmul.f32 %v3686, %v1895
    %v3689 = vadd.f32 %v3687, 1e-05
    %v3690 = vadd.f32 %v3688, 1e-05
    %v3691 = vrsqrt.pop %v3689
    %v3692 = vrsqrt.pop %v3690
    %v3693 = vmul.f32 %v3677, %v3691
    %v3694 = vmul.f32 %v3678, %v3692
    %v3696 = vlaneseq
    %v3697 = vshrl.u32 %v3696, 7
    %v3698 = vsub.s32 0, %v3697
    %v3699 = vrot.slane %v3666, %v3698
    %v3701 = vmul.f32 %v3693, %v3699
    %v3702 = vmul.f32 %v3694, %v3699
    %v3704 = vlaneseq
    %v3705 = vshrl.u32 %v3704, 7
    %v3706 = vsub.s32 0, %v3705
    %v3707 = vrot.slane %v3668, %v3706
    %v3709 = vadd.f32 %v3701, %v3707
    %v3710 = vadd.f32 %v3702, %v3707
    %v3711 = vld [vmem:[%s8] sm:$0xff]
    %v3712 = vld [vmem:[%s8 + $0x8] sm:$0xff]
    %v3713 = vld [vmem:[%s8 + $0x10] sm:$0xff]
    %v3714 = vld [vmem:[%s8 + $0x18] sm:$0xff]
    %s3715 = scalar_lea.vmem %s9, 6
    %v3716 = vld [vmem:[%s3715] sm:$0x1]
    %v3718 = vlaneseq
    %v3719 = vshrl.u32 %v3718, 7
    %v3720 = vsub.s32 0, %v3719
    %v3721 = vrot.slane %v3716, %v3720
    %v3724 = vsel %vm171, %v3709, 0
    %v3727 = vsel %vm171, %v3710, 0
    %3729 = vmatprep.subr.mxu0 0.0
    %3730 = vmatpush1.msra.mxu0 %v3711
    %3731 = vmatprep.subr.mxu0 0.0
    %3732 = vmatpush1.msra.mxu0 %v3712
    %3733 = vmatprep.subr.mxu0 0.0
    %3734 = vmatpush1.msra.mxu0 %v3713
    %3735 = vmatprep.subr.mxu0 0.0
    %3736 = vmatpush1.msra.mxu0 %v3714
    %3737 = vmatprep.subr.mxu0 0.0
    %3738 = vmatpush1.msra.mxu0 0.0
    %3739 = vmatprep.subr.mxu0 0.0
    %3740 = vmatpush1.msra.mxu0 0.0
    %3741 = vmatprep.subr.mxu0 0.0
    %3742 = vmatpush1.msra.mxu0 0.0
    %3743 = vmatprep.subr.mxu0 0.0
    %3744 = vmatpush1.msra.mxu0 0.0
    %3745 = vmatprep.subr.mxu0 0.0
    %3746 = vmatpush1.msra.mxu0 0.0
    %3747 = vmatprep.subr.mxu0 0.0
    %3748 = vmatpush1.msra.mxu0 0.0
    %3749 = vmatprep.subr.mxu0 0.0
    %3750 = vmatpush1.msra.mxu0 0.0
    %3751 = vmatprep.subr.mxu0 0.0
    %3752 = vmatpush1.msra.mxu0 0.0
    %3753 = vmatprep.subr.mxu0 0.0
    %3754 = vmatpush1.msra.mxu0 0.0
    %3755 = vmatprep.subr.mxu0 0.0
    %3756 = vmatpush1.msra.mxu0 0.0
    %3757 = vmatprep.subr.mxu0 0.0
    %3758 = vmatpush1.msra.mxu0 0.0
    %3759 = vmatprep.subr.mxu0 0.0
    %3760 = vmatpush1.msra.mxu0 0.0
    %3761 = vmatprep.subr.mxu0 0.0
    %3762 = vmatpush1.msra.mxu0 0.0
    %3763 = vmatprep.subr.mxu0 0.0
    %3764 = vmatpush1.msra.mxu0 0.0
    %3765 = vmatprep.subr.mxu0 0.0
    %3766 = vmatpush1.msra.mxu0 0.0
    %3767 = vmatprep.subr.mxu0 0.0
    %3768 = vmatpush1.msra.mxu0 0.0
    %3769 = vmatprep.subr.mxu0 0.0
    %3770 = vmatpush1.msra.mxu0 0.0
    %3771 = vmatprep.subr.mxu0 0.0
    %3772 = vmatpush1.msra.mxu0 0.0
    %3773 = vmatprep.subr.mxu0 0.0
    %3774 = vmatpush1.msra.mxu0 0.0
    %3775 = vmatprep.subr.mxu0 0.0
    %3776 = vmatpush1.msra.mxu0 0.0
    %3777 = vmatprep.subr.mxu0 0.0
    %3778 = vmatpush1.msra.mxu0 0.0
    %3779 = vmatprep.subr.mxu0 0.0
    %3780 = vmatpush1.msra.mxu0 0.0
    %3781 = vmatprep.subr.mxu0 0.0
    %3782 = vmatpush1.msra.mxu0 0.0
    %3783 = vmatprep.subr.mxu0 0.0
    %3784 = vmatpush1.msra.mxu0 0.0
    %3785 = vmatprep.subr.mxu0 0.0
    %3786 = vmatpush1.msra.mxu0 0.0
    %3787 = vmatprep.subr.mxu0 0.0
    %3788 = vmatpush1.msra.mxu0 0.0
    %3789 = vmatprep.subr.mxu0 0.0
    %3790 = vmatpush1.msra.mxu0 0.0
    %3791 = vmatprep.subr.mxu0 0.0
    %3792 = vmatpush1.msra.mxu0 0.0
    %3793 = vmatprep.mubr.f32.mxu0 0.0
    %3794 = vmatmul.mubr.f32.gmra.mrb[0].mxu0 %v3724
    %v3795 = vpop.f32.mrb[0].mxu0
    %v3796 = vadd.f32 %v3721, %v3795
    %v3797 = vpop.f32.mrb[0].mxu0
    %3798 = vmatprep.mubr.f32.mxu0 0.0
    %3799 = vmatmul.mubr.f32.gmra.mrb[0].mxu0 %v3727
    %v3800 = vpop.f32.mrb[0].mxu0
    %v3801 = vadd.f32 %v3721, %v3800
    %v3802 = vpop.f32.mrb[0].mxu0
    %3803 = vdwg.mxu0
    %v3804 = vmax.f32 %v3796, 0.0
    %v3805 = vmax.f32 %v3801, 0.0
    %s3806 = scalar_lea.vmem %s8, 32
    %v3807 = vld [vmem:[%s3806] sm:$0xff]
    %v3808 = vld [vmem:[%s3806 + $0x8] sm:$0xff]
    %v3809 = vld [vmem:[%s3806 + $0x10] sm:$0xff]
    %v3810 = vld [vmem:[%s3806 + $0x18] sm:$0xff]
    %s3811 = scalar_lea.vmem %s9, 7
    %v3812 = vld [vmem:[%s3811] sm:$0x1]
    %v3814 = vlaneseq
    %v3815 = vshrl.u32 %v3814, 7
    %v3816 = vsub.s32 0, %v3815
    %v3817 = vrot.slane %v3812, %v3816
    %v3820 = vsel %vm171, %v3804, 0
    %v3823 = vsel %vm171, %v3805, 0
    %3825 = vmatprep.subr.mxu0 0.0
    %3826 = vmatpush1.msra.mxu0 %v3807
    %3827 = vmatprep.subr.mxu0 0.0
    %3828 = vmatpush1.msra.mxu0 %v3808
    %3829 = vmatprep.subr.mxu0 0.0
    %3830 = vmatpush1.msra.mxu0 %v3809
    %3831 = vmatprep.subr.mxu0 0.0
    %3832 = vmatpush1.msra.mxu0 %v3810
    %3833 = vmatprep.subr.mxu0 0.0
    %3834 = vmatpush1.msra.mxu0 0.0
    %3835 = vmatprep.subr.mxu0 0.0
    %3836 = vmatpush1.msra.mxu0 0.0
    %3837 = vmatprep.subr.mxu0 0.0
    %3838 = vmatpush1.msra.mxu0 0.0
    %3839 = vmatprep.subr.mxu0 0.0
    %3840 = vmatpush1.msra.mxu0 0.0
    %3841 = vmatprep.subr.mxu0 0.0
    %3842 = vmatpush1.msra.mxu0 0.0
    %3843 = vmatprep.subr.mxu0 0.0
    %3844 = vmatpush1.msra.mxu0 0.0
    %3845 = vmatprep.subr.mxu0 0.0
    %3846 = vmatpush1.msra.mxu0 0.0
    %3847 = vmatprep.subr.mxu0 0.0
    %3848 = vmatpush1.msra.mxu0 0.0
    %3849 = vmatprep.subr.mxu0 0.0
    %3850 = vmatpush1.msra.mxu0 0.0
    %3851 = vmatprep.subr.mxu0 0.0
    %3852 = vmatpush1.msra.mxu0 0.0
    %3853 = vmatprep.subr.mxu0 0.0
    %3854 = vmatpush1.msra.mxu0 0.0
    %3855 = vmatprep.subr.mxu0 0.0
    %3856 = vmatpush1.msra.mxu0 0.0
    %3857 = vmatprep.subr.mxu0 0.0
    %3858 = vmatpush1.msra.mxu0 0.0
    %3859 = vmatprep.subr.mxu0 0.0
    %3860 = vmatpush1.msra.mxu0 0.0
    %3861 = vmatprep.subr.mxu0 0.0
    %3862 = vmatpush1.msra.mxu0 0.0
    %3863 = vmatprep.subr.mxu0 0.0
    %3864 = vmatpush1.msra.mxu0 0.0
    %3865 = vmatprep.subr.mxu0 0.0
    %3866 = vmatpush1.msra.mxu0 0.0
    %3867 = vmatprep.subr.mxu0 0.0
    %3868 = vmatpush1.msra.mxu0 0.0
    %3869 = vmatprep.subr.mxu0 0.0
    %3870 = vmatpush1.msra.mxu0 0.0
    %3871 = vmatprep.subr.mxu0 0.0
    %3872 = vmatpush1.msra.mxu0 0.0
    %3873 = vmatprep.subr.mxu0 0.0
    %3874 = vmatpush1.msra.mxu0 0.0
    %3875 = vmatprep.subr.mxu0 0.0
    %3876 = vmatpush1.msra.mxu0 0.0
    %3877 = vmatprep.subr.mxu0 0.0
    %3878 = vmatpush1.msra.mxu0 0.0
    %3879 = vmatprep.subr.mxu0 0.0
    %3880 = vmatpush1.msra.mxu0 0.0
    %3881 = vmatprep.subr.mxu0 0.0
    %3882 = vmatpush1.msra.mxu0 0.0
    %3883 = vmatprep.subr.mxu0 0.0
    %3884 = vmatpush1.msra.mxu0 0.0
    %3885 = vmatprep.subr.mxu0 0.0
    %3886 = vmatpush1.msra.mxu0 0.0
    %3887 = vmatprep.subr.mxu0 0.0
    %3888 = vmatpush1.msra.mxu0 0.0
    %3889 = vmatprep.mubr.f32.mxu0 0.0
    %3890 = vmatmul.mubr.f32.gmra.mrb[0].mxu0 %v3820
    %v3891 = vpop.f32.mrb[0].mxu0
    %v3892 = vadd.f32 %v3817, %v3891
    %v3893 = vpop.f32.mrb[0].mxu0
    %3894 = vmatprep.mubr.f32.mxu0 0.0
    %3895 = vmatmul.mubr.f32.gmra.mrb[0].mxu0 %v3823
    %v3896 = vpop.f32.mrb[0].mxu0
    %v3897 = vadd.f32 %v3817, %v3896
    %v3898 = vpop.f32.mrb[0].mxu0
    %3899 = vdwg.mxu0
    %v3900 = vadd.f32 %v3709, %v3892
    %v3901 = vadd.f32 %v3710, %v3897
    %s3902 = scalar_lea.vmem %s9, 8
    %v3903 = vld [vmem:[%s3902] sm:$0x1]
    %s3904 = scalar_lea.vmem %s9, 9
    %v3905 = vld [vmem:[%s3904] sm:$0x1]
    %v3906 = vsel %vm171, %v3900, 0.0
    %3907 = vadd.xlane.f32.xlu0 %v3906
    %v3908 = vpop.xlane.xlu0 %3907
    %v3909 = vsel %vm171, %v3901, 0.0
    %3910 = vadd.xlane.f32.xlu0 %v3909
    %v3911 = vpop.xlane.xlu0 %3910
    %v3912 = vmul.f32 %v3908, %v1895
    %v3913 = vmul.f32 %v3911, %v1895
    %v3914 = vsub.f32 %v3900, %v3912
    %v3915 = vsub.f32 %v3901, %v3913
    %v3916 = vmul.f32 %v3914, %v3914
    %v3917 = vmul.f32 %v3915, %v3915
    %v3918 = vsel %vm171, %v3916, 0.0
    %3919 = vadd.xlane.f32.xlu0 %v3918
    %v3920 = vpop.xlane.xlu0 %3919
    %v3921 = vsel %vm171, %v3917, 0.0
    %3922 = vadd.xlane.f32.xlu0 %v3921
    %v3923 = vpop.xlane.xlu0 %3922
    %v3924 = vmul.f32 %v3920, %v1895
    %v3925 = vmul.f32 %v3923, %v1895
    %v3926 = vadd.f32 %v3924, 1e-05
    %v3927 = vadd.f32 %v3925, 1e-05
    %v3928 = vrsqrt.pop %v3926
    %v3929 = vrsqrt.pop %v3927
    %v3930 = vmul.f32 %v3914, %v3928
    %v3931 = vmul.f32 %v3915, %v3929
    %v3933 = vlaneseq
    %v3934 = vshrl.u32 %v3933, 7
    %v3935 = vsub.s32 0, %v3934
    %v3936 = vrot.slane %v3903, %v3935
    %v3938 = vmul.f32 %v3930, %v3936
    %v3939 = vmul.f32 %v3931, %v3936
    %v3941 = vlaneseq
    %v3942 = vshrl.u32 %v3941, 7
    %v3943 = vsub.s32 0, %v3942
    %v3944 = vrot.slane %v3905, %v3943
    %v3946 = vadd.f32 %v3938, %v3944
    %v3947 = vadd.f32 %v3939, %v3944
    %s3948 = scalar_lea.vmem %s9, 10
    %v3949 = vld [vmem:[%s3948] sm:$0x1]
    %s3950 = scalar_lea.vmem %s5, 768
    %v3951 = vld [vmem:[%s3950] sm:$0xff]
    %v3952 = vld [vmem:[%s3950 + $0x8] sm:$0xff]
    %v3953 = vld [vmem:[%s3950 + $0x10] sm:$0xff]
    %v3954 = vld [vmem:[%s3950 + $0x18] sm:$0xff]
    %v3955 = vld [vmem:[%s3950 + $0x20] sm:$0xff]
    %v3956 = vld [vmem:[%s3950 + $0x28] sm:$0xff]
    %v3957 = vld [vmem:[%s3950 + $0x30] sm:$0xff]
    %v3958 = vld [vmem:[%s3950 + $0x38] sm:$0xff]
    %v3959 = vld [vmem:[%s3950 + $0x40] sm:$0xff]
    %v3960 = vld [vmem:[%s3950 + $0x48] sm:$0xff]
    %v3961 = vld [vmem:[%s3950 + $0x50] sm:$0xff]
    %v3962 = vld [vmem:[%s3950 + $0x58] sm:$0xff]
    %v3963 = vld [vmem:[%s3950 + $0x60] sm:$0xff]
    %v3964 = vld [vmem:[%s3950 + $0x68] sm:$0xff]
    %v3965 = vld [vmem:[%s3950 + $0x70] sm:$0xff]
    %v3966 = vld [vmem:[%s3950 + $0x78] sm:$0xff]
    %v3968 = vsel %vm171, %v3946, 0
    %v3971 = vsel %vm171, %v3947, 0
    %3973 = vmatprep.subr.mxu0 0.0
    %3974 = vmatpush1.msra.mxu0 %v3951
    %3975 = vmatprep.subr.mxu0 0.0
    %3976 = vmatpush1.msra.mxu0 %v3952
    %3977 = vmatprep.subr.mxu0 0.0
    %3978 = vmatpush1.msra.mxu0 %v3953
    %3979 = vmatprep.subr.mxu0 0.0
    %3980 = vmatpush1.msra.mxu0 %v3954
    %3981 = vmatprep.subr.mxu0 0.0
    %3982 = vmatpush1.msra.mxu0 0.0
    %3983 = vmatprep.subr.mxu0 0.0
    %3984 = vmatpush1.msra.mxu0 0.0
    %3985 = vmatprep.subr.mxu0 0.0
    %3986 = vmatpush1.msra.mxu0 0.0
    %3987 = vmatprep.subr.mxu0 0.0
    %3988 = vmatpush1.msra.mxu0 0.0
    %3989 = vmatprep.subr.mxu0 0.0
    %3990 = vmatpush1.msra.mxu0 0.0
    %3991 = vmatprep.subr.mxu0 0.0
    %3992 = vmatpush1.msra.mxu0 0.0
    %3993 = vmatprep.subr.mxu0 0.0
    %3994 = vmatpush1.msra.mxu0 0.0
    %3995 = vmatprep.subr.mxu0 0.0
    %3996 = vmatpush1.msra.mxu0 0.0
    %3997 = vmatprep.subr.mxu0 0.0
    %3998 = vmatpush1.msra.mxu0 0.0
    %3999 = vmatprep.subr.mxu0 0.0
    %4000 = vmatpush1.msra.mxu0 0.0
    %4001 = vmatprep.subr.mxu0 0.0
    %4002 = vmatpush1.msra.mxu0 0.0
    %4003 = vmatprep.subr.mxu0 0.0
    %4004 = vmatpush1.msra.mxu0 0.0
    %4005 = vmatprep.subr.mxu0 0.0
    %4006 = vmatpush1.msra.mxu0 0.0
    %4007 = vmatprep.subr.mxu0 0.0
    %4008 = vmatpush1.msra.mxu0 0.0
    %4009 = vmatprep.subr.mxu0 0.0
    %4010 = vmatpush1.msra.mxu0 0.0
    %4011 = vmatprep.subr.mxu0 0.0
    %4012 = vmatpush1.msra.mxu0 0.0
    %4013 = vmatprep.subr.mxu0 0.0
    %4014 = vmatpush1.msra.mxu0 0.0
    %4015 = vmatprep.subr.mxu0 0.0
    %4016 = vmatpush1.msra.mxu0 0.0
    %4017 = vmatprep.subr.mxu0 0.0
    %4018 = vmatpush1.msra.mxu0 0.0
    %4019 = vmatprep.subr.mxu0 0.0
    %4020 = vmatpush1.msra.mxu0 0.0
    %4021 = vmatprep.subr.mxu0 0.0
    %4022 = vmatpush1.msra.mxu0 0.0
    %4023 = vmatprep.subr.mxu0 0.0
    %4024 = vmatpush1.msra.mxu0 0.0
    %4025 = vmatprep.subr.mxu0 0.0
    %4026 = vmatpush1.msra.mxu0 0.0
    %4027 = vmatprep.subr.mxu0 0.0
    %4028 = vmatpush1.msra.mxu0 0.0
    %4029 = vmatprep.subr.mxu0 0.0
    %4030 = vmatpush1.msra.mxu0 0.0
    %4031 = vmatprep.subr.mxu0 0.0
    %4032 = vmatpush1.msra.mxu0 0.0
    %4033 = vmatprep.subr.mxu0 0.0
    %4034 = vmatpush1.msra.mxu0 0.0
    %4035 = vmatprep.subr.mxu0 0.0
    %4036 = vmatpush1.msra.mxu0 0.0
    %4037 = vmatprep.mubr.f32.mxu0 0.0
    %4038 = vmatmul.mubr.f32.gmra.mrb[0].mxu0 %v3968
    %v4039 = vpop.f32.mrb[0].mxu0
    %v4040 = vadd.f32 0.0, %v4039
    %v4041 = vpop.f32.mrb[0].mxu0
    %4042 = vmatprep.mubr.f32.mxu0 0.0
    %4043 = vmatmul.mubr.f32.gmra.mrb[0].mxu0 %v3971
    %v4044 = vpop.f32.mrb[0].mxu0
    %v4045 = vadd.f32 0.0, %v4044
    %v4046 = vpop.f32.mrb[0].mxu0
    %4047 = vdwg.mxu0
    %4048 = vmatprep.subr.mxu0 0.0
    %4049 = vmatpush1.msra.mxu0 %v3955
    %4050 = vmatprep.subr.mxu0 0.0
    %4051 = vmatpush1.msra.mxu0 %v3956
    %4052 = vmatprep.subr.mxu0 0.0
    %4053 = vmatpush1.msra.mxu0 %v3957
    %4054 = vmatprep.subr.mxu0 0.0
    %4055 = vmatpush1.msra.mxu0 %v3958
    %4056 = vmatprep.subr.mxu0 0.0
    %4057 = vmatpush1.msra.mxu0 0.0
    %4058 = vmatprep.subr.mxu0 0.0
    %4059 = vmatpush1.msra.mxu0 0.0
    %4060 = vmatprep.subr.mxu0 0.0
    %4061 = vmatpush1.msra.mxu0 0.0
    %4062 = vmatprep.subr.mxu0 0.0
    %4063 = vmatpush1.msra.mxu0 0.0
    %4064 = vmatprep.subr.mxu0 0.0
    %4065 = vmatpush1.msra.mxu0 0.0
    %4066 = vmatprep.subr.mxu0 0.0
    %4067 = vmatpush1.msra.mxu0 0.0
    %4068 = vmatprep.subr.mxu0 0.0
    %4069 = vmatpush1.msra.mxu0 0.0
    %4070 = vmatprep.subr.mxu0 0.0
    %4071 = vmatpush1.msra.mxu0 0.0
    %4072 = vmatprep.subr.mxu0 0.0
    %4073 = vmatpush1.msra.mxu0 0.0
    %4074 = vmatprep.subr.mxu0 0.0
    %4075 = vmatpush1.msra.mxu0 0.0
    %4076 = vmatprep.subr.mxu0 0.0
    %4077 = vmatpush1.msra.mxu0 0.0
    %4078 = vmatprep.subr.mxu0 0.0
    %4079 = vmatpush1.msra.mxu0 0.0
    %4080 = vmatprep.subr.mxu0 0.0
    %4081 = vmatpush1.msra.mxu0 0.0
    %4082 = vmatprep.subr.mxu0 0.0
    %4083 = vmatpush1.msra.mxu0 0.0
    %4084 = vmatprep.subr.mxu0 0.0
    %4085 = vmatpush1.msra.mxu0 0.0
    %4086 = vmatprep.subr.mxu0 0.0
    %4087 = vmatpush1.msra.mxu0 0.0
    %4088 = vmatprep.subr.mxu0 0.0
    %4089 = vmatpush1.msra.mxu0 0.0
    %4090 = vmatprep.subr.mxu0 0.0
    %4091 = vmatpush1.msra.mxu0 0.0
    %4092 = vmatprep.subr.mxu0 0.0
    %4093 = vmatpush1.msra.mxu0 0.0
    %4094 = vmatprep.subr.mxu0 0.0
    %4095 = vmatpush1.msra.mxu0 0.0
    %4096 = vmatprep.subr.mxu0 0.0
    %4097 = vmatpush1.msra.mxu0 0.0
    %4098 = vmatprep.subr.mxu0 0.0
    %4099 = vmatpush1.msra.mxu0 0.0
    %4100 = vmatprep.subr.mxu0 0.0
    %4101 = vmatpush1.msra.mxu0 0.0
    %4102 = vmatprep.subr.mxu0 0.0
    %4103 = vmatpush1.msra.mxu0 0.0
    %4104 = vmatprep.subr.mxu0 0.0
    %4105 = vmatpush1.msra.mxu0 0.0
    %4106 = vmatprep.subr.mxu0 0.0
    %4107 = vmatpush1.msra.mxu0 0.0
    %4108 = vmatprep.subr.mxu0 0.0
    %4109 = vmatpush1.msra.mxu0 0.0
    %4110 = vmatprep.subr.mxu0 0.0
    %4111 = vmatpush1.msra.mxu0 0.0
    %4112 = vmatprep.mubr.f32.mxu0 0.0
    %4113 = vmatmul.mubr.f32.gmra.mrb[0].mxu0 %v3968
    %v4114 = vpop.f32.mrb[0].mxu0
    %v4115 = vadd.f32 0.0, %v4114
    %v4116 = vpop.f32.mrb[0].mxu0
    %4117 = vmatprep.mubr.f32.mxu0 0.0
    %4118 = vmatmul.mubr.f32.gmra.mrb[0].mxu0 %v3971
    %v4119 = vpop.f32.mrb[0].mxu0
    %v4120 = vadd.f32 0.0, %v4119
    %v4121 = vpop.f32.mrb[0].mxu0
    %4122 = vdwg.mxu0
    %4123 = vmatprep.subr.mxu0 0.0
    %4124 = vmatpush1.msra.mxu0 %v3959
    %4125 = vmatprep.subr.mxu0 0.0
    %4126 = vmatpush1.msra.mxu0 %v3960
    %4127 = vmatprep.subr.mxu0 0.0
    %4128 = vmatpush1.msra.mxu0 %v3961
    %4129 = vmatprep.subr.mxu0 0.0
    %4130 = vmatpush1.msra.mxu0 %v3962
    %4131 = vmatprep.subr.mxu0 0.0
    %4132 = vmatpush1.msra.mxu0 0.0
    %4133 = vmatprep.subr.mxu0 0.0
    %4134 = vmatpush1.msra.mxu0 0.0
    %4135 = vmatprep.subr.mxu0 0.0
    %4136 = vmatpush1.msra.mxu0 0.0
    %4137 = vmatprep.subr.mxu0 0.0
    %4138 = vmatpush1.msra.mxu0 0.0
    %4139 = vmatprep.subr.mxu0 0.0
    %4140 = vmatpush1.msra.mxu0 0.0
    %4141 = vmatprep.subr.mxu0 0.0
    %4142 = vmatpush1.msra.mxu0 0.0
    %4143 = vmatprep.subr.mxu0 0.0
    %4144 = vmatpush1.msra.mxu0 0.0
    %4145 = vmatprep.subr.mxu0 0.0
    %4146 = vmatpush1.msra.mxu0 0.0
    %4147 = vmatprep.subr.mxu0 0.0
    %4148 = vmatpush1.msra.mxu0 0.0
    %4149 = vmatprep.subr.mxu0 0.0
    %4150 = vmatpush1.msra.mxu0 0.0
    %4151 = vmatprep.subr.mxu0 0.0
    %4152 = vmatpush1.msra.mxu0 0.0
    %4153 = vmatprep.subr.mxu0 0.0
    %4154 = vmatpush1.msra.mxu0 0.0
    %4155 = vmatprep.subr.mxu0 0.0
    %4156 = vmatpush1.msra.mxu0 0.0
    %4157 = vmatprep.subr.mxu0 0.0
    %4158 = vmatpush1.msra.mxu0 0.0
    %4159 = vmatprep.subr.mxu0 0.0
    %4160 = vmatpush1.msra.mxu0 0.0
    %4161 = vmatprep.subr.mxu0 0.0
    %4162 = vmatpush1.msra.mxu0 0.0
    %4163 = vmatprep.subr.mxu0 0.0
    %4164 = vmatpush1.msra.mxu0 0.0
    %4165 = vmatprep.subr.mxu0 0.0
    %4166 = vmatpush1.msra.mxu0 0.0
    %4167 = vmatprep.subr.mxu0 0.0
    %4168 = vmatpush1.msra.mxu0 0.0
    %4169 = vmatprep.subr.mxu0 0.0
    %4170 = vmatpush1.msra.mxu0 0.0
    %4171 = vmatprep.subr.mxu0 0.0
    %4172 = vmatpush1.msra.mxu0 0.0
    %4173 = vmatprep.subr.mxu0 0.0
    %4174 = vmatpush1.msra.mxu0 0.0
    %4175 = vmatprep.subr.mxu0 0.0
    %4176 = vmatpush1.msra.mxu0 0.0
    %4177 = vmatprep.subr.mxu0 0.0
    %4178 = vmatpush1.msra.mxu0 0.0
    %4179 = vmatprep.subr.mxu0 0.0
    %4180 = vmatpush1.msra.mxu0 0.0
    %4181 = vmatprep.subr.mxu0 0.0
    %4182 = vmatpush1.msra.mxu0 0.0
    %4183 = vmatprep.subr.mxu0 0.0
    %4184 = vmatpush1.msra.mxu0 0.0
    %4185 = vmatprep.subr.mxu0 0.0
    %4186 = vmatpush1.msra.mxu0 0.0
    %4187 = vmatprep.mubr.f32.mxu0 0.0
    %4188 = vmatmul.mubr.f32.gmra.mrb[0].mxu0 %v3968
    %v4189 = vpop.f32.mrb[0].mxu0
    %v4190 = vadd.f32 0.0, %v4189
    %v4191 = vpop.f32.mrb[0].mxu0
    %4192 = vmatprep.mubr.f32.mxu0 0.0
    %4193 = vmatmul.mubr.f32.gmra.mrb[0].mxu0 %v3971
    %v4194 = vpop.f32.mrb[0].mxu0
    %v4195 = vadd.f32 0.0, %v4194
    %v4196 = vpop.f32.mrb[0].mxu0
    %4197 = vdwg.mxu0
    %4198 = vmatprep.subr.mxu0 0.0
    %4199 = vmatpush1.msra.mxu0 %v3963
    %4200 = vmatprep.subr.mxu0 0.0
    %4201 = vmatpush1.msra.mxu0 %v3964
    %4202 = vmatprep.subr.mxu0 0.0
    %4203 = vmatpush1.msra.mxu0 %v3965
    %4204 = vmatprep.subr.mxu0 0.0
    %4205 = vmatpush1.msra.mxu0 %v3966
    %4206 = vmatprep.subr.mxu0 0.0
    %4207 = vmatpush1.msra.mxu0 0.0
    %4208 = vmatprep.subr.mxu0 0.0
    %4209 = vmatpush1.msra.mxu0 0.0
    %4210 = vmatprep.subr.mxu0 0.0
    %4211 = vmatpush1.msra.mxu0 0.0
    %4212 = vmatprep.subr.mxu0 0.0
    %4213 = vmatpush1.msra.mxu0 0.0
    %4214 = vmatprep.subr.mxu0 0.0
    %4215 = vmatpush1.msra.mxu0 0.0
    %4216 = vmatprep.subr.mxu0 0.0
    %4217 = vmatpush1.msra.mxu0 0.0
    %4218 = vmatprep.subr.mxu0 0.0
    %4219 = vmatpush1.msra.mxu0 0.0
    %4220 = vmatprep.subr.mxu0 0.0
    %4221 = vmatpush1.msra.mxu0 0.0
    %4222 = vmatprep.subr.mxu0 0.0
    %4223 = vmatpush1.msra.mxu0 0.0
    %4224 = vmatprep.subr.mxu0 0.0
    %4225 = vmatpush1.msra.mxu0 0.0
    %4226 = vmatprep.subr.mxu0 0.0
    %4227 = vmatpush1.msra.mxu0 0.0
    %4228 = vmatprep.subr.mxu0 0.0
    %4229 = vmatpush1.msra.mxu0 0.0
    %4230 = vmatprep.subr.mxu0 0.0
    %4231 = vmatpush1.msra.mxu0 0.0
    %4232 = vmatprep.subr.mxu0 0.0
    %4233 = vmatpush1.msra.mxu0 0.0
    %4234 = vmatprep.subr.mxu0 0.0
    %4235 = vmatpush1.msra.mxu0 0.0
    %4236 = vmatprep.subr.mxu0 0.0
    %4237 = vmatpush1.msra.mxu0 0.0
    %4238 = vmatprep.subr.mxu0 0.0
    %4239 = vmatpush1.msra.mxu0 0.0
    %4240 = vmatprep.subr.mxu0 0.0
    %4241 = vmatpush1.msra.mxu0 0.0
    %4242 = vmatprep.subr.mxu0 0.0
    %4243 = vmatpush1.msra.mxu0 0.0
    %4244 = vmatprep.subr.mxu0 0.0
    %4245 = vmatpush1.msra.mxu0 0.0
    %4246 = vmatprep.subr.mxu0 0.0
    %4247 = vmatpush1.msra.mxu0 0.0
    %4248 = vmatprep.subr.mxu0 0.0
    %4249 = vmatpush1.msra.mxu0 0.0
    %4250 = vmatprep.subr.mxu0 0.0
    %4251 = vmatpush1.msra.mxu0 0.0
    %4252 = vmatprep.subr.mxu0 0.0
    %4253 = vmatpush1.msra.mxu0 0.0
    %4254 = vmatprep.subr.mxu0 0.0
    %4255 = vmatpush1.msra.mxu0 0.0
    %4256 = vmatprep.subr.mxu0 0.0
    %4257 = vmatpush1.msra.mxu0 0.0
    %4258 = vmatprep.subr.mxu0 0.0
    %4259 = vmatpush1.msra.mxu0 0.0
    %4260 = vmatprep.subr.mxu0 0.0
    %4261 = vmatpush1.msra.mxu0 0.0
    %4262 = vmatprep.mubr.f32.mxu0 0.0
    %4263 = vmatmul.mubr.f32.gmra.mrb[0].mxu0 %v3968
    %v4264 = vpop.f32.mrb[0].mxu0
    %v4265 = vadd.f32 0.0, %v4264
    %v4266 = vpop.f32.mrb[0].mxu0
    %4267 = vmatprep.mubr.f32.mxu0 0.0
    %4268 = vmatmul.mubr.f32.gmra.mrb[0].mxu0 %v3971
    %v4269 = vpop.f32.mrb[0].mxu0
    %v4270 = vadd.f32 0.0, %v4269
    %v4271 = vpop.f32.mrb[0].mxu0
    %4272 = vdwg.mxu0
    %s4273 = scalar_lea.vmem %s5, 896
    %v4274 = vld [vmem:[%s4273] sm:$0xff]
    %v4275 = vld [vmem:[%s4273 + $0x8] sm:$0xff]
    %v4276 = vld [vmem:[%s4273 + $0x10] sm:$0xff]
    %v4277 = vld [vmem:[%s4273 + $0x18] sm:$0xff]
    %v4278 = vld [vmem:[%s4273 + $0x20] sm:$0xff]
    %v4279 = vld [vmem:[%s4273 + $0x28] sm:$0xff]
    %v4280 = vld [vmem:[%s4273 + $0x30] sm:$0xff]
    %v4281 = vld [vmem:[%s4273 + $0x38] sm:$0xff]
    %v4282 = vld [vmem:[%s4273 + $0x40] sm:$0xff]
    %v4283 = vld [vmem:[%s4273 + $0x48] sm:$0xff]
    %v4284 = vld [vmem:[%s4273 + $0x50] sm:$0xff]
    %v4285 = vld [vmem:[%s4273 + $0x58] sm:$0xff]
    %v4286 = vld [vmem:[%s4273 + $0x60] sm:$0xff]
    %v4287 = vld [vmem:[%s4273 + $0x68] sm:$0xff]
    %v4288 = vld [vmem:[%s4273 + $0x70] sm:$0xff]
    %v4289 = vld [vmem:[%s4273 + $0x78] sm:$0xff]
    %4290 = vmatprep.subr.mxu0 0.0
    %4291 = vmatpush1.msra.mxu0 %v4274
    %4292 = vmatprep.subr.mxu0 0.0
    %4293 = vmatpush1.msra.mxu0 %v4275
    %4294 = vmatprep.subr.mxu0 0.0
    %4295 = vmatpush1.msra.mxu0 %v4276
    %4296 = vmatprep.subr.mxu0 0.0
    %4297 = vmatpush1.msra.mxu0 %v4277
    %4298 = vmatprep.subr.mxu0 0.0
    %4299 = vmatpush1.msra.mxu0 0.0
    %4300 = vmatprep.subr.mxu0 0.0
    %4301 = vmatpush1.msra.mxu0 0.0
    %4302 = vmatprep.subr.mxu0 0.0
    %4303 = vmatpush1.msra.mxu0 0.0
    %4304 = vmatprep.subr.mxu0 0.0
    %4305 = vmatpush1.msra.mxu0 0.0
    %4306 = vmatprep.subr.mxu0 0.0
    %4307 = vmatpush1.msra.mxu0 0.0
    %4308 = vmatprep.subr.mxu0 0.0
    %4309 = vmatpush1.msra.mxu0 0.0
    %4310 = vmatprep.subr.mxu0 0.0
    %4311 = vmatpush1.msra.mxu0 0.0
    %4312 = vmatprep.subr.mxu0 0.0
    %4313 = vmatpush1.msra.mxu0 0.0
    %4314 = vmatprep.subr.mxu0 0.0
    %4315 = vmatpush1.msra.mxu0 0.0
    %4316 = vmatprep.subr.mxu0 0.0
    %4317 = vmatpush1.msra.mxu0 0.0
    %4318 = vmatprep.subr.mxu0 0.0
    %4319 = vmatpush1.msra.mxu0 0.0
    %4320 = vmatprep.subr.mxu0 0.0
    %4321 = vmatpush1.msra.mxu0 0.0
    %4322 = vmatprep.subr.mxu0 0.0
    %4323 = vmatpush1.msra.mxu0 0.0
    %4324 = vmatprep.subr.mxu0 0.0
    %4325 = vmatpush1.msra.mxu0 0.0
    %4326 = vmatprep.subr.mxu0 0.0
    %4327 = vmatpush1.msra.mxu0 0.0
    %4328 = vmatprep.subr.mxu0 0.0
    %4329 = vmatpush1.msra.mxu0 0.0
    %4330 = vmatprep.subr.mxu0 0.0
    %4331 = vmatpush1.msra.mxu0 0.0
    %4332 = vmatprep.subr.mxu0 0.0
    %4333 = vmatpush1.msra.mxu0 0.0
    %4334 = vmatprep.subr.mxu0 0.0
    %4335 = vmatpush1.msra.mxu0 0.0
    %4336 = vmatprep.subr.mxu0 0.0
    %4337 = vmatpush1.msra.mxu0 0.0
    %4338 = vmatprep.subr.mxu0 0.0
    %4339 = vmatpush1.msra.mxu0 0.0
    %4340 = vmatprep.subr.mxu0 0.0
    %4341 = vmatpush1.msra.mxu0 0.0
    %4342 = vmatprep.subr.mxu0 0.0
    %4343 = vmatpush1.msra.mxu0 0.0
    %4344 = vmatprep.subr.mxu0 0.0
    %4345 = vmatpush1.msra.mxu0 0.0
    %4346 = vmatprep.subr.mxu0 0.0
    %4347 = vmatpush1.msra.mxu0 0.0
    %4348 = vmatprep.subr.mxu0 0.0
    %4349 = vmatpush1.msra.mxu0 0.0
    %4350 = vmatprep.subr.mxu0 0.0
    %4351 = vmatpush1.msra.mxu0 0.0
    %4352 = vmatprep.subr.mxu0 0.0
    %4353 = vmatpush1.msra.mxu0 0.0
    %4354 = vmatprep.mubr.f32.mxu0 0.0
    %4355 = vmatmul.mubr.f32.gmra.mrb[0].mxu0 %v3968
    %v4356 = vpop.f32.mrb[0].mxu0
    %v4357 = vadd.f32 0.0, %v4356
    %v4358 = vpop.f32.mrb[0].mxu0
    %4359 = vmatprep.mubr.f32.mxu0 0.0
    %4360 = vmatmul.mubr.f32.gmra.mrb[0].mxu0 %v3971
    %v4361 = vpop.f32.mrb[0].mxu0
    %v4362 = vadd.f32 0.0, %v4361
    %v4363 = vpop.f32.mrb[0].mxu0
    %4364 = vdwg.mxu0
    %4365 = vmatprep.subr.mxu0 0.0
    %4366 = vmatpush1.msra.mxu0 %v4278
    %4367 = vmatprep.subr.mxu0 0.0
    %4368 = vmatpush1.msra.mxu0 %v4279
    %4369 = vmatprep.subr.mxu0 0.0
    %4370 = vmatpush1.msra.mxu0 %v4280
    %4371 = vmatprep.subr.mxu0 0.0
    %4372 = vmatpush1.msra.mxu0 %v4281
    %4373 = vmatprep.subr.mxu0 0.0
    %4374 = vmatpush1.msra.mxu0 0.0
    %4375 = vmatprep.subr.mxu0 0.0
    %4376 = vmatpush1.msra.mxu0 0.0
    %4377 = vmatprep.subr.mxu0 0.0
    %4378 = vmatpush1.msra.mxu0 0.0
    %4379 = vmatprep.subr.mxu0 0.0
    %4380 = vmatpush1.msra.mxu0 0.0
    %4381 = vmatprep.subr.mxu0 0.0
    %4382 = vmatpush1.msra.mxu0 0.0
    %4383 = vmatprep.subr.mxu0 0.0
    %4384 = vmatpush1.msra.mxu0 0.0
    %4385 = vmatprep.subr.mxu0 0.0
    %4386 = vmatpush1.msra.mxu0 0.0
    %4387 = vmatprep.subr.mxu0 0.0
    %4388 = vmatpush1.msra.mxu0 0.0
    %4389 = vmatprep.subr.mxu0 0.0
    %4390 = vmatpush1.msra.mxu0 0.0
    %4391 = vmatprep.subr.mxu0 0.0
    %4392 = vmatpush1.msra.mxu0 0.0
    %4393 = vmatprep.subr.mxu0 0.0
    %4394 = vmatpush1.msra.mxu0 0.0
    %4395 = vmatprep.subr.mxu0 0.0
    %4396 = vmatpush1.msra.mxu0 0.0
    %4397 = vmatprep.subr.mxu0 0.0
    %4398 = vmatpush1.msra.mxu0 0.0
    %4399 = vmatprep.subr.mxu0 0.0
    %4400 = vmatpush1.msra.mxu0 0.0
    %4401 = vmatprep.subr.mxu0 0.0
    %4402 = vmatpush1.msra.mxu0 0.0
    %4403 = vmatprep.subr.mxu0 0.0
    %4404 = vmatpush1.msra.mxu0 0.0
    %4405 = vmatprep.subr.mxu0 0.0
    %4406 = vmatpush1.msra.mxu0 0.0
    %4407 = vmatprep.subr.mxu0 0.0
    %4408 = vmatpush1.msra.mxu0 0.0
    %4409 = vmatprep.subr.mxu0 0.0
    %4410 = vmatpush1.msra.mxu0 0.0
    %4411 = vmatprep.subr.mxu0 0.0
    %4412 = vmatpush1.msra.mxu0 0.0
    %4413 = vmatprep.subr.mxu0 0.0
    %4414 = vmatpush1.msra.mxu0 0.0
    %4415 = vmatprep.subr.mxu0 0.0
    %4416 = vmatpush1.msra.mxu0 0.0
    %4417 = vmatprep.subr.mxu0 0.0
    %4418 = vmatpush1.msra.mxu0 0.0
    %4419 = vmatprep.subr.mxu0 0.0
    %4420 = vmatpush1.msra.mxu0 0.0
    %4421 = vmatprep.subr.mxu0 0.0
    %4422 = vmatpush1.msra.mxu0 0.0
    %4423 = vmatprep.subr.mxu0 0.0
    %4424 = vmatpush1.msra.mxu0 0.0
    %4425 = vmatprep.subr.mxu0 0.0
    %4426 = vmatpush1.msra.mxu0 0.0
    %4427 = vmatprep.subr.mxu0 0.0
    %4428 = vmatpush1.msra.mxu0 0.0
    %4429 = vmatprep.mubr.f32.mxu0 0.0
    %4430 = vmatmul.mubr.f32.gmra.mrb[0].mxu0 %v3968
    %v4431 = vpop.f32.mrb[0].mxu0
    %v4432 = vadd.f32 0.0, %v4431
    %v4433 = vpop.f32.mrb[0].mxu0
    %4434 = vmatprep.mubr.f32.mxu0 0.0
    %4435 = vmatmul.mubr.f32.gmra.mrb[0].mxu0 %v3971
    %v4436 = vpop.f32.mrb[0].mxu0
    %v4437 = vadd.f32 0.0, %v4436
    %v4438 = vpop.f32.mrb[0].mxu0
    %4439 = vdwg.mxu0
    %4440 = vmatprep.subr.mxu0 0.0
    %4441 = vmatpush1.msra.mxu0 %v4282
    %4442 = vmatprep.subr.mxu0 0.0
    %4443 = vmatpush1.msra.mxu0 %v4283
    %4444 = vmatprep.subr.mxu0 0.0
    %4445 = vmatpush1.msra.mxu0 %v4284
    %4446 = vmatprep.subr.mxu0 0.0
    %4447 = vmatpush1.msra.mxu0 %v4285
    %4448 = vmatprep.subr.mxu0 0.0
    %4449 = vmatpush1.msra.mxu0 0.0
    %4450 = vmatprep.subr.mxu0 0.0
    %4451 = vmatpush1.msra.mxu0 0.0
    %4452 = vmatprep.subr.mxu0 0.0
    %4453 = vmatpush1.msra.mxu0 0.0
    %4454 = vmatprep.subr.mxu0 0.0
    %4455 = vmatpush1.msra.mxu0 0.0
    %4456 = vmatprep.subr.mxu0 0.0
    %4457 = vmatpush1.msra.mxu0 0.0
    %4458 = vmatprep.subr.mxu0 0.0
    %4459 = vmatpush1.msra.mxu0 0.0
    %4460 = vmatprep.subr.mxu0 0.0
    %4461 = vmatpush1.msra.mxu0 0.0
    %4462 = vmatprep.subr.mxu0 0.0
    %4463 = vmatpush1.msra.mxu0 0.0
    %4464 = vmatprep.subr.mxu0 0.0
    %4465 = vmatpush1.msra.mxu0 0.0
    %4466 = vmatprep.subr.mxu0 0.0
    %4467 = vmatpush1.msra.mxu0 0.0
    %4468 = vmatprep.subr.mxu0 0.0
    %4469 = vmatpush1.msra.mxu0 0.0
    %4470 = vmatprep.subr.mxu0 0.0
    %4471 = vmatpush1.msra.mxu0 0.0
    %4472 = vmatprep.subr.mxu0 0.0
    %4473 = vmatpush1.msra.mxu0 0.0
    %4474 = vmatprep.subr.mxu0 0.0
    %4475 = vmatpush1.msra.mxu0 0.0
    %4476 = vmatprep.subr.mxu0 0.0
    %4477 = vmatpush1.msra.mxu0 0.0
    %4478 = vmatprep.subr.mxu0 0.0
    %4479 = vmatpush1.msra.mxu0 0.0
    %4480 = vmatprep.subr.mxu0 0.0
    %4481 = vmatpush1.msra.mxu0 0.0
    %4482 = vmatprep.subr.mxu0 0.0
    %4483 = vmatpush1.msra.mxu0 0.0
    %4484 = vmatprep.subr.mxu0 0.0
    %4485 = vmatpush1.msra.mxu0 0.0
    %4486 = vmatprep.subr.mxu0 0.0
    %4487 = vmatpush1.msra.mxu0 0.0
    %4488 = vmatprep.subr.mxu0 0.0
    %4489 = vmatpush1.msra.mxu0 0.0
    %4490 = vmatprep.subr.mxu0 0.0
    %4491 = vmatpush1.msra.mxu0 0.0
    %4492 = vmatprep.subr.mxu0 0.0
    %4493 = vmatpush1.msra.mxu0 0.0
    %4494 = vmatprep.subr.mxu0 0.0
    %4495 = vmatpush1.msra.mxu0 0.0
    %4496 = vmatprep.subr.mxu0 0.0
    %4497 = vmatpush1.msra.mxu0 0.0
    %4498 = vmatprep.subr.mxu0 0.0
    %4499 = vmatpush1.msra.mxu0 0.0
    %4500 = vmatprep.subr.mxu0 0.0
    %4501 = vmatpush1.msra.mxu0 0.0
    %4502 = vmatprep.subr.mxu0 0.0
    %4503 = vmatpush1.msra.mxu0 0.0
    %4504 = vmatprep.mubr.f32.mxu0 0.0
    %4505 = vmatmul.mubr.f32.gmra.mrb[0].mxu0 %v3968
    %v4506 = vpop.f32.mrb[0].mxu0
    %v4507 = vadd.f32 0.0, %v4506
    %v4508 = vpop.f32.mrb[0].mxu0
    %4509 = vmatprep.mubr.f32.mxu0 0.0
    %4510 = vmatmul.mubr.f32.gmra.mrb[0].mxu0 %v3971
    %v4511 = vpop.f32.mrb[0].mxu0
    %v4512 = vadd.f32 0.0, %v4511
    %v4513 = vpop.f32.mrb[0].mxu0
    %4514 = vdwg.mxu0
    %4515 = vmatprep.subr.mxu0 0.0
    %4516 = vmatpush1.msra.mxu0 %v4286
    %4517 = vmatprep.subr.mxu0 0.0
    %4518 = vmatpush1.msra.mxu0 %v4287
    %4519 = vmatprep.subr.mxu0 0.0
    %4520 = vmatpush1.msra.mxu0 %v4288
    %4521 = vmatprep.subr.mxu0 0.0
    %4522 = vmatpush1.msra.mxu0 %v4289
    %4523 = vmatprep.subr.mxu0 0.0
    %4524 = vmatpush1.msra.mxu0 0.0
    %4525 = vmatprep.subr.mxu0 0.0
    %4526 = vmatpush1.msra.mxu0 0.0
    %4527 = vmatprep.subr.mxu0 0.0
    %4528 = vmatpush1.msra.mxu0 0.0
    %4529 = vmatprep.subr.mxu0 0.0
    %4530 = vmatpush1.msra.mxu0 0.0
    %4531 = vmatprep.subr.mxu0 0.0
    %4532 = vmatpush1.msra.mxu0 0.0
    %4533 = vmatprep.subr.mxu0 0.0
    %4534 = vmatpush1.msra.mxu0 0.0
    %4535 = vmatprep.subr.mxu0 0.0
    %4536 = vmatpush1.msra.mxu0 0.0
    %4537 = vmatprep.subr.mxu0 0.0
    %4538 = vmatpush1.msra.mxu0 0.0
    %4539 = vmatprep.subr.mxu0 0.0
    %4540 = vmatpush1.msra.mxu0 0.0
    %4541 = vmatprep.subr.mxu0 0.0
    %4542 = vmatpush1.msra.mxu0 0.0
    %4543 = vmatprep.subr.mxu0 0.0
    %4544 = vmatpush1.msra.mxu0 0.0
    %4545 = vmatprep.subr.mxu0 0.0
    %4546 = vmatpush1.msra.mxu0 0.0
    %4547 = vmatprep.subr.mxu0 0.0
    %4548 = vmatpush1.msra.mxu0 0.0
    %4549 = vmatprep.subr.mxu0 0.0
    %4550 = vmatpush1.msra.mxu0 0.0
    %4551 = vmatprep.subr.mxu0 0.0
    %4552 = vmatpush1.msra.mxu0 0.0
    %4553 = vmatprep.subr.mxu0 0.0
    %4554 = vmatpush1.msra.mxu0 0.0
    %4555 = vmatprep.subr.mxu0 0.0
    %4556 = vmatpush1.msra.mxu0 0.0
    %4557 = vmatprep.subr.mxu0 0.0
    %4558 = vmatpush1.msra.mxu0 0.0
    %4559 = vmatprep.subr.mxu0 0.0
    %4560 = vmatpush1.msra.mxu0 0.0
    %4561 = vmatprep.subr.mxu0 0.0
    %4562 = vmatpush1.msra.mxu0 0.0
    %4563 = vmatprep.subr.mxu0 0.0
    %4564 = vmatpush1.msra.mxu0 0.0
    %4565 = vmatprep.subr.mxu0 0.0
    %4566 = vmatpush1.msra.mxu0 0.0
    %4567 = vmatprep.subr.mxu0 0.0
    %4568 = vmatpush1.msra.mxu0 0.0
    %4569 = vmatprep.subr.mxu0 0.0
    %4570 = vmatpush1.msra.mxu0 0.0
    %4571 = vmatprep.subr.mxu0 0.0
    %4572 = vmatpush1.msra.mxu0 0.0
    %4573 = vmatprep.subr.mxu0 0.0
    %4574 = vmatpush1.msra.mxu0 0.0
    %4575 = vmatprep.subr.mxu0 0.0
    %4576 = vmatpush1.msra.mxu0 0.0
    %4577 = vmatprep.subr.mxu0 0.0
    %4578 = vmatpush1.msra.mxu0 0.0
    %4579 = vmatprep.mubr.f32.mxu0 0.0
    %4580 = vmatmul.mubr.f32.gmra.mrb[0].mxu0 %v3968
    %v4581 = vpop.f32.mrb[0].mxu0
    %v4582 = vadd.f32 0.0, %v4581
    %v4583 = vpop.f32.mrb[0].mxu0
    %4584 = vmatprep.mubr.f32.mxu0 0.0
    %4585 = vmatmul.mubr.f32.gmra.mrb[0].mxu0 %v3971
    %v4586 = vpop.f32.mrb[0].mxu0
    %v4587 = vadd.f32 0.0, %v4586
    %v4588 = vpop.f32.mrb[0].mxu0
    %4589 = vdwg.mxu0
    %s4590 = scalar_lea.vmem %s5, 1024
    %v4591 = vld [vmem:[%s4590] sm:$0xff]
    %v4592 = vld [vmem:[%s4590 + $0x8] sm:$0xff]
    %v4593 = vld [vmem:[%s4590 + $0x10] sm:$0xff]
    %v4594 = vld [vmem:[%s4590 + $0x18] sm:$0xff]
    %v4595 = vld [vmem:[%s4590 + $0x20] sm:$0xff]
    %v4596 = vld [vmem:[%s4590 + $0x28] sm:$0xff]
    %v4597 = vld [vmem:[%s4590 + $0x30] sm:$0xff]
    %v4598 = vld [vmem:[%s4590 + $0x38] sm:$0xff]
    %v4599 = vld [vmem:[%s4590 + $0x40] sm:$0xff]
    %v4600 = vld [vmem:[%s4590 + $0x48] sm:$0xff]
    %v4601 = vld [vmem:[%s4590 + $0x50] sm:$0xff]
    %v4602 = vld [vmem:[%s4590 + $0x58] sm:$0xff]
    %v4603 = vld [vmem:[%s4590 + $0x60] sm:$0xff]
    %v4604 = vld [vmem:[%s4590 + $0x68] sm:$0xff]
    %v4605 = vld [vmem:[%s4590 + $0x70] sm:$0xff]
    %v4606 = vld [vmem:[%s4590 + $0x78] sm:$0xff]
    %4607 = vmatprep.subr.mxu0 0.0
    %4608 = vmatpush1.msra.mxu0 %v4591
    %4609 = vmatprep.subr.mxu0 0.0
    %4610 = vmatpush1.msra.mxu0 %v4592
    %4611 = vmatprep.subr.mxu0 0.0
    %4612 = vmatpush1.msra.mxu0 %v4593
    %4613 = vmatprep.subr.mxu0 0.0
    %4614 = vmatpush1.msra.mxu0 %v4594
    %4615 = vmatprep.subr.mxu0 0.0
    %4616 = vmatpush1.msra.mxu0 0.0
    %4617 = vmatprep.subr.mxu0 0.0
    %4618 = vmatpush1.msra.mxu0 0.0
    %4619 = vmatprep.subr.mxu0 0.0
    %4620 = vmatpush1.msra.mxu0 0.0
    %4621 = vmatprep.subr.mxu0 0.0
    %4622 = vmatpush1.msra.mxu0 0.0
    %4623 = vmatprep.subr.mxu0 0.0
    %4624 = vmatpush1.msra.mxu0 0.0
    %4625 = vmatprep.subr.mxu0 0.0
    %4626 = vmatpush1.msra.mxu0 0.0
    %4627 = vmatprep.subr.mxu0 0.0
    %4628 = vmatpush1.msra.mxu0 0.0
    %4629 = vmatprep.subr.mxu0 0.0
    %4630 = vmatpush1.msra.mxu0 0.0
    %4631 = vmatprep.subr.mxu0 0.0
    %4632 = vmatpush1.msra.mxu0 0.0
    %4633 = vmatprep.subr.mxu0 0.0
    %4634 = vmatpush1.msra.mxu0 0.0
    %4635 = vmatprep.subr.mxu0 0.0
    %4636 = vmatpush1.msra.mxu0 0.0
    %4637 = vmatprep.subr.mxu0 0.0
    %4638 = vmatpush1.msra.mxu0 0.0
    %4639 = vmatprep.subr.mxu0 0.0
    %4640 = vmatpush1.msra.mxu0 0.0
    %4641 = vmatprep.subr.mxu0 0.0
    %4642 = vmatpush1.msra.mxu0 0.0
    %4643 = vmatprep.subr.mxu0 0.0
    %4644 = vmatpush1.msra.mxu0 0.0
    %4645 = vmatprep.subr.mxu0 0.0
    %4646 = vmatpush1.msra.mxu0 0.0
    %4647 = vmatprep.subr.mxu0 0.0
    %4648 = vmatpush1.msra.mxu0 0.0
    %4649 = vmatprep.subr.mxu0 0.0
    %4650 = vmatpush1.msra.mxu0 0.0
    %4651 = vmatprep.subr.mxu0 0.0
    %4652 = vmatpush1.msra.mxu0 0.0
    %4653 = vmatprep.subr.mxu0 0.0
    %4654 = vmatpush1.msra.mxu0 0.0
    %4655 = vmatprep.subr.mxu0 0.0
    %4656 = vmatpush1.msra.mxu0 0.0
    %4657 = vmatprep.subr.mxu0 0.0
    %4658 = vmatpush1.msra.mxu0 0.0
    %4659 = vmatprep.subr.mxu0 0.0
    %4660 = vmatpush1.msra.mxu0 0.0
    %4661 = vmatprep.subr.mxu0 0.0
    %4662 = vmatpush1.msra.mxu0 0.0
    %4663 = vmatprep.subr.mxu0 0.0
    %4664 = vmatpush1.msra.mxu0 0.0
    %4665 = vmatprep.subr.mxu0 0.0
    %4666 = vmatpush1.msra.mxu0 0.0
    %4667 = vmatprep.subr.mxu0 0.0
    %4668 = vmatpush1.msra.mxu0 0.0
    %4669 = vmatprep.subr.mxu0 0.0
    %4670 = vmatpush1.msra.mxu0 0.0
    %4671 = vmatprep.mubr.f32.mxu0 0.0
    %4672 = vmatmul.mubr.f32.gmra.mrb[0].mxu0 %v3968
    %v4673 = vpop.f32.mrb[0].mxu0
    %v4674 = vadd.f32 0.0, %v4673
    %v4675 = vpop.f32.mrb[0].mxu0
    %4676 = vmatprep.mubr.f32.mxu0 0.0
    %4677 = vmatmul.mubr.f32.gmra.mrb[0].mxu0 %v3971
    %v4678 = vpop.f32.mrb[0].mxu0
    %v4679 = vadd.f32 0.0, %v4678
    %v4680 = vpop.f32.mrb[0].mxu0
    %4681 = vdwg.mxu0
    %4682 = vmatprep.subr.mxu0 0.0
    %4683 = vmatpush1.msra.mxu0 %v4595
    %4684 = vmatprep.subr.mxu0 0.0
    %4685 = vmatpush1.msra.mxu0 %v4596
    %4686 = vmatprep.subr.mxu0 0.0
    %4687 = vmatpush1.msra.mxu0 %v4597
    %4688 = vmatprep.subr.mxu0 0.0
    %4689 = vmatpush1.msra.mxu0 %v4598
    %4690 = vmatprep.subr.mxu0 0.0
    %4691 = vmatpush1.msra.mxu0 0.0
    %4692 = vmatprep.subr.mxu0 0.0
    %4693 = vmatpush1.msra.mxu0 0.0
    %4694 = vmatprep.subr.mxu0 0.0
    %4695 = vmatpush1.msra.mxu0 0.0
    %4696 = vmatprep.subr.mxu0 0.0
    %4697 = vmatpush1.msra.mxu0 0.0
    %4698 = vmatprep.subr.mxu0 0.0
    %4699 = vmatpush1.msra.mxu0 0.0
    %4700 = vmatprep.subr.mxu0 0.0
    %4701 = vmatpush1.msra.mxu0 0.0
    %4702 = vmatprep.subr.mxu0 0.0
    %4703 = vmatpush1.msra.mxu0 0.0
    %4704 = vmatprep.subr.mxu0 0.0
    %4705 = vmatpush1.msra.mxu0 0.0
    %4706 = vmatprep.subr.mxu0 0.0
    %4707 = vmatpush1.msra.mxu0 0.0
    %4708 = vmatprep.subr.mxu0 0.0
    %4709 = vmatpush1.msra.mxu0 0.0
    %4710 = vmatprep.subr.mxu0 0.0
    %4711 = vmatpush1.msra.mxu0 0.0
    %4712 = vmatprep.subr.mxu0 0.0
    %4713 = vmatpush1.msra.mxu0 0.0
    %4714 = vmatprep.subr.mxu0 0.0
    %4715 = vmatpush1.msra.mxu0 0.0
    %4716 = vmatprep.subr.mxu0 0.0
    %4717 = vmatpush1.msra.mxu0 0.0
    %4718 = vmatprep.subr.mxu0 0.0
    %4719 = vmatpush1.msra.mxu0 0.0
    %4720 = vmatprep.subr.mxu0 0.0
    %4721 = vmatpush1.msra.mxu0 0.0
    %4722 = vmatprep.subr.mxu0 0.0
    %4723 = vmatpush1.msra.mxu0 0.0
    %4724 = vmatprep.subr.mxu0 0.0
    %4725 = vmatpush1.msra.mxu0 0.0
    %4726 = vmatprep.subr.mxu0 0.0
    %4727 = vmatpush1.msra.mxu0 0.0
    %4728 = vmatprep.subr.mxu0 0.0
    %4729 = vmatpush1.msra.mxu0 0.0
    %4730 = vmatprep.subr.mxu0 0.0
    %4731 = vmatpush1.msra.mxu0 0.0
    %4732 = vmatprep.subr.mxu0 0.0
    %4733 = vmatpush1.msra.mxu0 0.0
    %4734 = vmatprep.subr.mxu0 0.0
    %4735 = vmatpush1.msra.mxu0 0.0
    %4736 = vmatprep.subr.mxu0 0.0
    %4737 = vmatpush1.msra.mxu0 0.0
    %4738 = vmatprep.subr.mxu0 0.0
    %4739 = vmatpush1.msra.mxu0 0.0
    %4740 = vmatprep.subr.mxu0 0.0
    %4741 = vmatpush1.msra.mxu0 0.0
    %4742 = vmatprep.subr.mxu0 0.0
    %4743 = vmatpush1.msra.mxu0 0.0
    %4744 = vmatprep.subr.mxu0 0.0
    %4745 = vmatpush1.msra.mxu0 0.0
    %4746 = vmatprep.mubr.f32.mxu0 0.0
    %4747 = vmatmul.mubr.f32.gmra.mrb[0].mxu0 %v3968
    %v4748 = vpop.f32.mrb[0].mxu0
    %v4749 = vadd.f32 0.0, %v4748
    %v4750 = vpop.f32.mrb[0].mxu0
    %4751 = vmatprep.mubr.f32.mxu0 0.0
    %4752 = vmatmul.mubr.f32.gmra.mrb[0].mxu0 %v3971
    %v4753 = vpop.f32.mrb[0].mxu0
    %v4754 = vadd.f32 0.0, %v4753
    %v4755 = vpop.f32.mrb[0].mxu0
    %4756 = vdwg.mxu0
    %4757 = vmatprep.subr.mxu0 0.0
    %4758 = vmatpush1.msra.mxu0 %v4599
    %4759 = vmatprep.subr.mxu0 0.0
    %4760 = vmatpush1.msra.mxu0 %v4600
    %4761 = vmatprep.subr.mxu0 0.0
    %4762 = vmatpush1.msra.mxu0 %v4601
    %4763 = vmatprep.subr.mxu0 0.0
    %4764 = vmatpush1.msra.mxu0 %v4602
    %4765 = vmatprep.subr.mxu0 0.0
    %4766 = vmatpush1.msra.mxu0 0.0
    %4767 = vmatprep.subr.mxu0 0.0
    %4768 = vmatpush1.msra.mxu0 0.0
    %4769 = vmatprep.subr.mxu0 0.0
    %4770 = vmatpush1.msra.mxu0 0.0
    %4771 = vmatprep.subr.mxu0 0.0
    %4772 = vmatpush1.msra.mxu0 0.0
    %4773 = vmatprep.subr.mxu0 0.0
    %4774 = vmatpush1.msra.mxu0 0.0
    %4775 = vmatprep.subr.mxu0 0.0
    %4776 = vmatpush1.msra.mxu0 0.0
    %4777 = vmatprep.subr.mxu0 0.0
    %4778 = vmatpush1.msra.mxu0 0.0
    %4779 = vmatprep.subr.mxu0 0.0
    %4780 = vmatpush1.msra.mxu0 0.0
    %4781 = vmatprep.subr.mxu0 0.0
    %4782 = vmatpush1.msra.mxu0 0.0
    %4783 = vmatprep.subr.mxu0 0.0
    %4784 = vmatpush1.msra.mxu0 0.0
    %4785 = vmatprep.subr.mxu0 0.0
    %4786 = vmatpush1.msra.mxu0 0.0
    %4787 = vmatprep.subr.mxu0 0.0
    %4788 = vmatpush1.msra.mxu0 0.0
    %4789 = vmatprep.subr.mxu0 0.0
    %4790 = vmatpush1.msra.mxu0 0.0
    %4791 = vmatprep.subr.mxu0 0.0
    %4792 = vmatpush1.msra.mxu0 0.0
    %4793 = vmatprep.subr.mxu0 0.0
    %4794 = vmatpush1.msra.mxu0 0.0
    %4795 = vmatprep.subr.mxu0 0.0
    %4796 = vmatpush1.msra.mxu0 0.0
    %4797 = vmatprep.subr.mxu0 0.0
    %4798 = vmatpush1.msra.mxu0 0.0
    %4799 = vmatprep.subr.mxu0 0.0
    %4800 = vmatpush1.msra.mxu0 0.0
    %4801 = vmatprep.subr.mxu0 0.0
    %4802 = vmatpush1.msra.mxu0 0.0
    %4803 = vmatprep.subr.mxu0 0.0
    %4804 = vmatpush1.msra.mxu0 0.0
    %4805 = vmatprep.subr.mxu0 0.0
    %4806 = vmatpush1.msra.mxu0 0.0
    %4807 = vmatprep.subr.mxu0 0.0
    %4808 = vmatpush1.msra.mxu0 0.0
    %4809 = vmatprep.subr.mxu0 0.0
    %4810 = vmatpush1.msra.mxu0 0.0
    %4811 = vmatprep.subr.mxu0 0.0
    %4812 = vmatpush1.msra.mxu0 0.0
    %4813 = vmatprep.subr.mxu0 0.0
    %4814 = vmatpush1.msra.mxu0 0.0
    %4815 = vmatprep.subr.mxu0 0.0
    %4816 = vmatpush1.msra.mxu0 0.0
    %4817 = vmatprep.subr.mxu0 0.0
    %4818 = vmatpush1.msra.mxu0 0.0
    %4819 = vmatprep.subr.mxu0 0.0
    %4820 = vmatpush1.msra.mxu0 0.0
    %4821 = vmatprep.mubr.f32.mxu0 0.0
    %4822 = vmatmul.mubr.f32.gmra.mrb[0].mxu0 %v3968
    %v4823 = vpop.f32.mrb[0].mxu0
    %v4824 = vadd.f32 0.0, %v4823
    %v4825 = vpop.f32.mrb[0].mxu0
    %4826 = vmatprep.mubr.f32.mxu0 0.0
    %4827 = vmatmul.mubr.f32.gmra.mrb[0].mxu0 %v3971
    %v4828 = vpop.f32.mrb[0].mxu0
    %v4829 = vadd.f32 0.0, %v4828
    %v4830 = vpop.f32.mrb[0].mxu0
    %4831 = vdwg.mxu0
    %4832 = vmatprep.subr.mxu0 0.0
    %4833 = vmatpush1.msra.mxu0 %v4603
    %4834 = vmatprep.subr.mxu0 0.0
    %4835 = vmatpush1.msra.mxu0 %v4604
    %4836 = vmatprep.subr.mxu0 0.0
    %4837 = vmatpush1.msra.mxu0 %v4605
    %4838 = vmatprep.subr.mxu0 0.0
    %4839 = vmatpush1.msra.mxu0 %v4606
    %4840 = vmatprep.subr.mxu0 0.0
    %4841 = vmatpush1.msra.mxu0 0.0
    %4842 = vmatprep.subr.mxu0 0.0
    %4843 = vmatpush1.msra.mxu0 0.0
    %4844 = vmatprep.subr.mxu0 0.0
    %4845 = vmatpush1.msra.mxu0 0.0
    %4846 = vmatprep.subr.mxu0 0.0
    %4847 = vmatpush1.msra.mxu0 0.0
    %4848 = vmatprep.subr.mxu0 0.0
    %4849 = vmatpush1.msra.mxu0 0.0
    %4850 = vmatprep.subr.mxu0 0.0
    %4851 = vmatpush1.msra.mxu0 0.0
    %4852 = vmatprep.subr.mxu0 0.0
    %4853 = vmatpush1.msra.mxu0 0.0
    %4854 = vmatprep.subr.mxu0 0.0
    %4855 = vmatpush1.msra.mxu0 0.0
    %4856 = vmatprep.subr.mxu0 0.0
    %4857 = vmatpush1.msra.mxu0 0.0
    %4858 = vmatprep.subr.mxu0 0.0
    %4859 = vmatpush1.msra.mxu0 0.0
    %4860 = vmatprep.subr.mxu0 0.0
    %4861 = vmatpush1.msra.mxu0 0.0
    %4862 = vmatprep.subr.mxu0 0.0
    %4863 = vmatpush1.msra.mxu0 0.0
    %4864 = vmatprep.subr.mxu0 0.0
    %4865 = vmatpush1.msra.mxu0 0.0
    %4866 = vmatprep.subr.mxu0 0.0
    %4867 = vmatpush1.msra.mxu0 0.0
    %4868 = vmatprep.subr.mxu0 0.0
    %4869 = vmatpush1.msra.mxu0 0.0
    %4870 = vmatprep.subr.mxu0 0.0
    %4871 = vmatpush1.msra.mxu0 0.0
    %4872 = vmatprep.subr.mxu0 0.0
    %4873 = vmatpush1.msra.mxu0 0.0
    %4874 = vmatprep.subr.mxu0 0.0
    %4875 = vmatpush1.msra.mxu0 0.0
    %4876 = vmatprep.subr.mxu0 0.0
    %4877 = vmatpush1.msra.mxu0 0.0
    %4878 = vmatprep.subr.mxu0 0.0
    %4879 = vmatpush1.msra.mxu0 0.0
    %4880 = vmatprep.subr.mxu0 0.0
    %4881 = vmatpush1.msra.mxu0 0.0
    %4882 = vmatprep.subr.mxu0 0.0
    %4883 = vmatpush1.msra.mxu0 0.0
    %4884 = vmatprep.subr.mxu0 0.0
    %4885 = vmatpush1.msra.mxu0 0.0
    %4886 = vmatprep.subr.mxu0 0.0
    %4887 = vmatpush1.msra.mxu0 0.0
    %4888 = vmatprep.subr.mxu0 0.0
    %4889 = vmatpush1.msra.mxu0 0.0
    %4890 = vmatprep.subr.mxu0 0.0
    %4891 = vmatpush1.msra.mxu0 0.0
    %4892 = vmatprep.subr.mxu0 0.0
    %4893 = vmatpush1.msra.mxu0 0.0
    %4894 = vmatprep.subr.mxu0 0.0
    %4895 = vmatpush1.msra.mxu0 0.0
    %4896 = vmatprep.mubr.f32.mxu0 0.0
    %4897 = vmatmul.mubr.f32.gmra.mrb[0].mxu0 %v3968
    %v4898 = vpop.f32.mrb[0].mxu0
    %v4899 = vadd.f32 0.0, %v4898
    %v4900 = vpop.f32.mrb[0].mxu0
    %4901 = vmatprep.mubr.f32.mxu0 0.0
    %4902 = vmatmul.mubr.f32.gmra.mrb[0].mxu0 %v3971
    %v4903 = vpop.f32.mrb[0].mxu0
    %v4904 = vadd.f32 0.0, %v4903
    %v4905 = vpop.f32.mrb[0].mxu0
    %4906 = vdwg.mxu0
    %s4907 = scalar_lea.vmem %s6, 384
    %v4908 = vld [vmem:[%s4907] sm:$0xff]
    %v4909 = vld [vmem:[%s4907 + $0x8] sm:$0xff]
    %v4910 = vld [vmem:[%s4907 + $0x10] sm:$0xff]
    %v4911 = vld [vmem:[%s4907 + $0x18] sm:$0xff]
    %v4912 = vld [vmem:[%s4907 + $0x20] sm:$0xff]
    %v4913 = vld [vmem:[%s4907 + $0x28] sm:$0xff]
    %v4914 = vld [vmem:[%s4907 + $0x30] sm:$0xff]
    %v4915 = vld [vmem:[%s4907 + $0x38] sm:$0xff]
    %v4916 = vadd.f32 %v4040, %v4908
    %v4917 = vadd.f32 %v4045, %v4909
    %v4918 = vadd.f32 %v4115, %v4910
    %v4919 = vadd.f32 %v4120, %v4911
    %v4920 = vadd.f32 %v4190, %v4912
    %v4921 = vadd.f32 %v4195, %v4913
    %v4922 = vadd.f32 %v4265, %v4914
    %v4923 = vadd.f32 %v4270, %v4915
    %s4924 = scalar_lea.vmem %s6, 448
    %v4925 = vld [vmem:[%s4924] sm:$0xff]
    %v4926 = vld [vmem:[%s4924 + $0x8] sm:$0xff]
    %v4927 = vld [vmem:[%s4924 + $0x10] sm:$0xff]
    %v4928 = vld [vmem:[%s4924 + $0x18] sm:$0xff]
    %v4929 = vld [vmem:[%s4924 + $0x20] sm:$0xff]
    %v4930 = vld [vmem:[%s4924 + $0x28] sm:$0xff]
    %v4931 = vld [vmem:[%s4924 + $0x30] sm:$0xff]
    %v4932 = vld [vmem:[%s4924 + $0x38] sm:$0xff]
    %v4933 = vadd.f32 %v4357, %v4925
    %v4934 = vadd.f32 %v4362, %v4926
    %v4935 = vadd.f32 %v4432, %v4927
    %v4936 = vadd.f32 %v4437, %v4928
    %v4937 = vadd.f32 %v4507, %v4929
    %v4938 = vadd.f32 %v4512, %v4930
    %v4939 = vadd.f32 %v4582, %v4931
    %v4940 = vadd.f32 %v4587, %v4932
    %s4941 = scalar_lea.vmem %s6, 512
    %v4942 = vld [vmem:[%s4941] sm:$0xff]
    %v4943 = vld [vmem:[%s4941 + $0x8] sm:$0xff]
    %v4944 = vld [vmem:[%s4941 + $0x10] sm:$0xff]
    %v4945 = vld [vmem:[%s4941 + $0x18] sm:$0xff]
    %v4946 = vld [vmem:[%s4941 + $0x20] sm:$0xff]
    %v4947 = vld [vmem:[%s4941 + $0x28] sm:$0xff]
    %v4948 = vld [vmem:[%s4941 + $0x30] sm:$0xff]
    %v4949 = vld [vmem:[%s4941 + $0x38] sm:$0xff]
    %v4950 = vadd.f32 %v4674, %v4942
    %v4951 = vadd.f32 %v4679, %v4943
    %v4952 = vadd.f32 %v4749, %v4944
    %v4953 = vadd.f32 %v4754, %v4945
    %v4954 = vadd.f32 %v4824, %v4946
    %v4955 = vadd.f32 %v4829, %v4947
    %v4956 = vadd.f32 %v4899, %v4948
    %v4957 = vadd.f32 %v4904, %v4949
    %v4959 = vsel %vm1162, %v4916, 0
    %v4962 = vsel %vm1162, %v4917, 0
    %v4965 = vsel %vm1162, %v4918, 0
    %v4968 = vsel %vm1162, %v4919, 0
    %v4971 = vsel %vm1162, %v4920, 0
    %v4974 = vsel %vm1162, %v4921, 0
    %v4977 = vsel %vm1162, %v4922, 0
    %v4980 = vsel %vm1162, %v4923, 0
    %v4983 = vsel %vm1162, %v4933, 0
    %v4986 = vsel %vm1162, %v4934, 0
    %v4989 = vsel %vm1162, %v4935, 0
    %v4992 = vsel %vm1162, %v4936, 0
    %v4995 = vsel %vm1162, %v4937, 0
    %v4998 = vsel %vm1162, %v4938, 0
    %v5001 = vsel %vm1162, %v4939, 0
    %v5004 = vsel %vm1162, %v4940, 0
    %5006 = vmatprep.subr.mxu0 0.0
    %5007 = vmatpush1.xpose.msra.mxu0 %v4983
    %5008 = vmatprep.subr.mxu0 0.0
    %5009 = vmatpush1.xpose.msra.mxu0 %v4986
    %5010 = vmatprep.subr.mxu0 0.0
    %5011 = vmatpush1.xpose.msra.mxu0 %v4989
    %5012 = vmatprep.subr.mxu0 0.0
    %5013 = vmatpush1.xpose.msra.mxu0 %v4992
    %5014 = vmatprep.subr.mxu0 0.0
    %5015 = vmatpush1.xpose.msra.mxu0 %v4995
    %5016 = vmatprep.subr.mxu0 0.0
    %5017 = vmatpush1.xpose.msra.mxu0 %v4998
    %5018 = vmatprep.subr.mxu0 0.0
    %5019 = vmatpush1.xpose.msra.mxu0 %v5001
    %5020 = vmatprep.subr.mxu0 0.0
    %5021 = vmatpush1.xpose.msra.mxu0 %v5004
    %5022 = vmatprep.subr.mxu0 0.0
    %5023 = vmatpush1.xpose.msra.mxu0 0.0
    %5024 = vmatprep.subr.mxu0 0.0
    %5025 = vmatpush1.xpose.msra.mxu0 0.0
    %5026 = vmatprep.subr.mxu0 0.0
    %5027 = vmatpush1.xpose.msra.mxu0 0.0
    %5028 = vmatprep.subr.mxu0 0.0
    %5029 = vmatpush1.xpose.msra.mxu0 0.0
    %5030 = vmatprep.subr.mxu0 0.0
    %5031 = vmatpush1.xpose.msra.mxu0 0.0
    %5032 = vmatprep.subr.mxu0 0.0
    %5033 = vmatpush1.xpose.msra.mxu0 0.0
    %5034 = vmatprep.subr.mxu0 0.0
    %5035 = vmatpush1.xpose.msra.mxu0 0.0
    %5036 = vmatprep.subr.mxu0 0.0
    %5037 = vmatpush1.xpose.msra.mxu0 0.0
    %5038 = vmatprep.subr.mxu0 0.0
    %5039 = vmatpush1.xpose.msra.mxu0 0.0
    %5040 = vmatprep.subr.mxu0 0.0
    %5041 = vmatpush1.xpose.msra.mxu0 0.0
    %5042 = vmatprep.subr.mxu0 0.0
    %5043 = vmatpush1.xpose.msra.mxu0 0.0
    %5044 = vmatprep.subr.mxu0 0.0
    %5045 = vmatpush1.xpose.msra.mxu0 0.0
    %5046 = vmatprep.subr.mxu0 0.0
    %5047 = vmatpush1.xpose.msra.mxu0 0.0
    %5048 = vmatprep.subr.mxu0 0.0
    %5049 = vmatpush1.xpose.msra.mxu0 0.0
    %5050 = vmatprep.subr.mxu0 0.0
    %5051 = vmatpush1.xpose.msra.mxu0 0.0
    %5052 = vmatprep.subr.mxu0 0.0
    %5053 = vmatpush1.xpose.msra.mxu0 0.0
    %5054 = vmatprep.subr.mxu0 0.0
    %5055 = vmatpush1.xpose.msra.mxu0 0.0
    %5056 = vmatprep.subr.mxu0 0.0
    %5057 = vmatpush1.xpose.msra.mxu0 0.0
    %5058 = vmatprep.subr.mxu0 0.0
    %5059 = vmatpush1.xpose.msra.mxu0 0.0
    %5060 = vmatprep.subr.mxu0 0.0
    %5061 = vmatpush1.xpose.msra.mxu0 0.0
    %5062 = vmatprep.subr.mxu0 0.0
    %5063 = vmatpush1.xpose.msra.mxu0 0.0
    %5064 = vmatprep.subr.mxu0 0.0
    %5065 = vmatpush1.xpose.msra.mxu0 0.0
    %5066 = vmatprep.subr.mxu0 0.0
    %5067 = vmatpush1.xpose.msra.mxu0 0.0
    %5068 = vmatprep.subr.mxu0 0.0
    %5069 = vmatpush1.xpose.msra.mxu0 0.0
    %5070 = vmatprep.mubr.f32.mxu0 0.0
    %5071 = vmatmul.mubr.f32.gmra.mrb[0].mxu0 %v4959
    %v5072 = vpop.f32.mrb[0].mxu0
    %v5073 = vadd.f32 %v146, %v5072
    %v5074 = vpop.f32.mrb[0].mxu0
    %5075 = vmatprep.mubr.f32.mxu0 0.0
    %5076 = vmatmul.mubr.f32.gmra.mrb[0].mxu0 %v4962
    %v5077 = vpop.f32.mrb[0].mxu0
    %v5078 = vadd.f32 %v147, %v5077
    %v5079 = vpop.f32.mrb[0].mxu0
    %5080 = vmatprep.mubr.f32.mxu0 0.0
    %5081 = vmatmul.mubr.f32.gmra.mrb[0].mxu0 %v4965
    %v5082 = vpop.f32.mrb[0].mxu0
    %v5083 = vadd.f32 %v148, %v5082
    %v5084 = vpop.f32.mrb[0].mxu0
    %5085 = vmatprep.mubr.f32.mxu0 0.0
    %5086 = vmatmul.mubr.f32.gmra.mrb[0].mxu0 %v4968
    %v5087 = vpop.f32.mrb[0].mxu0
    %v5088 = vadd.f32 %v149, %v5087
    %v5089 = vpop.f32.mrb[0].mxu0
    %5090 = vmatprep.mubr.f32.mxu0 0.0
    %5091 = vmatmul.mubr.f32.gmra.mrb[0].mxu0 %v4971
    %v5092 = vpop.f32.mrb[0].mxu0
    %v5093 = vadd.f32 %v150, %v5092
    %v5094 = vpop.f32.mrb[0].mxu0
    %5095 = vmatprep.mubr.f32.mxu0 0.0
    %5096 = vmatmul.mubr.f32.gmra.mrb[0].mxu0 %v4974
    %v5097 = vpop.f32.mrb[0].mxu0
    %v5098 = vadd.f32 %v151, %v5097
    %v5099 = vpop.f32.mrb[0].mxu0
    %5100 = vmatprep.mubr.f32.mxu0 0.0
    %5101 = vmatmul.mubr.f32.gmra.mrb[0].mxu0 %v4977
    %v5102 = vpop.f32.mrb[0].mxu0
    %v5103 = vadd.f32 %v152, %v5102
    %v5104 = vpop.f32.mrb[0].mxu0
    %5105 = vmatprep.mubr.f32.mxu0 0.0
    %5106 = vmatmul.mubr.f32.gmra.mrb[0].mxu0 %v4980
    %v5107 = vpop.f32.mrb[0].mxu0
    %v5108 = vadd.f32 %v153, %v5107
    %v5109 = vpop.f32.mrb[0].mxu0
    %5110 = vdwg.mxu0
    %v5111 = vsel %vm62, %v5073, -inf
    %5112 = vmax.xlane.f32.xlu0 %v5111
    %v5113 = vpop.xlane.xlu0 %5112
    %v5114 = vsel %vm62, %v5078, -inf
    %5115 = vmax.xlane.f32.xlu0 %v5114
    %v5116 = vpop.xlane.xlu0 %5115
    %v5117 = vsel %vm62, %v5083, -inf
    %5118 = vmax.xlane.f32.xlu0 %v5117
    %v5119 = vpop.xlane.xlu0 %5118
    %v5120 = vsel %vm62, %v5088, -inf
    %5121 = vmax.xlane.f32.xlu0 %v5120
    %v5122 = vpop.xlane.xlu0 %5121
    %v5123 = vsel %vm62, %v5093, -inf
    %5124 = vmax.xlane.f32.xlu0 %v5123
    %v5125 = vpop.xlane.xlu0 %5124
    %v5126 = vsel %vm62, %v5098, -inf
    %5127 = vmax.xlane.f32.xlu0 %v5126
    %v5128 = vpop.xlane.xlu0 %5127
    %v5129 = vsel %vm62, %v5103, -inf
    %5130 = vmax.xlane.f32.xlu0 %v5129
    %v5131 = vpop.xlane.xlu0 %5130
    %v5132 = vsel %vm62, %v5108, -inf
    %5133 = vmax.xlane.f32.xlu0 %v5132
    %v5134 = vpop.xlane.xlu0 %5133
    %v5135 = vsub.f32 %v5073, %v5113
    %v5136 = vsub.f32 %v5078, %v5116
    %v5137 = vsub.f32 %v5083, %v5119
    %v5138 = vsub.f32 %v5088, %v5122
    %v5139 = vsub.f32 %v5093, %v5125
    %v5140 = vsub.f32 %v5098, %v5128
    %v5141 = vsub.f32 %v5103, %v5131
    %v5142 = vsub.f32 %v5108, %v5134
    %v5143 = vmul.f32 %v5135, 1.442695
    %v5144 = vpow.pop %v5143
    %v5145 = vmul.f32 %v5136, 1.442695
    %v5146 = vpow.pop %v5145
    %v5147 = vmul.f32 %v5137, 1.442695
    %v5148 = vpow.pop %v5147
    %v5149 = vmul.f32 %v5138, 1.442695
    %v5150 = vpow.pop %v5149
    %v5151 = vmul.f32 %v5139, 1.442695
    %v5152 = vpow.pop %v5151
    %v5153 = vmul.f32 %v5140, 1.442695
    %v5154 = vpow.pop %v5153
    %v5155 = vmul.f32 %v5141, 1.442695
    %v5156 = vpow.pop %v5155
    %v5157 = vmul.f32 %v5142, 1.442695
    %v5158 = vpow.pop %v5157
    %v5159 = vsel %vm62, %v5144, 0.0
    %5160 = vadd.xlane.f32.xlu0 %v5159
    %v5161 = vpop.xlane.xlu0 %5160
    %v5162 = vsel %vm62, %v5146, 0.0
    %5163 = vadd.xlane.f32.xlu0 %v5162
    %v5164 = vpop.xlane.xlu0 %5163
    %v5165 = vsel %vm62, %v5148, 0.0
    %5166 = vadd.xlane.f32.xlu0 %v5165
    %v5167 = vpop.xlane.xlu0 %5166
    %v5168 = vsel %vm62, %v5150, 0.0
    %5169 = vadd.xlane.f32.xlu0 %v5168
    %v5170 = vpop.xlane.xlu0 %5169
    %v5171 = vsel %vm62, %v5152, 0.0
    %5172 = vadd.xlane.f32.xlu0 %v5171
    %v5173 = vpop.xlane.xlu0 %5172
    %v5174 = vsel %vm62, %v5154, 0.0
    %5175 = vadd.xlane.f32.xlu0 %v5174
    %v5176 = vpop.xlane.xlu0 %5175
    %v5177 = vsel %vm62, %v5156, 0.0
    %5178 = vadd.xlane.f32.xlu0 %v5177
    %v5179 = vpop.xlane.xlu0 %5178
    %v5180 = vsel %vm62, %v5158, 0.0
    %5181 = vadd.xlane.f32.xlu0 %v5180
    %v5182 = vpop.xlane.xlu0 %5181
    %v5183 = vrcp.pop %v5161
    %v5184 = vrcp.pop %v5164
    %v5185 = vrcp.pop %v5167
    %v5186 = vrcp.pop %v5170
    %v5187 = vrcp.pop %v5173
    %v5188 = vrcp.pop %v5176
    %v5189 = vrcp.pop %v5179
    %v5190 = vrcp.pop %v5182
    %v5191 = vmul.f32 %v5144, %v5183
    %v5192 = vmul.f32 %v5146, %v5184
    %v5193 = vmul.f32 %v5148, %v5185
    %v5194 = vmul.f32 %v5150, %v5186
    %v5195 = vmul.f32 %v5152, %v5187
    %v5196 = vmul.f32 %v5154, %v5188
    %v5197 = vmul.f32 %v5156, %v5189
    %v5198 = vmul.f32 %v5158, %v5190
    %v5200 = vsel %vm62, %v5191, 0
    %v5203 = vsel %vm62, %v5192, 0
    %v5206 = vsel %vm62, %v5193, 0
    %v5209 = vsel %vm62, %v5194, 0
    %v5212 = vsel %vm62, %v5195, 0
    %v5215 = vsel %vm62, %v5196, 0
    %v5218 = vsel %vm62, %v5197, 0
    %v5221 = vsel %vm62, %v5198, 0
    %5223 = vmatprep.subr.mxu0 0.0
    %5224 = vmatpush1.msra.mxu0 %v4950
    %5225 = vmatprep.subr.mxu0 0.0
    %5226 = vmatpush1.msra.mxu0 %v4951
    %5227 = vmatprep.subr.mxu0 0.0
    %5228 = vmatpush1.msra.mxu0 %v4952
    %5229 = vmatprep.subr.mxu0 0.0
    %5230 = vmatpush1.msra.mxu0 %v4953
    %5231 = vmatprep.subr.mxu0 0.0
    %5232 = vmatpush1.msra.mxu0 %v4954
    %5233 = vmatprep.subr.mxu0 0.0
    %5234 = vmatpush1.msra.mxu0 %v4955
    %5235 = vmatprep.subr.mxu0 0.0
    %5236 = vmatpush1.msra.mxu0 %v4956
    %5237 = vmatprep.subr.mxu0 0.0
    %5238 = vmatpush1.msra.mxu0 %v4957
    %5239 = vmatprep.subr.mxu0 0.0
    %5240 = vmatpush1.msra.mxu0 0.0
    %5241 = vmatprep.subr.mxu0 0.0
    %5242 = vmatpush1.msra.mxu0 0.0
    %5243 = vmatprep.subr.mxu0 0.0
    %5244 = vmatpush1.msra.mxu0 0.0
    %5245 = vmatprep.subr.mxu0 0.0
    %5246 = vmatpush1.msra.mxu0 0.0
    %5247 = vmatprep.subr.mxu0 0.0
    %5248 = vmatpush1.msra.mxu0 0.0
    %5249 = vmatprep.subr.mxu0 0.0
    %5250 = vmatpush1.msra.mxu0 0.0
    %5251 = vmatprep.subr.mxu0 0.0
    %5252 = vmatpush1.msra.mxu0 0.0
    %5253 = vmatprep.subr.mxu0 0.0
    %5254 = vmatpush1.msra.mxu0 0.0
    %5255 = vmatprep.subr.mxu0 0.0
    %5256 = vmatpush1.msra.mxu0 0.0
    %5257 = vmatprep.subr.mxu0 0.0
    %5258 = vmatpush1.msra.mxu0 0.0
    %5259 = vmatprep.subr.mxu0 0.0
    %5260 = vmatpush1.msra.mxu0 0.0
    %5261 = vmatprep.subr.mxu0 0.0
    %5262 = vmatpush1.msra.mxu0 0.0
    %5263 = vmatprep.subr.mxu0 0.0
    %5264 = vmatpush1.msra.mxu0 0.0
    %5265 = vmatprep.subr.mxu0 0.0
    %5266 = vmatpush1.msra.mxu0 0.0
    %5267 = vmatprep.subr.mxu0 0.0
    %5268 = vmatpush1.msra.mxu0 0.0
    %5269 = vmatprep.subr.mxu0 0.0
    %5270 = vmatpush1.msra.mxu0 0.0
    %5271 = vmatprep.subr.mxu0 0.0
    %5272 = vmatpush1.msra.mxu0 0.0
    %5273 = vmatprep.subr.mxu0 0.0
    %5274 = vmatpush1.msra.mxu0 0.0
    %5275 = vmatprep.subr.mxu0 0.0
    %5276 = vmatpush1.msra.mxu0 0.0
    %5277 = vmatprep.subr.mxu0 0.0
    %5278 = vmatpush1.msra.mxu0 0.0
    %5279 = vmatprep.subr.mxu0 0.0
    %5280 = vmatpush1.msra.mxu0 0.0
    %5281 = vmatprep.subr.mxu0 0.0
    %5282 = vmatpush1.msra.mxu0 0.0
    %5283 = vmatprep.subr.mxu0 0.0
    %5284 = vmatpush1.msra.mxu0 0.0
    %5285 = vmatprep.subr.mxu0 0.0
    %5286 = vmatpush1.msra.mxu0 0.0
    %5287 = vmatprep.mubr.f32.mxu0 0.0
    %5288 = vmatmul.mubr.f32.gmra.mrb[0].mxu0 %v5200
    %v5289 = vpop.f32.mrb[0].mxu0
    %v5290 = vadd.f32 0.0, %v5289
    %v5291 = vpop.f32.mrb[0].mxu0
    %5292 = vmatprep.mubr.f32.mxu0 0.0
    %5293 = vmatmul.mubr.f32.gmra.mrb[0].mxu0 %v5203
    %v5294 = vpop.f32.mrb[0].mxu0
    %v5295 = vadd.f32 0.0, %v5294
    %v5296 = vpop.f32.mrb[0].mxu0
    %5297 = vmatprep.mubr.f32.mxu0 0.0
    %5298 = vmatmul.mubr.f32.gmra.mrb[0].mxu0 %v5206
    %v5299 = vpop.f32.mrb[0].mxu0
    %v5300 = vadd.f32 0.0, %v5299
    %v5301 = vpop.f32.mrb[0].mxu0
    %5302 = vmatprep.mubr.f32.mxu0 0.0
    %5303 = vmatmul.mubr.f32.gmra.mrb[0].mxu0 %v5209
    %v5304 = vpop.f32.mrb[0].mxu0
    %v5305 = vadd.f32 0.0, %v5304
    %v5306 = vpop.f32.mrb[0].mxu0
    %5307 = vmatprep.mubr.f32.mxu0 0.0
    %5308 = vmatmul.mubr.f32.gmra.mrb[0].mxu0 %v5212
    %v5309 = vpop.f32.mrb[0].mxu0
    %v5310 = vadd.f32 0.0, %v5309
    %v5311 = vpop.f32.mrb[0].mxu0
    %5312 = vmatprep.mubr.f32.mxu0 0.0
    %5313 = vmatmul.mubr.f32.gmra.mrb[0].mxu0 %v5215
    %v5314 = vpop.f32.mrb[0].mxu0
    %v5315 = vadd.f32 0.0, %v5314
    %v5316 = vpop.f32.mrb[0].mxu0
    %5317 = vmatprep.mubr.f32.mxu0 0.0
    %5318 = vmatmul.mubr.f32.gmra.mrb[0].mxu0 %v5218
    %v5319 = vpop.f32.mrb[0].mxu0
    %v5320 = vadd.f32 0.0, %v5319
    %v5321 = vpop.f32.mrb[0].mxu0
    %5322 = vmatprep.mubr.f32.mxu0 0.0
    %5323 = vmatmul.mubr.f32.gmra.mrb[0].mxu0 %v5221
    %v5324 = vpop.f32.mrb[0].mxu0
    %v5325 = vadd.f32 0.0, %v5324
    %v5326 = vpop.f32.mrb[0].mxu0
    %5327 = vdwg.mxu0
    %s5328 = scalar_lea.vmem %s7, 64
    %v5329 = vld [vmem:[%s5328] sm:$0xff]
    %v5330 = vld [vmem:[%s5328 + $0x8] sm:$0xff]
    %v5331 = vld [vmem:[%s5328 + $0x10] sm:$0xff]
    %v5332 = vld [vmem:[%s5328 + $0x18] sm:$0xff]
    %v5334 = vsel %vm1162, %v5290, 0
    %v5337 = vsel %vm1162, %v5295, 0
    %5339 = vmatprep.subr.mxu0 0.0
    %5340 = vmatpush1.msra.mxu0 %v5329
    %5341 = vmatprep.subr.mxu0 0.0
    %5342 = vmatpush1.msra.mxu0 0.0
    %5343 = vmatprep.subr.mxu0 0.0
    %5344 = vmatpush1.msra.mxu0 0.0
    %5345 = vmatprep.subr.mxu0 0.0
    %5346 = vmatpush1.msra.mxu0 0.0
    %5347 = vmatprep.subr.mxu0 0.0
    %5348 = vmatpush1.msra.mxu0 0.0
    %5349 = vmatprep.subr.mxu0 0.0
    %5350 = vmatpush1.msra.mxu0 0.0
    %5351 = vmatprep.subr.mxu0 0.0
    %5352 = vmatpush1.msra.mxu0 0.0
    %5353 = vmatprep.subr.mxu0 0.0
    %5354 = vmatpush1.msra.mxu0 0.0
    %5355 = vmatprep.subr.mxu0 0.0
    %5356 = vmatpush1.msra.mxu0 0.0
    %5357 = vmatprep.subr.mxu0 0.0
    %5358 = vmatpush1.msra.mxu0 0.0
    %5359 = vmatprep.subr.mxu0 0.0
    %5360 = vmatpush1.msra.mxu0 0.0
    %5361 = vmatprep.subr.mxu0 0.0
    %5362 = vmatpush1.msra.mxu0 0.0
    %5363 = vmatprep.subr.mxu0 0.0
    %5364 = vmatpush1.msra.mxu0 0.0
    %5365 = vmatprep.subr.mxu0 0.0
    %5366 = vmatpush1.msra.mxu0 0.0
    %5367 = vmatprep.subr.mxu0 0.0
    %5368 = vmatpush1.msra.mxu0 0.0
    %5369 = vmatprep.subr.mxu0 0.0
    %5370 = vmatpush1.msra.mxu0 0.0
    %5371 = vmatprep.subr.mxu0 0.0
    %5372 = vmatpush1.msra.mxu0 0.0
    %5373 = vmatprep.subr.mxu0 0.0
    %5374 = vmatpush1.msra.mxu0 0.0
    %5375 = vmatprep.subr.mxu0 0.0
    %5376 = vmatpush1.msra.mxu0 0.0
    %5377 = vmatprep.subr.mxu0 0.0
    %5378 = vmatpush1.msra.mxu0 0.0
    %5379 = vmatprep.subr.mxu0 0.0
    %5380 = vmatpush1.msra.mxu0 0.0
    %5381 = vmatprep.subr.mxu0 0.0
    %5382 = vmatpush1.msra.mxu0 0.0
    %5383 = vmatprep.subr.mxu0 0.0
    %5384 = vmatpush1.msra.mxu0 0.0
    %5385 = vmatprep.subr.mxu0 0.0
    %5386 = vmatpush1.msra.mxu0 0.0
    %5387 = vmatprep.subr.mxu0 0.0
    %5388 = vmatpush1.msra.mxu0 0.0
    %5389 = vmatprep.subr.mxu0 0.0
    %5390 = vmatpush1.msra.mxu0 0.0
    %5391 = vmatprep.subr.mxu0 0.0
    %5392 = vmatpush1.msra.mxu0 0.0
    %5393 = vmatprep.subr.mxu0 0.0
    %5394 = vmatpush1.msra.mxu0 0.0
    %5395 = vmatprep.subr.mxu0 0.0
    %5396 = vmatpush1.msra.mxu0 0.0
    %5397 = vmatprep.subr.mxu0 0.0
    %5398 = vmatpush1.msra.mxu0 0.0
    %5399 = vmatprep.subr.mxu0 0.0
    %5400 = vmatpush1.msra.mxu0 0.0
    %5401 = vmatprep.subr.mxu0 0.0
    %5402 = vmatpush1.msra.mxu0 0.0
    %5403 = vmatprep.mubr.f32.mxu0 0.0
    %5404 = vmatmul.mubr.f32.gmra.mrb[0].mxu0 %v5334
    %v5405 = vpop.f32.mrb[0].mxu0
    %v5406 = vadd.f32 0.0, %v5405
    %v5407 = vpop.f32.mrb[0].mxu0
    %5408 = vmatprep.mubr.f32.mxu0 0.0
    %5409 = vmatmul.mubr.f32.gmra.mrb[0].mxu0 %v5337
    %v5410 = vpop.f32.mrb[0].mxu0
    %v5411 = vadd.f32 0.0, %v5410
    %v5412 = vpop.f32.mrb[0].mxu0
    %5413 = vdwg.mxu0
    %v5415 = vsel %vm1162, %v5300, 0
    %v5418 = vsel %vm1162, %v5305, 0
    %5420 = vmatprep.subr.mxu0 0.0
    %5421 = vmatpush1.msra.mxu0 %v5330
    %5422 = vmatprep.subr.mxu0 0.0
    %5423 = vmatpush1.msra.mxu0 0.0
    %5424 = vmatprep.subr.mxu0 0.0
    %5425 = vmatpush1.msra.mxu0 0.0
    %5426 = vmatprep.subr.mxu0 0.0
    %5427 = vmatpush1.msra.mxu0 0.0
    %5428 = vmatprep.subr.mxu0 0.0
    %5429 = vmatpush1.msra.mxu0 0.0
    %5430 = vmatprep.subr.mxu0 0.0
    %5431 = vmatpush1.msra.mxu0 0.0
    %5432 = vmatprep.subr.mxu0 0.0
    %5433 = vmatpush1.msra.mxu0 0.0
    %5434 = vmatprep.subr.mxu0 0.0
    %5435 = vmatpush1.msra.mxu0 0.0
    %5436 = vmatprep.subr.mxu0 0.0
    %5437 = vmatpush1.msra.mxu0 0.0
    %5438 = vmatprep.subr.mxu0 0.0
    %5439 = vmatpush1.msra.mxu0 0.0
    %5440 = vmatprep.subr.mxu0 0.0
    %5441 = vmatpush1.msra.mxu0 0.0
    %5442 = vmatprep.subr.mxu0 0.0
    %5443 = vmatpush1.msra.mxu0 0.0
    %5444 = vmatprep.subr.mxu0 0.0
    %5445 = vmatpush1.msra.mxu0 0.0
    %5446 = vmatprep.subr.mxu0 0.0
    %5447 = vmatpush1.msra.mxu0 0.0
    %5448 = vmatprep.subr.mxu0 0.0
    %5449 = vmatpush1.msra.mxu0 0.0
    %5450 = vmatprep.subr.mxu0 0.0
    %5451 = vmatpush1.msra.mxu0 0.0
    %5452 = vmatprep.subr.mxu0 0.0
    %5453 = vmatpush1.msra.mxu0 0.0
    %5454 = vmatprep.subr.mxu0 0.0
    %5455 = vmatpush1.msra.mxu0 0.0
    %5456 = vmatprep.subr.mxu0 0.0
    %5457 = vmatpush1.msra.mxu0 0.0
    %5458 = vmatprep.subr.mxu0 0.0
    %5459 = vmatpush1.msra.mxu0 0.0
    %5460 = vmatprep.subr.mxu0 0.0
    %5461 = vmatpush1.msra.mxu0 0.0
    %5462 = vmatprep.subr.mxu0 0.0
    %5463 = vmatpush1.msra.mxu0 0.0
    %5464 = vmatprep.subr.mxu0 0.0
    %5465 = vmatpush1.msra.mxu0 0.0
    %5466 = vmatprep.subr.mxu0 0.0
    %5467 = vmatpush1.msra.mxu0 0.0
    %5468 = vmatprep.subr.mxu0 0.0
    %5469 = vmatpush1.msra.mxu0 0.0
    %5470 = vmatprep.subr.mxu0 0.0
    %5471 = vmatpush1.msra.mxu0 0.0
    %5472 = vmatprep.subr.mxu0 0.0
    %5473 = vmatpush1.msra.mxu0 0.0
    %5474 = vmatprep.subr.mxu0 0.0
    %5475 = vmatpush1.msra.mxu0 0.0
    %5476 = vmatprep.subr.mxu0 0.0
    %5477 = vmatpush1.msra.mxu0 0.0
    %5478 = vmatprep.subr.mxu0 0.0
    %5479 = vmatpush1.msra.mxu0 0.0
    %5480 = vmatprep.subr.mxu0 0.0
    %5481 = vmatpush1.msra.mxu0 0.0
    %5482 = vmatprep.subr.mxu0 0.0
    %5483 = vmatpush1.msra.mxu0 0.0
    %5484 = vmatprep.mubr.f32.mxu0 0.0
    %5485 = vmatmul.mubr.f32.gmra.mrb[0].mxu0 %v5415
    %v5486 = vpop.f32.mrb[0].mxu0
    %v5487 = vadd.f32 0.0, %v5486
    %v5488 = vpop.f32.mrb[0].mxu0
    %5489 = vmatprep.mubr.f32.mxu0 0.0
    %5490 = vmatmul.mubr.f32.gmra.mrb[0].mxu0 %v5418
    %v5491 = vpop.f32.mrb[0].mxu0
    %v5492 = vadd.f32 0.0, %v5491
    %v5493 = vpop.f32.mrb[0].mxu0
    %5494 = vdwg.mxu0
    %v5496 = vsel %vm1162, %v5310, 0
    %v5499 = vsel %vm1162, %v5315, 0
    %5501 = vmatprep.subr.mxu0 0.0
    %5502 = vmatpush1.msra.mxu0 %v5331
    %5503 = vmatprep.subr.mxu0 0.0
    %5504 = vmatpush1.msra.mxu0 0.0
    %5505 = vmatprep.subr.mxu0 0.0
    %5506 = vmatpush1.msra.mxu0 0.0
    %5507 = vmatprep.subr.mxu0 0.0
    %5508 = vmatpush1.msra.mxu0 0.0
    %5509 = vmatprep.subr.mxu0 0.0
    %5510 = vmatpush1.msra.mxu0 0.0
    %5511 = vmatprep.subr.mxu0 0.0
    %5512 = vmatpush1.msra.mxu0 0.0
    %5513 = vmatprep.subr.mxu0 0.0
    %5514 = vmatpush1.msra.mxu0 0.0
    %5515 = vmatprep.subr.mxu0 0.0
    %5516 = vmatpush1.msra.mxu0 0.0
    %5517 = vmatprep.subr.mxu0 0.0
    %5518 = vmatpush1.msra.mxu0 0.0
    %5519 = vmatprep.subr.mxu0 0.0
    %5520 = vmatpush1.msra.mxu0 0.0
    %5521 = vmatprep.subr.mxu0 0.0
    %5522 = vmatpush1.msra.mxu0 0.0
    %5523 = vmatprep.subr.mxu0 0.0
    %5524 = vmatpush1.msra.mxu0 0.0
    %5525 = vmatprep.subr.mxu0 0.0
    %5526 = vmatpush1.msra.mxu0 0.0
    %5527 = vmatprep.subr.mxu0 0.0
    %5528 = vmatpush1.msra.mxu0 0.0
    %5529 = vmatprep.subr.mxu0 0.0
    %5530 = vmatpush1.msra.mxu0 0.0
    %5531 = vmatprep.subr.mxu0 0.0
    %5532 = vmatpush1.msra.mxu0 0.0
    %5533 = vmatprep.subr.mxu0 0.0
    %5534 = vmatpush1.msra.mxu0 0.0
    %5535 = vmatprep.subr.mxu0 0.0
    %5536 = vmatpush1.msra.mxu0 0.0
    %5537 = vmatprep.subr.mxu0 0.0
    %5538 = vmatpush1.msra.mxu0 0.0
    %5539 = vmatprep.subr.mxu0 0.0
    %5540 = vmatpush1.msra.mxu0 0.0
    %5541 = vmatprep.subr.mxu0 0.0
    %5542 = vmatpush1.msra.mxu0 0.0
    %5543 = vmatprep.subr.mxu0 0.0
    %5544 = vmatpush1.msra.mxu0 0.0
    %5545 = vmatprep.subr.mxu0 0.0
    %5546 = vmatpush1.msra.mxu0 0.0
    %5547 = vmatprep.subr.mxu0 0.0
    %5548 = vmatpush1.msra.mxu0 0.0
    %5549 = vmatprep.subr.mxu0 0.0
    %5550 = vmatpush1.msra.mxu0 0.0
    %5551 = vmatprep.subr.mxu0 0.0
    %5552 = vmatpush1.msra.mxu0 0.0
    %5553 = vmatprep.subr.mxu0 0.0
    %5554 = vmatpush1.msra.mxu0 0.0
    %5555 = vmatprep.subr.mxu0 0.0
    %5556 = vmatpush1.msra.mxu0 0.0
    %5557 = vmatprep.subr.mxu0 0.0
    %5558 = vmatpush1.msra.mxu0 0.0
    %5559 = vmatprep.subr.mxu0 0.0
    %5560 = vmatpush1.msra.mxu0 0.0
    %5561 = vmatprep.subr.mxu0 0.0
    %5562 = vmatpush1.msra.mxu0 0.0
    %5563 = vmatprep.subr.mxu0 0.0
    %5564 = vmatpush1.msra.mxu0 0.0
    %5565 = vmatprep.mubr.f32.mxu0 0.0
    %5566 = vmatmul.mubr.f32.gmra.mrb[0].mxu0 %v5496
    %v5567 = vpop.f32.mrb[0].mxu0
    %v5568 = vadd.f32 0.0, %v5567
    %v5569 = vpop.f32.mrb[0].mxu0
    %5570 = vmatprep.mubr.f32.mxu0 0.0
    %5571 = vmatmul.mubr.f32.gmra.mrb[0].mxu0 %v5499
    %v5572 = vpop.f32.mrb[0].mxu0
    %v5573 = vadd.f32 0.0, %v5572
    %v5574 = vpop.f32.mrb[0].mxu0
    %5575 = vdwg.mxu0
    %v5577 = vsel %vm1162, %v5320, 0
    %v5580 = vsel %vm1162, %v5325, 0
    %5582 = vmatprep.subr.mxu0 0.0
    %5583 = vmatpush1.msra.mxu0 %v5332
    %5584 = vmatprep.subr.mxu0 0.0
    %5585 = vmatpush1.msra.mxu0 0.0
    %5586 = vmatprep.subr.mxu0 0.0
    %5587 = vmatpush1.msra.mxu0 0.0
    %5588 = vmatprep.subr.mxu0 0.0
    %5589 = vmatpush1.msra.mxu0 0.0
    %5590 = vmatprep.subr.mxu0 0.0
    %5591 = vmatpush1.msra.mxu0 0.0
    %5592 = vmatprep.subr.mxu0 0.0
    %5593 = vmatpush1.msra.mxu0 0.0
    %5594 = vmatprep.subr.mxu0 0.0
    %5595 = vmatpush1.msra.mxu0 0.0
    %5596 = vmatprep.subr.mxu0 0.0
    %5597 = vmatpush1.msra.mxu0 0.0
    %5598 = vmatprep.subr.mxu0 0.0
    %5599 = vmatpush1.msra.mxu0 0.0
    %5600 = vmatprep.subr.mxu0 0.0
    %5601 = vmatpush1.msra.mxu0 0.0
    %5602 = vmatprep.subr.mxu0 0.0
    %5603 = vmatpush1.msra.mxu0 0.0
    %5604 = vmatprep.subr.mxu0 0.0
    %5605 = vmatpush1.msra.mxu0 0.0
    %5606 = vmatprep.subr.mxu0 0.0
    %5607 = vmatpush1.msra.mxu0 0.0
    %5608 = vmatprep.subr.mxu0 0.0
    %5609 = vmatpush1.msra.mxu0 0.0
    %5610 = vmatprep.subr.mxu0 0.0
    %5611 = vmatpush1.msra.mxu0 0.0
    %5612 = vmatprep.subr.mxu0 0.0
    %5613 = vmatpush1.msra.mxu0 0.0
    %5614 = vmatprep.subr.mxu0 0.0
    %5615 = vmatpush1.msra.mxu0 0.0
    %5616 = vmatprep.subr.mxu0 0.0
    %5617 = vmatpush1.msra.mxu0 0.0
    %5618 = vmatprep.subr.mxu0 0.0
    %5619 = vmatpush1.msra.mxu0 0.0
    %5620 = vmatprep.subr.mxu0 0.0
    %5621 = vmatpush1.msra.mxu0 0.0
    %5622 = vmatprep.subr.mxu0 0.0
    %5623 = vmatpush1.msra.mxu0 0.0
    %5624 = vmatprep.subr.mxu0 0.0
    %5625 = vmatpush1.msra.mxu0 0.0
    %5626 = vmatprep.subr.mxu0 0.0
    %5627 = vmatpush1.msra.mxu0 0.0
    %5628 = vmatprep.subr.mxu0 0.0
    %5629 = vmatpush1.msra.mxu0 0.0
    %5630 = vmatprep.subr.mxu0 0.0
    %5631 = vmatpush1.msra.mxu0 0.0
    %5632 = vmatprep.subr.mxu0 0.0
    %5633 = vmatpush1.msra.mxu0 0.0
    %5634 = vmatprep.subr.mxu0 0.0
    %5635 = vmatpush1.msra.mxu0 0.0
    %5636 = vmatprep.subr.mxu0 0.0
    %5637 = vmatpush1.msra.mxu0 0.0
    %5638 = vmatprep.subr.mxu0 0.0
    %5639 = vmatpush1.msra.mxu0 0.0
    %5640 = vmatprep.subr.mxu0 0.0
    %5641 = vmatpush1.msra.mxu0 0.0
    %5642 = vmatprep.subr.mxu0 0.0
    %5643 = vmatpush1.msra.mxu0 0.0
    %5644 = vmatprep.subr.mxu0 0.0
    %5645 = vmatpush1.msra.mxu0 0.0
    %5646 = vmatprep.mubr.f32.mxu0 0.0
    %5647 = vmatmul.mubr.f32.gmra.mrb[0].mxu0 %v5577
    %v5648 = vpop.f32.mrb[0].mxu0
    %v5649 = vadd.f32 0.0, %v5648
    %v5650 = vpop.f32.mrb[0].mxu0
    %5651 = vmatprep.mubr.f32.mxu0 0.0
    %5652 = vmatmul.mubr.f32.gmra.mrb[0].mxu0 %v5580
    %v5653 = vpop.f32.mrb[0].mxu0
    %v5654 = vadd.f32 0.0, %v5653
    %v5655 = vpop.f32.mrb[0].mxu0
    %5656 = vdwg.mxu0
    %v5657 = vsel %vm171, %v5406, 0.0
    %v5658 = vsel %vm171, %v5487, 0.0
    %v5659 = vadd.f32 %v5657, %v5658
    %v5660 = vsel %vm171, %v5568, 0.0
    %v5661 = vadd.f32 %v5659, %v5660
    %v5662 = vsel %vm171, %v5649, 0.0
    %v5663 = vadd.f32 %v5661, %v5662
    %v5664 = vsel %vm171, %v5411, 0.0
    %v5665 = vsel %vm171, %v5492, 0.0
    %v5666 = vadd.f32 %v5664, %v5665
    %v5667 = vsel %vm171, %v5573, 0.0
    %v5668 = vadd.f32 %v5666, %v5667
    %v5669 = vsel %vm171, %v5654, 0.0
    %v5670 = vadd.f32 %v5668, %v5669
    %v5672 = vlaneseq
    %v5673 = vshrl.u32 %v5672, 7
    %v5674 = vsub.s32 0, %v5673
    %v5675 = vrot.slane %v3949, %v5674
    %v5677 = vadd.f32 %v5663, %v5675
    %v5678 = vadd.f32 %v5670, %v5675
    %v5679 = vadd.f32 %v3946, %v5677
    %v5680 = vadd.f32 %v3947, %v5678
    %s5681 = scalar_lea.vmem %s9, 11
    %v5682 = vld [vmem:[%s5681] sm:$0x1]
    %s5683 = scalar_lea.vmem %s9, 12
    %v5684 = vld [vmem:[%s5683] sm:$0x1]
    %v5685 = vsel %vm171, %v5679, 0.0
    %5686 = vadd.xlane.f32.xlu0 %v5685
    %v5687 = vpop.xlane.xlu0 %5686
    %v5688 = vsel %vm171, %v5680, 0.0
    %5689 = vadd.xlane.f32.xlu0 %v5688
    %v5690 = vpop.xlane.xlu0 %5689
    %v5691 = vmul.f32 %v5687, %v1895
    %v5692 = vmul.f32 %v5690, %v1895
    %v5693 = vsub.f32 %v5679, %v5691
    %v5694 = vsub.f32 %v5680, %v5692
    %v5695 = vmul.f32 %v5693, %v5693
    %v5696 = vmul.f32 %v5694, %v5694
    %v5697 = vsel %vm171, %v5695, 0.0
    %5698 = vadd.xlane.f32.xlu0 %v5697
    %v5699 = vpop.xlane.xlu0 %5698
    %v5700 = vsel %vm171, %v5696, 0.0
    %5701 = vadd.xlane.f32.xlu0 %v5700
    %v5702 = vpop.xlane.xlu0 %5701
    %v5703 = vmul.f32 %v5699, %v1895
    %v5704 = vmul.f32 %v5702, %v1895
    %v5705 = vadd.f32 %v5703, 1e-05
    %v5706 = vadd.f32 %v5704, 1e-05
    %v5707 = vrsqrt.pop %v5705
    %v5708 = vrsqrt.pop %v5706
    %v5709 = vmul.f32 %v5693, %v5707
    %v5710 = vmul.f32 %v5694, %v5708
    %v5712 = vlaneseq
    %v5713 = vshrl.u32 %v5712, 7
    %v5714 = vsub.s32 0, %v5713
    %v5715 = vrot.slane %v5682, %v5714
    %v5717 = vmul.f32 %v5709, %v5715
    %v5718 = vmul.f32 %v5710, %v5715
    %v5720 = vlaneseq
    %v5721 = vshrl.u32 %v5720, 7
    %v5722 = vsub.s32 0, %v5721
    %v5723 = vrot.slane %v5684, %v5722
    %v5725 = vadd.f32 %v5717, %v5723
    %v5726 = vadd.f32 %v5718, %v5723
    %s5727 = scalar_lea.vmem %s9, 13
    %v5728 = vld [vmem:[%s5727] sm:$0x1]
    %s5729 = scalar_lea.vmem %s5, 1152
    %v5730 = vld [vmem:[%s5729] sm:$0xff]
    %v5731 = vld [vmem:[%s5729 + $0x8] sm:$0xff]
    %v5732 = vld [vmem:[%s5729 + $0x10] sm:$0xff]
    %v5733 = vld [vmem:[%s5729 + $0x18] sm:$0xff]
    %v5734 = vld [vmem:[%s5729 + $0x20] sm:$0xff]
    %v5735 = vld [vmem:[%s5729 + $0x28] sm:$0xff]
    %v5736 = vld [vmem:[%s5729 + $0x30] sm:$0xff]
    %v5737 = vld [vmem:[%s5729 + $0x38] sm:$0xff]
    %v5738 = vld [vmem:[%s5729 + $0x40] sm:$0xff]
    %v5739 = vld [vmem:[%s5729 + $0x48] sm:$0xff]
    %v5740 = vld [vmem:[%s5729 + $0x50] sm:$0xff]
    %v5741 = vld [vmem:[%s5729 + $0x58] sm:$0xff]
    %v5742 = vld [vmem:[%s5729 + $0x60] sm:$0xff]
    %v5743 = vld [vmem:[%s5729 + $0x68] sm:$0xff]
    %v5744 = vld [vmem:[%s5729 + $0x70] sm:$0xff]
    %v5745 = vld [vmem:[%s5729 + $0x78] sm:$0xff]
    %5746 = vmatprep.subr.mxu0 0.0
    %5747 = vmatpush1.msra.mxu0 %v5730
    %5748 = vmatprep.subr.mxu0 0.0
    %5749 = vmatpush1.msra.mxu0 %v5731
    %5750 = vmatprep.subr.mxu0 0.0
    %5751 = vmatpush1.msra.mxu0 %v5732
    %5752 = vmatprep.subr.mxu0 0.0
    %5753 = vmatpush1.msra.mxu0 %v5733
    %5754 = vmatprep.subr.mxu0 0.0
    %5755 = vmatpush1.msra.mxu0 0.0
    %5756 = vmatprep.subr.mxu0 0.0
    %5757 = vmatpush1.msra.mxu0 0.0
    %5758 = vmatprep.subr.mxu0 0.0
    %5759 = vmatpush1.msra.mxu0 0.0
    %5760 = vmatprep.subr.mxu0 0.0
    %5761 = vmatpush1.msra.mxu0 0.0
    %5762 = vmatprep.subr.mxu0 0.0
    %5763 = vmatpush1.msra.mxu0 0.0
    %5764 = vmatprep.subr.mxu0 0.0
    %5765 = vmatpush1.msra.mxu0 0.0
    %5766 = vmatprep.subr.mxu0 0.0
    %5767 = vmatpush1.msra.mxu0 0.0
    %5768 = vmatprep.subr.mxu0 0.0
    %5769 = vmatpush1.msra.mxu0 0.0
    %5770 = vmatprep.subr.mxu0 0.0
    %5771 = vmatpush1.msra.mxu0 0.0
    %5772 = vmatprep.subr.mxu0 0.0
    %5773 = vmatpush1.msra.mxu0 0.0
    %5774 = vmatprep.subr.mxu0 0.0
    %5775 = vmatpush1.msra.mxu0 0.0
    %5776 = vmatprep.subr.mxu0 0.0
    %5777 = vmatpush1.msra.mxu0 0.0
    %5778 = vmatprep.subr.mxu0 0.0
    %5779 = vmatpush1.msra.mxu0 0.0
    %5780 = vmatprep.subr.mxu0 0.0
    %5781 = vmatpush1.msra.mxu0 0.0
    %5782 = vmatprep.subr.mxu0 0.0
    %5783 = vmatpush1.msra.mxu0 0.0
    %5784 = vmatprep.subr.mxu0 0.0
    %5785 = vmatpush1.msra.mxu0 0.0
    %5786 = vmatprep.subr.mxu0 0.0
    %5787 = vmatpush1.msra.mxu0 0.0
    %5788 = vmatprep.subr.mxu0 0.0
    %5789 = vmatpush1.msra.mxu0 0.0
    %5790 = vmatprep.subr.mxu0 0.0
    %5791 = vmatpush1.msra.mxu0 0.0
    %5792 = vmatprep.subr.mxu0 0.0
    %5793 = vmatpush1.msra.mxu0 0.0
    %5794 = vmatprep.subr.mxu0 0.0
    %5795 = vmatpush1.msra.mxu0 0.0
    %5796 = vmatprep.subr.mxu0 0.0
    %5797 = vmatpush1.msra.mxu0 0.0
    %5798 = vmatprep.subr.mxu0 0.0
    %5799 = vmatpush1.msra.mxu0 0.0
    %5800 = vmatprep.subr.mxu0 0.0
    %5801 = vmatpush1.msra.mxu0 0.0
    %5802 = vmatprep.subr.mxu0 0.0
    %5803 = vmatpush1.msra.mxu0 0.0
    %5804 = vmatprep.subr.mxu0 0.0
    %5805 = vmatpush1.msra.mxu0 0.0
    %5806 = vmatprep.subr.mxu0 0.0
    %5807 = vmatpush1.msra.mxu0 0.0
    %5808 = vmatprep.subr.mxu0 0.0
    %5809 = vmatpush1.msra.mxu0 0.0
    %5810 = vmatprep.mubr.f32.mxu0 0.0
    %5811 = vmatmul.mubr.f32.gmra.mrb[0].mxu0 %v1952
    %v5812 = vpop.f32.mrb[0].mxu0
    %v5813 = vadd.f32 0.0, %v5812
    %v5814 = vpop.f32.mrb[0].mxu0
    %5815 = vmatprep.mubr.f32.mxu0 0.0
    %5816 = vmatmul.mubr.f32.gmra.mrb[0].mxu0 %v1955
    %v5817 = vpop.f32.mrb[0].mxu0
    %v5818 = vadd.f32 0.0, %v5817
    %v5819 = vpop.f32.mrb[0].mxu0
    %5820 = vdwg.mxu0
    %5821 = vmatprep.subr.mxu0 0.0
    %5822 = vmatpush1.msra.mxu0 %v5734
    %5823 = vmatprep.subr.mxu0 0.0
    %5824 = vmatpush1.msra.mxu0 %v5735
    %5825 = vmatprep.subr.mxu0 0.0
    %5826 = vmatpush1.msra.mxu0 %v5736
    %5827 = vmatprep.subr.mxu0 0.0
    %5828 = vmatpush1.msra.mxu0 %v5737
    %5829 = vmatprep.subr.mxu0 0.0
    %5830 = vmatpush1.msra.mxu0 0.0
    %5831 = vmatprep.subr.mxu0 0.0
    %5832 = vmatpush1.msra.mxu0 0.0
    %5833 = vmatprep.subr.mxu0 0.0
    %5834 = vmatpush1.msra.mxu0 0.0
    %5835 = vmatprep.subr.mxu0 0.0
    %5836 = vmatpush1.msra.mxu0 0.0
    %5837 = vmatprep.subr.mxu0 0.0
    %5838 = vmatpush1.msra.mxu0 0.0
    %5839 = vmatprep.subr.mxu0 0.0
    %5840 = vmatpush1.msra.mxu0 0.0
    %5841 = vmatprep.subr.mxu0 0.0
    %5842 = vmatpush1.msra.mxu0 0.0
    %5843 = vmatprep.subr.mxu0 0.0
    %5844 = vmatpush1.msra.mxu0 0.0
    %5845 = vmatprep.subr.mxu0 0.0
    %5846 = vmatpush1.msra.mxu0 0.0
    %5847 = vmatprep.subr.mxu0 0.0
    %5848 = vmatpush1.msra.mxu0 0.0
    %5849 = vmatprep.subr.mxu0 0.0
    %5850 = vmatpush1.msra.mxu0 0.0
    %5851 = vmatprep.subr.mxu0 0.0
    %5852 = vmatpush1.msra.mxu0 0.0
    %5853 = vmatprep.subr.mxu0 0.0
    %5854 = vmatpush1.msra.mxu0 0.0
    %5855 = vmatprep.subr.mxu0 0.0
    %5856 = vmatpush1.msra.mxu0 0.0
    %5857 = vmatprep.subr.mxu0 0.0
    %5858 = vmatpush1.msra.mxu0 0.0
    %5859 = vmatprep.subr.mxu0 0.0
    %5860 = vmatpush1.msra.mxu0 0.0
    %5861 = vmatprep.subr.mxu0 0.0
    %5862 = vmatpush1.msra.mxu0 0.0
    %5863 = vmatprep.subr.mxu0 0.0
    %5864 = vmatpush1.msra.mxu0 0.0
    %5865 = vmatprep.subr.mxu0 0.0
    %5866 = vmatpush1.msra.mxu0 0.0
    %5867 = vmatprep.subr.mxu0 0.0
    %5868 = vmatpush1.msra.mxu0 0.0
    %5869 = vmatprep.subr.mxu0 0.0
    %5870 = vmatpush1.msra.mxu0 0.0
    %5871 = vmatprep.subr.mxu0 0.0
    %5872 = vmatpush1.msra.mxu0 0.0
    %5873 = vmatprep.subr.mxu0 0.0
    %5874 = vmatpush1.msra.mxu0 0.0
    %5875 = vmatprep.subr.mxu0 0.0
    %5876 = vmatpush1.msra.mxu0 0.0
    %5877 = vmatprep.subr.mxu0 0.0
    %5878 = vmatpush1.msra.mxu0 0.0
    %5879 = vmatprep.subr.mxu0 0.0
    %5880 = vmatpush1.msra.mxu0 0.0
    %5881 = vmatprep.subr.mxu0 0.0
    %5882 = vmatpush1.msra.mxu0 0.0
    %5883 = vmatprep.subr.mxu0 0.0
    %5884 = vmatpush1.msra.mxu0 0.0
    %5885 = vmatprep.mubr.f32.mxu0 0.0
    %5886 = vmatmul.mubr.f32.gmra.mrb[0].mxu0 %v1952
    %v5887 = vpop.f32.mrb[0].mxu0
    %v5888 = vadd.f32 0.0, %v5887
    %v5889 = vpop.f32.mrb[0].mxu0
    %5890 = vmatprep.mubr.f32.mxu0 0.0
    %5891 = vmatmul.mubr.f32.gmra.mrb[0].mxu0 %v1955
    %v5892 = vpop.f32.mrb[0].mxu0
    %v5893 = vadd.f32 0.0, %v5892
    %v5894 = vpop.f32.mrb[0].mxu0
    %5895 = vdwg.mxu0
    %5896 = vmatprep.subr.mxu0 0.0
    %5897 = vmatpush1.msra.mxu0 %v5738
    %5898 = vmatprep.subr.mxu0 0.0
    %5899 = vmatpush1.msra.mxu0 %v5739
    %5900 = vmatprep.subr.mxu0 0.0
    %5901 = vmatpush1.msra.mxu0 %v5740
    %5902 = vmatprep.subr.mxu0 0.0
    %5903 = vmatpush1.msra.mxu0 %v5741
    %5904 = vmatprep.subr.mxu0 0.0
    %5905 = vmatpush1.msra.mxu0 0.0
    %5906 = vmatprep.subr.mxu0 0.0
    %5907 = vmatpush1.msra.mxu0 0.0
    %5908 = vmatprep.subr.mxu0 0.0
    %5909 = vmatpush1.msra.mxu0 0.0
    %5910 = vmatprep.subr.mxu0 0.0
    %5911 = vmatpush1.msra.mxu0 0.0
    %5912 = vmatprep.subr.mxu0 0.0
    %5913 = vmatpush1.msra.mxu0 0.0
    %5914 = vmatprep.subr.mxu0 0.0
    %5915 = vmatpush1.msra.mxu0 0.0
    %5916 = vmatprep.subr.mxu0 0.0
    %5917 = vmatpush1.msra.mxu0 0.0
    %5918 = vmatprep.subr.mxu0 0.0
    %5919 = vmatpush1.msra.mxu0 0.0
    %5920 = vmatprep.subr.mxu0 0.0
    %5921 = vmatpush1.msra.mxu0 0.0
    %5922 = vmatprep.subr.mxu0 0.0
    %5923 = vmatpush1.msra.mxu0 0.0
    %5924 = vmatprep.subr.mxu0 0.0
    %5925 = vmatpush1.msra.mxu0 0.0
    %5926 = vmatprep.subr.mxu0 0.0
    %5927 = vmatpush1.msra.mxu0 0.0
    %5928 = vmatprep.subr.mxu0 0.0
    %5929 = vmatpush1.msra.mxu0 0.0
    %5930 = vmatprep.subr.mxu0 0.0
    %5931 = vmatpush1.msra.mxu0 0.0
    %5932 = vmatprep.subr.mxu0 0.0
    %5933 = vmatpush1.msra.mxu0 0.0
    %5934 = vmatprep.subr.mxu0 0.0
    %5935 = vmatpush1.msra.mxu0 0.0
    %5936 = vmatprep.subr.mxu0 0.0
    %5937 = vmatpush1.msra.mxu0 0.0
    %5938 = vmatprep.subr.mxu0 0.0
    %5939 = vmatpush1.msra.mxu0 0.0
    %5940 = vmatprep.subr.mxu0 0.0
    %5941 = vmatpush1.msra.mxu0 0.0
    %5942 = vmatprep.subr.mxu0 0.0
    %5943 = vmatpush1.msra.mxu0 0.0
    %5944 = vmatprep.subr.mxu0 0.0
    %5945 = vmatpush1.msra.mxu0 0.0
    %5946 = vmatprep.subr.mxu0 0.0
    %5947 = vmatpush1.msra.mxu0 0.0
    %5948 = vmatprep.subr.mxu0 0.0
    %5949 = vmatpush1.msra.mxu0 0.0
    %5950 = vmatprep.subr.mxu0 0.0
    %5951 = vmatpush1.msra.mxu0 0.0
    %5952 = vmatprep.subr.mxu0 0.0
    %5953 = vmatpush1.msra.mxu0 0.0
    %5954 = vmatprep.subr.mxu0 0.0
    %5955 = vmatpush1.msra.mxu0 0.0
    %5956 = vmatprep.subr.mxu0 0.0
    %5957 = vmatpush1.msra.mxu0 0.0
    %5958 = vmatprep.subr.mxu0 0.0
    %5959 = vmatpush1.msra.mxu0 0.0
    %5960 = vmatprep.mubr.f32.mxu0 0.0
    %5961 = vmatmul.mubr.f32.gmra.mrb[0].mxu0 %v1952
    %v5962 = vpop.f32.mrb[0].mxu0
    %v5963 = vadd.f32 0.0, %v5962
    %v5964 = vpop.f32.mrb[0].mxu0
    %5965 = vmatprep.mubr.f32.mxu0 0.0
    %5966 = vmatmul.mubr.f32.gmra.mrb[0].mxu0 %v1955
    %v5967 = vpop.f32.mrb[0].mxu0
    %v5968 = vadd.f32 0.0, %v5967
    %v5969 = vpop.f32.mrb[0].mxu0
    %5970 = vdwg.mxu0
    %5971 = vmatprep.subr.mxu0 0.0
    %5972 = vmatpush1.msra.mxu0 %v5742
    %5973 = vmatprep.subr.mxu0 0.0
    %5974 = vmatpush1.msra.mxu0 %v5743
    %5975 = vmatprep.subr.mxu0 0.0
    %5976 = vmatpush1.msra.mxu0 %v5744
    %5977 = vmatprep.subr.mxu0 0.0
    %5978 = vmatpush1.msra.mxu0 %v5745
    %5979 = vmatprep.subr.mxu0 0.0
    %5980 = vmatpush1.msra.mxu0 0.0
    %5981 = vmatprep.subr.mxu0 0.0
    %5982 = vmatpush1.msra.mxu0 0.0
    %5983 = vmatprep.subr.mxu0 0.0
    %5984 = vmatpush1.msra.mxu0 0.0
    %5985 = vmatprep.subr.mxu0 0.0
    %5986 = vmatpush1.msra.mxu0 0.0
    %5987 = vmatprep.subr.mxu0 0.0
    %5988 = vmatpush1.msra.mxu0 0.0
    %5989 = vmatprep.subr.mxu0 0.0
    %5990 = vmatpush1.msra.mxu0 0.0
    %5991 = vmatprep.subr.mxu0 0.0
    %5992 = vmatpush1.msra.mxu0 0.0
    %5993 = vmatprep.subr.mxu0 0.0
    %5994 = vmatpush1.msra.mxu0 0.0
    %5995 = vmatprep.subr.mxu0 0.0
    %5996 = vmatpush1.msra.mxu0 0.0
    %5997 = vmatprep.subr.mxu0 0.0
    %5998 = vmatpush1.msra.mxu0 0.0
    %5999 = vmatprep.subr.mxu0 0.0
    %6000 = vmatpush1.msra.mxu0 0.0
    %6001 = vmatprep.subr.mxu0 0.0
    %6002 = vmatpush1.msra.mxu0 0.0
    %6003 = vmatprep.subr.mxu0 0.0
    %6004 = vmatpush1.msra.mxu0 0.0
    %6005 = vmatprep.subr.mxu0 0.0
    %6006 = vmatpush1.msra.mxu0 0.0
    %6007 = vmatprep.subr.mxu0 0.0
    %6008 = vmatpush1.msra.mxu0 0.0
    %6009 = vmatprep.subr.mxu0 0.0
    %6010 = vmatpush1.msra.mxu0 0.0
    %6011 = vmatprep.subr.mxu0 0.0
    %6012 = vmatpush1.msra.mxu0 0.0
    %6013 = vmatprep.subr.mxu0 0.0
    %6014 = vmatpush1.msra.mxu0 0.0
    %6015 = vmatprep.subr.mxu0 0.0
    %6016 = vmatpush1.msra.mxu0 0.0
    %6017 = vmatprep.subr.mxu0 0.0
    %6018 = vmatpush1.msra.mxu0 0.0
    %6019 = vmatprep.subr.mxu0 0.0
    %6020 = vmatpush1.msra.mxu0 0.0
    %6021 = vmatprep.subr.mxu0 0.0
    %6022 = vmatpush1.msra.mxu0 0.0
    %6023 = vmatprep.subr.mxu0 0.0
    %6024 = vmatpush1.msra.mxu0 0.0
    %6025 = vmatprep.subr.mxu0 0.0
    %6026 = vmatpush1.msra.mxu0 0.0
    %6027 = vmatprep.subr.mxu0 0.0
    %6028 = vmatpush1.msra.mxu0 0.0
    %6029 = vmatprep.subr.mxu0 0.0
    %6030 = vmatpush1.msra.mxu0 0.0
    %6031 = vmatprep.subr.mxu0 0.0
    %6032 = vmatpush1.msra.mxu0 0.0
    %6033 = vmatprep.subr.mxu0 0.0
    %6034 = vmatpush1.msra.mxu0 0.0
    %6035 = vmatprep.mubr.f32.mxu0 0.0
    %6036 = vmatmul.mubr.f32.gmra.mrb[0].mxu0 %v1952
    %v6037 = vpop.f32.mrb[0].mxu0
    %v6038 = vadd.f32 0.0, %v6037
    %v6039 = vpop.f32.mrb[0].mxu0
    %6040 = vmatprep.mubr.f32.mxu0 0.0
    %6041 = vmatmul.mubr.f32.gmra.mrb[0].mxu0 %v1955
    %v6042 = vpop.f32.mrb[0].mxu0
    %v6043 = vadd.f32 0.0, %v6042
    %v6044 = vpop.f32.mrb[0].mxu0
    %6045 = vdwg.mxu0
    %s6046 = scalar_lea.vmem %s5, 1280
    %v6047 = vld [vmem:[%s6046] sm:$0xff]
    %v6048 = vld [vmem:[%s6046 + $0x8] sm:$0xff]
    %v6049 = vld [vmem:[%s6046 + $0x10] sm:$0xff]
    %v6050 = vld [vmem:[%s6046 + $0x18] sm:$0xff]
    %v6051 = vld [vmem:[%s6046 + $0x20] sm:$0xff]
    %v6052 = vld [vmem:[%s6046 + $0x28] sm:$0xff]
    %v6053 = vld [vmem:[%s6046 + $0x30] sm:$0xff]
    %v6054 = vld [vmem:[%s6046 + $0x38] sm:$0xff]
    %v6055 = vld [vmem:[%s6046 + $0x40] sm:$0xff]
    %v6056 = vld [vmem:[%s6046 + $0x48] sm:$0xff]
    %v6057 = vld [vmem:[%s6046 + $0x50] sm:$0xff]
    %v6058 = vld [vmem:[%s6046 + $0x58] sm:$0xff]
    %v6059 = vld [vmem:[%s6046 + $0x60] sm:$0xff]
    %v6060 = vld [vmem:[%s6046 + $0x68] sm:$0xff]
    %v6061 = vld [vmem:[%s6046 + $0x70] sm:$0xff]
    %v6062 = vld [vmem:[%s6046 + $0x78] sm:$0xff]
    %6063 = vmatprep.subr.mxu0 0.0
    %6064 = vmatpush1.msra.mxu0 %v6047
    %6065 = vmatprep.subr.mxu0 0.0
    %6066 = vmatpush1.msra.mxu0 %v6048
    %6067 = vmatprep.subr.mxu0 0.0
    %6068 = vmatpush1.msra.mxu0 %v6049
    %6069 = vmatprep.subr.mxu0 0.0
    %6070 = vmatpush1.msra.mxu0 %v6050
    %6071 = vmatprep.subr.mxu0 0.0
    %6072 = vmatpush1.msra.mxu0 0.0
    %6073 = vmatprep.subr.mxu0 0.0
    %6074 = vmatpush1.msra.mxu0 0.0
    %6075 = vmatprep.subr.mxu0 0.0
    %6076 = vmatpush1.msra.mxu0 0.0
    %6077 = vmatprep.subr.mxu0 0.0
    %6078 = vmatpush1.msra.mxu0 0.0
    %6079 = vmatprep.subr.mxu0 0.0
    %6080 = vmatpush1.msra.mxu0 0.0
    %6081 = vmatprep.subr.mxu0 0.0
    %6082 = vmatpush1.msra.mxu0 0.0
    %6083 = vmatprep.subr.mxu0 0.0
    %6084 = vmatpush1.msra.mxu0 0.0
    %6085 = vmatprep.subr.mxu0 0.0
    %6086 = vmatpush1.msra.mxu0 0.0
    %6087 = vmatprep.subr.mxu0 0.0
    %6088 = vmatpush1.msra.mxu0 0.0
    %6089 = vmatprep.subr.mxu0 0.0
    %6090 = vmatpush1.msra.mxu0 0.0
    %6091 = vmatprep.subr.mxu0 0.0
    %6092 = vmatpush1.msra.mxu0 0.0
    %6093 = vmatprep.subr.mxu0 0.0
    %6094 = vmatpush1.msra.mxu0 0.0
    %6095 = vmatprep.subr.mxu0 0.0
    %6096 = vmatpush1.msra.mxu0 0.0
    %6097 = vmatprep.subr.mxu0 0.0
    %6098 = vmatpush1.msra.mxu0 0.0
    %6099 = vmatprep.subr.mxu0 0.0
    %6100 = vmatpush1.msra.mxu0 0.0
    %6101 = vmatprep.subr.mxu0 0.0
    %6102 = vmatpush1.msra.mxu0 0.0
    %6103 = vmatprep.subr.mxu0 0.0
    %6104 = vmatpush1.msra.mxu0 0.0
    %6105 = vmatprep.subr.mxu0 0.0
    %6106 = vmatpush1.msra.mxu0 0.0
    %6107 = vmatprep.subr.mxu0 0.0
    %6108 = vmatpush1.msra.mxu0 0.0
    %6109 = vmatprep.subr.mxu0 0.0
    %6110 = vmatpush1.msra.mxu0 0.0
    %6111 = vmatprep.subr.mxu0 0.0
    %6112 = vmatpush1.msra.mxu0 0.0
    %6113 = vmatprep.subr.mxu0 0.0
    %6114 = vmatpush1.msra.mxu0 0.0
    %6115 = vmatprep.subr.mxu0 0.0
    %6116 = vmatpush1.msra.mxu0 0.0
    %6117 = vmatprep.subr.mxu0 0.0
    %6118 = vmatpush1.msra.mxu0 0.0
    %6119 = vmatprep.subr.mxu0 0.0
    %6120 = vmatpush1.msra.mxu0 0.0
    %6121 = vmatprep.subr.mxu0 0.0
    %6122 = vmatpush1.msra.mxu0 0.0
    %6123 = vmatprep.subr.mxu0 0.0
    %6124 = vmatpush1.msra.mxu0 0.0
    %6125 = vmatprep.subr.mxu0 0.0
    %6126 = vmatpush1.msra.mxu0 0.0
    %6127 = vmatprep.mubr.f32.mxu0 0.0
    %6128 = vmatmul.mubr.f32.gmra.mrb[0].mxu0 %v3968
    %v6129 = vpop.f32.mrb[0].mxu0
    %v6130 = vadd.f32 0.0, %v6129
    %v6131 = vpop.f32.mrb[0].mxu0
    %6132 = vmatprep.mubr.f32.mxu0 0.0
    %6133 = vmatmul.mubr.f32.gmra.mrb[0].mxu0 %v3971
    %v6134 = vpop.f32.mrb[0].mxu0
    %v6135 = vadd.f32 0.0, %v6134
    %v6136 = vpop.f32.mrb[0].mxu0
    %6137 = vdwg.mxu0
    %6138 = vmatprep.subr.mxu0 0.0
    %6139 = vmatpush1.msra.mxu0 %v6051
    %6140 = vmatprep.subr.mxu0 0.0
    %6141 = vmatpush1.msra.mxu0 %v6052
    %6142 = vmatprep.subr.mxu0 0.0
    %6143 = vmatpush1.msra.mxu0 %v6053
    %6144 = vmatprep.subr.mxu0 0.0
    %6145 = vmatpush1.msra.mxu0 %v6054
    %6146 = vmatprep.subr.mxu0 0.0
    %6147 = vmatpush1.msra.mxu0 0.0
    %6148 = vmatprep.subr.mxu0 0.0
    %6149 = vmatpush1.msra.mxu0 0.0
    %6150 = vmatprep.subr.mxu0 0.0
    %6151 = vmatpush1.msra.mxu0 0.0
    %6152 = vmatprep.subr.mxu0 0.0
    %6153 = vmatpush1.msra.mxu0 0.0
    %6154 = vmatprep.subr.mxu0 0.0
    %6155 = vmatpush1.msra.mxu0 0.0
    %6156 = vmatprep.subr.mxu0 0.0
    %6157 = vmatpush1.msra.mxu0 0.0
    %6158 = vmatprep.subr.mxu0 0.0
    %6159 = vmatpush1.msra.mxu0 0.0
    %6160 = vmatprep.subr.mxu0 0.0
    %6161 = vmatpush1.msra.mxu0 0.0
    %6162 = vmatprep.subr.mxu0 0.0
    %6163 = vmatpush1.msra.mxu0 0.0
    %6164 = vmatprep.subr.mxu0 0.0
    %6165 = vmatpush1.msra.mxu0 0.0
    %6166 = vmatprep.subr.mxu0 0.0
    %6167 = vmatpush1.msra.mxu0 0.0
    %6168 = vmatprep.subr.mxu0 0.0
    %6169 = vmatpush1.msra.mxu0 0.0
    %6170 = vmatprep.subr.mxu0 0.0
    %6171 = vmatpush1.msra.mxu0 0.0
    %6172 = vmatprep.subr.mxu0 0.0
    %6173 = vmatpush1.msra.mxu0 0.0
    %6174 = vmatprep.subr.mxu0 0.0
    %6175 = vmatpush1.msra.mxu0 0.0
    %6176 = vmatprep.subr.mxu0 0.0
    %6177 = vmatpush1.msra.mxu0 0.0
    %6178 = vmatprep.subr.mxu0 0.0
    %6179 = vmatpush1.msra.mxu0 0.0
    %6180 = vmatprep.subr.mxu0 0.0
    %6181 = vmatpush1.msra.mxu0 0.0
    %6182 = vmatprep.subr.mxu0 0.0
    %6183 = vmatpush1.msra.mxu0 0.0
    %6184 = vmatprep.subr.mxu0 0.0
    %6185 = vmatpush1.msra.mxu0 0.0
    %6186 = vmatprep.subr.mxu0 0.0
    %6187 = vmatpush1.msra.mxu0 0.0
    %6188 = vmatprep.subr.mxu0 0.0
    %6189 = vmatpush1.msra.mxu0 0.0
    %6190 = vmatprep.subr.mxu0 0.0
    %6191 = vmatpush1.msra.mxu0 0.0
    %6192 = vmatprep.subr.mxu0 0.0
    %6193 = vmatpush1.msra.mxu0 0.0
    %6194 = vmatprep.subr.mxu0 0.0
    %6195 = vmatpush1.msra.mxu0 0.0
    %6196 = vmatprep.subr.mxu0 0.0
    %6197 = vmatpush1.msra.mxu0 0.0
    %6198 = vmatprep.subr.mxu0 0.0
    %6199 = vmatpush1.msra.mxu0 0.0
    %6200 = vmatprep.subr.mxu0 0.0
    %6201 = vmatpush1.msra.mxu0 0.0
    %6202 = vmatprep.mubr.f32.mxu0 0.0
    %6203 = vmatmul.mubr.f32.gmra.mrb[0].mxu0 %v3968
    %v6204 = vpop.f32.mrb[0].mxu0
    %v6205 = vadd.f32 0.0, %v6204
    %v6206 = vpop.f32.mrb[0].mxu0
    %6207 = vmatprep.mubr.f32.mxu0 0.0
    %6208 = vmatmul.mubr.f32.gmra.mrb[0].mxu0 %v3971
    %v6209 = vpop.f32.mrb[0].mxu0
    %v6210 = vadd.f32 0.0, %v6209
    %v6211 = vpop.f32.mrb[0].mxu0
    %6212 = vdwg.mxu0
    %6213 = vmatprep.subr.mxu0 0.0
    %6214 = vmatpush1.msra.mxu0 %v6055
    %6215 = vmatprep.subr.mxu0 0.0
    %6216 = vmatpush1.msra.mxu0 %v6056
    %6217 = vmatprep.subr.mxu0 0.0
    %6218 = vmatpush1.msra.mxu0 %v6057
    %6219 = vmatprep.subr.mxu0 0.0
    %6220 = vmatpush1.msra.mxu0 %v6058
    %6221 = vmatprep.subr.mxu0 0.0
    %6222 = vmatpush1.msra.mxu0 0.0
    %6223 = vmatprep.subr.mxu0 0.0
    %6224 = vmatpush1.msra.mxu0 0.0
    %6225 = vmatprep.subr.mxu0 0.0
    %6226 = vmatpush1.msra.mxu0 0.0
    %6227 = vmatprep.subr.mxu0 0.0
    %6228 = vmatpush1.msra.mxu0 0.0
    %6229 = vmatprep.subr.mxu0 0.0
    %6230 = vmatpush1.msra.mxu0 0.0
    %6231 = vmatprep.subr.mxu0 0.0
    %6232 = vmatpush1.msra.mxu0 0.0
    %6233 = vmatprep.subr.mxu0 0.0
    %6234 = vmatpush1.msra.mxu0 0.0
    %6235 = vmatprep.subr.mxu0 0.0
    %6236 = vmatpush1.msra.mxu0 0.0
    %6237 = vmatprep.subr.mxu0 0.0
    %6238 = vmatpush1.msra.mxu0 0.0
    %6239 = vmatprep.subr.mxu0 0.0
    %6240 = vmatpush1.msra.mxu0 0.0
    %6241 = vmatprep.subr.mxu0 0.0
    %6242 = vmatpush1.msra.mxu0 0.0
    %6243 = vmatprep.subr.mxu0 0.0
    %6244 = vmatpush1.msra.mxu0 0.0
    %6245 = vmatprep.subr.mxu0 0.0
    %6246 = vmatpush1.msra.mxu0 0.0
    %6247 = vmatprep.subr.mxu0 0.0
    %6248 = vmatpush1.msra.mxu0 0.0
    %6249 = vmatprep.subr.mxu0 0.0
    %6250 = vmatpush1.msra.mxu0 0.0
    %6251 = vmatprep.subr.mxu0 0.0
    %6252 = vmatpush1.msra.mxu0 0.0
    %6253 = vmatprep.subr.mxu0 0.0
    %6254 = vmatpush1.msra.mxu0 0.0
    %6255 = vmatprep.subr.mxu0 0.0
    %6256 = vmatpush1.msra.mxu0 0.0
    %6257 = vmatprep.subr.mxu0 0.0
    %6258 = vmatpush1.msra.mxu0 0.0
    %6259 = vmatprep.subr.mxu0 0.0
    %6260 = vmatpush1.msra.mxu0 0.0
    %6261 = vmatprep.subr.mxu0 0.0
    %6262 = vmatpush1.msra.mxu0 0.0
    %6263 = vmatprep.subr.mxu0 0.0
    %6264 = vmatpush1.msra.mxu0 0.0
    %6265 = vmatprep.subr.mxu0 0.0
    %6266 = vmatpush1.msra.mxu0 0.0
    %6267 = vmatprep.subr.mxu0 0.0
    %6268 = vmatpush1.msra.mxu0 0.0
    %6269 = vmatprep.subr.mxu0 0.0
    %6270 = vmatpush1.msra.mxu0 0.0
    %6271 = vmatprep.subr.mxu0 0.0
    %6272 = vmatpush1.msra.mxu0 0.0
    %6273 = vmatprep.subr.mxu0 0.0
    %6274 = vmatpush1.msra.mxu0 0.0
    %6275 = vmatprep.subr.mxu0 0.0
    %6276 = vmatpush1.msra.mxu0 0.0
    %6277 = vmatprep.mubr.f32.mxu0 0.0
    %6278 = vmatmul.mubr.f32.gmra.mrb[0].mxu0 %v3968
    %v6279 = vpop.f32.mrb[0].mxu0
    %v6280 = vadd.f32 0.0, %v6279
    %v6281 = vpop.f32.mrb[0].mxu0
    %6282 = vmatprep.mubr.f32.mxu0 0.0
    %6283 = vmatmul.mubr.f32.gmra.mrb[0].mxu0 %v3971
    %v6284 = vpop.f32.mrb[0].mxu0
    %v6285 = vadd.f32 0.0, %v6284
    %v6286 = vpop.f32.mrb[0].mxu0
    %6287 = vdwg.mxu0
    %6288 = vmatprep.subr.mxu0 0.0
    %6289 = vmatpush1.msra.mxu0 %v6059
    %6290 = vmatprep.subr.mxu0 0.0
    %6291 = vmatpush1.msra.mxu0 %v6060
    %6292 = vmatprep.subr.mxu0 0.0
    %6293 = vmatpush1.msra.mxu0 %v6061
    %6294 = vmatprep.subr.mxu0 0.0
    %6295 = vmatpush1.msra.mxu0 %v6062
    %6296 = vmatprep.subr.mxu0 0.0
    %6297 = vmatpush1.msra.mxu0 0.0
    %6298 = vmatprep.subr.mxu0 0.0
    %6299 = vmatpush1.msra.mxu0 0.0
    %6300 = vmatprep.subr.mxu0 0.0
    %6301 = vmatpush1.msra.mxu0 0.0
    %6302 = vmatprep.subr.mxu0 0.0
    %6303 = vmatpush1.msra.mxu0 0.0
    %6304 = vmatprep.subr.mxu0 0.0
    %6305 = vmatpush1.msra.mxu0 0.0
    %6306 = vmatprep.subr.mxu0 0.0
    %6307 = vmatpush1.msra.mxu0 0.0
    %6308 = vmatprep.subr.mxu0 0.0
    %6309 = vmatpush1.msra.mxu0 0.0
    %6310 = vmatprep.subr.mxu0 0.0
    %6311 = vmatpush1.msra.mxu0 0.0
    %6312 = vmatprep.subr.mxu0 0.0
    %6313 = vmatpush1.msra.mxu0 0.0
    %6314 = vmatprep.subr.mxu0 0.0
    %6315 = vmatpush1.msra.mxu0 0.0
    %6316 = vmatprep.subr.mxu0 0.0
    %6317 = vmatpush1.msra.mxu0 0.0
    %6318 = vmatprep.subr.mxu0 0.0
    %6319 = vmatpush1.msra.mxu0 0.0
    %6320 = vmatprep.subr.mxu0 0.0
    %6321 = vmatpush1.msra.mxu0 0.0
    %6322 = vmatprep.subr.mxu0 0.0
    %6323 = vmatpush1.msra.mxu0 0.0
    %6324 = vmatprep.subr.mxu0 0.0
    %6325 = vmatpush1.msra.mxu0 0.0
    %6326 = vmatprep.subr.mxu0 0.0
    %6327 = vmatpush1.msra.mxu0 0.0
    %6328 = vmatprep.subr.mxu0 0.0
    %6329 = vmatpush1.msra.mxu0 0.0
    %6330 = vmatprep.subr.mxu0 0.0
    %6331 = vmatpush1.msra.mxu0 0.0
    %6332 = vmatprep.subr.mxu0 0.0
    %6333 = vmatpush1.msra.mxu0 0.0
    %6334 = vmatprep.subr.mxu0 0.0
    %6335 = vmatpush1.msra.mxu0 0.0
    %6336 = vmatprep.subr.mxu0 0.0
    %6337 = vmatpush1.msra.mxu0 0.0
    %6338 = vmatprep.subr.mxu0 0.0
    %6339 = vmatpush1.msra.mxu0 0.0
    %6340 = vmatprep.subr.mxu0 0.0
    %6341 = vmatpush1.msra.mxu0 0.0
    %6342 = vmatprep.subr.mxu0 0.0
    %6343 = vmatpush1.msra.mxu0 0.0
    %6344 = vmatprep.subr.mxu0 0.0
    %6345 = vmatpush1.msra.mxu0 0.0
    %6346 = vmatprep.subr.mxu0 0.0
    %6347 = vmatpush1.msra.mxu0 0.0
    %6348 = vmatprep.subr.mxu0 0.0
    %6349 = vmatpush1.msra.mxu0 0.0
    %6350 = vmatprep.subr.mxu0 0.0
    %6351 = vmatpush1.msra.mxu0 0.0
    %6352 = vmatprep.mubr.f32.mxu0 0.0
    %6353 = vmatmul.mubr.f32.gmra.mrb[0].mxu0 %v3968
    %v6354 = vpop.f32.mrb[0].mxu0
    %v6355 = vadd.f32 0.0, %v6354
    %v6356 = vpop.f32.mrb[0].mxu0
    %6357 = vmatprep.mubr.f32.mxu0 0.0
    %6358 = vmatmul.mubr.f32.gmra.mrb[0].mxu0 %v3971
    %v6359 = vpop.f32.mrb[0].mxu0
    %v6360 = vadd.f32 0.0, %v6359
    %v6361 = vpop.f32.mrb[0].mxu0
    %6362 = vdwg.mxu0
    %s6363 = scalar_lea.vmem %s5, 1408
    %v6364 = vld [vmem:[%s6363] sm:$0xff]
    %v6365 = vld [vmem:[%s6363 + $0x8] sm:$0xff]
    %v6366 = vld [vmem:[%s6363 + $0x10] sm:$0xff]
    %v6367 = vld [vmem:[%s6363 + $0x18] sm:$0xff]
    %v6368 = vld [vmem:[%s6363 + $0x20] sm:$0xff]
    %v6369 = vld [vmem:[%s6363 + $0x28] sm:$0xff]
    %v6370 = vld [vmem:[%s6363 + $0x30] sm:$0xff]
    %v6371 = vld [vmem:[%s6363 + $0x38] sm:$0xff]
    %v6372 = vld [vmem:[%s6363 + $0x40] sm:$0xff]
    %v6373 = vld [vmem:[%s6363 + $0x48] sm:$0xff]
    %v6374 = vld [vmem:[%s6363 + $0x50] sm:$0xff]
    %v6375 = vld [vmem:[%s6363 + $0x58] sm:$0xff]
    %v6376 = vld [vmem:[%s6363 + $0x60] sm:$0xff]
    %v6377 = vld [vmem:[%s6363 + $0x68] sm:$0xff]
    %v6378 = vld [vmem:[%s6363 + $0x70] sm:$0xff]
    %v6379 = vld [vmem:[%s6363 + $0x78] sm:$0xff]
    %6380 = vmatprep.subr.mxu0 0.0
    %6381 = vmatpush1.msra.mxu0 %v6364
    %6382 = vmatprep.subr.mxu0 0.0
    %6383 = vmatpush1.msra.mxu0 %v6365
    %6384 = vmatprep.subr.mxu0 0.0
    %6385 = vmatpush1.msra.mxu0 %v6366
    %6386 = vmatprep.subr.mxu0 0.0
    %6387 = vmatpush1.msra.mxu0 %v6367
    %6388 = vmatprep.subr.mxu0 0.0
    %6389 = vmatpush1.msra.mxu0 0.0
    %6390 = vmatprep.subr.mxu0 0.0
    %6391 = vmatpush1.msra.mxu0 0.0
    %6392 = vmatprep.subr.mxu0 0.0
    %6393 = vmatpush1.msra.mxu0 0.0
    %6394 = vmatprep.subr.mxu0 0.0
    %6395 = vmatpush1.msra.mxu0 0.0
    %6396 = vmatprep.subr.mxu0 0.0
    %6397 = vmatpush1.msra.mxu0 0.0
    %6398 = vmatprep.subr.mxu0 0.0
    %6399 = vmatpush1.msra.mxu0 0.0
    %6400 = vmatprep.subr.mxu0 0.0
    %6401 = vmatpush1.msra.mxu0 0.0
    %6402 = vmatprep.subr.mxu0 0.0
    %6403 = vmatpush1.msra.mxu0 0.0
    %6404 = vmatprep.subr.mxu0 0.0
    %6405 = vmatpush1.msra.mxu0 0.0
    %6406 = vmatprep.subr.mxu0 0.0
    %6407 = vmatpush1.msra.mxu0 0.0
    %6408 = vmatprep.subr.mxu0 0.0
    %6409 = vmatpush1.msra.mxu0 0.0
    %6410 = vmatprep.subr.mxu0 0.0
    %6411 = vmatpush1.msra.mxu0 0.0
    %6412 = vmatprep.subr.mxu0 0.0
    %6413 = vmatpush1.msra.mxu0 0.0
    %6414 = vmatprep.subr.mxu0 0.0
    %6415 = vmatpush1.msra.mxu0 0.0
    %6416 = vmatprep.subr.mxu0 0.0
    %6417 = vmatpush1.msra.mxu0 0.0
    %6418 = vmatprep.subr.mxu0 0.0
    %6419 = vmatpush1.msra.mxu0 0.0
    %6420 = vmatprep.subr.mxu0 0.0
    %6421 = vmatpush1.msra.mxu0 0.0
    %6422 = vmatprep.subr.mxu0 0.0
    %6423 = vmatpush1.msra.mxu0 0.0
    %6424 = vmatprep.subr.mxu0 0.0
    %6425 = vmatpush1.msra.mxu0 0.0
    %6426 = vmatprep.subr.mxu0 0.0
    %6427 = vmatpush1.msra.mxu0 0.0
    %6428 = vmatprep.subr.mxu0 0.0
    %6429 = vmatpush1.msra.mxu0 0.0
    %6430 = vmatprep.subr.mxu0 0.0
    %6431 = vmatpush1.msra.mxu0 0.0
    %6432 = vmatprep.subr.mxu0 0.0
    %6433 = vmatpush1.msra.mxu0 0.0
    %6434 = vmatprep.subr.mxu0 0.0
    %6435 = vmatpush1.msra.mxu0 0.0
    %6436 = vmatprep.subr.mxu0 0.0
    %6437 = vmatpush1.msra.mxu0 0.0
    %6438 = vmatprep.subr.mxu0 0.0
    %6439 = vmatpush1.msra.mxu0 0.0
    %6440 = vmatprep.subr.mxu0 0.0
    %6441 = vmatpush1.msra.mxu0 0.0
    %6442 = vmatprep.subr.mxu0 0.0
    %6443 = vmatpush1.msra.mxu0 0.0
    %6444 = vmatprep.mubr.f32.mxu0 0.0
    %6445 = vmatmul.mubr.f32.gmra.mrb[0].mxu0 %v1952
    %v6446 = vpop.f32.mrb[0].mxu0
    %v6447 = vadd.f32 0.0, %v6446
    %v6448 = vpop.f32.mrb[0].mxu0
    %6449 = vmatprep.mubr.f32.mxu0 0.0
    %6450 = vmatmul.mubr.f32.gmra.mrb[0].mxu0 %v1955
    %v6451 = vpop.f32.mrb[0].mxu0
    %v6452 = vadd.f32 0.0, %v6451
    %v6453 = vpop.f32.mrb[0].mxu0
    %6454 = vdwg.mxu0
    %6455 = vmatprep.subr.mxu0 0.0
    %6456 = vmatpush1.msra.mxu0 %v6368
    %6457 = vmatprep.subr.mxu0 0.0
    %6458 = vmatpush1.msra.mxu0 %v6369
    %6459 = vmatprep.subr.mxu0 0.0
    %6460 = vmatpush1.msra.mxu0 %v6370
    %6461 = vmatprep.subr.mxu0 0.0
    %6462 = vmatpush1.msra.mxu0 %v6371
    %6463 = vmatprep.subr.mxu0 0.0
    %6464 = vmatpush1.msra.mxu0 0.0
    %6465 = vmatprep.subr.mxu0 0.0
    %6466 = vmatpush1.msra.mxu0 0.0
    %6467 = vmatprep.subr.mxu0 0.0
    %6468 = vmatpush1.msra.mxu0 0.0
    %6469 = vmatprep.subr.mxu0 0.0
    %6470 = vmatpush1.msra.mxu0 0.0
    %6471 = vmatprep.subr.mxu0 0.0
    %6472 = vmatpush1.msra.mxu0 0.0
    %6473 = vmatprep.subr.mxu0 0.0
    %6474 = vmatpush1.msra.mxu0 0.0
    %6475 = vmatprep.subr.mxu0 0.0
    %6476 = vmatpush1.msra.mxu0 0.0
    %6477 = vmatprep.subr.mxu0 0.0
    %6478 = vmatpush1.msra.mxu0 0.0
    %6479 = vmatprep.subr.mxu0 0.0
    %6480 = vmatpush1.msra.mxu0 0.0
    %6481 = vmatprep.subr.mxu0 0.0
    %6482 = vmatpush1.msra.mxu0 0.0
    %6483 = vmatprep.subr.mxu0 0.0
    %6484 = vmatpush1.msra.mxu0 0.0
    %6485 = vmatprep.subr.mxu0 0.0
    %6486 = vmatpush1.msra.mxu0 0.0
    %6487 = vmatprep.subr.mxu0 0.0
    %6488 = vmatpush1.msra.mxu0 0.0
    %6489 = vmatprep.subr.mxu0 0.0
    %6490 = vmatpush1.msra.mxu0 0.0
    %6491 = vmatprep.subr.mxu0 0.0
    %6492 = vmatpush1.msra.mxu0 0.0
    %6493 = vmatprep.subr.mxu0 0.0
    %6494 = vmatpush1.msra.mxu0 0.0
    %6495 = vmatprep.subr.mxu0 0.0
    %6496 = vmatpush1.msra.mxu0 0.0
    %6497 = vmatprep.subr.mxu0 0.0
    %6498 = vmatpush1.msra.mxu0 0.0
    %6499 = vmatprep.subr.mxu0 0.0
    %6500 = vmatpush1.msra.mxu0 0.0
    %6501 = vmatprep.subr.mxu0 0.0
    %6502 = vmatpush1.msra.mxu0 0.0
    %6503 = vmatprep.subr.mxu0 0.0
    %6504 = vmatpush1.msra.mxu0 0.0
    %6505 = vmatprep.subr.mxu0 0.0
    %6506 = vmatpush1.msra.mxu0 0.0
    %6507 = vmatprep.subr.mxu0 0.0
    %6508 = vmatpush1.msra.mxu0 0.0
    %6509 = vmatprep.subr.mxu0 0.0
    %6510 = vmatpush1.msra.mxu0 0.0
    %6511 = vmatprep.subr.mxu0 0.0
    %6512 = vmatpush1.msra.mxu0 0.0
    %6513 = vmatprep.subr.mxu0 0.0
    %6514 = vmatpush1.msra.mxu0 0.0
    %6515 = vmatprep.subr.mxu0 0.0
    %6516 = vmatpush1.msra.mxu0 0.0
    %6517 = vmatprep.subr.mxu0 0.0
    %6518 = vmatpush1.msra.mxu0 0.0
    %6519 = vmatprep.mubr.f32.mxu0 0.0
    %6520 = vmatmul.mubr.f32.gmra.mrb[0].mxu0 %v1952
    %v6521 = vpop.f32.mrb[0].mxu0
    %v6522 = vadd.f32 0.0, %v6521
    %v6523 = vpop.f32.mrb[0].mxu0
    %6524 = vmatprep.mubr.f32.mxu0 0.0
    %6525 = vmatmul.mubr.f32.gmra.mrb[0].mxu0 %v1955
    %v6526 = vpop.f32.mrb[0].mxu0
    %v6527 = vadd.f32 0.0, %v6526
    %v6528 = vpop.f32.mrb[0].mxu0
    %6529 = vdwg.mxu0
    %6530 = vmatprep.subr.mxu0 0.0
    %6531 = vmatpush1.msra.mxu0 %v6372
    %6532 = vmatprep.subr.mxu0 0.0
    %6533 = vmatpush1.msra.mxu0 %v6373
    %6534 = vmatprep.subr.mxu0 0.0
    %6535 = vmatpush1.msra.mxu0 %v6374
    %6536 = vmatprep.subr.mxu0 0.0
    %6537 = vmatpush1.msra.mxu0 %v6375
    %6538 = vmatprep.subr.mxu0 0.0
    %6539 = vmatpush1.msra.mxu0 0.0
    %6540 = vmatprep.subr.mxu0 0.0
    %6541 = vmatpush1.msra.mxu0 0.0
    %6542 = vmatprep.subr.mxu0 0.0
    %6543 = vmatpush1.msra.mxu0 0.0
    %6544 = vmatprep.subr.mxu0 0.0
    %6545 = vmatpush1.msra.mxu0 0.0
    %6546 = vmatprep.subr.mxu0 0.0
    %6547 = vmatpush1.msra.mxu0 0.0
    %6548 = vmatprep.subr.mxu0 0.0
    %6549 = vmatpush1.msra.mxu0 0.0
    %6550 = vmatprep.subr.mxu0 0.0
    %6551 = vmatpush1.msra.mxu0 0.0
    %6552 = vmatprep.subr.mxu0 0.0
    %6553 = vmatpush1.msra.mxu0 0.0
    %6554 = vmatprep.subr.mxu0 0.0
    %6555 = vmatpush1.msra.mxu0 0.0
    %6556 = vmatprep.subr.mxu0 0.0
    %6557 = vmatpush1.msra.mxu0 0.0
    %6558 = vmatprep.subr.mxu0 0.0
    %6559 = vmatpush1.msra.mxu0 0.0
    %6560 = vmatprep.subr.mxu0 0.0
    %6561 = vmatpush1.msra.mxu0 0.0
    %6562 = vmatprep.subr.mxu0 0.0
    %6563 = vmatpush1.msra.mxu0 0.0
    %6564 = vmatprep.subr.mxu0 0.0
    %6565 = vmatpush1.msra.mxu0 0.0
    %6566 = vmatprep.subr.mxu0 0.0
    %6567 = vmatpush1.msra.mxu0 0.0
    %6568 = vmatprep.subr.mxu0 0.0
    %6569 = vmatpush1.msra.mxu0 0.0
    %6570 = vmatprep.subr.mxu0 0.0
    %6571 = vmatpush1.msra.mxu0 0.0
    %6572 = vmatprep.subr.mxu0 0.0
    %6573 = vmatpush1.msra.mxu0 0.0
    %6574 = vmatprep.subr.mxu0 0.0
    %6575 = vmatpush1.msra.mxu0 0.0
    %6576 = vmatprep.subr.mxu0 0.0
    %6577 = vmatpush1.msra.mxu0 0.0
    %6578 = vmatprep.subr.mxu0 0.0
    %6579 = vmatpush1.msra.mxu0 0.0
    %6580 = vmatprep.subr.mxu0 0.0
    %6581 = vmatpush1.msra.mxu0 0.0
    %6582 = vmatprep.subr.mxu0 0.0
    %6583 = vmatpush1.msra.mxu0 0.0
    %6584 = vmatprep.subr.mxu0 0.0
    %6585 = vmatpush1.msra.mxu0 0.0
    %6586 = vmatprep.subr.mxu0 0.0
    %6587 = vmatpush1.msra.mxu0 0.0
    %6588 = vmatprep.subr.mxu0 0.0
    %6589 = vmatpush1.msra.mxu0 0.0
    %6590 = vmatprep.subr.mxu0 0.0
    %6591 = vmatpush1.msra.mxu0 0.0
    %6592 = vmatprep.subr.mxu0 0.0
    %6593 = vmatpush1.msra.mxu0 0.0
    %6594 = vmatprep.mubr.f32.mxu0 0.0
    %6595 = vmatmul.mubr.f32.gmra.mrb[0].mxu0 %v1952
    %v6596 = vpop.f32.mrb[0].mxu0
    %v6597 = vadd.f32 0.0, %v6596
    %v6598 = vpop.f32.mrb[0].mxu0
    %6599 = vmatprep.mubr.f32.mxu0 0.0
    %6600 = vmatmul.mubr.f32.gmra.mrb[0].mxu0 %v1955
    %v6601 = vpop.f32.mrb[0].mxu0
    %v6602 = vadd.f32 0.0, %v6601
    %v6603 = vpop.f32.mrb[0].mxu0
    %6604 = vdwg.mxu0
    %6605 = vmatprep.subr.mxu0 0.0
    %6606 = vmatpush1.msra.mxu0 %v6376
    %6607 = vmatprep.subr.mxu0 0.0
    %6608 = vmatpush1.msra.mxu0 %v6377
    %6609 = vmatprep.subr.mxu0 0.0
    %6610 = vmatpush1.msra.mxu0 %v6378
    %6611 = vmatprep.subr.mxu0 0.0
    %6612 = vmatpush1.msra.mxu0 %v6379
    %6613 = vmatprep.subr.mxu0 0.0
    %6614 = vmatpush1.msra.mxu0 0.0
    %6615 = vmatprep.subr.mxu0 0.0
    %6616 = vmatpush1.msra.mxu0 0.0
    %6617 = vmatprep.subr.mxu0 0.0
    %6618 = vmatpush1.msra.mxu0 0.0
    %6619 = vmatprep.subr.mxu0 0.0
    %6620 = vmatpush1.msra.mxu0 0.0
    %6621 = vmatprep.subr.mxu0 0.0
    %6622 = vmatpush1.msra.mxu0 0.0
    %6623 = vmatprep.subr.mxu0 0.0
    %6624 = vmatpush1.msra.mxu0 0.0
    %6625 = vmatprep.subr.mxu0 0.0
    %6626 = vmatpush1.msra.mxu0 0.0
    %6627 = vmatprep.subr.mxu0 0.0
    %6628 = vmatpush1.msra.mxu0 0.0
    %6629 = vmatprep.subr.mxu0 0.0
    %6630 = vmatpush1.msra.mxu0 0.0
    %6631 = vmatprep.subr.mxu0 0.0
    %6632 = vmatpush1.msra.mxu0 0.0
    %6633 = vmatprep.subr.mxu0 0.0
    %6634 = vmatpush1.msra.mxu0 0.0
    %6635 = vmatprep.subr.mxu0 0.0
    %6636 = vmatpush1.msra.mxu0 0.0
    %6637 = vmatprep.subr.mxu0 0.0
    %6638 = vmatpush1.msra.mxu0 0.0
    %6639 = vmatprep.subr.mxu0 0.0
    %6640 = vmatpush1.msra.mxu0 0.0
    %6641 = vmatprep.subr.mxu0 0.0
    %6642 = vmatpush1.msra.mxu0 0.0
    %6643 = vmatprep.subr.mxu0 0.0
    %6644 = vmatpush1.msra.mxu0 0.0
    %6645 = vmatprep.subr.mxu0 0.0
    %6646 = vmatpush1.msra.mxu0 0.0
    %6647 = vmatprep.subr.mxu0 0.0
    %6648 = vmatpush1.msra.mxu0 0.0
    %6649 = vmatprep.subr.mxu0 0.0
    %6650 = vmatpush1.msra.mxu0 0.0
    %6651 = vmatprep.subr.mxu0 0.0
    %6652 = vmatpush1.msra.mxu0 0.0
    %6653 = vmatprep.subr.mxu0 0.0
    %6654 = vmatpush1.msra.mxu0 0.0
    %6655 = vmatprep.subr.mxu0 0.0
    %6656 = vmatpush1.msra.mxu0 0.0
    %6657 = vmatprep.subr.mxu0 0.0
    %6658 = vmatpush1.msra.mxu0 0.0
    %6659 = vmatprep.subr.mxu0 0.0
    %6660 = vmatpush1.msra.mxu0 0.0
    %6661 = vmatprep.subr.mxu0 0.0
    %6662 = vmatpush1.msra.mxu0 0.0
    %6663 = vmatprep.subr.mxu0 0.0
    %6664 = vmatpush1.msra.mxu0 0.0
    %6665 = vmatprep.subr.mxu0 0.0
    %6666 = vmatpush1.msra.mxu0 0.0
    %6667 = vmatprep.subr.mxu0 0.0
    %6668 = vmatpush1.msra.mxu0 0.0
    %6669 = vmatprep.mubr.f32.mxu0 0.0
    %6670 = vmatmul.mubr.f32.gmra.mrb[0].mxu0 %v1952
    %v6671 = vpop.f32.mrb[0].mxu0
    %v6672 = vadd.f32 0.0, %v6671
    %v6673 = vpop.f32.mrb[0].mxu0
    %6674 = vmatprep.mubr.f32.mxu0 0.0
    %6675 = vmatmul.mubr.f32.gmra.mrb[0].mxu0 %v1955
    %v6676 = vpop.f32.mrb[0].mxu0
    %v6677 = vadd.f32 0.0, %v6676
    %v6678 = vpop.f32.mrb[0].mxu0
    %6679 = vdwg.mxu0
    %s6680 = scalar_lea.vmem %s6, 576
    %v6681 = vld [vmem:[%s6680] sm:$0xff]
    %v6682 = vld [vmem:[%s6680 + $0x8] sm:$0xff]
    %v6683 = vld [vmem:[%s6680 + $0x10] sm:$0xff]
    %v6684 = vld [vmem:[%s6680 + $0x18] sm:$0xff]
    %v6685 = vld [vmem:[%s6680 + $0x20] sm:$0xff]
    %v6686 = vld [vmem:[%s6680 + $0x28] sm:$0xff]
    %v6687 = vld [vmem:[%s6680 + $0x30] sm:$0xff]
    %v6688 = vld [vmem:[%s6680 + $0x38] sm:$0xff]
    %v6689 = vadd.f32 %v5813, %v6681
    %v6690 = vadd.f32 %v5818, %v6682
    %v6691 = vadd.f32 %v5888, %v6683
    %v6692 = vadd.f32 %v5893, %v6684
    %v6693 = vadd.f32 %v5963, %v6685
    %v6694 = vadd.f32 %v5968, %v6686
    %v6695 = vadd.f32 %v6038, %v6687
    %v6696 = vadd.f32 %v6043, %v6688
    %s6697 = scalar_lea.vmem %s6, 640
    %v6698 = vld [vmem:[%s6697] sm:$0xff]
    %v6699 = vld [vmem:[%s6697 + $0x8] sm:$0xff]
    %v6700 = vld [vmem:[%s6697 + $0x10] sm:$0xff]
    %v6701 = vld [vmem:[%s6697 + $0x18] sm:$0xff]
    %v6702 = vld [vmem:[%s6697 + $0x20] sm:$0xff]
    %v6703 = vld [vmem:[%s6697 + $0x28] sm:$0xff]
    %v6704 = vld [vmem:[%s6697 + $0x30] sm:$0xff]
    %v6705 = vld [vmem:[%s6697 + $0x38] sm:$0xff]
    %v6706 = vadd.f32 %v6130, %v6698
    %v6707 = vadd.f32 %v6135, %v6699
    %v6708 = vadd.f32 %v6205, %v6700
    %v6709 = vadd.f32 %v6210, %v6701
    %v6710 = vadd.f32 %v6280, %v6702
    %v6711 = vadd.f32 %v6285, %v6703
    %v6712 = vadd.f32 %v6355, %v6704
    %v6713 = vadd.f32 %v6360, %v6705
    %s6714 = scalar_lea.vmem %s6, 704
    %v6715 = vld [vmem:[%s6714] sm:$0xff]
    %v6716 = vld [vmem:[%s6714 + $0x8] sm:$0xff]
    %v6717 = vld [vmem:[%s6714 + $0x10] sm:$0xff]
    %v6718 = vld [vmem:[%s6714 + $0x18] sm:$0xff]
    %v6719 = vld [vmem:[%s6714 + $0x20] sm:$0xff]
    %v6720 = vld [vmem:[%s6714 + $0x28] sm:$0xff]
    %v6721 = vld [vmem:[%s6714 + $0x30] sm:$0xff]
    %v6722 = vld [vmem:[%s6714 + $0x38] sm:$0xff]
    %v6723 = vadd.f32 %v6447, %v6715
    %v6724 = vadd.f32 %v6452, %v6716
    %v6725 = vadd.f32 %v6522, %v6717
    %v6726 = vadd.f32 %v6527, %v6718
    %v6727 = vadd.f32 %v6597, %v6719
    %v6728 = vadd.f32 %v6602, %v6720
    %v6729 = vadd.f32 %v6672, %v6721
    %v6730 = vadd.f32 %v6677, %v6722
    %v6732 = vsel %vm1162, %v6689, 0
    %v6735 = vsel %vm1162, %v6690, 0
    %v6738 = vsel %vm1162, %v6691, 0
    %v6741 = vsel %vm1162, %v6692, 0
    %v6744 = vsel %vm1162, %v6693, 0
    %v6747 = vsel %vm1162, %v6694, 0
    %v6750 = vsel %vm1162, %v6695, 0
    %v6753 = vsel %vm1162, %v6696, 0
    %v6756 = vsel %vm1162, %v6706, 0
    %v6759 = vsel %vm1162, %v6707, 0
    %v6762 = vsel %vm1162, %v6708, 0
    %v6765 = vsel %vm1162, %v6709, 0
    %v6768 = vsel %vm1162, %v6710, 0
    %v6771 = vsel %vm1162, %v6711, 0
    %v6774 = vsel %vm1162, %v6712, 0
    %v6777 = vsel %vm1162, %v6713, 0
    %6779 = vmatprep.subr.mxu0 0.0
    %6780 = vmatpush1.xpose.msra.mxu0 %v6756
    %6781 = vmatprep.subr.mxu0 0.0
    %6782 = vmatpush1.xpose.msra.mxu0 %v6759
    %6783 = vmatprep.subr.mxu0 0.0
    %6784 = vmatpush1.xpose.msra.mxu0 %v6762
    %6785 = vmatprep.subr.mxu0 0.0
    %6786 = vmatpush1.xpose.msra.mxu0 %v6765
    %6787 = vmatprep.subr.mxu0 0.0
    %6788 = vmatpush1.xpose.msra.mxu0 %v6768
    %6789 = vmatprep.subr.mxu0 0.0
    %6790 = vmatpush1.xpose.msra.mxu0 %v6771
    %6791 = vmatprep.subr.mxu0 0.0
    %6792 = vmatpush1.xpose.msra.mxu0 %v6774
    %6793 = vmatprep.subr.mxu0 0.0
    %6794 = vmatpush1.xpose.msra.mxu0 %v6777
    %6795 = vmatprep.subr.mxu0 0.0
    %6796 = vmatpush1.xpose.msra.mxu0 0.0
    %6797 = vmatprep.subr.mxu0 0.0
    %6798 = vmatpush1.xpose.msra.mxu0 0.0
    %6799 = vmatprep.subr.mxu0 0.0
    %6800 = vmatpush1.xpose.msra.mxu0 0.0
    %6801 = vmatprep.subr.mxu0 0.0
    %6802 = vmatpush1.xpose.msra.mxu0 0.0
    %6803 = vmatprep.subr.mxu0 0.0
    %6804 = vmatpush1.xpose.msra.mxu0 0.0
    %6805 = vmatprep.subr.mxu0 0.0
    %6806 = vmatpush1.xpose.msra.mxu0 0.0
    %6807 = vmatprep.subr.mxu0 0.0
    %6808 = vmatpush1.xpose.msra.mxu0 0.0
    %6809 = vmatprep.subr.mxu0 0.0
    %6810 = vmatpush1.xpose.msra.mxu0 0.0
    %6811 = vmatprep.subr.mxu0 0.0
    %6812 = vmatpush1.xpose.msra.mxu0 0.0
    %6813 = vmatprep.subr.mxu0 0.0
    %6814 = vmatpush1.xpose.msra.mxu0 0.0
    %6815 = vmatprep.subr.mxu0 0.0
    %6816 = vmatpush1.xpose.msra.mxu0 0.0
    %6817 = vmatprep.subr.mxu0 0.0
    %6818 = vmatpush1.xpose.msra.mxu0 0.0
    %6819 = vmatprep.subr.mxu0 0.0
    %6820 = vmatpush1.xpose.msra.mxu0 0.0
    %6821 = vmatprep.subr.mxu0 0.0
    %6822 = vmatpush1.xpose.msra.mxu0 0.0
    %6823 = vmatprep.subr.mxu0 0.0
    %6824 = vmatpush1.xpose.msra.mxu0 0.0
    %6825 = vmatprep.subr.mxu0 0.0
    %6826 = vmatpush1.xpose.msra.mxu0 0.0
    %6827 = vmatprep.subr.mxu0 0.0
    %6828 = vmatpush1.xpose.msra.mxu0 0.0
    %6829 = vmatprep.subr.mxu0 0.0
    %6830 = vmatpush1.xpose.msra.mxu0 0.0
    %6831 = vmatprep.subr.mxu0 0.0
    %6832 = vmatpush1.xpose.msra.mxu0 0.0
    %6833 = vmatprep.subr.mxu0 0.0
    %6834 = vmatpush1.xpose.msra.mxu0 0.0
    %6835 = vmatprep.subr.mxu0 0.0
    %6836 = vmatpush1.xpose.msra.mxu0 0.0
    %6837 = vmatprep.subr.mxu0 0.0
    %6838 = vmatpush1.xpose.msra.mxu0 0.0
    %6839 = vmatprep.subr.mxu0 0.0
    %6840 = vmatpush1.xpose.msra.mxu0 0.0
    %6841 = vmatprep.subr.mxu0 0.0
    %6842 = vmatpush1.xpose.msra.mxu0 0.0
    %6843 = vmatprep.mubr.f32.mxu0 0.0
    %6844 = vmatmul.mubr.f32.gmra.mrb[0].mxu0 %v6732
    %v6845 = vpop.f32.mrb[0].mxu0
    %v6846 = vadd.f32 %v146, %v6845
    %v6847 = vpop.f32.mrb[0].mxu0
    %6848 = vmatprep.mubr.f32.mxu0 0.0
    %6849 = vmatmul.mubr.f32.gmra.mrb[0].mxu0 %v6735
    %v6850 = vpop.f32.mrb[0].mxu0
    %v6851 = vadd.f32 %v147, %v6850
    %v6852 = vpop.f32.mrb[0].mxu0
    %6853 = vmatprep.mubr.f32.mxu0 0.0
    %6854 = vmatmul.mubr.f32.gmra.mrb[0].mxu0 %v6738
    %v6855 = vpop.f32.mrb[0].mxu0
    %v6856 = vadd.f32 %v148, %v6855
    %v6857 = vpop.f32.mrb[0].mxu0
    %6858 = vmatprep.mubr.f32.mxu0 0.0
    %6859 = vmatmul.mubr.f32.gmra.mrb[0].mxu0 %v6741
    %v6860 = vpop.f32.mrb[0].mxu0
    %v6861 = vadd.f32 %v149, %v6860
    %v6862 = vpop.f32.mrb[0].mxu0
    %6863 = vmatprep.mubr.f32.mxu0 0.0
    %6864 = vmatmul.mubr.f32.gmra.mrb[0].mxu0 %v6744
    %v6865 = vpop.f32.mrb[0].mxu0
    %v6866 = vadd.f32 %v150, %v6865
    %v6867 = vpop.f32.mrb[0].mxu0
    %6868 = vmatprep.mubr.f32.mxu0 0.0
    %6869 = vmatmul.mubr.f32.gmra.mrb[0].mxu0 %v6747
    %v6870 = vpop.f32.mrb[0].mxu0
    %v6871 = vadd.f32 %v151, %v6870
    %v6872 = vpop.f32.mrb[0].mxu0
    %6873 = vmatprep.mubr.f32.mxu0 0.0
    %6874 = vmatmul.mubr.f32.gmra.mrb[0].mxu0 %v6750
    %v6875 = vpop.f32.mrb[0].mxu0
    %v6876 = vadd.f32 %v152, %v6875
    %v6877 = vpop.f32.mrb[0].mxu0
    %6878 = vmatprep.mubr.f32.mxu0 0.0
    %6879 = vmatmul.mubr.f32.gmra.mrb[0].mxu0 %v6753
    %v6880 = vpop.f32.mrb[0].mxu0
    %v6881 = vadd.f32 %v153, %v6880
    %v6882 = vpop.f32.mrb[0].mxu0
    %6883 = vdwg.mxu0
    %v6884 = vsel %vm62, %v6846, -inf
    %6885 = vmax.xlane.f32.xlu0 %v6884
    %v6886 = vpop.xlane.xlu0 %6885
    %v6887 = vsel %vm62, %v6851, -inf
    %6888 = vmax.xlane.f32.xlu0 %v6887
    %v6889 = vpop.xlane.xlu0 %6888
    %v6890 = vsel %vm62, %v6856, -inf
    %6891 = vmax.xlane.f32.xlu0 %v6890
    %v6892 = vpop.xlane.xlu0 %6891
    %v6893 = vsel %vm62, %v6861, -inf
    %6894 = vmax.xlane.f32.xlu0 %v6893
    %v6895 = vpop.xlane.xlu0 %6894
    %v6896 = vsel %vm62, %v6866, -inf
    %6897 = vmax.xlane.f32.xlu0 %v6896
    %v6898 = vpop.xlane.xlu0 %6897
    %v6899 = vsel %vm62, %v6871, -inf
    %6900 = vmax.xlane.f32.xlu0 %v6899
    %v6901 = vpop.xlane.xlu0 %6900
    %v6902 = vsel %vm62, %v6876, -inf
    %6903 = vmax.xlane.f32.xlu0 %v6902
    %v6904 = vpop.xlane.xlu0 %6903
    %v6905 = vsel %vm62, %v6881, -inf
    %6906 = vmax.xlane.f32.xlu0 %v6905
    %v6907 = vpop.xlane.xlu0 %6906
    %v6908 = vsub.f32 %v6846, %v6886
    %v6909 = vsub.f32 %v6851, %v6889
    %v6910 = vsub.f32 %v6856, %v6892
    %v6911 = vsub.f32 %v6861, %v6895
    %v6912 = vsub.f32 %v6866, %v6898
    %v6913 = vsub.f32 %v6871, %v6901
    %v6914 = vsub.f32 %v6876, %v6904
    %v6915 = vsub.f32 %v6881, %v6907
    %v6916 = vmul.f32 %v6908, 1.442695
    %v6917 = vpow.pop %v6916
    %v6918 = vmul.f32 %v6909, 1.442695
    %v6919 = vpow.pop %v6918
    %v6920 = vmul.f32 %v6910, 1.442695
    %v6921 = vpow.pop %v6920
    %v6922 = vmul.f32 %v6911, 1.442695
    %v6923 = vpow.pop %v6922
    %v6924 = vmul.f32 %v6912, 1.442695
    %v6925 = vpow.pop %v6924
    %v6926 = vmul.f32 %v6913, 1.442695
    %v6927 = vpow.pop %v6926
    %v6928 = vmul.f32 %v6914, 1.442695
    %v6929 = vpow.pop %v6928
    %v6930 = vmul.f32 %v6915, 1.442695
    %v6931 = vpow.pop %v6930
    %v6932 = vsel %vm62, %v6917, 0.0
    %6933 = vadd.xlane.f32.xlu0 %v6932
    %v6934 = vpop.xlane.xlu0 %6933
    %v6935 = vsel %vm62, %v6919, 0.0
    %6936 = vadd.xlane.f32.xlu0 %v6935
    %v6937 = vpop.xlane.xlu0 %6936
    %v6938 = vsel %vm62, %v6921, 0.0
    %6939 = vadd.xlane.f32.xlu0 %v6938
    %v6940 = vpop.xlane.xlu0 %6939
    %v6941 = vsel %vm62, %v6923, 0.0
    %6942 = vadd.xlane.f32.xlu0 %v6941
    %v6943 = vpop.xlane.xlu0 %6942
    %v6944 = vsel %vm62, %v6925, 0.0
    %6945 = vadd.xlane.f32.xlu0 %v6944
    %v6946 = vpop.xlane.xlu0 %6945
    %v6947 = vsel %vm62, %v6927, 0.0
    %6948 = vadd.xlane.f32.xlu0 %v6947
    %v6949 = vpop.xlane.xlu0 %6948
    %v6950 = vsel %vm62, %v6929, 0.0
    %6951 = vadd.xlane.f32.xlu0 %v6950
    %v6952 = vpop.xlane.xlu0 %6951
    %v6953 = vsel %vm62, %v6931, 0.0
    %6954 = vadd.xlane.f32.xlu0 %v6953
    %v6955 = vpop.xlane.xlu0 %6954
    %v6956 = vrcp.pop %v6934
    %v6957 = vrcp.pop %v6937
    %v6958 = vrcp.pop %v6940
    %v6959 = vrcp.pop %v6943
    %v6960 = vrcp.pop %v6946
    %v6961 = vrcp.pop %v6949
    %v6962 = vrcp.pop %v6952
    %v6963 = vrcp.pop %v6955
    %v6964 = vmul.f32 %v6917, %v6956
    %v6965 = vmul.f32 %v6919, %v6957
    %v6966 = vmul.f32 %v6921, %v6958
    %v6967 = vmul.f32 %v6923, %v6959
    %v6968 = vmul.f32 %v6925, %v6960
    %v6969 = vmul.f32 %v6927, %v6961
    %v6970 = vmul.f32 %v6929, %v6962
    %v6971 = vmul.f32 %v6931, %v6963
    %v6973 = vsel %vm62, %v6964, 0
    %v6976 = vsel %vm62, %v6965, 0
    %v6979 = vsel %vm62, %v6966, 0
    %v6982 = vsel %vm62, %v6967, 0
    %v6985 = vsel %vm62, %v6968, 0
    %v6988 = vsel %vm62, %v6969, 0
    %v6991 = vsel %vm62, %v6970, 0
    %v6994 = vsel %vm62, %v6971, 0
    %6996 = vmatprep.subr.mxu0 0.0
    %6997 = vmatpush1.msra.mxu0 %v6723
    %6998 = vmatprep.subr.mxu0 0.0
    %6999 = vmatpush1.msra.mxu0 %v6724
    %7000 = vmatprep.subr.mxu0 0.0
    %7001 = vmatpush1.msra.mxu0 %v6725
    %7002 = vmatprep.subr.mxu0 0.0
    %7003 = vmatpush1.msra.mxu0 %v6726
    %7004 = vmatprep.subr.mxu0 0.0
    %7005 = vmatpush1.msra.mxu0 %v6727
    %7006 = vmatprep.subr.mxu0 0.0
    %7007 = vmatpush1.msra.mxu0 %v6728
    %7008 = vmatprep.subr.mxu0 0.0
    %7009 = vmatpush1.msra.mxu0 %v6729
    %7010 = vmatprep.subr.mxu0 0.0
    %7011 = vmatpush1.msra.mxu0 %v6730
    %7012 = vmatprep.subr.mxu0 0.0
    %7013 = vmatpush1.msra.mxu0 0.0
    %7014 = vmatprep.subr.mxu0 0.0
    %7015 = vmatpush1.msra.mxu0 0.0
    %7016 = vmatprep.subr.mxu0 0.0
    %7017 = vmatpush1.msra.mxu0 0.0
    %7018 = vmatprep.subr.mxu0 0.0
    %7019 = vmatpush1.msra.mxu0 0.0
    %7020 = vmatprep.subr.mxu0 0.0
    %7021 = vmatpush1.msra.mxu0 0.0
    %7022 = vmatprep.subr.mxu0 0.0
    %7023 = vmatpush1.msra.mxu0 0.0
    %7024 = vmatprep.subr.mxu0 0.0
    %7025 = vmatpush1.msra.mxu0 0.0
    %7026 = vmatprep.subr.mxu0 0.0
    %7027 = vmatpush1.msra.mxu0 0.0
    %7028 = vmatprep.subr.mxu0 0.0
    %7029 = vmatpush1.msra.mxu0 0.0
    %7030 = vmatprep.subr.mxu0 0.0
    %7031 = vmatpush1.msra.mxu0 0.0
    %7032 = vmatprep.subr.mxu0 0.0
    %7033 = vmatpush1.msra.mxu0 0.0
    %7034 = vmatprep.subr.mxu0 0.0
    %7035 = vmatpush1.msra.mxu0 0.0
    %7036 = vmatprep.subr.mxu0 0.0
    %7037 = vmatpush1.msra.mxu0 0.0
    %7038 = vmatprep.subr.mxu0 0.0
    %7039 = vmatpush1.msra.mxu0 0.0
    %7040 = vmatprep.subr.mxu0 0.0
    %7041 = vmatpush1.msra.mxu0 0.0
    %7042 = vmatprep.subr.mxu0 0.0
    %7043 = vmatpush1.msra.mxu0 0.0
    %7044 = vmatprep.subr.mxu0 0.0
    %7045 = vmatpush1.msra.mxu0 0.0
    %7046 = vmatprep.subr.mxu0 0.0
    %7047 = vmatpush1.msra.mxu0 0.0
    %7048 = vmatprep.subr.mxu0 0.0
    %7049 = vmatpush1.msra.mxu0 0.0
    %7050 = vmatprep.subr.mxu0 0.0
    %7051 = vmatpush1.msra.mxu0 0.0
    %7052 = vmatprep.subr.mxu0 0.0
    %7053 = vmatpush1.msra.mxu0 0.0
    %7054 = vmatprep.subr.mxu0 0.0
    %7055 = vmatpush1.msra.mxu0 0.0
    %7056 = vmatprep.subr.mxu0 0.0
    %7057 = vmatpush1.msra.mxu0 0.0
    %7058 = vmatprep.subr.mxu0 0.0
    %7059 = vmatpush1.msra.mxu0 0.0
    %7060 = vmatprep.mubr.f32.mxu0 0.0
    %7061 = vmatmul.mubr.f32.gmra.mrb[0].mxu0 %v6973
    %v7062 = vpop.f32.mrb[0].mxu0
    %v7063 = vadd.f32 0.0, %v7062
    %v7064 = vpop.f32.mrb[0].mxu0
    %7065 = vmatprep.mubr.f32.mxu0 0.0
    %7066 = vmatmul.mubr.f32.gmra.mrb[0].mxu0 %v6976
    %v7067 = vpop.f32.mrb[0].mxu0
    %v7068 = vadd.f32 0.0, %v7067
    %v7069 = vpop.f32.mrb[0].mxu0
    %7070 = vmatprep.mubr.f32.mxu0 0.0
    %7071 = vmatmul.mubr.f32.gmra.mrb[0].mxu0 %v6979
    %v7072 = vpop.f32.mrb[0].mxu0
    %v7073 = vadd.f32 0.0, %v7072
    %v7074 = vpop.f32.mrb[0].mxu0
    %7075 = vmatprep.mubr.f32.mxu0 0.0
    %7076 = vmatmul.mubr.f32.gmra.mrb[0].mxu0 %v6982
    %v7077 = vpop.f32.mrb[0].mxu0
    %v7078 = vadd.f32 0.0, %v7077
    %v7079 = vpop.f32.mrb[0].mxu0
    %7080 = vmatprep.mubr.f32.mxu0 0.0
    %7081 = vmatmul.mubr.f32.gmra.mrb[0].mxu0 %v6985
    %v7082 = vpop.f32.mrb[0].mxu0
    %v7083 = vadd.f32 0.0, %v7082
    %v7084 = vpop.f32.mrb[0].mxu0
    %7085 = vmatprep.mubr.f32.mxu0 0.0
    %7086 = vmatmul.mubr.f32.gmra.mrb[0].mxu0 %v6988
    %v7087 = vpop.f32.mrb[0].mxu0
    %v7088 = vadd.f32 0.0, %v7087
    %v7089 = vpop.f32.mrb[0].mxu0
    %7090 = vmatprep.mubr.f32.mxu0 0.0
    %7091 = vmatmul.mubr.f32.gmra.mrb[0].mxu0 %v6991
    %v7092 = vpop.f32.mrb[0].mxu0
    %v7093 = vadd.f32 0.0, %v7092
    %v7094 = vpop.f32.mrb[0].mxu0
    %7095 = vmatprep.mubr.f32.mxu0 0.0
    %7096 = vmatmul.mubr.f32.gmra.mrb[0].mxu0 %v6994
    %v7097 = vpop.f32.mrb[0].mxu0
    %v7098 = vadd.f32 0.0, %v7097
    %v7099 = vpop.f32.mrb[0].mxu0
    %7100 = vdwg.mxu0
    %s7101 = scalar_lea.vmem %s7, 96
    %v7102 = vld [vmem:[%s7101] sm:$0xff]
    %v7103 = vld [vmem:[%s7101 + $0x8] sm:$0xff]
    %v7104 = vld [vmem:[%s7101 + $0x10] sm:$0xff]
    %v7105 = vld [vmem:[%s7101 + $0x18] sm:$0xff]
    %v7107 = vsel %vm1162, %v7063, 0
    %v7110 = vsel %vm1162, %v7068, 0
    %7112 = vmatprep.subr.mxu0 0.0
    %7113 = vmatpush1.msra.mxu0 %v7102
    %7114 = vmatprep.subr.mxu0 0.0
    %7115 = vmatpush1.msra.mxu0 0.0
    %7116 = vmatprep.subr.mxu0 0.0
    %7117 = vmatpush1.msra.mxu0 0.0
    %7118 = vmatprep.subr.mxu0 0.0
    %7119 = vmatpush1.msra.mxu0 0.0
    %7120 = vmatprep.subr.mxu0 0.0
    %7121 = vmatpush1.msra.mxu0 0.0
    %7122 = vmatprep.subr.mxu0 0.0
    %7123 = vmatpush1.msra.mxu0 0.0
    %7124 = vmatprep.subr.mxu0 0.0
    %7125 = vmatpush1.msra.mxu0 0.0
    %7126 = vmatprep.subr.mxu0 0.0
    %7127 = vmatpush1.msra.mxu0 0.0
    %7128 = vmatprep.subr.mxu0 0.0
    %7129 = vmatpush1.msra.mxu0 0.0
    %7130 = vmatprep.subr.mxu0 0.0
    %7131 = vmatpush1.msra.mxu0 0.0
    %7132 = vmatprep.subr.mxu0 0.0
    %7133 = vmatpush1.msra.mxu0 0.0
    %7134 = vmatprep.subr.mxu0 0.0
    %7135 = vmatpush1.msra.mxu0 0.0
    %7136 = vmatprep.subr.mxu0 0.0
    %7137 = vmatpush1.msra.mxu0 0.0
    %7138 = vmatprep.subr.mxu0 0.0
    %7139 = vmatpush1.msra.mxu0 0.0
    %7140 = vmatprep.subr.mxu0 0.0
    %7141 = vmatpush1.msra.mxu0 0.0
    %7142 = vmatprep.subr.mxu0 0.0
    %7143 = vmatpush1.msra.mxu0 0.0
    %7144 = vmatprep.subr.mxu0 0.0
    %7145 = vmatpush1.msra.mxu0 0.0
    %7146 = vmatprep.subr.mxu0 0.0
    %7147 = vmatpush1.msra.mxu0 0.0
    %7148 = vmatprep.subr.mxu0 0.0
    %7149 = vmatpush1.msra.mxu0 0.0
    %7150 = vmatprep.subr.mxu0 0.0
    %7151 = vmatpush1.msra.mxu0 0.0
    %7152 = vmatprep.subr.mxu0 0.0
    %7153 = vmatpush1.msra.mxu0 0.0
    %7154 = vmatprep.subr.mxu0 0.0
    %7155 = vmatpush1.msra.mxu0 0.0
    %7156 = vmatprep.subr.mxu0 0.0
    %7157 = vmatpush1.msra.mxu0 0.0
    %7158 = vmatprep.subr.mxu0 0.0
    %7159 = vmatpush1.msra.mxu0 0.0
    %7160 = vmatprep.subr.mxu0 0.0
    %7161 = vmatpush1.msra.mxu0 0.0
    %7162 = vmatprep.subr.mxu0 0.0
    %7163 = vmatpush1.msra.mxu0 0.0
    %7164 = vmatprep.subr.mxu0 0.0
    %7165 = vmatpush1.msra.mxu0 0.0
    %7166 = vmatprep.subr.mxu0 0.0
    %7167 = vmatpush1.msra.mxu0 0.0
    %7168 = vmatprep.subr.mxu0 0.0
    %7169 = vmatpush1.msra.mxu0 0.0
    %7170 = vmatprep.subr.mxu0 0.0
    %7171 = vmatpush1.msra.mxu0 0.0
    %7172 = vmatprep.subr.mxu0 0.0
    %7173 = vmatpush1.msra.mxu0 0.0
    %7174 = vmatprep.subr.mxu0 0.0
    %7175 = vmatpush1.msra.mxu0 0.0
    %7176 = vmatprep.mubr.f32.mxu0 0.0
    %7177 = vmatmul.mubr.f32.gmra.mrb[0].mxu0 %v7107
    %v7178 = vpop.f32.mrb[0].mxu0
    %v7179 = vadd.f32 0.0, %v7178
    %v7180 = vpop.f32.mrb[0].mxu0
    %7181 = vmatprep.mubr.f32.mxu0 0.0
    %7182 = vmatmul.mubr.f32.gmra.mrb[0].mxu0 %v7110
    %v7183 = vpop.f32.mrb[0].mxu0
    %v7184 = vadd.f32 0.0, %v7183
    %v7185 = vpop.f32.mrb[0].mxu0
    %7186 = vdwg.mxu0
    %v7188 = vsel %vm1162, %v7073, 0
    %v7191 = vsel %vm1162, %v7078, 0
    %7193 = vmatprep.subr.mxu0 0.0
    %7194 = vmatpush1.msra.mxu0 %v7103
    %7195 = vmatprep.subr.mxu0 0.0
    %7196 = vmatpush1.msra.mxu0 0.0
    %7197 = vmatprep.subr.mxu0 0.0
    %7198 = vmatpush1.msra.mxu0 0.0
    %7199 = vmatprep.subr.mxu0 0.0
    %7200 = vmatpush1.msra.mxu0 0.0
    %7201 = vmatprep.subr.mxu0 0.0
    %7202 = vmatpush1.msra.mxu0 0.0
    %7203 = vmatprep.subr.mxu0 0.0
    %7204 = vmatpush1.msra.mxu0 0.0
    %7205 = vmatprep.subr.mxu0 0.0
    %7206 = vmatpush1.msra.mxu0 0.0
    %7207 = vmatprep.subr.mxu0 0.0
    %7208 = vmatpush1.msra.mxu0 0.0
    %7209 = vmatprep.subr.mxu0 0.0
    %7210 = vmatpush1.msra.mxu0 0.0
    %7211 = vmatprep.subr.mxu0 0.0
    %7212 = vmatpush1.msra.mxu0 0.0
    %7213 = vmatprep.subr.mxu0 0.0
    %7214 = vmatpush1.msra.mxu0 0.0
    %7215 = vmatprep.subr.mxu0 0.0
    %7216 = vmatpush1.msra.mxu0 0.0
    %7217 = vmatprep.subr.mxu0 0.0
    %7218 = vmatpush1.msra.mxu0 0.0
    %7219 = vmatprep.subr.mxu0 0.0
    %7220 = vmatpush1.msra.mxu0 0.0
    %7221 = vmatprep.subr.mxu0 0.0
    %7222 = vmatpush1.msra.mxu0 0.0
    %7223 = vmatprep.subr.mxu0 0.0
    %7224 = vmatpush1.msra.mxu0 0.0
    %7225 = vmatprep.subr.mxu0 0.0
    %7226 = vmatpush1.msra.mxu0 0.0
    %7227 = vmatprep.subr.mxu0 0.0
    %7228 = vmatpush1.msra.mxu0 0.0
    %7229 = vmatprep.subr.mxu0 0.0
    %7230 = vmatpush1.msra.mxu0 0.0
    %7231 = vmatprep.subr.mxu0 0.0
    %7232 = vmatpush1.msra.mxu0 0.0
    %7233 = vmatprep.subr.mxu0 0.0
    %7234 = vmatpush1.msra.mxu0 0.0
    %7235 = vmatprep.subr.mxu0 0.0
    %7236 = vmatpush1.msra.mxu0 0.0
    %7237 = vmatprep.subr.mxu0 0.0
    %7238 = vmatpush1.msra.mxu0 0.0
    %7239 = vmatprep.subr.mxu0 0.0
    %7240 = vmatpush1.msra.mxu0 0.0
    %7241 = vmatprep.subr.mxu0 0.0
    %7242 = vmatpush1.msra.mxu0 0.0
    %7243 = vmatprep.subr.mxu0 0.0
    %7244 = vmatpush1.msra.mxu0 0.0
    %7245 = vmatprep.subr.mxu0 0.0
    %7246 = vmatpush1.msra.mxu0 0.0
    %7247 = vmatprep.subr.mxu0 0.0
    %7248 = vmatpush1.msra.mxu0 0.0
    %7249 = vmatprep.subr.mxu0 0.0
    %7250 = vmatpush1.msra.mxu0 0.0
    %7251 = vmatprep.subr.mxu0 0.0
    %7252 = vmatpush1.msra.mxu0 0.0
    %7253 = vmatprep.subr.mxu0 0.0
    %7254 = vmatpush1.msra.mxu0 0.0
    %7255 = vmatprep.subr.mxu0 0.0
    %7256 = vmatpush1.msra.mxu0 0.0
    %7257 = vmatprep.mubr.f32.mxu0 0.0
    %7258 = vmatmul.mubr.f32.gmra.mrb[0].mxu0 %v7188
    %v7259 = vpop.f32.mrb[0].mxu0
    %v7260 = vadd.f32 0.0, %v7259
    %v7261 = vpop.f32.mrb[0].mxu0
    %7262 = vmatprep.mubr.f32.mxu0 0.0
    %7263 = vmatmul.mubr.f32.gmra.mrb[0].mxu0 %v7191
    %v7264 = vpop.f32.mrb[0].mxu0
    %v7265 = vadd.f32 0.0, %v7264
    %v7266 = vpop.f32.mrb[0].mxu0
    %7267 = vdwg.mxu0
    %v7269 = vsel %vm1162, %v7083, 0
    %v7272 = vsel %vm1162, %v7088, 0
    %7274 = vmatprep.subr.mxu0 0.0
    %7275 = vmatpush1.msra.mxu0 %v7104
    %7276 = vmatprep.subr.mxu0 0.0
    %7277 = vmatpush1.msra.mxu0 0.0
    %7278 = vmatprep.subr.mxu0 0.0
    %7279 = vmatpush1.msra.mxu0 0.0
    %7280 = vmatprep.subr.mxu0 0.0
    %7281 = vmatpush1.msra.mxu0 0.0
    %7282 = vmatprep.subr.mxu0 0.0
    %7283 = vmatpush1.msra.mxu0 0.0
    %7284 = vmatprep.subr.mxu0 0.0
    %7285 = vmatpush1.msra.mxu0 0.0
    %7286 = vmatprep.subr.mxu0 0.0
    %7287 = vmatpush1.msra.mxu0 0.0
    %7288 = vmatprep.subr.mxu0 0.0
    %7289 = vmatpush1.msra.mxu0 0.0
    %7290 = vmatprep.subr.mxu0 0.0
    %7291 = vmatpush1.msra.mxu0 0.0
    %7292 = vmatprep.subr.mxu0 0.0
    %7293 = vmatpush1.msra.mxu0 0.0
    %7294 = vmatprep.subr.mxu0 0.0
    %7295 = vmatpush1.msra.mxu0 0.0
    %7296 = vmatprep.subr.mxu0 0.0
    %7297 = vmatpush1.msra.mxu0 0.0
    %7298 = vmatprep.subr.mxu0 0.0
    %7299 = vmatpush1.msra.mxu0 0.0
    %7300 = vmatprep.subr.mxu0 0.0
    %7301 = vmatpush1.msra.mxu0 0.0
    %7302 = vmatprep.subr.mxu0 0.0
    %7303 = vmatpush1.msra.mxu0 0.0
    %7304 = vmatprep.subr.mxu0 0.0
    %7305 = vmatpush1.msra.mxu0 0.0
    %7306 = vmatprep.subr.mxu0 0.0
    %7307 = vmatpush1.msra.mxu0 0.0
    %7308 = vmatprep.subr.mxu0 0.0
    %7309 = vmatpush1.msra.mxu0 0.0
    %7310 = vmatprep.subr.mxu0 0.0
    %7311 = vmatpush1.msra.mxu0 0.0
    %7312 = vmatprep.subr.mxu0 0.0
    %7313 = vmatpush1.msra.mxu0 0.0
    %7314 = vmatprep.subr.mxu0 0.0
    %7315 = vmatpush1.msra.mxu0 0.0
    %7316 = vmatprep.subr.mxu0 0.0
    %7317 = vmatpush1.msra.mxu0 0.0
    %7318 = vmatprep.subr.mxu0 0.0
    %7319 = vmatpush1.msra.mxu0 0.0
    %7320 = vmatprep.subr.mxu0 0.0
    %7321 = vmatpush1.msra.mxu0 0.0
    %7322 = vmatprep.subr.mxu0 0.0
    %7323 = vmatpush1.msra.mxu0 0.0
    %7324 = vmatprep.subr.mxu0 0.0
    %7325 = vmatpush1.msra.mxu0 0.0
    %7326 = vmatprep.subr.mxu0 0.0
    %7327 = vmatpush1.msra.mxu0 0.0
    %7328 = vmatprep.subr.mxu0 0.0
    %7329 = vmatpush1.msra.mxu0 0.0
    %7330 = vmatprep.subr.mxu0 0.0
    %7331 = vmatpush1.msra.mxu0 0.0
    %7332 = vmatprep.subr.mxu0 0.0
    %7333 = vmatpush1.msra.mxu0 0.0
    %7334 = vmatprep.subr.mxu0 0.0
    %7335 = vmatpush1.msra.mxu0 0.0
    %7336 = vmatprep.subr.mxu0 0.0
    %7337 = vmatpush1.msra.mxu0 0.0
    %7338 = vmatprep.mubr.f32.mxu0 0.0
    %7339 = vmatmul.mubr.f32.gmra.mrb[0].mxu0 %v7269
    %v7340 = vpop.f32.mrb[0].mxu0
    %v7341 = vadd.f32 0.0, %v7340
    %v7342 = vpop.f32.mrb[0].mxu0
    %7343 = vmatprep.mubr.f32.mxu0 0.0
    %7344 = vmatmul.mubr.f32.gmra.mrb[0].mxu0 %v7272
    %v7345 = vpop.f32.mrb[0].mxu0
    %v7346 = vadd.f32 0.0, %v7345
    %v7347 = vpop.f32.mrb[0].mxu0
    %7348 = vdwg.mxu0
    %v7350 = vsel %vm1162, %v7093, 0
    %v7353 = vsel %vm1162, %v7098, 0
    %7355 = vmatprep.subr.mxu0 0.0
    %7356 = vmatpush1.msra.mxu0 %v7105
    %7357 = vmatprep.subr.mxu0 0.0
    %7358 = vmatpush1.msra.mxu0 0.0
    %7359 = vmatprep.subr.mxu0 0.0
    %7360 = vmatpush1.msra.mxu0 0.0
    %7361 = vmatprep.subr.mxu0 0.0
    %7362 = vmatpush1.msra.mxu0 0.0
    %7363 = vmatprep.subr.mxu0 0.0
    %7364 = vmatpush1.msra.mxu0 0.0
    %7365 = vmatprep.subr.mxu0 0.0
    %7366 = vmatpush1.msra.mxu0 0.0
    %7367 = vmatprep.subr.mxu0 0.0
    %7368 = vmatpush1.msra.mxu0 0.0
    %7369 = vmatprep.subr.mxu0 0.0
    %7370 = vmatpush1.msra.mxu0 0.0
    %7371 = vmatprep.subr.mxu0 0.0
    %7372 = vmatpush1.msra.mxu0 0.0
    %7373 = vmatprep.subr.mxu0 0.0
    %7374 = vmatpush1.msra.mxu0 0.0
    %7375 = vmatprep.subr.mxu0 0.0
    %7376 = vmatpush1.msra.mxu0 0.0
    %7377 = vmatprep.subr.mxu0 0.0
    %7378 = vmatpush1.msra.mxu0 0.0
    %7379 = vmatprep.subr.mxu0 0.0
    %7380 = vmatpush1.msra.mxu0 0.0
    %7381 = vmatprep.subr.mxu0 0.0
    %7382 = vmatpush1.msra.mxu0 0.0
    %7383 = vmatprep.subr.mxu0 0.0
    %7384 = vmatpush1.msra.mxu0 0.0
    %7385 = vmatprep.subr.mxu0 0.0
    %7386 = vmatpush1.msra.mxu0 0.0
    %7387 = vmatprep.subr.mxu0 0.0
    %7388 = vmatpush1.msra.mxu0 0.0
    %7389 = vmatprep.subr.mxu0 0.0
    %7390 = vmatpush1.msra.mxu0 0.0
    %7391 = vmatprep.subr.mxu0 0.0
    %7392 = vmatpush1.msra.mxu0 0.0
    %7393 = vmatprep.subr.mxu0 0.0
    %7394 = vmatpush1.msra.mxu0 0.0
    %7395 = vmatprep.subr.mxu0 0.0
    %7396 = vmatpush1.msra.mxu0 0.0
    %7397 = vmatprep.subr.mxu0 0.0
    %7398 = vmatpush1.msra.mxu0 0.0
    %7399 = vmatprep.subr.mxu0 0.0
    %7400 = vmatpush1.msra.mxu0 0.0
    %7401 = vmatprep.subr.mxu0 0.0
    %7402 = vmatpush1.msra.mxu0 0.0
    %7403 = vmatprep.subr.mxu0 0.0
    %7404 = vmatpush1.msra.mxu0 0.0
    %7405 = vmatprep.subr.mxu0 0.0
    %7406 = vmatpush1.msra.mxu0 0.0
    %7407 = vmatprep.subr.mxu0 0.0
    %7408 = vmatpush1.msra.mxu0 0.0
    %7409 = vmatprep.subr.mxu0 0.0
    %7410 = vmatpush1.msra.mxu0 0.0
    %7411 = vmatprep.subr.mxu0 0.0
    %7412 = vmatpush1.msra.mxu0 0.0
    %7413 = vmatprep.subr.mxu0 0.0
    %7414 = vmatpush1.msra.mxu0 0.0
    %7415 = vmatprep.subr.mxu0 0.0
    %7416 = vmatpush1.msra.mxu0 0.0
    %7417 = vmatprep.subr.mxu0 0.0
    %7418 = vmatpush1.msra.mxu0 0.0
    %7419 = vmatprep.mubr.f32.mxu0 0.0
    %7420 = vmatmul.mubr.f32.gmra.mrb[0].mxu0 %v7350
    %v7421 = vpop.f32.mrb[0].mxu0
    %v7422 = vadd.f32 0.0, %v7421
    %v7423 = vpop.f32.mrb[0].mxu0
    %7424 = vmatprep.mubr.f32.mxu0 0.0
    %7425 = vmatmul.mubr.f32.gmra.mrb[0].mxu0 %v7353
    %v7426 = vpop.f32.mrb[0].mxu0
    %v7427 = vadd.f32 0.0, %v7426
    %v7428 = vpop.f32.mrb[0].mxu0
    %7429 = vdwg.mxu0
    %v7430 = vsel %vm171, %v7179, 0.0
    %v7431 = vsel %vm171, %v7260, 0.0
    %v7432 = vadd.f32 %v7430, %v7431
    %v7433 = vsel %vm171, %v7341, 0.0
    %v7434 = vadd.f32 %v7432, %v7433
    %v7435 = vsel %vm171, %v7422, 0.0
    %v7436 = vadd.f32 %v7434, %v7435
    %v7437 = vsel %vm171, %v7184, 0.0
    %v7438 = vsel %vm171, %v7265, 0.0
    %v7439 = vadd.f32 %v7437, %v7438
    %v7440 = vsel %vm171, %v7346, 0.0
    %v7441 = vadd.f32 %v7439, %v7440
    %v7442 = vsel %vm171, %v7427, 0.0
    %v7443 = vadd.f32 %v7441, %v7442
    %v7445 = vlaneseq
    %v7446 = vshrl.u32 %v7445, 7
    %v7447 = vsub.s32 0, %v7446
    %v7448 = vrot.slane %v5728, %v7447
    %v7450 = vadd.f32 %v7436, %v7448
    %v7451 = vadd.f32 %v7443, %v7448
    %v7452 = vadd.f32 %v5725, %v7450
    %v7453 = vadd.f32 %v5726, %v7451
    %s7454 = scalar_lea.vmem %s9, 14
    %v7455 = vld [vmem:[%s7454] sm:$0x1]
    %s7456 = scalar_lea.vmem %s9, 15
    %v7457 = vld [vmem:[%s7456] sm:$0x1]
    %v7458 = vsel %vm171, %v7452, 0.0
    %7459 = vadd.xlane.f32.xlu0 %v7458
    %v7460 = vpop.xlane.xlu0 %7459
    %v7461 = vsel %vm171, %v7453, 0.0
    %7462 = vadd.xlane.f32.xlu0 %v7461
    %v7463 = vpop.xlane.xlu0 %7462
    %v7464 = vmul.f32 %v7460, %v1895
    %v7465 = vmul.f32 %v7463, %v1895
    %v7466 = vsub.f32 %v7452, %v7464
    %v7467 = vsub.f32 %v7453, %v7465
    %v7468 = vmul.f32 %v7466, %v7466
    %v7469 = vmul.f32 %v7467, %v7467
    %v7470 = vsel %vm171, %v7468, 0.0
    %7471 = vadd.xlane.f32.xlu0 %v7470
    %v7472 = vpop.xlane.xlu0 %7471
    %v7473 = vsel %vm171, %v7469, 0.0
    %7474 = vadd.xlane.f32.xlu0 %v7473
    %v7475 = vpop.xlane.xlu0 %7474
    %v7476 = vmul.f32 %v7472, %v1895
    %v7477 = vmul.f32 %v7475, %v1895
    %v7478 = vadd.f32 %v7476, 1e-05
    %v7479 = vadd.f32 %v7477, 1e-05
    %v7480 = vrsqrt.pop %v7478
    %v7481 = vrsqrt.pop %v7479
    %v7482 = vmul.f32 %v7466, %v7480
    %v7483 = vmul.f32 %v7467, %v7481
    %v7485 = vlaneseq
    %v7486 = vshrl.u32 %v7485, 7
    %v7487 = vsub.s32 0, %v7486
    %v7488 = vrot.slane %v7455, %v7487
    %v7490 = vmul.f32 %v7482, %v7488
    %v7491 = vmul.f32 %v7483, %v7488
    %v7493 = vlaneseq
    %v7494 = vshrl.u32 %v7493, 7
    %v7495 = vsub.s32 0, %v7494
    %v7496 = vrot.slane %v7457, %v7495
    %v7498 = vadd.f32 %v7490, %v7496
    %v7499 = vadd.f32 %v7491, %v7496
    %s7500 = scalar_lea.vmem %s8, 64
    %v7501 = vld [vmem:[%s7500] sm:$0xff]
    %v7502 = vld [vmem:[%s7500 + $0x8] sm:$0xff]
    %v7503 = vld [vmem:[%s7500 + $0x10] sm:$0xff]
    %v7504 = vld [vmem:[%s7500 + $0x18] sm:$0xff]
    %s7505 = scalar_lea.vmem %s9, 16
    %v7506 = vld [vmem:[%s7505] sm:$0x1]
    %v7508 = vlaneseq
    %v7509 = vshrl.u32 %v7508, 7
    %v7510 = vsub.s32 0, %v7509
    %v7511 = vrot.slane %v7506, %v7510
    %v7514 = vsel %vm171, %v7498, 0
    %v7517 = vsel %vm171, %v7499, 0
    %7519 = vmatprep.subr.mxu0 0.0
    %7520 = vmatpush1.msra.mxu0 %v7501
    %7521 = vmatprep.subr.mxu0 0.0
    %7522 = vmatpush1.msra.mxu0 %v7502
    %7523 = vmatprep.subr.mxu0 0.0
    %7524 = vmatpush1.msra.mxu0 %v7503
    %7525 = vmatprep.subr.mxu0 0.0
    %7526 = vmatpush1.msra.mxu0 %v7504
    %7527 = vmatprep.subr.mxu0 0.0
    %7528 = vmatpush1.msra.mxu0 0.0
    %7529 = vmatprep.subr.mxu0 0.0
    %7530 = vmatpush1.msra.mxu0 0.0
    %7531 = vmatprep.subr.mxu0 0.0
    %7532 = vmatpush1.msra.mxu0 0.0
    %7533 = vmatprep.subr.mxu0 0.0
    %7534 = vmatpush1.msra.mxu0 0.0
    %7535 = vmatprep.subr.mxu0 0.0
    %7536 = vmatpush1.msra.mxu0 0.0
    %7537 = vmatprep.subr.mxu0 0.0
    %7538 = vmatpush1.msra.mxu0 0.0
    %7539 = vmatprep.subr.mxu0 0.0
    %7540 = vmatpush1.msra.mxu0 0.0
    %7541 = vmatprep.subr.mxu0 0.0
    %7542 = vmatpush1.msra.mxu0 0.0
    %7543 = vmatprep.subr.mxu0 0.0
    %7544 = vmatpush1.msra.mxu0 0.0
    %7545 = vmatprep.subr.mxu0 0.0
    %7546 = vmatpush1.msra.mxu0 0.0
    %7547 = vmatprep.subr.mxu0 0.0
    %7548 = vmatpush1.msra.mxu0 0.0
    %7549 = vmatprep.subr.mxu0 0.0
    %7550 = vmatpush1.msra.mxu0 0.0
    %7551 = vmatprep.subr.mxu0 0.0
    %7552 = vmatpush1.msra.mxu0 0.0
    %7553 = vmatprep.subr.mxu0 0.0
    %7554 = vmatpush1.msra.mxu0 0.0
    %7555 = vmatprep.subr.mxu0 0.0
    %7556 = vmatpush1.msra.mxu0 0.0
    %7557 = vmatprep.subr.mxu0 0.0
    %7558 = vmatpush1.msra.mxu0 0.0
    %7559 = vmatprep.subr.mxu0 0.0
    %7560 = vmatpush1.msra.mxu0 0.0
    %7561 = vmatprep.subr.mxu0 0.0
    %7562 = vmatpush1.msra.mxu0 0.0
    %7563 = vmatprep.subr.mxu0 0.0
    %7564 = vmatpush1.msra.mxu0 0.0
    %7565 = vmatprep.subr.mxu0 0.0
    %7566 = vmatpush1.msra.mxu0 0.0
    %7567 = vmatprep.subr.mxu0 0.0
    %7568 = vmatpush1.msra.mxu0 0.0
    %7569 = vmatprep.subr.mxu0 0.0
    %7570 = vmatpush1.msra.mxu0 0.0
    %7571 = vmatprep.subr.mxu0 0.0
    %7572 = vmatpush1.msra.mxu0 0.0
    %7573 = vmatprep.subr.mxu0 0.0
    %7574 = vmatpush1.msra.mxu0 0.0
    %7575 = vmatprep.subr.mxu0 0.0
    %7576 = vmatpush1.msra.mxu0 0.0
    %7577 = vmatprep.subr.mxu0 0.0
    %7578 = vmatpush1.msra.mxu0 0.0
    %7579 = vmatprep.subr.mxu0 0.0
    %7580 = vmatpush1.msra.mxu0 0.0
    %7581 = vmatprep.subr.mxu0 0.0
    %7582 = vmatpush1.msra.mxu0 0.0
    %7583 = vmatprep.mubr.f32.mxu0 0.0
    %7584 = vmatmul.mubr.f32.gmra.mrb[0].mxu0 %v7514
    %v7585 = vpop.f32.mrb[0].mxu0
    %v7586 = vadd.f32 %v7511, %v7585
    %v7587 = vpop.f32.mrb[0].mxu0
    %7588 = vmatprep.mubr.f32.mxu0 0.0
    %7589 = vmatmul.mubr.f32.gmra.mrb[0].mxu0 %v7517
    %v7590 = vpop.f32.mrb[0].mxu0
    %v7591 = vadd.f32 %v7511, %v7590
    %v7592 = vpop.f32.mrb[0].mxu0
    %7593 = vdwg.mxu0
    %v7594 = vmax.f32 %v7586, 0.0
    %v7595 = vmax.f32 %v7591, 0.0
    %s7596 = scalar_lea.vmem %s8, 96
    %v7597 = vld [vmem:[%s7596] sm:$0xff]
    %v7598 = vld [vmem:[%s7596 + $0x8] sm:$0xff]
    %v7599 = vld [vmem:[%s7596 + $0x10] sm:$0xff]
    %v7600 = vld [vmem:[%s7596 + $0x18] sm:$0xff]
    %s7601 = scalar_lea.vmem %s9, 17
    %v7602 = vld [vmem:[%s7601] sm:$0x1]
    %v7604 = vlaneseq
    %v7605 = vshrl.u32 %v7604, 7
    %v7606 = vsub.s32 0, %v7605
    %v7607 = vrot.slane %v7602, %v7606
    %v7610 = vsel %vm171, %v7594, 0
    %v7613 = vsel %vm171, %v7595, 0
    %7615 = vmatprep.subr.mxu0 0.0
    %7616 = vmatpush1.msra.mxu0 %v7597
    %7617 = vmatprep.subr.mxu0 0.0
    %7618 = vmatpush1.msra.mxu0 %v7598
    %7619 = vmatprep.subr.mxu0 0.0
    %7620 = vmatpush1.msra.mxu0 %v7599
    %7621 = vmatprep.subr.mxu0 0.0
    %7622 = vmatpush1.msra.mxu0 %v7600
    %7623 = vmatprep.subr.mxu0 0.0
    %7624 = vmatpush1.msra.mxu0 0.0
    %7625 = vmatprep.subr.mxu0 0.0
    %7626 = vmatpush1.msra.mxu0 0.0
    %7627 = vmatprep.subr.mxu0 0.0
    %7628 = vmatpush1.msra.mxu0 0.0
    %7629 = vmatprep.subr.mxu0 0.0
    %7630 = vmatpush1.msra.mxu0 0.0
    %7631 = vmatprep.subr.mxu0 0.0
    %7632 = vmatpush1.msra.mxu0 0.0
    %7633 = vmatprep.subr.mxu0 0.0
    %7634 = vmatpush1.msra.mxu0 0.0
    %7635 = vmatprep.subr.mxu0 0.0
    %7636 = vmatpush1.msra.mxu0 0.0
    %7637 = vmatprep.subr.mxu0 0.0
    %7638 = vmatpush1.msra.mxu0 0.0
    %7639 = vmatprep.subr.mxu0 0.0
    %7640 = vmatpush1.msra.mxu0 0.0
    %7641 = vmatprep.subr.mxu0 0.0
    %7642 = vmatpush1.msra.mxu0 0.0
    %7643 = vmatprep.subr.mxu0 0.0
    %7644 = vmatpush1.msra.mxu0 0.0
    %7645 = vmatprep.subr.mxu0 0.0
    %7646 = vmatpush1.msra.mxu0 0.0
    %7647 = vmatprep.subr.mxu0 0.0
    %7648 = vmatpush1.msra.mxu0 0.0
    %7649 = vmatprep.subr.mxu0 0.0
    %7650 = vmatpush1.msra.mxu0 0.0
    %7651 = vmatprep.subr.mxu0 0.0
    %7652 = vmatpush1.msra.mxu0 0.0
    %7653 = vmatprep.subr.mxu0 0.0
    %7654 = vmatpush1.msra.mxu0 0.0
    %7655 = vmatprep.subr.mxu0 0.0
    %7656 = vmatpush1.msra.mxu0 0.0
    %7657 = vmatprep.subr.mxu0 0.0
    %7658 = vmatpush1.msra.mxu0 0.0
    %7659 = vmatprep.subr.mxu0 0.0
    %7660 = vmatpush1.msra.mxu0 0.0
    %7661 = vmatprep.subr.mxu0 0.0
    %7662 = vmatpush1.msra.mxu0 0.0
    %7663 = vmatprep.subr.mxu0 0.0
    %7664 = vmatpush1.msra.mxu0 0.0
    %7665 = vmatprep.subr.mxu0 0.0
    %7666 = vmatpush1.msra.mxu0 0.0
    %7667 = vmatprep.subr.mxu0 0.0
    %7668 = vmatpush1.msra.mxu0 0.0
    %7669 = vmatprep.subr.mxu0 0.0
    %7670 = vmatpush1.msra.mxu0 0.0
    %7671 = vmatprep.subr.mxu0 0.0
    %7672 = vmatpush1.msra.mxu0 0.0
    %7673 = vmatprep.subr.mxu0 0.0
    %7674 = vmatpush1.msra.mxu0 0.0
    %7675 = vmatprep.subr.mxu0 0.0
    %7676 = vmatpush1.msra.mxu0 0.0
    %7677 = vmatprep.subr.mxu0 0.0
    %7678 = vmatpush1.msra.mxu0 0.0
    %7679 = vmatprep.mubr.f32.mxu0 0.0
    %7680 = vmatmul.mubr.f32.gmra.mrb[0].mxu0 %v7610
    %v7681 = vpop.f32.mrb[0].mxu0
    %v7682 = vadd.f32 %v7607, %v7681
    %v7683 = vpop.f32.mrb[0].mxu0
    %7684 = vmatprep.mubr.f32.mxu0 0.0
    %7685 = vmatmul.mubr.f32.gmra.mrb[0].mxu0 %v7613
    %v7686 = vpop.f32.mrb[0].mxu0
    %v7687 = vadd.f32 %v7607, %v7686
    %v7688 = vpop.f32.mrb[0].mxu0
    %7689 = vdwg.mxu0
    %v7690 = vadd.f32 %v7498, %v7682
    %v7691 = vadd.f32 %v7499, %v7687
    %s7692 = scalar_lea.vmem %s9, 18
    %v7693 = vld [vmem:[%s7692] sm:$0x1]
    %s7694 = scalar_lea.vmem %s9, 19
    %v7695 = vld [vmem:[%s7694] sm:$0x1]
    %v7696 = vsel %vm171, %v7690, 0.0
    %7697 = vadd.xlane.f32.xlu0 %v7696
    %v7698 = vpop.xlane.xlu0 %7697
    %v7699 = vsel %vm171, %v7691, 0.0
    %7700 = vadd.xlane.f32.xlu0 %v7699
    %v7701 = vpop.xlane.xlu0 %7700
    %v7702 = vmul.f32 %v7698, %v1895
    %v7703 = vmul.f32 %v7701, %v1895
    %v7704 = vsub.f32 %v7690, %v7702
    %v7705 = vsub.f32 %v7691, %v7703
    %v7706 = vmul.f32 %v7704, %v7704
    %v7707 = vmul.f32 %v7705, %v7705
    %v7708 = vsel %vm171, %v7706, 0.0
    %7709 = vadd.xlane.f32.xlu0 %v7708
    %v7710 = vpop.xlane.xlu0 %7709
    %v7711 = vsel %vm171, %v7707, 0.0
    %7712 = vadd.xlane.f32.xlu0 %v7711
    %v7713 = vpop.xlane.xlu0 %7712
    %v7714 = vmul.f32 %v7710, %v1895
    %v7715 = vmul.f32 %v7713, %v1895
    %v7716 = vadd.f32 %v7714, 1e-05
    %v7717 = vadd.f32 %v7715, 1e-05
    %v7718 = vrsqrt.pop %v7716
    %v7719 = vrsqrt.pop %v7717
    %v7720 = vmul.f32 %v7704, %v7718
    %v7721 = vmul.f32 %v7705, %v7719
    %v7723 = vlaneseq
    %v7724 = vshrl.u32 %v7723, 7
    %v7725 = vsub.s32 0, %v7724
    %v7726 = vrot.slane %v7693, %v7725
    %v7728 = vmul.f32 %v7720, %v7726
    %v7729 = vmul.f32 %v7721, %v7726
    %v7731 = vlaneseq
    %v7732 = vshrl.u32 %v7731, 7
    %v7733 = vsub.s32 0, %v7732
    %v7734 = vrot.slane %v7695, %v7733
    %v7736 = vadd.f32 %v7728, %v7734
    %v7737 = vadd.f32 %v7729, %v7734
    %7738 = vst.msk [vmem:[#allocation2] sm:$0xff] %vm171, %v7736
    %7739 = vst.msk [vmem:[#allocation2 + $0x8] sm:$0xff] %vm171, %v7737
    // Predicated region
    $region42: #{decoder_forward.1} parent=1 // pred_check
      _
    $region43: #{decoder_forward.1} parent=1 // pred_check_branch
      %7741 = sbr.rel (0) target = $region45
    $region44: #{decoder_forward.1} parent=1 // pred_region
      %s7743 = ssub.s32 256, 256
      %7744 = vsyncadd [#allocation3], %s7743
      %s7745 = sshll.u32 [#allocation2], 4
      %s7746 = int_to_ptr.vmem [resolvable:$true] %s7745
      %7751 = dma.vmem_to_hbm [thread:$0]  %s7746, 256, %s10, [#allocation3], 128, 128, 8
    $region45: #{decoder_forward.1} parent=1 // pred_fallthru
      _
    // Predicated region
    $region46: #{decoder_forward.1} parent=1 // pred_check
      _
    $region47: #{decoder_forward.1} parent=1 // pred_check_branch
      %7753 = sbr.rel (0) target = $region49
    $region48: #{decoder_forward.1} parent=1 // pred_region
      %7754 = dma.done [#allocation3], 256
    $region49: #{decoder_forward.1} parent=1 // pred_fallthru
      _
    %7755 = vsyncpa [#allocation3], 1

</llo_original>
